<compile_context>
chip_gen: v7x
topology: tpu7x:2x2x1
jax: 0.10.0
libtpu: 0.0.40
codegen_flags: <defaults>
</compile_context>

<pallas_src>
import jax
import jax.numpy as jnp
from jax.experimental import pallas as pl
from jax.experimental.pallas import tpu as pltpu

# TODO(synk): BertTokenizer / BertModel('chinese-bert-wwm-ext') are pretrained
# components that cannot be reproduced in a Pallas kernel; synthetic (B, 768)
# CLS embeddings stand in for the encoder output.

HIDDEN = 768
MLP_HID = 1152      # keep a multiple of 128 -> the pu[:, :MLP_HID] / [:, MLP_HID:]
LN_EPS = 1e-5       # lane slices stay 128-aligned (zero-cost)
assert MLP_HID % 128 == 0 and HIDDEN % 128 == 0


def _build_layout():
    """Packed layout for every small f32 parameter (scales / biases / LN).

    Each slot starts at a 128-lane-aligned offset so the in-kernel static
    slices are free.
    """
    slots = [
        # per-output-channel int8 dequant scales
        ("s_wu", MLP_HID + HIDDEN), ("s_wi", MLP_HID + HIDDEN),
        ("s_w2", HIDDEN), ("s_w3t", HIDDEN), ("s_w3b", HIDDEN), ("s_w4", 256),
        # biases / LayerNorm params
        ("bfu", HIDDEN), ("bfi", HIDDEN), ("b1f", MLP_HID), ("b2", HIDDEN),
        ("g1", HIDDEN), ("be1", HIDDEN), ("b3", HIDDEN), ("b4", 256),
        ("g2", 256), ("be2", 256), ("b5", 64), ("b6", 32),
        # final Linear(32,1) with LayerNorm(32) affine folded in
        ("w7", 32), ("b7", 1),
    ]
    layout, off = {}, 0
    for name, width in slots:
        layout[name] = (off, width)
        off += ((width + 127) // 128) * 128
    return layout, off


_P_LAYOUT, _P_WIDTH = _build_layout()


def _ncf_head_kernel(
    u_ref, i_ref,                                        # (tb, 768) activations
    wu_ref, wi_ref, w2_ref, w3t_ref, w3b_ref, w4_ref,    # int8 weights
    w5_ref, w6_ref,                                      # bf16 tail weights
    p_ref,                                               # packed f32 params
    out_ref,
):
    f32 = jnp.float32
    bf16 = jnp.bfloat16

    def pslice(name):
        off, width = _P_LAYOUT[name]
        return p_ref[:, off:off + width]

    def qdot(x, wq_ref, scale_name):
        # Weight-only int8: integer values held exactly in bf16, bf16 MXU
        # matmul with f32 accumulate, per-output-channel dequant scale applied
        # after the accumulate.
        w = wq_ref[...].astype(bf16)
        acc = jnp.dot(x.astype(bf16), w, preferred_element_type=f32)
        return acc * pslice(scale_name)

    def bdot(x, w_ref):
        # bf16 MXU matmul, f32 accumulate (tiny tail weights stay bf16).
        return jnp.dot(x.astype(bf16), w_ref[...], preferred_element_type=f32)

    def layernorm(x, g, b):
        # LN statistics stay f32 (v5e has no bf16 VPU/EUP path).
        mu = jnp.mean(x, axis=-1, keepdims=True)
        var = jnp.mean((x - mu) * (x - mu), axis=-1, keepdims=True)
        return (x - mu) * jax.lax.rsqrt(var + LN_EPS) * g + b

    u = u_ref[...]
    it = i_ref[...]

    # Fused per-side projections: wu = [wmu@w1_top | wfu], wi = [wmi@w1_bot | wfi].
    pu = qdot(u, wu_ref, "s_wu")          # (tb, 1152 + 768)
    pi = qdot(it, wi_ref, "s_wi")         # (tb, 1152 + 768)

    # GMF branch (MF projections), element-wise product in f32.
    ui_mu = (pu[:, MLP_HID:] + pslice("bfu")) * (pi[:, MLP_HID:] + pslice("bfi"))

    # MLP tower; Linear(1536,1152) is already folded with the MLP projections.
    h = jax.nn.relu(pu[:, :MLP_HID] + pi[:, :MLP_HID] + pslice("b1f"))
    h = qdot(h, w2_ref, "s_w2") + pslice("b2")            # (tb, 768)
    h = jax.nn.relu(layernorm(h, pslice("g1"), pslice("be1")))

    # NeuMF tower; concat([h, ui_mu]) @ w3 done as two accumulating matmuls.
    z = jax.nn.relu(qdot(h, w3t_ref, "s_w3t")
                    + qdot(ui_mu, w3b_ref, "s_w3b") + pslice("b3"))  # (tb, 768)
    z = qdot(z, w4_ref, "s_w4") + pslice("b4")             # (tb, 256)
    z = jax.nn.relu(layernorm(z, pslice("g2"), pslice("be2")))
    z = jax.nn.relu(bdot(z, w5_ref) + pslice("b5"))        # (tb, 64)
    z = bdot(z, w6_ref) + pslice("b6")                     # (tb, 32)
    z = layernorm(z, 1.0, 0.0)          # LN(32) affine folded into w7/b7
    # Final Linear(32, 1) as a lane reduction (w7 stored as a (1, 32) row).
    logit = jnp.sum(z * pslice("w7"), axis=-1, keepdims=True) + pslice("b7")

    out_ref[...] = jax.nn.sigmoid(logit)


def ncf_head(u_emb, i_emb, kparams, *, tb=256):
    """NCF head; batch grid keeps weights VMEM-resident (DMA'd once)."""
    B = u_emb.shape[0]

    # Adaptive batch tile: 256 MXU rows for large batches, a single
    # 8-sublane-rounded tile (one grid step, one core) for small batches.
    tb = int(min(tb, max(8, ((B + 7) // 8) * 8)))
    assert tb % 8 == 0
    B_pad = ((B + tb - 1) // tb) * tb
    if B_pad != B:
        pad = ((0, B_pad - B), (0, 0))
        u_emb = jnp.pad(u_emb, pad)
        i_emb = jnp.pad(i_emb, pad)
    num_tiles = B_pad // tb

    act_spec = pl.BlockSpec((tb, HIDDEN), lambda i: (i, 0))
    out_spec = pl.BlockSpec((tb, 1), lambda i: (i, 0))

    def const_spec(arr):
        # Whole-array block, constant index_map -> DMA'd once, stays resident.
        # Buffered(1): single-buffered (these blocks are never re-fetched), so
        # no duplicated weight copy eats VMEM.
        return pl.BlockSpec(arr.shape, lambda i: (0, 0),
                            pipeline_mode=pl.Buffered(1))

    in_specs = [act_spec, act_spec] + [const_spec(p) for p in kparams]

    # Megacore: only shard the batch across TensorCores once it is large
    # enough to amortize the duplicated per-core weight DMA (v7x has 2 TCs;
    # no-op on v5e/v6e).
    dims = ("parallel",) if B_pad >= 512 else ("arbitrary",)

    out = pl.pallas_call(
        _ncf_head_kernel,
        out_shape=jax.ShapeDtypeStruct((B_pad, 1), jnp.float32),
        grid=(num_tiles,),
        in_specs=in_specs,
        out_specs=out_spec,
        compiler_params=pltpu.CompilerParams(
            dimension_semantics=dims,
            vmem_limit_bytes=32 * 1024 * 1024,   # fits v7x's 64 MiB VMEM easily
        ),
    )(u_emb, i_emb, *kparams)
    return out[:B]


def init_params(key):
    """Parameters in the original module's shapes (Linear stored as (in, out))."""
    def dense(k, d_in, d_out):
        kw, kb = jax.random.split(k)
        w = 0.02 * jax.random.normal(kw, (d_in, d_out), jnp.float32)
        b = 0.02 * jax.random.normal(kb, (1, d_out), jnp.float32)
        return w, b

    keys = jax.random.split(key, 11)
    p = {}
    p["wmu"], p["bmu"] = dense(keys[0], HIDDEN, HIDDEN)       # MLP_user_projection
    p["wmi"], p["bmi"] = dense(keys[1], HIDDEN, HIDDEN)       # MLP_item_projection
    p["wfu"], p["bfu"] = dense(keys[2], HIDDEN, HIDDEN)       # MF_user_projection
    p["wfi"], p["bfi"] = dense(keys[3], HIDDEN, HIDDEN)       # MF_item_projection
    p["w1"], p["b1"] = dense(keys[4], 2 * HIDDEN, MLP_HID)    # MLP Linear(1536,1152)
    p["w2"], p["b2"] = dense(keys[5], MLP_HID, HIDDEN)        # MLP Linear(1152,768)
    p["g1"], p["be1"] = jnp.ones((1, HIDDEN), jnp.float32), jnp.zeros((1, HIDDEN), jnp.float32)
    p["w3"], p["b3"] = dense(keys[6], 2 * HIDDEN, HIDDEN)     # NeuMF Linear(1536,768)
    p["w4"], p["b4"] = dense(keys[7], HIDDEN, 256)
    p["g2"], p["be2"] = jnp.ones((1, 256), jnp.float32), jnp.zeros((1, 256), jnp.float32)
    p["w5"], p["b5"] = dense(keys[8], 256, 64)
    p["w6"], p["b6"] = dense(keys[9], 64, 32)
    p["g3"], p["be3"] = jnp.ones((1, 32), jnp.float32), jnp.zeros((1, 32), jnp.float32)
    p["w7"], p["b7"] = dense(keys[10], 32, 1)
    return p


def _quantize_int8(w):
    """Per-output-channel symmetric int8 quantization: w ~= q * scale."""
    amax = jnp.max(jnp.abs(w), axis=0, keepdims=True)
    scale = jnp.maximum(amax, 1e-8) / 127.0
    q = jnp.clip(jnp.round(w / scale), -127.0, 127.0).astype(jnp.int8)
    return q, scale.astype(jnp.float32)


def _pack_params(vals):
    """Pack the small f32 params into one (1, K) 128-lane-aligned vector."""
    buf = jnp.zeros((1, _P_WIDTH), jnp.float32)
    for name, (off, width) in _P_LAYOUT.items():
        v = jnp.asarray(vals[name], jnp.float32).reshape(1, width)
        buf = buf.at[:, off:off + width].set(v)
    return buf


def prepare_kernel_params(p):
    """Host-side weight prep: fold MLP projections into w1, fuse per-side
    matmuls, split concat-consuming weights, fold LN(32) into the final Linear,
    int8-quantize the large matrices, pack scales/biases/LN params into one
    f32 vector."""
    bf16 = jnp.bfloat16
    w1_top, w1_bot = p["w1"][:HIDDEN], p["w1"][HIDDEN:]
    # No nonlinearity between the MLP projections and w1 -> fold offline.
    wA = p["wmu"] @ w1_top                                    # (768, 1152)
    wB = p["wmi"] @ w1_bot                                    # (768, 1152)
    b1f = p["bmu"] @ w1_top + p["bmi"] @ w1_bot + p["b1"]     # (1, 1152)
    # Fuse each side's two matmuls into one (768, 1152+768) weight.
    wu = jnp.concatenate([wA, p["wfu"]], axis=1)
    wi = jnp.concatenate([wB, p["wfi"]], axis=1)
    # Split w3 so concat([h, ui_mu]) @ w3 becomes two accumulating matmuls.
    w3t = p["w3"][:HIDDEN]
    w3b = p["w3"][HIDDEN:]

    # Weight-only int8 for the large matrices (per-output-channel scales).
    wu_q, s_wu = _quantize_int8(wu)
    wi_q, s_wi = _quantize_int8(wi)
    w2_q, s_w2 = _quantize_int8(p["w2"])
    w3t_q, s_w3t = _quantize_int8(w3t)
    w3b_q, s_w3b = _quantize_int8(w3b)
    w4_q, s_w4 = _quantize_int8(p["w4"])

    # Fold LayerNorm(32) affine into the final Linear(32, 1).
    w7_row = p["w7"].T * p["g3"]                              # (1, 32)
    b7_eff = p["be3"] @ p["w7"] + p["b7"]                     # (1, 1)

    packed = _pack_params({
        "s_wu": s_wu, "s_wi": s_wi, "s_w2": s_w2, "s_w3t": s_w3t,
        "s_w3b": s_w3b, "s_w4": s_w4,
        "bfu": p["bfu"], "bfi": p["bfi"], "b1f": b1f, "b2": p["b2"],
        "g1": p["g1"], "be1": p["be1"], "b3": p["b3"], "b4": p["b4"],
        "g2": p["g2"], "be2": p["be2"], "b5": p["b5"], "b6": p["b6"],
        "w7": w7_row, "b7": b7_eff,
    })

    return (wu_q, wi_q, w2_q, w3t_q, w3b_q, w4_q,
            p["w5"].astype(bf16), p["w6"].astype(bf16), packed)


def recommend_model_forward(u_emb, i_emb, kparams, *, tb=256):
    preds = ncf_head(u_emb, i_emb, kparams, tb=tb)
    return jnp.squeeze(preds, axis=-1)                        # torch .squeeze()


def kernel_math_reference(u, it, kp):
    """Pure-JAX f32 emulation of the exact kernel math (same folded +
    int8-quantized parameters); returns (probs, pre-sigmoid logits)."""
    wu_q, wi_q, w2_q, w3t_q, w3b_q, w4_q, w5, w6, packed = kp
    f32 = jnp.float32

    def ps(name):
        off, width = _P_LAYOUT[name]
        return packed[:, off:off + width]

    def qdot(x, q, sname):
        return (x @ q.astype(f32)) * ps(sname)

    def ln(x, g, b):
        mu = jnp.mean(x, axis=-1, keepdims=True)
        var = jnp.mean((x - mu) * (x - mu), axis=-1, keepdims=True)
        return (x - mu) * jax.lax.rsqrt(var + LN_EPS) * g + b

    pu = qdot(u, wu_q, "s_wu")
    pi = qdot(it, wi_q, "s_wi")
    ui_mu = (pu[:, MLP_HID:] + ps("bfu")) * (pi[:, MLP_HID:] + ps("bfi"))
    h = jax.nn.relu(pu[:, :MLP_HID] + pi[:, :MLP_HID] + ps("b1f"))
    h = qdot(h, w2_q, "s_w2") + ps("b2")
    h = jax.nn.relu(ln(h, ps("g1"), ps("be1")))
    z = jax.nn.relu(qdot(h, w3t_q, "s_w3t") + qdot(ui_mu, w3b_q, "s_w3b") + ps("b3"))
    z = qdot(z, w4_q, "s_w4") + ps("b4")
    z = jax.nn.relu(ln(z, ps("g2"), ps("be2")))
    z = jax.nn.relu(z @ w5.astype(f32) + ps("b5"))
    z = z @ w6.astype(f32) + ps("b6")
    z = ln(z, 1.0, 0.0)
    logits = jnp.sum(z * ps("w7"), axis=-1, keepdims=True) + ps("b7")
    return jnp.squeeze(jax.nn.sigmoid(logits), -1), jnp.squeeze(logits, -1)


def reference_forward(u, it, p):
    """Pure-JAX f32 reference with the original parameterization."""
    def ln(x, g, b):
        mu = jnp.mean(x, axis=-1, keepdims=True)
        var = jnp.mean((x - mu) * (x - mu), axis=-1, keepdims=True)
        return (x - mu) * jax.lax.rsqrt(var + LN_EPS) * g + b

    mlp_u = u @ p["wmu"] + p["bmu"]
    mlp_i = it @ p["wmi"] + p["bmi"]
    mf_u = u @ p["wfu"] + p["bfu"]
    mf_i = it @ p["wfi"] + p["bfi"]
    ui = jnp.concatenate([mlp_u, mlp_i], axis=1)
    h = jax.nn.relu(ui @ p["w1"] + p["b1"])
    h = h @ p["w2"] + p["b2"]
    h = jax.nn.relu(ln(h, p["g1"], p["be1"]))
    comb = jnp.concatenate([h, mf_u * mf_i], axis=1)
    z = jax.nn.relu(comb @ p["w3"] + p["b3"])
    z = z @ p["w4"] + p["b4"]
    z = jax.nn.relu(ln(z, p["g2"], p["be2"]))
    z = jax.nn.relu(z @ p["w5"] + p["b5"])
    z = z @ p["w6"] + p["b6"]
    z = ln(z, p["g3"], p["be3"])
    z = z @ p["w7"] + p["b7"]
    return jnp.squeeze(jax.nn.sigmoid(z), axis=-1)


if __name__ == "__main__":
    key = jax.random.PRNGKey(0)
    k_u, k_i, k_p = jax.random.split(key, 3)

    B = 8       # small test batch; the wrapper pads/tiles automatically

    # Synthetic stand-ins for the BERT [CLS] embeddings (encoder not translatable).
    user_emb = jax.random.normal(k_u, (B, HIDDEN), jnp.float32)
    item_emb = jax.random.normal(k_i, (B, HIDDEN), jnp.float32)

    params = init_params(k_p)
    kparams = prepare_kernel_params(params)

    preds = recommend_model_forward(user_emb, item_emb, kparams)
    jax.block_until_ready(preds)

    assert preds.shape == (B,)
    assert bool(jnp.all(jnp.isfinite(preds)))

    # (a) Tight check against a pure-JAX f32 emulation of the exact kernel
    #     math (same folded / int8 weights): validates the Pallas kernel
    #     itself, on both probabilities and recovered pre-sigmoid logits.
    ref_p, ref_logit = kernel_math_reference(user_emb, item_emb, kparams)
    kern_logit = jnp.log(preds) - jnp.log1p(-preds)
    assert bool(jnp.max(jnp.abs(preds - ref_p)) < 1e-2)
    assert bool(jnp.max(jnp.abs(kern_logit - ref_logit)) < 5e-2)

    # (b) Loose check against the original-parameterization f32 reference:
    #     bounds the error introduced by the offline folds + int8 weights.
    ref_full = reference_forward(user_emb, item_emb, params)
    assert bool(jnp.max(jnp.abs(preds - ref_full)) < 5e-2)

    print("KERNEL_OK")
</pallas_src>

<mosaic_0001>
module attributes {stable_mosaic.version = 11 : i64} {
  func.func @_ncf_head_kernel(%arg0: i32, %arg1: memref<8x768xf32, #tpu.memory_space<vmem>>, %arg2: memref<8x768xf32, #tpu.memory_space<vmem>>, %arg3: memref<768x1920xi8, #tpu.memory_space<vmem>>, %arg4: memref<768x1920xi8, #tpu.memory_space<vmem>>, %arg5: memref<1152x768xi8, #tpu.memory_space<vmem>>, %arg6: memref<768x768xi8, #tpu.memory_space<vmem>>, %arg7: memref<768x768xi8, #tpu.memory_space<vmem>>, %arg8: memref<768x256xi8, #tpu.memory_space<vmem>>, %arg9: memref<256x64xbf16, #tpu.memory_space<vmem>>, %arg10: memref<64x32xbf16, #tpu.memory_space<vmem>>, %arg11: memref<1x13440xf32, #tpu.memory_space<vmem>>, %arg12: memref<8x1xf32, #tpu.memory_space<vmem>>) attributes {dimension_semantics = [#tpu.dimension_semantics<arbitrary>], iteration_bounds = array<i64: 1>, scalar_prefetch = 0 : i64, scratch_operands = 0 : i64, tpu.core_type = #tpu.core_type<tc>, window_params = [{transform_indices = @transform_0, window_bounds = array<i64: 8, 768>}, {transform_indices = @transform_1, window_bounds = array<i64: 8, 768>}, {pipeline_mode = #tpu.pipeline_mode<synchronous>, transform_indices = @transform_2, window_bounds = array<i64: 768, 1920>}, {pipeline_mode = #tpu.pipeline_mode<synchronous>, transform_indices = @transform_3, window_bounds = array<i64: 768, 1920>}, {pipeline_mode = #tpu.pipeline_mode<synchronous>, transform_indices = @transform_4, window_bounds = array<i64: 1152, 768>}, {pipeline_mode = #tpu.pipeline_mode<synchronous>, transform_indices = @transform_5, window_bounds = array<i64: 768, 768>}, {pipeline_mode = #tpu.pipeline_mode<synchronous>, transform_indices = @transform_6, window_bounds = array<i64: 768, 768>}, {pipeline_mode = #tpu.pipeline_mode<synchronous>, transform_indices = @transform_7, window_bounds = array<i64: 768, 256>}, {pipeline_mode = #tpu.pipeline_mode<synchronous>, transform_indices = @transform_8, window_bounds = array<i64: 256, 64>}, {pipeline_mode = #tpu.pipeline_mode<synchronous>, transform_indices = @transform_9, window_bounds = array<i64: 64, 32>}, {pipeline_mode = #tpu.pipeline_mode<synchronous>, transform_indices = @transform_10, window_bounds = array<i64: 1, 13440>}, {transform_indices = @transform_11, window_bounds = array<i64: 8, 1>}]} {
    %c0 = arith.constant 0 : index
    %c0_0 = arith.constant 0 : index
    %0 = vector.load %arg1[%c0, %c0_0] : memref<8x768xf32, #tpu.memory_space<vmem>>, vector<8x768xf32>
    %c0_1 = arith.constant 0 : index
    %c0_2 = arith.constant 0 : index
    %1 = vector.load %arg2[%c0_1, %c0_2] : memref<8x768xf32, #tpu.memory_space<vmem>>, vector<8x768xf32>
    %c0_3 = arith.constant 0 : index
    %c0_4 = arith.constant 0 : index
    %2 = vector.load %arg3[%c0_3, %c0_4] : memref<768x1920xi8, #tpu.memory_space<vmem>>, vector<768x1920xi8>
    %3 = arith.sitofp %2 : vector<768x1920xi8> to vector<768x1920xbf16>
    %4 = arith.truncf %0 : vector<8x768xf32> to vector<8x768xbf16>
    %cst = arith.constant dense<0.000000e+00> : vector<8x1920xf32>
    %5 = tpu.matmul %4, %3, %cst {dimension_numbers = #tpu.dot_dimension_numbers<[1], [0], [0], [1], [0, 0, 1, 1], [], []>} : vector<8x768xbf16>, vector<768x1920xbf16>, vector<8x1920xf32> -> vector<8x1920xf32>
    %c0_5 = arith.constant 0 : index
    %c0_6 = arith.constant 0 : index
    %6 = vector.load %arg11[%c0_5, %c0_6] : memref<1x13440xf32, #tpu.memory_space<vmem>>, vector<1x1920xf32>
    %7 = vector.broadcast %6 : vector<1x1920xf32> to vector<8x1920xf32>
    %8 = arith.mulf %5, %7 : vector<8x1920xf32>
    %c0_7 = arith.constant 0 : index
    %c0_8 = arith.constant 0 : index
    %9 = vector.load %arg4[%c0_7, %c0_8] : memref<768x1920xi8, #tpu.memory_space<vmem>>, vector<768x1920xi8>
    %10 = arith.sitofp %9 : vector<768x1920xi8> to vector<768x1920xbf16>
    %11 = arith.truncf %1 : vector<8x768xf32> to vector<8x768xbf16>
    %cst_9 = arith.constant dense<0.000000e+00> : vector<8x1920xf32>
    %12 = tpu.matmul %11, %10, %cst_9 {dimension_numbers = #tpu.dot_dimension_numbers<[1], [0], [0], [1], [0, 0, 1, 1], [], []>} : vector<8x768xbf16>, vector<768x1920xbf16>, vector<8x1920xf32> -> vector<8x1920xf32>
    %c0_10 = arith.constant 0 : index
    %c1920 = arith.constant 1920 : index
    %13 = vector.load %arg11[%c0_10, %c1920] : memref<1x13440xf32, #tpu.memory_space<vmem>>, vector<1x1920xf32>
    %14 = vector.broadcast %13 : vector<1x1920xf32> to vector<8x1920xf32>
    %15 = arith.mulf %12, %14 : vector<8x1920xf32>
    %16 = vector.extract_strided_slice %8 {offsets = [0, 1152], sizes = [8, 768], strides = [1, 1]} : vector<8x1920xf32> to vector<8x768xf32>
    %c0_11 = arith.constant 0 : index
    %c6400 = arith.constant 6400 : index
    %17 = vector.load %arg11[%c0_11, %c6400] : memref<1x13440xf32, #tpu.memory_space<vmem>>, vector<1x768xf32>
    %18 = vector.broadcast %17 : vector<1x768xf32> to vector<8x768xf32>
    %19 = arith.addf %16, %18 : vector<8x768xf32>
    %20 = vector.extract_strided_slice %15 {offsets = [0, 1152], sizes = [8, 768], strides = [1, 1]} : vector<8x1920xf32> to vector<8x768xf32>
    %c0_12 = arith.constant 0 : index
    %c7168 = arith.constant 7168 : index
    %21 = vector.load %arg11[%c0_12, %c7168] : memref<1x13440xf32, #tpu.memory_space<vmem>>, vector<1x768xf32>
    %22 = vector.broadcast %21 : vector<1x768xf32> to vector<8x768xf32>
    %23 = arith.addf %20, %22 : vector<8x768xf32>
    %24 = arith.mulf %19, %23 : vector<8x768xf32>
    %25 = vector.extract_strided_slice %8 {offsets = [0, 0], sizes = [8, 1152], strides = [1, 1]} : vector<8x1920xf32> to vector<8x1152xf32>
    %26 = vector.extract_strided_slice %15 {offsets = [0, 0], sizes = [8, 1152], strides = [1, 1]} : vector<8x1920xf32> to vector<8x1152xf32>
    %27 = arith.addf %25, %26 : vector<8x1152xf32>
    %c0_13 = arith.constant 0 : index
    %c7936 = arith.constant 7936 : index
    %28 = vector.load %arg11[%c0_13, %c7936] : memref<1x13440xf32, #tpu.memory_space<vmem>>, vector<1x1152xf32>
    %29 = vector.broadcast %28 : vector<1x1152xf32> to vector<8x1152xf32>
    %30 = arith.addf %27, %29 : vector<8x1152xf32>
    %cst_14 = arith.constant 0.000000e+00 : f32
    %31 = vector.broadcast %cst_14 : f32 to vector<8x1152xf32>
    %32 = arith.maximumf %30, %31 : vector<8x1152xf32>
    %c0_15 = arith.constant 0 : index
    %c0_16 = arith.constant 0 : index
    %33 = vector.load %arg5[%c0_15, %c0_16] : memref<1152x768xi8, #tpu.memory_space<vmem>>, vector<1152x768xi8>
    %34 = arith.sitofp %33 : vector<1152x768xi8> to vector<1152x768xbf16>
    %35 = arith.truncf %32 : vector<8x1152xf32> to vector<8x1152xbf16>
    %cst_17 = arith.constant dense<0.000000e+00> : vector<8x768xf32>
    %36 = tpu.matmul %35, %34, %cst_17 {dimension_numbers = #tpu.dot_dimension_numbers<[1], [0], [0], [1], [0, 0, 1, 1], [], []>} : vector<8x1152xbf16>, vector<1152x768xbf16>, vector<8x768xf32> -> vector<8x768xf32>
    %c0_18 = arith.constant 0 : index
    %c3840 = arith.constant 3840 : index
    %37 = vector.load %arg11[%c0_18, %c3840] : memref<1x13440xf32, #tpu.memory_space<vmem>>, vector<1x768xf32>
    %38 = vector.broadcast %37 : vector<1x768xf32> to vector<8x768xf32>
    %39 = arith.mulf %36, %38 : vector<8x768xf32>
    %c0_19 = arith.constant 0 : index
    %c9088 = arith.constant 9088 : index
    %40 = vector.load %arg11[%c0_19, %c9088] : memref<1x13440xf32, #tpu.memory_space<vmem>>, vector<1x768xf32>
    %41 = vector.broadcast %40 : vector<1x768xf32> to vector<8x768xf32>
    %42 = arith.addf %39, %41 : vector<8x768xf32>
    %c0_20 = arith.constant 0 : index
    %c9856 = arith.constant 9856 : index
    %43 = vector.load %arg11[%c0_20, %c9856] : memref<1x13440xf32, #tpu.memory_space<vmem>>, vector<1x768xf32>
    %c0_21 = arith.constant 0 : index
    %c10624 = arith.constant 10624 : index
    %44 = vector.load %arg11[%c0_21, %c10624] : memref<1x13440xf32, #tpu.memory_space<vmem>>, vector<1x768xf32>
    %cst_22 = arith.constant dense<0.000000e+00> : vector<8xf32>
    %45 = vector.multi_reduction <add>, %42, %cst_22 [1] : vector<8x768xf32> to vector<8xf32>
    %46 = vector.shape_cast %45 : vector<8xf32> to vector<8x1xf32>
    %cst_23 = arith.constant 7.680000e+02 : f32
    %47 = vector.broadcast %cst_23 : f32 to vector<8x1xf32>
    %48 = arith.divf %46, %47 : vector<8x1xf32>
    %49 = vector.broadcast %48 : vector<8x1xf32> to vector<8x768xf32>
    %50 = arith.subf %42, %49 : vector<8x768xf32>
    %51 = vector.broadcast %48 : vector<8x1xf32> to vector<8x768xf32>
    %52 = arith.subf %42, %51 : vector<8x768xf32>
    %53 = arith.mulf %50, %52 : vector<8x768xf32>
    %cst_24 = arith.constant dense<0.000000e+00> : vector<8xf32>
    %54 = vector.multi_reduction <add>, %53, %cst_24 [1] : vector<8x768xf32> to vector<8xf32>
    %55 = vector.shape_cast %54 : vector<8xf32> to vector<8x1xf32>
    %cst_25 = arith.constant 7.680000e+02 : f32
    %56 = vector.broadcast %cst_25 : f32 to vector<8x1xf32>
    %57 = arith.divf %55, %56 : vector<8x1xf32>
    %58 = vector.broadcast %48 : vector<8x1xf32> to vector<8x768xf32>
    %59 = arith.subf %42, %58 : vector<8x768xf32>
    %cst_26 = arith.constant 9.99999974E-6 : f32
    %60 = vector.broadcast %cst_26 : f32 to vector<8x1xf32>
    %61 = arith.addf %57, %60 : vector<8x1xf32>
    %62 = math.rsqrt %61 : vector<8x1xf32>
    %63 = vector.broadcast %62 : vector<8x1xf32> to vector<8x768xf32>
    %64 = arith.mulf %59, %63 : vector<8x768xf32>
    %65 = vector.broadcast %43 : vector<1x768xf32> to vector<8x768xf32>
    %66 = arith.mulf %64, %65 : vector<8x768xf32>
    %67 = vector.broadcast %44 : vector<1x768xf32> to vector<8x768xf32>
    %68 = arith.addf %66, %67 : vector<8x768xf32>
    %cst_27 = arith.constant 0.000000e+00 : f32
    %69 = vector.broadcast %cst_27 : f32 to vector<8x768xf32>
    %70 = arith.maximumf %68, %69 : vector<8x768xf32>
    %c0_28 = arith.constant 0 : index
    %c0_29 = arith.constant 0 : index
    %71 = vector.load %arg6[%c0_28, %c0_29] : memref<768x768xi8, #tpu.memory_space<vmem>>, vector<768x768xi8>
    %72 = arith.sitofp %71 : vector<768x768xi8> to vector<768x768xbf16>
    %73 = arith.truncf %70 : vector<8x768xf32> to vector<8x768xbf16>
    %cst_30 = arith.constant dense<0.000000e+00> : vector<8x768xf32>
    %74 = tpu.matmul %73, %72, %cst_30 {dimension_numbers = #tpu.dot_dimension_numbers<[1], [0], [0], [1], [0, 0, 1, 1], [], []>} : vector<8x768xbf16>, vector<768x768xbf16>, vector<8x768xf32> -> vector<8x768xf32>
    %c0_31 = arith.constant 0 : index
    %c4608 = arith.constant 4608 : index
    %75 = vector.load %arg11[%c0_31, %c4608] : memref<1x13440xf32, #tpu.memory_space<vmem>>, vector<1x768xf32>
    %76 = vector.broadcast %75 : vector<1x768xf32> to vector<8x768xf32>
    %77 = arith.mulf %74, %76 : vector<8x768xf32>
    %c0_32 = arith.constant 0 : index
    %c0_33 = arith.constant 0 : index
    %78 = vector.load %arg7[%c0_32, %c0_33] : memref<768x768xi8, #tpu.memory_space<vmem>>, vector<768x768xi8>
    %79 = arith.sitofp %78 : vector<768x768xi8> to vector<768x768xbf16>
    %80 = arith.truncf %24 : vector<8x768xf32> to vector<8x768xbf16>
    %cst_34 = arith.constant dense<0.000000e+00> : vector<8x768xf32>
    %81 = tpu.matmul %80, %79, %cst_34 {dimension_numbers = #tpu.dot_dimension_numbers<[1], [0], [0], [1], [0, 0, 1, 1], [], []>} : vector<8x768xbf16>, vector<768x768xbf16>, vector<8x768xf32> -> vector<8x768xf32>
    %c0_35 = arith.constant 0 : index
    %c5376 = arith.constant 5376 : index
    %82 = vector.load %arg11[%c0_35, %c5376] : memref<1x13440xf32, #tpu.memory_space<vmem>>, vector<1x768xf32>
    %83 = vector.broadcast %82 : vector<1x768xf32> to vector<8x768xf32>
    %84 = arith.mulf %81, %83 : vector<8x768xf32>
    %85 = arith.addf %77, %84 : vector<8x768xf32>
    %c0_36 = arith.constant 0 : index
    %c11392 = arith.constant 11392 : index
    %86 = vector.load %arg11[%c0_36, %c11392] : memref<1x13440xf32, #tpu.memory_space<vmem>>, vector<1x768xf32>
    %87 = vector.broadcast %86 : vector<1x768xf32> to vector<8x768xf32>
    %88 = arith.addf %85, %87 : vector<8x768xf32>
    %cst_37 = arith.constant 0.000000e+00 : f32
    %89 = vector.broadcast %cst_37 : f32 to vector<8x768xf32>
    %90 = arith.maximumf %88, %89 : vector<8x768xf32>
    %c0_38 = arith.constant 0 : index
    %c0_39 = arith.constant 0 : index
    %91 = vector.load %arg8[%c0_38, %c0_39] : memref<768x256xi8, #tpu.memory_space<vmem>>, vector<768x256xi8>
    %92 = arith.sitofp %91 : vector<768x256xi8> to vector<768x256xbf16>
    %93 = arith.truncf %90 : vector<8x768xf32> to vector<8x768xbf16>
    %cst_40 = arith.constant dense<0.000000e+00> : vector<8x256xf32>
    %94 = tpu.matmul %93, %92, %cst_40 {dimension_numbers = #tpu.dot_dimension_numbers<[1], [0], [0], [1], [0, 0, 1, 1], [], []>} : vector<8x768xbf16>, vector<768x256xbf16>, vector<8x256xf32> -> vector<8x256xf32>
    %c0_41 = arith.constant 0 : index
    %c6144 = arith.constant 6144 : index
    %95 = vector.load %arg11[%c0_41, %c6144] : memref<1x13440xf32, #tpu.memory_space<vmem>>, vector<1x256xf32>
    %96 = vector.broadcast %95 : vector<1x256xf32> to vector<8x256xf32>
    %97 = arith.mulf %94, %96 : vector<8x256xf32>
    %c0_42 = arith.constant 0 : index
    %c12160 = arith.constant 12160 : index
    %98 = vector.load %arg11[%c0_42, %c12160] : memref<1x13440xf32, #tpu.memory_space<vmem>>, vector<1x256xf32>
    %99 = vector.broadcast %98 : vector<1x256xf32> to vector<8x256xf32>
    %100 = arith.addf %97, %99 : vector<8x256xf32>
    %c0_43 = arith.constant 0 : index
    %c12416 = arith.constant 12416 : index
    %101 = vector.load %arg11[%c0_43, %c12416] : memref<1x13440xf32, #tpu.memory_space<vmem>>, vector<1x256xf32>
    %c0_44 = arith.constant 0 : index
    %c12672 = arith.constant 12672 : index
    %102 = vector.load %arg11[%c0_44, %c12672] : memref<1x13440xf32, #tpu.memory_space<vmem>>, vector<1x256xf32>
    %cst_45 = arith.constant dense<0.000000e+00> : vector<8xf32>
    %103 = vector.multi_reduction <add>, %100, %cst_45 [1] : vector<8x256xf32> to vector<8xf32>
    %104 = vector.shape_cast %103 : vector<8xf32> to vector<8x1xf32>
    %cst_46 = arith.constant 2.560000e+02 : f32
    %105 = vector.broadcast %cst_46 : f32 to vector<8x1xf32>
    %106 = arith.divf %104, %105 : vector<8x1xf32>
    %107 = vector.broadcast %106 : vector<8x1xf32> to vector<8x256xf32>
    %108 = arith.subf %100, %107 : vector<8x256xf32>
    %109 = vector.broadcast %106 : vector<8x1xf32> to vector<8x256xf32>
    %110 = arith.subf %100, %109 : vector<8x256xf32>
    %111 = arith.mulf %108, %110 : vector<8x256xf32>
    %cst_47 = arith.constant dense<0.000000e+00> : vector<8xf32>
    %112 = vector.multi_reduction <add>, %111, %cst_47 [1] : vector<8x256xf32> to vector<8xf32>
    %113 = vector.shape_cast %112 : vector<8xf32> to vector<8x1xf32>
    %cst_48 = arith.constant 2.560000e+02 : f32
    %114 = vector.broadcast %cst_48 : f32 to vector<8x1xf32>
    %115 = arith.divf %113, %114 : vector<8x1xf32>
    %116 = vector.broadcast %106 : vector<8x1xf32> to vector<8x256xf32>
    %117 = arith.subf %100, %116 : vector<8x256xf32>
    %cst_49 = arith.constant 9.99999974E-6 : f32
    %118 = vector.broadcast %cst_49 : f32 to vector<8x1xf32>
    %119 = arith.addf %115, %118 : vector<8x1xf32>
    %120 = math.rsqrt %119 : vector<8x1xf32>
    %121 = vector.broadcast %120 : vector<8x1xf32> to vector<8x256xf32>
    %122 = arith.mulf %117, %121 : vector<8x256xf32>
    %123 = vector.broadcast %101 : vector<1x256xf32> to vector<8x256xf32>
    %124 = arith.mulf %122, %123 : vector<8x256xf32>
    %125 = vector.broadcast %102 : vector<1x256xf32> to vector<8x256xf32>
    %126 = arith.addf %124, %125 : vector<8x256xf32>
    %cst_50 = arith.constant 0.000000e+00 : f32
    %127 = vector.broadcast %cst_50 : f32 to vector<8x256xf32>
    %128 = arith.maximumf %126, %127 : vector<8x256xf32>
    %129 = arith.truncf %128 : vector<8x256xf32> to vector<8x256xbf16>
    %c0_51 = arith.constant 0 : index
    %c0_52 = arith.constant 0 : index
    %130 = vector.load %arg9[%c0_51, %c0_52] : memref<256x64xbf16, #tpu.memory_space<vmem>>, vector<256x64xbf16>
    %cst_53 = arith.constant dense<0.000000e+00> : vector<8x64xf32>
    %131 = tpu.matmul %129, %130, %cst_53 {dimension_numbers = #tpu.dot_dimension_numbers<[1], [0], [0], [1], [0, 0, 1, 1], [], []>} : vector<8x256xbf16>, vector<256x64xbf16>, vector<8x64xf32> -> vector<8x64xf32>
    %c0_54 = arith.constant 0 : index
    %c12928 = arith.constant 12928 : index
    %132 = vector.load %arg11[%c0_54, %c12928] : memref<1x13440xf32, #tpu.memory_space<vmem>>, vector<1x64xf32>
    %133 = vector.broadcast %132 : vector<1x64xf32> to vector<8x64xf32>
    %134 = arith.addf %131, %133 : vector<8x64xf32>
    %cst_55 = arith.constant 0.000000e+00 : f32
    %135 = vector.broadcast %cst_55 : f32 to vector<8x64xf32>
    %136 = arith.maximumf %134, %135 : vector<8x64xf32>
    %137 = arith.truncf %136 : vector<8x64xf32> to vector<8x64xbf16>
    %c0_56 = arith.constant 0 : index
    %c0_57 = arith.constant 0 : index
    %138 = vector.load %arg10[%c0_56, %c0_57] : memref<64x32xbf16, #tpu.memory_space<vmem>>, vector<64x32xbf16>
    %cst_58 = arith.constant dense<0.000000e+00> : vector<8x32xf32>
    %139 = tpu.matmul %137, %138, %cst_58 {dimension_numbers = #tpu.dot_dimension_numbers<[1], [0], [0], [1], [0, 0, 1, 1], [], []>} : vector<8x64xbf16>, vector<64x32xbf16>, vector<8x32xf32> -> vector<8x32xf32>
    %c0_59 = arith.constant 0 : index
    %c13056 = arith.constant 13056 : index
    %140 = vector.load %arg11[%c0_59, %c13056] : memref<1x13440xf32, #tpu.memory_space<vmem>>, vector<1x32xf32>
    %141 = vector.broadcast %140 : vector<1x32xf32> to vector<8x32xf32>
    %142 = arith.addf %139, %141 : vector<8x32xf32>
    %cst_60 = arith.constant dense<0.000000e+00> : vector<8xf32>
    %143 = vector.multi_reduction <add>, %142, %cst_60 [1] : vector<8x32xf32> to vector<8xf32>
    %144 = vector.shape_cast %143 : vector<8xf32> to vector<8x1xf32>
    %cst_61 = arith.constant 3.200000e+01 : f32
    %145 = vector.broadcast %cst_61 : f32 to vector<8x1xf32>
    %146 = arith.divf %144, %145 : vector<8x1xf32>
    %147 = vector.broadcast %146 : vector<8x1xf32> to vector<8x32xf32>
    %148 = arith.subf %142, %147 : vector<8x32xf32>
    %149 = vector.broadcast %146 : vector<8x1xf32> to vector<8x32xf32>
    %150 = arith.subf %142, %149 : vector<8x32xf32>
    %151 = arith.mulf %148, %150 : vector<8x32xf32>
    %cst_62 = arith.constant dense<0.000000e+00> : vector<8xf32>
    %152 = vector.multi_reduction <add>, %151, %cst_62 [1] : vector<8x32xf32> to vector<8xf32>
    %153 = vector.shape_cast %152 : vector<8xf32> to vector<8x1xf32>
    %cst_63 = arith.constant 3.200000e+01 : f32
    %154 = vector.broadcast %cst_63 : f32 to vector<8x1xf32>
    %155 = arith.divf %153, %154 : vector<8x1xf32>
    %156 = vector.broadcast %146 : vector<8x1xf32> to vector<8x32xf32>
    %157 = arith.subf %142, %156 : vector<8x32xf32>
    %cst_64 = arith.constant 9.99999974E-6 : f32
    %158 = vector.broadcast %cst_64 : f32 to vector<8x1xf32>
    %159 = arith.addf %155, %158 : vector<8x1xf32>
    %160 = math.rsqrt %159 : vector<8x1xf32>
    %161 = vector.broadcast %160 : vector<8x1xf32> to vector<8x32xf32>
    %162 = arith.mulf %157, %161 : vector<8x32xf32>
    %cst_65 = arith.constant 1.000000e+00 : f32
    %163 = vector.broadcast %cst_65 : f32 to vector<8x32xf32>
    %164 = arith.mulf %162, %163 : vector<8x32xf32>
    %cst_66 = arith.constant 0.000000e+00 : f32
    %165 = vector.broadcast %cst_66 : f32 to vector<8x32xf32>
    %166 = arith.addf %164, %165 : vector<8x32xf32>
    %c0_67 = arith.constant 0 : index
    %c13184 = arith.constant 13184 : index
    %167 = vector.load %arg11[%c0_67, %c13184] : memref<1x13440xf32, #tpu.memory_space<vmem>>, vector<1x32xf32>
    %168 = vector.broadcast %167 : vector<1x32xf32> to vector<8x32xf32>
    %169 = arith.mulf %166, %168 : vector<8x32xf32>
    %cst_68 = arith.constant dense<0.000000e+00> : vector<8xf32>
    %170 = vector.multi_reduction <add>, %169, %cst_68 [1] : vector<8x32xf32> to vector<8xf32>
    %171 = vector.shape_cast %170 : vector<8xf32> to vector<8x1xf32>
    %c0_69 = arith.constant 0 : index
    %c13312 = arith.constant 13312 : index
    %172 = vector.load %arg11[%c0_69, %c13312] : memref<1x13440xf32, #tpu.memory_space<vmem>>, vector<1x1xf32>
    %173 = vector.broadcast %172 : vector<1x1xf32> to vector<8x1xf32>
    %174 = arith.addf %171, %173 : vector<8x1xf32>
    %175 = arith.negf %174 : vector<8x1xf32>
    %176 = math.exp %175 : vector<8x1xf32>
    %cst_70 = arith.constant 1.000000e+00 : f32
    %177 = vector.broadcast %cst_70 : f32 to vector<8x1xf32>
    %178 = arith.addf %177, %176 : vector<8x1xf32>
    %179 = arith.divf %177, %178 : vector<8x1xf32>
    %c0_71 = arith.constant 0 : index
    %c0_72 = arith.constant 0 : index
    %180 = vector.load %arg12[%c0_71, %c0_72] : memref<8x1xf32, #tpu.memory_space<vmem>>, vector<8x1xf32>
    tpu.vector_store %arg12[%c0_71, %c0_72], %179 {strides = array<i32>} : memref<8x1xf32, #tpu.memory_space<vmem>>, vector<8x1xf32>,
    return
  }
  func.func @transform_0(%arg0: i32) -> (i32, i32) {
    %c0_i32 = arith.constant 0 : i32
    %c0_i32_0 = arith.constant 0 : i32
    return %arg0, %c0_i32 : i32, i32
  }
  func.func @transform_1(%arg0: i32) -> (i32, i32) {
    %c0_i32 = arith.constant 0 : i32
    %c0_i32_0 = arith.constant 0 : i32
    return %arg0, %c0_i32 : i32, i32
  }
  func.func @transform_2(%arg0: i32) -> (i32, i32) {
    %c0_i32 = arith.constant 0 : i32
    %c0_i32_0 = arith.constant 0 : i32
    %c0_i32_1 = arith.constant 0 : i32
    return %c0_i32, %c0_i32_0 : i32, i32
  }
  func.func @transform_3(%arg0: i32) -> (i32, i32) {
    %c0_i32 = arith.constant 0 : i32
    %c0_i32_0 = arith.constant 0 : i32
    %c0_i32_1 = arith.constant 0 : i32
    return %c0_i32, %c0_i32_0 : i32, i32
  }
  func.func @transform_4(%arg0: i32) -> (i32, i32) {
    %c0_i32 = arith.constant 0 : i32
    %c0_i32_0 = arith.constant 0 : i32
    %c0_i32_1 = arith.constant 0 : i32
    return %c0_i32, %c0_i32_0 : i32, i32
  }
  func.func @transform_5(%arg0: i32) -> (i32, i32) {
    %c0_i32 = arith.constant 0 : i32
    %c0_i32_0 = arith.constant 0 : i32
    %c0_i32_1 = arith.constant 0 : i32
    return %c0_i32, %c0_i32_0 : i32, i32
  }
  func.func @transform_6(%arg0: i32) -> (i32, i32) {
    %c0_i32 = arith.constant 0 : i32
    %c0_i32_0 = arith.constant 0 : i32
    %c0_i32_1 = arith.constant 0 : i32
    return %c0_i32, %c0_i32_0 : i32, i32
  }
  func.func @transform_7(%arg0: i32) -> (i32, i32) {
    %c0_i32 = arith.constant 0 : i32
    %c0_i32_0 = arith.constant 0 : i32
    %c0_i32_1 = arith.constant 0 : i32
    return %c0_i32, %c0_i32_0 : i32, i32
  }
  func.func @transform_8(%arg0: i32) -> (i32, i32) {
    %c0_i32 = arith.constant 0 : i32
    %c0_i32_0 = arith.constant 0 : i32
    %c0_i32_1 = arith.constant 0 : i32
    return %c0_i32, %c0_i32_0 : i32, i32
  }
  func.func @transform_9(%arg0: i32) -> (i32, i32) {
    %c0_i32 = arith.constant 0 : i32
    %c0_i32_0 = arith.constant 0 : i32
    %c0_i32_1 = arith.constant 0 : i32
    return %c0_i32, %c0_i32_0 : i32, i32
  }
  func.func @transform_10(%arg0: i32) -> (i32, i32) {
    %c0_i32 = arith.constant 0 : i32
    %c0_i32_0 = arith.constant 0 : i32
    %c0_i32_1 = arith.constant 0 : i32
    return %c0_i32, %c0_i32_0 : i32, i32
  }
  func.func @transform_11(%arg0: i32) -> (i32, i32) {
    %c0_i32 = arith.constant 0 : i32
    %c0_i32_0 = arith.constant 0 : i32
    return %arg0, %c0_i32 : i32, i32
  }
}

</mosaic_0001>

<llo_original>
// kernel: tpu_custom_call.1
$region0: #{tpu_custom_call.1}
  #allocation0 [shape = 'u32[]', space=smem, size = 0x4, offset = 0x4, fixed_abs, tag = 'smem constant byte address 0x4 - core index']
  #allocation1 [shape = 'u32[144,128]{1,0:T(1,128)}', space=vmem, size = 0x12000, scoped, tag = 'internal scratch']
  %s0 = inlined_call_operand.hbm [shape: f32[8,768], index: 0, kind: input, shape index: {}]
  %s1 = inlined_call_operand.hbm [shape: f32[8,768], index: 1, kind: input, shape index: {}]
  %s2 = inlined_call_operand.hbm [shape: s8[768,1920], index: 2, kind: input, shape index: {}]
  %s3 = inlined_call_operand.hbm [shape: s8[768,1920], index: 3, kind: input, shape index: {}]
  %s4 = inlined_call_operand.hbm [shape: s8[1152,768], index: 4, kind: input, shape index: {}]
  %s5 = inlined_call_operand.hbm [shape: s8[768,768], index: 5, kind: input, shape index: {}]
  %s6 = inlined_call_operand.hbm [shape: s8[768,768], index: 6, kind: input, shape index: {}]
  %s7 = inlined_call_operand.hbm [shape: s8[768,256], index: 7, kind: input, shape index: {}]
  %s8 = inlined_call_operand.vmem [shape: bf16[256,64], index: 8, kind: input, shape index: {}]
  %s9 = inlined_call_operand.vmem [shape: bf16[64,32], index: 9, kind: input, shape index: {}]
  %s10 = inlined_call_operand.hbm [shape: f32[1,13440], index: 10, kind: input, shape index: {}]
  %s11 = inlined_call_operand.vmem [shape: f32[8,1], index: 11, kind: output, shape index: {}]
  %s12 = sld [smem:[#allocation0]]
  $region90: #{tpu_custom_call.1} parent=0
    _
  %s14 = ssub.s32 1, %s12
  %s15 = scalar_select 0, %s14, %s12
  $region1: #{tpu_custom_call.1} parent=0
    #allocation2 [shape = 'u8[24576]{0}', space=vmem, size = 0x6000, scoped, tag = 'input window, operand 0, single buffered']
    #allocation3 [shape = 's32[1]{0}', space=sflag, size = 0x4, scoped, tag = 'scoped memory for tpu_custom_call.1']
    #allocation4 [shape = 'u8[24576]{0}', space=vmem, size = 0x6000, scoped, tag = 'input window, operand 1, single buffered']
    #allocation5 [shape = 's32[1]{0}', space=sflag, size = 0x4, scoped, tag = 'scoped memory for tpu_custom_call.1']
    #allocation6 [shape = 'u8[1474560]{0}', space=vmem, size = 0x168000, scoped, tag = 'input window, operand 2, single buffered']
    #allocation7 [shape = 'u8[1474560]{0}', space=vmem, size = 0x168000, scoped, tag = 'input window, operand 3, single buffered']
    #allocation8 [shape = 's32[1]{0}', space=sflag, size = 0x4, scoped, tag = 'scoped memory for tpu_custom_call.1']
    #allocation9 [shape = 'u8[884736]{0}', space=vmem, size = 0xd8000, scoped, tag = 'input window, operand 4, single buffered']
    #allocation10 [shape = 'u8[589824]{0}', space=vmem, size = 0x90000, scoped, tag = 'input window, operand 5, single buffered']
    #allocation11 [shape = 's32[1]{0}', space=sflag, size = 0x4, scoped, tag = 'scoped memory for tpu_custom_call.1']
    #allocation12 [shape = 'u8[589824]{0}', space=vmem, size = 0x90000, scoped, tag = 'input window, operand 6, single buffered']
    #allocation13 [shape = 'u8[196608]{0}', space=vmem, size = 0x30000, scoped, tag = 'input window, operand 7, single buffered']
    #allocation14 [shape = 's32[1]{0}', space=sflag, size = 0x4, scoped, tag = 'scoped memory for tpu_custom_call.1']
    #allocation15 [shape = 'u8[53760]{0}', space=vmem, size = 0xd400, scoped, tag = 'input window, operand 10, single buffered']
    %16 = vsyncpa [#allocation3], 0
    %17 = vsyncpa [#allocation5], 0
    %18 = vsyncpa [#allocation8], 0
    %19 = vsyncpa [#allocation11], 0
    %20 = vsyncpa [#allocation14], 0
    // Predicated region
    $region2: #{tpu_custom_call.1} parent=1 // pred_check
      _
    $region3: #{tpu_custom_call.1} parent=1 // pred_check_branch
      %22 = sbr.rel (0) target = $region5
    $region4: #{tpu_custom_call.1} parent=1 // pred_region
      %s24 = ssub.s32 768, 768
      %25 = vsyncadd [#allocation3], %s24
      %s27 = sshll.u32 [#allocation2], 4
      %s28 = int_to_ptr.vmem [resolvable:$true] %s27
      %30 = dma.hbm_to_vmem [thread:$0]  %s0, 768, %s28, [#allocation3]
    $region5: #{tpu_custom_call.1} parent=1 // pred_fallthru
      _
    // Predicated region
    $region6: #{tpu_custom_call.1} parent=1 // pred_check
      _
    $region7: #{tpu_custom_call.1} parent=1 // pred_check_branch
      %32 = sbr.rel (0) target = $region9
    $region8: #{tpu_custom_call.1} parent=1 // pred_region
      %s34 = ssub.s32 768, 768
      %35 = vsyncadd [#allocation5], %s34
      %s37 = sshll.u32 [#allocation4], 4
      %s38 = int_to_ptr.vmem [resolvable:$true] %s37
      %40 = dma.hbm_to_vmem [thread:$0]  %s1, 768, %s38, [#allocation5]
    $region9: #{tpu_custom_call.1} parent=1 // pred_fallthru
      _
    // Predicated region
    $region10: #{tpu_custom_call.1} parent=1 // pred_check
      _
    $region11: #{tpu_custom_call.1} parent=1 // pred_check_branch
      %42 = sbr.rel (0) target = $region13
    $region12: #{tpu_custom_call.1} parent=1 // pred_region
      %s44 = ssub.s32 46080, 46080
      %45 = vsyncadd [#allocation5], %s44
      %s46 = sshll.u32 [#allocation6], 4
      %s47 = int_to_ptr.vmem [resolvable:$true] %s46
      %52 = dma.hbm_to_vmem [thread:$0]  %s2, 46080, %s47, [#allocation5], 1920, 1920, 120
    $region13: #{tpu_custom_call.1} parent=1 // pred_fallthru
      _
    // Predicated region
    $region14: #{tpu_custom_call.1} parent=1 // pred_check
      _
    $region15: #{tpu_custom_call.1} parent=1 // pred_check_branch
      %54 = sbr.rel (0) target = $region17
    $region16: #{tpu_custom_call.1} parent=1 // pred_region
      %s56 = ssub.s32 46080, 46080
      %57 = vsyncadd [#allocation8], %s56
      %s58 = sshll.u32 [#allocation7], 4
      %s59 = int_to_ptr.vmem [resolvable:$true] %s58
      %64 = dma.hbm_to_vmem [thread:$0]  %s3, 46080, %s59, [#allocation8], 1920, 1920, 120
    $region17: #{tpu_custom_call.1} parent=1 // pred_fallthru
      _
    // Predicated region
    $region18: #{tpu_custom_call.1} parent=1 // pred_check
      _
    $region19: #{tpu_custom_call.1} parent=1 // pred_check_branch
      %66 = sbr.rel (0) target = $region21
    $region20: #{tpu_custom_call.1} parent=1 // pred_region
      %s68 = ssub.s32 27648, 27648
      %69 = vsyncadd [#allocation8], %s68
      %s70 = sshll.u32 [#allocation9], 4
      %s71 = int_to_ptr.vmem [resolvable:$true] %s70
      %76 = dma.hbm_to_vmem [thread:$0]  %s4, 27648, %s71, [#allocation8], 768, 768, 48
    $region21: #{tpu_custom_call.1} parent=1 // pred_fallthru
      _
    // Predicated region
    $region22: #{tpu_custom_call.1} parent=1 // pred_check
      _
    $region23: #{tpu_custom_call.1} parent=1 // pred_check_branch
      %78 = sbr.rel (0) target = $region25
    $region24: #{tpu_custom_call.1} parent=1 // pred_region
      %s80 = ssub.s32 18432, 18432
      %81 = vsyncadd [#allocation11], %s80
      %s82 = sshll.u32 [#allocation10], 4
      %s83 = int_to_ptr.vmem [resolvable:$true] %s82
      %88 = dma.hbm_to_vmem [thread:$0]  %s5, 18432, %s83, [#allocation11], 768, 768, 48
    $region25: #{tpu_custom_call.1} parent=1 // pred_fallthru
      _
    // Predicated region
    $region26: #{tpu_custom_call.1} parent=1 // pred_check
      _
    $region27: #{tpu_custom_call.1} parent=1 // pred_check_branch
      %90 = sbr.rel (0) target = $region29
    $region28: #{tpu_custom_call.1} parent=1 // pred_region
      %s92 = ssub.s32 18432, 18432
      %93 = vsyncadd [#allocation11], %s92
      %s94 = sshll.u32 [#allocation12], 4
      %s95 = int_to_ptr.vmem [resolvable:$true] %s94
      %100 = dma.hbm_to_vmem [thread:$0]  %s6, 18432, %s95, [#allocation11], 768, 768, 48
    $region29: #{tpu_custom_call.1} parent=1 // pred_fallthru
      _
    // Predicated region
    $region30: #{tpu_custom_call.1} parent=1 // pred_check
      _
    $region31: #{tpu_custom_call.1} parent=1 // pred_check_branch
      %102 = sbr.rel (0) target = $region33
    $region32: #{tpu_custom_call.1} parent=1 // pred_region
      %s104 = ssub.s32 6144, 6144
      %105 = vsyncadd [#allocation14], %s104
      %s106 = sshll.u32 [#allocation13], 4
      %s107 = int_to_ptr.vmem [resolvable:$true] %s106
      %112 = dma.hbm_to_vmem [thread:$0]  %s7, 6144, %s107, [#allocation14], 256, 256, 16
    $region33: #{tpu_custom_call.1} parent=1 // pred_fallthru
      _
    // Predicated region
    $region34: #{tpu_custom_call.1} parent=1 // pred_check
      _
    $region35: #{tpu_custom_call.1} parent=1 // pred_check_branch
      %114 = sbr.rel (0) target = $region37
    $region36: #{tpu_custom_call.1} parent=1 // pred_region
      _
    $region37: #{tpu_custom_call.1} parent=1 // pred_fallthru
      _
    // Predicated region
    $region38: #{tpu_custom_call.1} parent=1 // pred_check
      _
    $region39: #{tpu_custom_call.1} parent=1 // pred_check_branch
      %116 = sbr.rel (0) target = $region41
    $region40: #{tpu_custom_call.1} parent=1 // pred_region
      _
    $region41: #{tpu_custom_call.1} parent=1 // pred_fallthru
      _
    // Predicated region
    $region42: #{tpu_custom_call.1} parent=1 // pred_check
      _
    $region43: #{tpu_custom_call.1} parent=1 // pred_check_branch
      %118 = sbr.rel (0) target = $region45
    $region44: #{tpu_custom_call.1} parent=1 // pred_region
      %s120 = ssub.s32 1680, 1680
      %121 = vsyncadd [#allocation14], %s120
      %s123 = sshll.u32 [#allocation15], 4
      %s124 = int_to_ptr.vmem [resolvable:$true] %s123
      %126 = dma.hbm_to_vmem [thread:$0]  %s10, 1680, %s124, [#allocation14]
    $region45: #{tpu_custom_call.1} parent=1 // pred_fallthru
      _
    // Predicated region
    $region46: #{tpu_custom_call.1} parent=1 // pred_check
      _
    $region47: #{tpu_custom_call.1} parent=1 // pred_check_branch
      %128 = sbr.rel (0) target = $region49
    $region48: #{tpu_custom_call.1} parent=1 // pred_region
      %129 = dma.done [#allocation3], 768
    $region49: #{tpu_custom_call.1} parent=1 // pred_fallthru
      _
    // Predicated region
    $region50: #{tpu_custom_call.1} parent=1 // pred_check
      _
    $region51: #{tpu_custom_call.1} parent=1 // pred_check_branch
      %131 = sbr.rel (0) target = $region53
    $region52: #{tpu_custom_call.1} parent=1 // pred_region
      %132 = dma.done [#allocation5], 768
    $region53: #{tpu_custom_call.1} parent=1 // pred_fallthru
      _
    // Predicated region
    $region54: #{tpu_custom_call.1} parent=1 // pred_check
      _
    $region55: #{tpu_custom_call.1} parent=1 // pred_check_branch
      %134 = sbr.rel (0) target = $region57
    $region56: #{tpu_custom_call.1} parent=1 // pred_region
      %135 = dma.done [#allocation5], 46080
    $region57: #{tpu_custom_call.1} parent=1 // pred_fallthru
      _
    // Predicated region
    $region58: #{tpu_custom_call.1} parent=1 // pred_check
      _
    $region59: #{tpu_custom_call.1} parent=1 // pred_check_branch
      %137 = sbr.rel (0) target = $region61
    $region60: #{tpu_custom_call.1} parent=1 // pred_region
      %138 = dma.done [#allocation8], 46080
    $region61: #{tpu_custom_call.1} parent=1 // pred_fallthru
      _
    // Predicated region
    $region62: #{tpu_custom_call.1} parent=1 // pred_check
      _
    $region63: #{tpu_custom_call.1} parent=1 // pred_check_branch
      %140 = sbr.rel (0) target = $region65
    $region64: #{tpu_custom_call.1} parent=1 // pred_region
      %141 = dma.done [#allocation8], 27648
    $region65: #{tpu_custom_call.1} parent=1 // pred_fallthru
      _
    // Predicated region
    $region66: #{tpu_custom_call.1} parent=1 // pred_check
      _
    $region67: #{tpu_custom_call.1} parent=1 // pred_check_branch
      %143 = sbr.rel (0) target = $region69
    $region68: #{tpu_custom_call.1} parent=1 // pred_region
      %144 = dma.done [#allocation11], 18432
    $region69: #{tpu_custom_call.1} parent=1 // pred_fallthru
      _
    // Predicated region
    $region70: #{tpu_custom_call.1} parent=1 // pred_check
      _
    $region71: #{tpu_custom_call.1} parent=1 // pred_check_branch
      %146 = sbr.rel (0) target = $region73
    $region72: #{tpu_custom_call.1} parent=1 // pred_region
      %147 = dma.done [#allocation11], 18432
    $region73: #{tpu_custom_call.1} parent=1 // pred_fallthru
      _
    // Predicated region
    $region74: #{tpu_custom_call.1} parent=1 // pred_check
      _
    $region75: #{tpu_custom_call.1} parent=1 // pred_check_branch
      %149 = sbr.rel (0) target = $region77
    $region76: #{tpu_custom_call.1} parent=1 // pred_region
      %150 = dma.done [#allocation14], 6144
    $region77: #{tpu_custom_call.1} parent=1 // pred_fallthru
      _
    // Predicated region
    $region78: #{tpu_custom_call.1} parent=1 // pred_check
      _
    $region79: #{tpu_custom_call.1} parent=1 // pred_check_branch
      %152 = sbr.rel (0) target = $region81
    $region80: #{tpu_custom_call.1} parent=1 // pred_region
      %153 = dma.done [#allocation14], 1680
    $region81: #{tpu_custom_call.1} parent=1 // pred_fallthru
      _
    %v155 = vld [vmem:[#allocation2] sm:$0xff]
    %v156 = vld [vmem:[#allocation2 + $0x8] sm:$0xff]
    %v157 = vld [vmem:[#allocation2 + $0x10] sm:$0xff]
    %v158 = vld [vmem:[#allocation2 + $0x18] sm:$0xff]
    %v159 = vld [vmem:[#allocation2 + $0x20] sm:$0xff]
    %v160 = vld [vmem:[#allocation2 + $0x28] sm:$0xff]
    %v161 = vld [vmem:[#allocation4] sm:$0xff]
    %v162 = vld [vmem:[#allocation4 + $0x8] sm:$0xff]
    %v163 = vld [vmem:[#allocation4 + $0x10] sm:$0xff]
    %v164 = vld [vmem:[#allocation4 + $0x18] sm:$0xff]
    %v165 = vld [vmem:[#allocation4 + $0x20] sm:$0xff]
    %v166 = vld [vmem:[#allocation4 + $0x28] sm:$0xff]
    %v167 = vld [vmem:[#allocation6] sm:$0xff]
    %v168 = vld [vmem:[#allocation6 + $0x8] sm:$0xff]
    %v169 = vld [vmem:[#allocation6 + $0x10] sm:$0xff]
    %v170 = vld [vmem:[#allocation6 + $0x18] sm:$0xff]
    %v171 = vld [vmem:[#allocation6 + $0x20] sm:$0xff]
    %v172 = vld [vmem:[#allocation6 + $0x28] sm:$0xff]
    %v173 = vld [vmem:[#allocation6 + $0x30] sm:$0xff]
    %v174 = vld [vmem:[#allocation6 + $0x38] sm:$0xff]
    %v175 = vld [vmem:[#allocation6 + $0x40] sm:$0xff]
    %v176 = vld [vmem:[#allocation6 + $0x48] sm:$0xff]
    %v177 = vld [vmem:[#allocation6 + $0x50] sm:$0xff]
    %v178 = vld [vmem:[#allocation6 + $0x58] sm:$0xff]
    %v179 = vld [vmem:[#allocation6 + $0x60] sm:$0xff]
    %v180 = vld [vmem:[#allocation6 + $0x68] sm:$0xff]
    %v181 = vld [vmem:[#allocation6 + $0x70] sm:$0xff]
    %v182 = vld [vmem:[#allocation6 + $0x78] sm:$0xff]
    %v183 = vld [vmem:[#allocation6 + $0x80] sm:$0xff]
    %v184 = vld [vmem:[#allocation6 + $0x88] sm:$0xff]
    %v185 = vld [vmem:[#allocation6 + $0x90] sm:$0xff]
    %v186 = vld [vmem:[#allocation6 + $0x98] sm:$0xff]
    %v187 = vld [vmem:[#allocation6 + $0xa0] sm:$0xff]
    %v188 = vld [vmem:[#allocation6 + $0xa8] sm:$0xff]
    %v189 = vld [vmem:[#allocation6 + $0xb0] sm:$0xff]
    %v190 = vld [vmem:[#allocation6 + $0xb8] sm:$0xff]
    %v191 = vld [vmem:[#allocation6 + $0xc0] sm:$0xff]
    %v192 = vld [vmem:[#allocation6 + $0xc8] sm:$0xff]
    %v193 = vld [vmem:[#allocation6 + $0xd0] sm:$0xff]
    %v194 = vld [vmem:[#allocation6 + $0xd8] sm:$0xff]
    %v195 = vld [vmem:[#allocation6 + $0xe0] sm:$0xff]
    %v196 = vld [vmem:[#allocation6 + $0xe8] sm:$0xff]
    %v197 = vld [vmem:[#allocation6 + $0xf0] sm:$0xff]
    %v198 = vld [vmem:[#allocation6 + $0xf8] sm:$0xff]
    %v199 = vld [vmem:[#allocation6 + $0x100] sm:$0xff]
    %v200 = vld [vmem:[#allocation6 + $0x108] sm:$0xff]
    %v201 = vld [vmem:[#allocation6 + $0x110] sm:$0xff]
    %v202 = vld [vmem:[#allocation6 + $0x118] sm:$0xff]
    %v203 = vld [vmem:[#allocation6 + $0x120] sm:$0xff]
    %v204 = vld [vmem:[#allocation6 + $0x128] sm:$0xff]
    %v205 = vld [vmem:[#allocation6 + $0x130] sm:$0xff]
    %v206 = vld [vmem:[#allocation6 + $0x138] sm:$0xff]
    %v207 = vld [vmem:[#allocation6 + $0x140] sm:$0xff]
    %v208 = vld [vmem:[#allocation6 + $0x148] sm:$0xff]
    %v209 = vld [vmem:[#allocation6 + $0x150] sm:$0xff]
    %v210 = vld [vmem:[#allocation6 + $0x158] sm:$0xff]
    %v211 = vld [vmem:[#allocation6 + $0x160] sm:$0xff]
    %v212 = vld [vmem:[#allocation6 + $0x168] sm:$0xff]
    %v213 = vld [vmem:[#allocation6 + $0x170] sm:$0xff]
    %v214 = vld [vmem:[#allocation6 + $0x178] sm:$0xff]
    %v215 = vld [vmem:[#allocation6 + $0x180] sm:$0xff]
    %v216 = vld [vmem:[#allocation6 + $0x188] sm:$0xff]
    %v217 = vld [vmem:[#allocation6 + $0x190] sm:$0xff]
    %v218 = vld [vmem:[#allocation6 + $0x198] sm:$0xff]
    %v219 = vld [vmem:[#allocation6 + $0x1a0] sm:$0xff]
    %v220 = vld [vmem:[#allocation6 + $0x1a8] sm:$0xff]
    %v221 = vld [vmem:[#allocation6 + $0x1b0] sm:$0xff]
    %v222 = vld [vmem:[#allocation6 + $0x1b8] sm:$0xff]
    %v223 = vld [vmem:[#allocation6 + $0x1c0] sm:$0xff]
    %v224 = vld [vmem:[#allocation6 + $0x1c8] sm:$0xff]
    %v225 = vld [vmem:[#allocation6 + $0x1d0] sm:$0xff]
    %v226 = vld [vmem:[#allocation6 + $0x1d8] sm:$0xff]
    %v227 = vld [vmem:[#allocation6 + $0x1e0] sm:$0xff]
    %v228 = vld [vmem:[#allocation6 + $0x1e8] sm:$0xff]
    %v229 = vld [vmem:[#allocation6 + $0x1f0] sm:$0xff]
    %v230 = vld [vmem:[#allocation6 + $0x1f8] sm:$0xff]
    %v231 = vld [vmem:[#allocation6 + $0x200] sm:$0xff]
    %v232 = vld [vmem:[#allocation6 + $0x208] sm:$0xff]
    %v233 = vld [vmem:[#allocation6 + $0x210] sm:$0xff]
    %v234 = vld [vmem:[#allocation6 + $0x218] sm:$0xff]
    %v235 = vld [vmem:[#allocation6 + $0x220] sm:$0xff]
    %v236 = vld [vmem:[#allocation6 + $0x228] sm:$0xff]
    %v237 = vld [vmem:[#allocation6 + $0x230] sm:$0xff]
    %v238 = vld [vmem:[#allocation6 + $0x238] sm:$0xff]
    %v239 = vld [vmem:[#allocation6 + $0x240] sm:$0xff]
    %v240 = vld [vmem:[#allocation6 + $0x248] sm:$0xff]
    %v241 = vld [vmem:[#allocation6 + $0x250] sm:$0xff]
    %v242 = vld [vmem:[#allocation6 + $0x258] sm:$0xff]
    %v243 = vld [vmem:[#allocation6 + $0x260] sm:$0xff]
    %v244 = vld [vmem:[#allocation6 + $0x268] sm:$0xff]
    %v245 = vld [vmem:[#allocation6 + $0x270] sm:$0xff]
    %v246 = vld [vmem:[#allocation6 + $0x278] sm:$0xff]
    %v247 = vld [vmem:[#allocation6 + $0x280] sm:$0xff]
    %v248 = vld [vmem:[#allocation6 + $0x288] sm:$0xff]
    %v249 = vld [vmem:[#allocation6 + $0x290] sm:$0xff]
    %v250 = vld [vmem:[#allocation6 + $0x298] sm:$0xff]
    %v251 = vld [vmem:[#allocation6 + $0x2a0] sm:$0xff]
    %v252 = vld [vmem:[#allocation6 + $0x2a8] sm:$0xff]
    %v253 = vld [vmem:[#allocation6 + $0x2b0] sm:$0xff]
    %v254 = vld [vmem:[#allocation6 + $0x2b8] sm:$0xff]
    %v255 = vld [vmem:[#allocation6 + $0x2c0] sm:$0xff]
    %v256 = vld [vmem:[#allocation6 + $0x2c8] sm:$0xff]
    %v257 = vld [vmem:[#allocation6 + $0x2d0] sm:$0xff]
    %v258 = vld [vmem:[#allocation6 + $0x2d8] sm:$0xff]
    %v259 = vld [vmem:[#allocation6 + $0x2e0] sm:$0xff]
    %v260 = vld [vmem:[#allocation6 + $0x2e8] sm:$0xff]
    %v261 = vld [vmem:[#allocation6 + $0x2f0] sm:$0xff]
    %v262 = vld [vmem:[#allocation6 + $0x2f8] sm:$0xff]
    %v263 = vld [vmem:[#allocation6 + $0x300] sm:$0xff]
    %v264 = vld [vmem:[#allocation6 + $0x308] sm:$0xff]
    %v265 = vld [vmem:[#allocation6 + $0x310] sm:$0xff]
    %v266 = vld [vmem:[#allocation6 + $0x318] sm:$0xff]
    %v267 = vld [vmem:[#allocation6 + $0x320] sm:$0xff]
    %v268 = vld [vmem:[#allocation6 + $0x328] sm:$0xff]
    %v269 = vld [vmem:[#allocation6 + $0x330] sm:$0xff]
    %v270 = vld [vmem:[#allocation6 + $0x338] sm:$0xff]
    %v271 = vld [vmem:[#allocation6 + $0x340] sm:$0xff]
    %v272 = vld [vmem:[#allocation6 + $0x348] sm:$0xff]
    %v273 = vld [vmem:[#allocation6 + $0x350] sm:$0xff]
    %v274 = vld [vmem:[#allocation6 + $0x358] sm:$0xff]
    %v275 = vld [vmem:[#allocation6 + $0x360] sm:$0xff]
    %v276 = vld [vmem:[#allocation6 + $0x368] sm:$0xff]
    %v277 = vld [vmem:[#allocation6 + $0x370] sm:$0xff]
    %v278 = vld [vmem:[#allocation6 + $0x378] sm:$0xff]
    %v279 = vld [vmem:[#allocation6 + $0x380] sm:$0xff]
    %v280 = vld [vmem:[#allocation6 + $0x388] sm:$0xff]
    %v281 = vld [vmem:[#allocation6 + $0x390] sm:$0xff]
    %v282 = vld [vmem:[#allocation6 + $0x398] sm:$0xff]
    %v283 = vld [vmem:[#allocation6 + $0x3a0] sm:$0xff]
    %v284 = vld [vmem:[#allocation6 + $0x3a8] sm:$0xff]
    %v285 = vld [vmem:[#allocation6 + $0x3b0] sm:$0xff]
    %v286 = vld [vmem:[#allocation6 + $0x3b8] sm:$0xff]
    %v287 = vld [vmem:[#allocation6 + $0x3c0] sm:$0xff]
    %v288 = vld [vmem:[#allocation6 + $0x3c8] sm:$0xff]
    %v289 = vld [vmem:[#allocation6 + $0x3d0] sm:$0xff]
    %v290 = vld [vmem:[#allocation6 + $0x3d8] sm:$0xff]
    %v291 = vld [vmem:[#allocation6 + $0x3e0] sm:$0xff]
    %v292 = vld [vmem:[#allocation6 + $0x3e8] sm:$0xff]
    %v293 = vld [vmem:[#allocation6 + $0x3f0] sm:$0xff]
    %v294 = vld [vmem:[#allocation6 + $0x3f8] sm:$0xff]
    %v295 = vld [vmem:[#allocation6 + $0x400] sm:$0xff]
    %v296 = vld [vmem:[#allocation6 + $0x408] sm:$0xff]
    %v297 = vld [vmem:[#allocation6 + $0x410] sm:$0xff]
    %v298 = vld [vmem:[#allocation6 + $0x418] sm:$0xff]
    %v299 = vld [vmem:[#allocation6 + $0x420] sm:$0xff]
    %v300 = vld [vmem:[#allocation6 + $0x428] sm:$0xff]
    %v301 = vld [vmem:[#allocation6 + $0x430] sm:$0xff]
    %v302 = vld [vmem:[#allocation6 + $0x438] sm:$0xff]
    %v303 = vld [vmem:[#allocation6 + $0x440] sm:$0xff]
    %v304 = vld [vmem:[#allocation6 + $0x448] sm:$0xff]
    %v305 = vld [vmem:[#allocation6 + $0x450] sm:$0xff]
    %v306 = vld [vmem:[#allocation6 + $0x458] sm:$0xff]
    %v307 = vld [vmem:[#allocation6 + $0x460] sm:$0xff]
    %v308 = vld [vmem:[#allocation6 + $0x468] sm:$0xff]
    %v309 = vld [vmem:[#allocation6 + $0x470] sm:$0xff]
    %v310 = vld [vmem:[#allocation6 + $0x478] sm:$0xff]
    %v311 = vld [vmem:[#allocation6 + $0x480] sm:$0xff]
    %v312 = vld [vmem:[#allocation6 + $0x488] sm:$0xff]
    %v313 = vld [vmem:[#allocation6 + $0x490] sm:$0xff]
    %v314 = vld [vmem:[#allocation6 + $0x498] sm:$0xff]
    %v315 = vld [vmem:[#allocation6 + $0x4a0] sm:$0xff]
    %v316 = vld [vmem:[#allocation6 + $0x4a8] sm:$0xff]
    %v317 = vld [vmem:[#allocation6 + $0x4b0] sm:$0xff]
    %v318 = vld [vmem:[#allocation6 + $0x4b8] sm:$0xff]
    %v319 = vld [vmem:[#allocation6 + $0x4c0] sm:$0xff]
    %v320 = vld [vmem:[#allocation6 + $0x4c8] sm:$0xff]
    %v321 = vld [vmem:[#allocation6 + $0x4d0] sm:$0xff]
    %v322 = vld [vmem:[#allocation6 + $0x4d8] sm:$0xff]
    %v323 = vld [vmem:[#allocation6 + $0x4e0] sm:$0xff]
    %v324 = vld [vmem:[#allocation6 + $0x4e8] sm:$0xff]
    %v325 = vld [vmem:[#allocation6 + $0x4f0] sm:$0xff]
    %v326 = vld [vmem:[#allocation6 + $0x4f8] sm:$0xff]
    %v327 = vld [vmem:[#allocation6 + $0x500] sm:$0xff]
    %v328 = vld [vmem:[#allocation6 + $0x508] sm:$0xff]
    %v329 = vld [vmem:[#allocation6 + $0x510] sm:$0xff]
    %v330 = vld [vmem:[#allocation6 + $0x518] sm:$0xff]
    %v331 = vld [vmem:[#allocation6 + $0x520] sm:$0xff]
    %v332 = vld [vmem:[#allocation6 + $0x528] sm:$0xff]
    %v333 = vld [vmem:[#allocation6 + $0x530] sm:$0xff]
    %v334 = vld [vmem:[#allocation6 + $0x538] sm:$0xff]
    %v335 = vld [vmem:[#allocation6 + $0x540] sm:$0xff]
    %v336 = vld [vmem:[#allocation6 + $0x548] sm:$0xff]
    %v337 = vld [vmem:[#allocation6 + $0x550] sm:$0xff]
    %v338 = vld [vmem:[#allocation6 + $0x558] sm:$0xff]
    %v339 = vld [vmem:[#allocation6 + $0x560] sm:$0xff]
    %v340 = vld [vmem:[#allocation6 + $0x568] sm:$0xff]
    %v341 = vld [vmem:[#allocation6 + $0x570] sm:$0xff]
    %v342 = vld [vmem:[#allocation6 + $0x578] sm:$0xff]
    %v343 = vld [vmem:[#allocation6 + $0x580] sm:$0xff]
    %v344 = vld [vmem:[#allocation6 + $0x588] sm:$0xff]
    %v345 = vld [vmem:[#allocation6 + $0x590] sm:$0xff]
    %v346 = vld [vmem:[#allocation6 + $0x598] sm:$0xff]
    %v347 = vld [vmem:[#allocation6 + $0x5a0] sm:$0xff]
    %v348 = vld [vmem:[#allocation6 + $0x5a8] sm:$0xff]
    %v349 = vld [vmem:[#allocation6 + $0x5b0] sm:$0xff]
    %v350 = vld [vmem:[#allocation6 + $0x5b8] sm:$0xff]
    %v351 = vld [vmem:[#allocation6 + $0x5c0] sm:$0xff]
    %v352 = vld [vmem:[#allocation6 + $0x5c8] sm:$0xff]
    %v353 = vld [vmem:[#allocation6 + $0x5d0] sm:$0xff]
    %v354 = vld [vmem:[#allocation6 + $0x5d8] sm:$0xff]
    %v355 = vld [vmem:[#allocation6 + $0x5e0] sm:$0xff]
    %v356 = vld [vmem:[#allocation6 + $0x5e8] sm:$0xff]
    %v357 = vld [vmem:[#allocation6 + $0x5f0] sm:$0xff]
    %v358 = vld [vmem:[#allocation6 + $0x5f8] sm:$0xff]
    %v359 = vld [vmem:[#allocation6 + $0x600] sm:$0xff]
    %v360 = vld [vmem:[#allocation6 + $0x608] sm:$0xff]
    %v361 = vld [vmem:[#allocation6 + $0x610] sm:$0xff]
    %v362 = vld [vmem:[#allocation6 + $0x618] sm:$0xff]
    %v363 = vld [vmem:[#allocation6 + $0x620] sm:$0xff]
    %v364 = vld [vmem:[#allocation6 + $0x628] sm:$0xff]
    %v365 = vld [vmem:[#allocation6 + $0x630] sm:$0xff]
    %v366 = vld [vmem:[#allocation6 + $0x638] sm:$0xff]
    %v367 = vld [vmem:[#allocation6 + $0x640] sm:$0xff]
    %v368 = vld [vmem:[#allocation6 + $0x648] sm:$0xff]
    %v369 = vld [vmem:[#allocation6 + $0x650] sm:$0xff]
    %v370 = vld [vmem:[#allocation6 + $0x658] sm:$0xff]
    %v371 = vld [vmem:[#allocation6 + $0x660] sm:$0xff]
    %v372 = vld [vmem:[#allocation6 + $0x668] sm:$0xff]
    %v373 = vld [vmem:[#allocation6 + $0x670] sm:$0xff]
    %v374 = vld [vmem:[#allocation6 + $0x678] sm:$0xff]
    %v375 = vld [vmem:[#allocation6 + $0x680] sm:$0xff]
    %v376 = vld [vmem:[#allocation6 + $0x688] sm:$0xff]
    %v377 = vld [vmem:[#allocation6 + $0x690] sm:$0xff]
    %v378 = vld [vmem:[#allocation6 + $0x698] sm:$0xff]
    %v379 = vld [vmem:[#allocation6 + $0x6a0] sm:$0xff]
    %v380 = vld [vmem:[#allocation6 + $0x6a8] sm:$0xff]
    %v381 = vld [vmem:[#allocation6 + $0x6b0] sm:$0xff]
    %v382 = vld [vmem:[#allocation6 + $0x6b8] sm:$0xff]
    %v383 = vld [vmem:[#allocation6 + $0x6c0] sm:$0xff]
    %v384 = vld [vmem:[#allocation6 + $0x6c8] sm:$0xff]
    %v385 = vld [vmem:[#allocation6 + $0x6d0] sm:$0xff]
    %v386 = vld [vmem:[#allocation6 + $0x6d8] sm:$0xff]
    %v387 = vld [vmem:[#allocation6 + $0x6e0] sm:$0xff]
    %v388 = vld [vmem:[#allocation6 + $0x6e8] sm:$0xff]
    %v389 = vld [vmem:[#allocation6 + $0x6f0] sm:$0xff]
    %v390 = vld [vmem:[#allocation6 + $0x6f8] sm:$0xff]
    %v391 = vld [vmem:[#allocation6 + $0x700] sm:$0xff]
    %v392 = vld [vmem:[#allocation6 + $0x708] sm:$0xff]
    %v393 = vld [vmem:[#allocation6 + $0x710] sm:$0xff]
    %v394 = vld [vmem:[#allocation6 + $0x718] sm:$0xff]
    %v395 = vld [vmem:[#allocation6 + $0x720] sm:$0xff]
    %v396 = vld [vmem:[#allocation6 + $0x728] sm:$0xff]
    %v397 = vld [vmem:[#allocation6 + $0x730] sm:$0xff]
    %v398 = vld [vmem:[#allocation6 + $0x738] sm:$0xff]
    %v399 = vld [vmem:[#allocation6 + $0x740] sm:$0xff]
    %v400 = vld [vmem:[#allocation6 + $0x748] sm:$0xff]
    %v401 = vld [vmem:[#allocation6 + $0x750] sm:$0xff]
    %v402 = vld [vmem:[#allocation6 + $0x758] sm:$0xff]
    %v403 = vld [vmem:[#allocation6 + $0x760] sm:$0xff]
    %v404 = vld [vmem:[#allocation6 + $0x768] sm:$0xff]
    %v405 = vld [vmem:[#allocation6 + $0x770] sm:$0xff]
    %v406 = vld [vmem:[#allocation6 + $0x778] sm:$0xff]
    %v407 = vld [vmem:[#allocation6 + $0x780] sm:$0xff]
    %v408 = vld [vmem:[#allocation6 + $0x788] sm:$0xff]
    %v409 = vld [vmem:[#allocation6 + $0x790] sm:$0xff]
    %v410 = vld [vmem:[#allocation6 + $0x798] sm:$0xff]
    %v411 = vld [vmem:[#allocation6 + $0x7a0] sm:$0xff]
    %v412 = vld [vmem:[#allocation6 + $0x7a8] sm:$0xff]
    %v413 = vld [vmem:[#allocation6 + $0x7b0] sm:$0xff]
    %v414 = vld [vmem:[#allocation6 + $0x7b8] sm:$0xff]
    %v415 = vld [vmem:[#allocation6 + $0x7c0] sm:$0xff]
    %v416 = vld [vmem:[#allocation6 + $0x7c8] sm:$0xff]
    %v417 = vld [vmem:[#allocation6 + $0x7d0] sm:$0xff]
    %v418 = vld [vmem:[#allocation6 + $0x7d8] sm:$0xff]
    %v419 = vld [vmem:[#allocation6 + $0x7e0] sm:$0xff]
    %v420 = vld [vmem:[#allocation6 + $0x7e8] sm:$0xff]
    %v421 = vld [vmem:[#allocation6 + $0x7f0] sm:$0xff]
    %v422 = vld [vmem:[#allocation6 + $0x7f8] sm:$0xff]
    %v423 = vld [vmem:[#allocation6 + $0x800] sm:$0xff]
    %v424 = vld [vmem:[#allocation6 + $0x808] sm:$0xff]
    %v425 = vld [vmem:[#allocation6 + $0x810] sm:$0xff]
    %v426 = vld [vmem:[#allocation6 + $0x818] sm:$0xff]
    %v427 = vld [vmem:[#allocation6 + $0x820] sm:$0xff]
    %v428 = vld [vmem:[#allocation6 + $0x828] sm:$0xff]
    %v429 = vld [vmem:[#allocation6 + $0x830] sm:$0xff]
    %v430 = vld [vmem:[#allocation6 + $0x838] sm:$0xff]
    %v431 = vld [vmem:[#allocation6 + $0x840] sm:$0xff]
    %v432 = vld [vmem:[#allocation6 + $0x848] sm:$0xff]
    %v433 = vld [vmem:[#allocation6 + $0x850] sm:$0xff]
    %v434 = vld [vmem:[#allocation6 + $0x858] sm:$0xff]
    %v435 = vld [vmem:[#allocation6 + $0x860] sm:$0xff]
    %v436 = vld [vmem:[#allocation6 + $0x868] sm:$0xff]
    %v437 = vld [vmem:[#allocation6 + $0x870] sm:$0xff]
    %v438 = vld [vmem:[#allocation6 + $0x878] sm:$0xff]
    %v439 = vld [vmem:[#allocation6 + $0x880] sm:$0xff]
    %v440 = vld [vmem:[#allocation6 + $0x888] sm:$0xff]
    %v441 = vld [vmem:[#allocation6 + $0x890] sm:$0xff]
    %v442 = vld [vmem:[#allocation6 + $0x898] sm:$0xff]
    %v443 = vld [vmem:[#allocation6 + $0x8a0] sm:$0xff]
    %v444 = vld [vmem:[#allocation6 + $0x8a8] sm:$0xff]
    %v445 = vld [vmem:[#allocation6 + $0x8b0] sm:$0xff]
    %v446 = vld [vmem:[#allocation6 + $0x8b8] sm:$0xff]
    %v447 = vld [vmem:[#allocation6 + $0x8c0] sm:$0xff]
    %v448 = vld [vmem:[#allocation6 + $0x8c8] sm:$0xff]
    %v449 = vld [vmem:[#allocation6 + $0x8d0] sm:$0xff]
    %v450 = vld [vmem:[#allocation6 + $0x8d8] sm:$0xff]
    %v451 = vld [vmem:[#allocation6 + $0x8e0] sm:$0xff]
    %v452 = vld [vmem:[#allocation6 + $0x8e8] sm:$0xff]
    %v453 = vld [vmem:[#allocation6 + $0x8f0] sm:$0xff]
    %v454 = vld [vmem:[#allocation6 + $0x8f8] sm:$0xff]
    %v455 = vld [vmem:[#allocation6 + $0x900] sm:$0xff]
    %v456 = vld [vmem:[#allocation6 + $0x908] sm:$0xff]
    %v457 = vld [vmem:[#allocation6 + $0x910] sm:$0xff]
    %v458 = vld [vmem:[#allocation6 + $0x918] sm:$0xff]
    %v459 = vld [vmem:[#allocation6 + $0x920] sm:$0xff]
    %v460 = vld [vmem:[#allocation6 + $0x928] sm:$0xff]
    %v461 = vld [vmem:[#allocation6 + $0x930] sm:$0xff]
    %v462 = vld [vmem:[#allocation6 + $0x938] sm:$0xff]
    %v463 = vld [vmem:[#allocation6 + $0x940] sm:$0xff]
    %v464 = vld [vmem:[#allocation6 + $0x948] sm:$0xff]
    %v465 = vld [vmem:[#allocation6 + $0x950] sm:$0xff]
    %v466 = vld [vmem:[#allocation6 + $0x958] sm:$0xff]
    %v467 = vld [vmem:[#allocation6 + $0x960] sm:$0xff]
    %v468 = vld [vmem:[#allocation6 + $0x968] sm:$0xff]
    %v469 = vld [vmem:[#allocation6 + $0x970] sm:$0xff]
    %v470 = vld [vmem:[#allocation6 + $0x978] sm:$0xff]
    %v471 = vld [vmem:[#allocation6 + $0x980] sm:$0xff]
    %v472 = vld [vmem:[#allocation6 + $0x988] sm:$0xff]
    %v473 = vld [vmem:[#allocation6 + $0x990] sm:$0xff]
    %v474 = vld [vmem:[#allocation6 + $0x998] sm:$0xff]
    %v475 = vld [vmem:[#allocation6 + $0x9a0] sm:$0xff]
    %v476 = vld [vmem:[#allocation6 + $0x9a8] sm:$0xff]
    %v477 = vld [vmem:[#allocation6 + $0x9b0] sm:$0xff]
    %v478 = vld [vmem:[#allocation6 + $0x9b8] sm:$0xff]
    %v479 = vld [vmem:[#allocation6 + $0x9c0] sm:$0xff]
    %v480 = vld [vmem:[#allocation6 + $0x9c8] sm:$0xff]
    %v481 = vld [vmem:[#allocation6 + $0x9d0] sm:$0xff]
    %v482 = vld [vmem:[#allocation6 + $0x9d8] sm:$0xff]
    %v483 = vld [vmem:[#allocation6 + $0x9e0] sm:$0xff]
    %v484 = vld [vmem:[#allocation6 + $0x9e8] sm:$0xff]
    %v485 = vld [vmem:[#allocation6 + $0x9f0] sm:$0xff]
    %v486 = vld [vmem:[#allocation6 + $0x9f8] sm:$0xff]
    %v487 = vld [vmem:[#allocation6 + $0xa00] sm:$0xff]
    %v488 = vld [vmem:[#allocation6 + $0xa08] sm:$0xff]
    %v489 = vld [vmem:[#allocation6 + $0xa10] sm:$0xff]
    %v490 = vld [vmem:[#allocation6 + $0xa18] sm:$0xff]
    %v491 = vld [vmem:[#allocation6 + $0xa20] sm:$0xff]
    %v492 = vld [vmem:[#allocation6 + $0xa28] sm:$0xff]
    %v493 = vld [vmem:[#allocation6 + $0xa30] sm:$0xff]
    %v494 = vld [vmem:[#allocation6 + $0xa38] sm:$0xff]
    %v495 = vld [vmem:[#allocation6 + $0xa40] sm:$0xff]
    %v496 = vld [vmem:[#allocation6 + $0xa48] sm:$0xff]
    %v497 = vld [vmem:[#allocation6 + $0xa50] sm:$0xff]
    %v498 = vld [vmem:[#allocation6 + $0xa58] sm:$0xff]
    %v499 = vld [vmem:[#allocation6 + $0xa60] sm:$0xff]
    %v500 = vld [vmem:[#allocation6 + $0xa68] sm:$0xff]
    %v501 = vld [vmem:[#allocation6 + $0xa70] sm:$0xff]
    %v502 = vld [vmem:[#allocation6 + $0xa78] sm:$0xff]
    %v503 = vld [vmem:[#allocation6 + $0xa80] sm:$0xff]
    %v504 = vld [vmem:[#allocation6 + $0xa88] sm:$0xff]
    %v505 = vld [vmem:[#allocation6 + $0xa90] sm:$0xff]
    %v506 = vld [vmem:[#allocation6 + $0xa98] sm:$0xff]
    %v507 = vld [vmem:[#allocation6 + $0xaa0] sm:$0xff]
    %v508 = vld [vmem:[#allocation6 + $0xaa8] sm:$0xff]
    %v509 = vld [vmem:[#allocation6 + $0xab0] sm:$0xff]
    %v510 = vld [vmem:[#allocation6 + $0xab8] sm:$0xff]
    %v511 = vld [vmem:[#allocation6 + $0xac0] sm:$0xff]
    %v512 = vld [vmem:[#allocation6 + $0xac8] sm:$0xff]
    %v513 = vld [vmem:[#allocation6 + $0xad0] sm:$0xff]
    %v514 = vld [vmem:[#allocation6 + $0xad8] sm:$0xff]
    %v515 = vld [vmem:[#allocation6 + $0xae0] sm:$0xff]
    %v516 = vld [vmem:[#allocation6 + $0xae8] sm:$0xff]
    %v517 = vld [vmem:[#allocation6 + $0xaf0] sm:$0xff]
    %v518 = vld [vmem:[#allocation6 + $0xaf8] sm:$0xff]
    %v519 = vld [vmem:[#allocation6 + $0xb00] sm:$0xff]
    %v520 = vld [vmem:[#allocation6 + $0xb08] sm:$0xff]
    %v521 = vld [vmem:[#allocation6 + $0xb10] sm:$0xff]
    %v522 = vld [vmem:[#allocation6 + $0xb18] sm:$0xff]
    %v523 = vld [vmem:[#allocation6 + $0xb20] sm:$0xff]
    %v524 = vld [vmem:[#allocation6 + $0xb28] sm:$0xff]
    %v525 = vld [vmem:[#allocation6 + $0xb30] sm:$0xff]
    %v526 = vld [vmem:[#allocation6 + $0xb38] sm:$0xff]
    %v527 = vunpack.c.l.s8.bf16 %v167
    %v528 = vunpack.c.l.s8.bf16 %v168
    %v529 = vunpack.c.l.s8.bf16 %v169
    %v530 = vunpack.c.l.s8.bf16 %v170
    %v531 = vunpack.c.l.s8.bf16 %v171
    %v532 = vunpack.c.l.s8.bf16 %v172
    %v533 = vunpack.c.l.s8.bf16 %v173
    %v534 = vunpack.c.l.s8.bf16 %v174
    %v535 = vunpack.c.l.s8.bf16 %v175
    %v536 = vunpack.c.l.s8.bf16 %v176
    %v537 = vunpack.c.l.s8.bf16 %v177
    %v538 = vunpack.c.l.s8.bf16 %v178
    %v539 = vunpack.c.l.s8.bf16 %v179
    %v540 = vunpack.c.l.s8.bf16 %v180
    %v541 = vunpack.c.l.s8.bf16 %v181
    %v542 = vunpack.c.h.s8.bf16 %v167
    %v543 = vunpack.c.h.s8.bf16 %v168
    %v544 = vunpack.c.h.s8.bf16 %v169
    %v545 = vunpack.c.h.s8.bf16 %v170
    %v546 = vunpack.c.h.s8.bf16 %v171
    %v547 = vunpack.c.h.s8.bf16 %v172
    %v548 = vunpack.c.h.s8.bf16 %v173
    %v549 = vunpack.c.h.s8.bf16 %v174
    %v550 = vunpack.c.h.s8.bf16 %v175
    %v551 = vunpack.c.h.s8.bf16 %v176
    %v552 = vunpack.c.h.s8.bf16 %v177
    %v553 = vunpack.c.h.s8.bf16 %v178
    %v554 = vunpack.c.h.s8.bf16 %v179
    %v555 = vunpack.c.h.s8.bf16 %v180
    %v556 = vunpack.c.h.s8.bf16 %v181
    %v557 = vunpack.c.l.s8.bf16 %v182
    %v558 = vunpack.c.l.s8.bf16 %v183
    %v559 = vunpack.c.l.s8.bf16 %v184
    %v560 = vunpack.c.l.s8.bf16 %v185
    %v561 = vunpack.c.l.s8.bf16 %v186
    %v562 = vunpack.c.l.s8.bf16 %v187
    %v563 = vunpack.c.l.s8.bf16 %v188
    %v564 = vunpack.c.l.s8.bf16 %v189
    %v565 = vunpack.c.l.s8.bf16 %v190
    %v566 = vunpack.c.l.s8.bf16 %v191
    %v567 = vunpack.c.l.s8.bf16 %v192
    %v568 = vunpack.c.l.s8.bf16 %v193
    %v569 = vunpack.c.l.s8.bf16 %v194
    %v570 = vunpack.c.l.s8.bf16 %v195
    %v571 = vunpack.c.l.s8.bf16 %v196
    %v572 = vunpack.c.h.s8.bf16 %v182
    %v573 = vunpack.c.h.s8.bf16 %v183
    %v574 = vunpack.c.h.s8.bf16 %v184
    %v575 = vunpack.c.h.s8.bf16 %v185
    %v576 = vunpack.c.h.s8.bf16 %v186
    %v577 = vunpack.c.h.s8.bf16 %v187
    %v578 = vunpack.c.h.s8.bf16 %v188
    %v579 = vunpack.c.h.s8.bf16 %v189
    %v580 = vunpack.c.h.s8.bf16 %v190
    %v581 = vunpack.c.h.s8.bf16 %v191
    %v582 = vunpack.c.h.s8.bf16 %v192
    %v583 = vunpack.c.h.s8.bf16 %v193
    %v584 = vunpack.c.h.s8.bf16 %v194
    %v585 = vunpack.c.h.s8.bf16 %v195
    %v586 = vunpack.c.h.s8.bf16 %v196
    %v587 = vunpack.c.l.s8.bf16 %v197
    %v588 = vunpack.c.l.s8.bf16 %v198
    %v589 = vunpack.c.l.s8.bf16 %v199
    %v590 = vunpack.c.l.s8.bf16 %v200
    %v591 = vunpack.c.l.s8.bf16 %v201
    %v592 = vunpack.c.l.s8.bf16 %v202
    %v593 = vunpack.c.l.s8.bf16 %v203
    %v594 = vunpack.c.l.s8.bf16 %v204
    %v595 = vunpack.c.l.s8.bf16 %v205
    %v596 = vunpack.c.l.s8.bf16 %v206
    %v597 = vunpack.c.l.s8.bf16 %v207
    %v598 = vunpack.c.l.s8.bf16 %v208
    %v599 = vunpack.c.l.s8.bf16 %v209
    %v600 = vunpack.c.l.s8.bf16 %v210
    %v601 = vunpack.c.l.s8.bf16 %v211
    %v602 = vunpack.c.h.s8.bf16 %v197
    %v603 = vunpack.c.h.s8.bf16 %v198
    %v604 = vunpack.c.h.s8.bf16 %v199
    %v605 = vunpack.c.h.s8.bf16 %v200
    %v606 = vunpack.c.h.s8.bf16 %v201
    %v607 = vunpack.c.h.s8.bf16 %v202
    %v608 = vunpack.c.h.s8.bf16 %v203
    %v609 = vunpack.c.h.s8.bf16 %v204
    %v610 = vunpack.c.h.s8.bf16 %v205
    %v611 = vunpack.c.h.s8.bf16 %v206
    %v612 = vunpack.c.h.s8.bf16 %v207
    %v613 = vunpack.c.h.s8.bf16 %v208
    %v614 = vunpack.c.h.s8.bf16 %v209
    %v615 = vunpack.c.h.s8.bf16 %v210
    %v616 = vunpack.c.h.s8.bf16 %v211
    %v617 = vunpack.c.l.s8.bf16 %v212
    %v618 = vunpack.c.l.s8.bf16 %v213
    %v619 = vunpack.c.l.s8.bf16 %v214
    %v620 = vunpack.c.l.s8.bf16 %v215
    %v621 = vunpack.c.l.s8.bf16 %v216
    %v622 = vunpack.c.l.s8.bf16 %v217
    %v623 = vunpack.c.l.s8.bf16 %v218
    %v624 = vunpack.c.l.s8.bf16 %v219
    %v625 = vunpack.c.l.s8.bf16 %v220
    %v626 = vunpack.c.l.s8.bf16 %v221
    %v627 = vunpack.c.l.s8.bf16 %v222
    %v628 = vunpack.c.l.s8.bf16 %v223
    %v629 = vunpack.c.l.s8.bf16 %v224
    %v630 = vunpack.c.l.s8.bf16 %v225
    %v631 = vunpack.c.l.s8.bf16 %v226
    %v632 = vunpack.c.h.s8.bf16 %v212
    %v633 = vunpack.c.h.s8.bf16 %v213
    %v634 = vunpack.c.h.s8.bf16 %v214
    %v635 = vunpack.c.h.s8.bf16 %v215
    %v636 = vunpack.c.h.s8.bf16 %v216
    %v637 = vunpack.c.h.s8.bf16 %v217
    %v638 = vunpack.c.h.s8.bf16 %v218
    %v639 = vunpack.c.h.s8.bf16 %v219
    %v640 = vunpack.c.h.s8.bf16 %v220
    %v641 = vunpack.c.h.s8.bf16 %v221
    %v642 = vunpack.c.h.s8.bf16 %v222
    %v643 = vunpack.c.h.s8.bf16 %v223
    %v644 = vunpack.c.h.s8.bf16 %v224
    %v645 = vunpack.c.h.s8.bf16 %v225
    %v646 = vunpack.c.h.s8.bf16 %v226
    %v647 = vunpack.c.l.s8.bf16 %v227
    %v648 = vunpack.c.l.s8.bf16 %v228
    %v649 = vunpack.c.l.s8.bf16 %v229
    %v650 = vunpack.c.l.s8.bf16 %v230
    %v651 = vunpack.c.l.s8.bf16 %v231
    %v652 = vunpack.c.l.s8.bf16 %v232
    %v653 = vunpack.c.l.s8.bf16 %v233
    %v654 = vunpack.c.l.s8.bf16 %v234
    %v655 = vunpack.c.l.s8.bf16 %v235
    %v656 = vunpack.c.l.s8.bf16 %v236
    %v657 = vunpack.c.l.s8.bf16 %v237
    %v658 = vunpack.c.l.s8.bf16 %v238
    %v659 = vunpack.c.l.s8.bf16 %v239
    %v660 = vunpack.c.l.s8.bf16 %v240
    %v661 = vunpack.c.l.s8.bf16 %v241
    %v662 = vunpack.c.h.s8.bf16 %v227
    %v663 = vunpack.c.h.s8.bf16 %v228
    %v664 = vunpack.c.h.s8.bf16 %v229
    %v665 = vunpack.c.h.s8.bf16 %v230
    %v666 = vunpack.c.h.s8.bf16 %v231
    %v667 = vunpack.c.h.s8.bf16 %v232
    %v668 = vunpack.c.h.s8.bf16 %v233
    %v669 = vunpack.c.h.s8.bf16 %v234
    %v670 = vunpack.c.h.s8.bf16 %v235
    %v671 = vunpack.c.h.s8.bf16 %v236
    %v672 = vunpack.c.h.s8.bf16 %v237
    %v673 = vunpack.c.h.s8.bf16 %v238
    %v674 = vunpack.c.h.s8.bf16 %v239
    %v675 = vunpack.c.h.s8.bf16 %v240
    %v676 = vunpack.c.h.s8.bf16 %v241
    %v677 = vunpack.c.l.s8.bf16 %v242
    %v678 = vunpack.c.l.s8.bf16 %v243
    %v679 = vunpack.c.l.s8.bf16 %v244
    %v680 = vunpack.c.l.s8.bf16 %v245
    %v681 = vunpack.c.l.s8.bf16 %v246
    %v682 = vunpack.c.l.s8.bf16 %v247
    %v683 = vunpack.c.l.s8.bf16 %v248
    %v684 = vunpack.c.l.s8.bf16 %v249
    %v685 = vunpack.c.l.s8.bf16 %v250
    %v686 = vunpack.c.l.s8.bf16 %v251
    %v687 = vunpack.c.l.s8.bf16 %v252
    %v688 = vunpack.c.l.s8.bf16 %v253
    %v689 = vunpack.c.l.s8.bf16 %v254
    %v690 = vunpack.c.l.s8.bf16 %v255
    %v691 = vunpack.c.l.s8.bf16 %v256
    %v692 = vunpack.c.h.s8.bf16 %v242
    %v693 = vunpack.c.h.s8.bf16 %v243
    %v694 = vunpack.c.h.s8.bf16 %v244
    %v695 = vunpack.c.h.s8.bf16 %v245
    %v696 = vunpack.c.h.s8.bf16 %v246
    %v697 = vunpack.c.h.s8.bf16 %v247
    %v698 = vunpack.c.h.s8.bf16 %v248
    %v699 = vunpack.c.h.s8.bf16 %v249
    %v700 = vunpack.c.h.s8.bf16 %v250
    %v701 = vunpack.c.h.s8.bf16 %v251
    %v702 = vunpack.c.h.s8.bf16 %v252
    %v703 = vunpack.c.h.s8.bf16 %v253
    %v704 = vunpack.c.h.s8.bf16 %v254
    %v705 = vunpack.c.h.s8.bf16 %v255
    %v706 = vunpack.c.h.s8.bf16 %v256
    %v707 = vunpack.c.l.s8.bf16 %v257
    %v708 = vunpack.c.l.s8.bf16 %v258
    %v709 = vunpack.c.l.s8.bf16 %v259
    %v710 = vunpack.c.l.s8.bf16 %v260
    %v711 = vunpack.c.l.s8.bf16 %v261
    %v712 = vunpack.c.l.s8.bf16 %v262
    %v713 = vunpack.c.l.s8.bf16 %v263
    %v714 = vunpack.c.l.s8.bf16 %v264
    %v715 = vunpack.c.l.s8.bf16 %v265
    %v716 = vunpack.c.l.s8.bf16 %v266
    %v717 = vunpack.c.l.s8.bf16 %v267
    %v718 = vunpack.c.l.s8.bf16 %v268
    %v719 = vunpack.c.l.s8.bf16 %v269
    %v720 = vunpack.c.l.s8.bf16 %v270
    %v721 = vunpack.c.l.s8.bf16 %v271
    %v722 = vunpack.c.h.s8.bf16 %v257
    %v723 = vunpack.c.h.s8.bf16 %v258
    %v724 = vunpack.c.h.s8.bf16 %v259
    %v725 = vunpack.c.h.s8.bf16 %v260
    %v726 = vunpack.c.h.s8.bf16 %v261
    %v727 = vunpack.c.h.s8.bf16 %v262
    %v728 = vunpack.c.h.s8.bf16 %v263
    %v729 = vunpack.c.h.s8.bf16 %v264
    %v730 = vunpack.c.h.s8.bf16 %v265
    %v731 = vunpack.c.h.s8.bf16 %v266
    %v732 = vunpack.c.h.s8.bf16 %v267
    %v733 = vunpack.c.h.s8.bf16 %v268
    %v734 = vunpack.c.h.s8.bf16 %v269
    %v735 = vunpack.c.h.s8.bf16 %v270
    %v736 = vunpack.c.h.s8.bf16 %v271
    %v737 = vunpack.c.l.s8.bf16 %v272
    %v738 = vunpack.c.l.s8.bf16 %v273
    %v739 = vunpack.c.l.s8.bf16 %v274
    %v740 = vunpack.c.l.s8.bf16 %v275
    %v741 = vunpack.c.l.s8.bf16 %v276
    %v742 = vunpack.c.l.s8.bf16 %v277
    %v743 = vunpack.c.l.s8.bf16 %v278
    %v744 = vunpack.c.l.s8.bf16 %v279
    %v745 = vunpack.c.l.s8.bf16 %v280
    %v746 = vunpack.c.l.s8.bf16 %v281
    %v747 = vunpack.c.l.s8.bf16 %v282
    %v748 = vunpack.c.l.s8.bf16 %v283
    %v749 = vunpack.c.l.s8.bf16 %v284
    %v750 = vunpack.c.l.s8.bf16 %v285
    %v751 = vunpack.c.l.s8.bf16 %v286
    %v752 = vunpack.c.h.s8.bf16 %v272
    %v753 = vunpack.c.h.s8.bf16 %v273
    %v754 = vunpack.c.h.s8.bf16 %v274
    %v755 = vunpack.c.h.s8.bf16 %v275
    %v756 = vunpack.c.h.s8.bf16 %v276
    %v757 = vunpack.c.h.s8.bf16 %v277
    %v758 = vunpack.c.h.s8.bf16 %v278
    %v759 = vunpack.c.h.s8.bf16 %v279
    %v760 = vunpack.c.h.s8.bf16 %v280
    %v761 = vunpack.c.h.s8.bf16 %v281
    %v762 = vunpack.c.h.s8.bf16 %v282
    %v763 = vunpack.c.h.s8.bf16 %v283
    %v764 = vunpack.c.h.s8.bf16 %v284
    %v765 = vunpack.c.h.s8.bf16 %v285
    %v766 = vunpack.c.h.s8.bf16 %v286
    %v767 = vunpack.c.l.s8.bf16 %v287
    %v768 = vunpack.c.l.s8.bf16 %v288
    %v769 = vunpack.c.l.s8.bf16 %v289
    %v770 = vunpack.c.l.s8.bf16 %v290
    %v771 = vunpack.c.l.s8.bf16 %v291
    %v772 = vunpack.c.l.s8.bf16 %v292
    %v773 = vunpack.c.l.s8.bf16 %v293
    %v774 = vunpack.c.l.s8.bf16 %v294
    %v775 = vunpack.c.l.s8.bf16 %v295
    %v776 = vunpack.c.l.s8.bf16 %v296
    %v777 = vunpack.c.l.s8.bf16 %v297
    %v778 = vunpack.c.l.s8.bf16 %v298
    %v779 = vunpack.c.l.s8.bf16 %v299
    %v780 = vunpack.c.l.s8.bf16 %v300
    %v781 = vunpack.c.l.s8.bf16 %v301
    %v782 = vunpack.c.h.s8.bf16 %v287
    %v783 = vunpack.c.h.s8.bf16 %v288
    %v784 = vunpack.c.h.s8.bf16 %v289
    %v785 = vunpack.c.h.s8.bf16 %v290
    %v786 = vunpack.c.h.s8.bf16 %v291
    %v787 = vunpack.c.h.s8.bf16 %v292
    %v788 = vunpack.c.h.s8.bf16 %v293
    %v789 = vunpack.c.h.s8.bf16 %v294
    %v790 = vunpack.c.h.s8.bf16 %v295
    %v791 = vunpack.c.h.s8.bf16 %v296
    %v792 = vunpack.c.h.s8.bf16 %v297
    %v793 = vunpack.c.h.s8.bf16 %v298
    %v794 = vunpack.c.h.s8.bf16 %v299
    %v795 = vunpack.c.h.s8.bf16 %v300
    %v796 = vunpack.c.h.s8.bf16 %v301
    %v797 = vunpack.c.l.s8.bf16 %v302
    %v798 = vunpack.c.l.s8.bf16 %v303
    %v799 = vunpack.c.l.s8.bf16 %v304
    %v800 = vunpack.c.l.s8.bf16 %v305
    %v801 = vunpack.c.l.s8.bf16 %v306
    %v802 = vunpack.c.l.s8.bf16 %v307
    %v803 = vunpack.c.l.s8.bf16 %v308
    %v804 = vunpack.c.l.s8.bf16 %v309
    %v805 = vunpack.c.l.s8.bf16 %v310
    %v806 = vunpack.c.l.s8.bf16 %v311
    %v807 = vunpack.c.l.s8.bf16 %v312
    %v808 = vunpack.c.l.s8.bf16 %v313
    %v809 = vunpack.c.l.s8.bf16 %v314
    %v810 = vunpack.c.l.s8.bf16 %v315
    %v811 = vunpack.c.l.s8.bf16 %v316
    %v812 = vunpack.c.h.s8.bf16 %v302
    %v813 = vunpack.c.h.s8.bf16 %v303
    %v814 = vunpack.c.h.s8.bf16 %v304
    %v815 = vunpack.c.h.s8.bf16 %v305
    %v816 = vunpack.c.h.s8.bf16 %v306
    %v817 = vunpack.c.h.s8.bf16 %v307
    %v818 = vunpack.c.h.s8.bf16 %v308
    %v819 = vunpack.c.h.s8.bf16 %v309
    %v820 = vunpack.c.h.s8.bf16 %v310
    %v821 = vunpack.c.h.s8.bf16 %v311
    %v822 = vunpack.c.h.s8.bf16 %v312
    %v823 = vunpack.c.h.s8.bf16 %v313
    %v824 = vunpack.c.h.s8.bf16 %v314
    %v825 = vunpack.c.h.s8.bf16 %v315
    %v826 = vunpack.c.h.s8.bf16 %v316
    %v827 = vunpack.c.l.s8.bf16 %v317
    %v828 = vunpack.c.l.s8.bf16 %v318
    %v829 = vunpack.c.l.s8.bf16 %v319
    %v830 = vunpack.c.l.s8.bf16 %v320
    %v831 = vunpack.c.l.s8.bf16 %v321
    %v832 = vunpack.c.l.s8.bf16 %v322
    %v833 = vunpack.c.l.s8.bf16 %v323
    %v834 = vunpack.c.l.s8.bf16 %v324
    %v835 = vunpack.c.l.s8.bf16 %v325
    %v836 = vunpack.c.l.s8.bf16 %v326
    %v837 = vunpack.c.l.s8.bf16 %v327
    %v838 = vunpack.c.l.s8.bf16 %v328
    %v839 = vunpack.c.l.s8.bf16 %v329
    %v840 = vunpack.c.l.s8.bf16 %v330
    %v841 = vunpack.c.l.s8.bf16 %v331
    %v842 = vunpack.c.h.s8.bf16 %v317
    %v843 = vunpack.c.h.s8.bf16 %v318
    %v844 = vunpack.c.h.s8.bf16 %v319
    %v845 = vunpack.c.h.s8.bf16 %v320
    %v846 = vunpack.c.h.s8.bf16 %v321
    %v847 = vunpack.c.h.s8.bf16 %v322
    %v848 = vunpack.c.h.s8.bf16 %v323
    %v849 = vunpack.c.h.s8.bf16 %v324
    %v850 = vunpack.c.h.s8.bf16 %v325
    %v851 = vunpack.c.h.s8.bf16 %v326
    %v852 = vunpack.c.h.s8.bf16 %v327
    %v853 = vunpack.c.h.s8.bf16 %v328
    %v854 = vunpack.c.h.s8.bf16 %v329
    %v855 = vunpack.c.h.s8.bf16 %v330
    %v856 = vunpack.c.h.s8.bf16 %v331
    %v857 = vunpack.c.l.s8.bf16 %v332
    %v858 = vunpack.c.l.s8.bf16 %v333
    %v859 = vunpack.c.l.s8.bf16 %v334
    %v860 = vunpack.c.l.s8.bf16 %v335
    %v861 = vunpack.c.l.s8.bf16 %v336
    %v862 = vunpack.c.l.s8.bf16 %v337
    %v863 = vunpack.c.l.s8.bf16 %v338
    %v864 = vunpack.c.l.s8.bf16 %v339
    %v865 = vunpack.c.l.s8.bf16 %v340
    %v866 = vunpack.c.l.s8.bf16 %v341
    %v867 = vunpack.c.l.s8.bf16 %v342
    %v868 = vunpack.c.l.s8.bf16 %v343
    %v869 = vunpack.c.l.s8.bf16 %v344
    %v870 = vunpack.c.l.s8.bf16 %v345
    %v871 = vunpack.c.l.s8.bf16 %v346
    %v872 = vunpack.c.h.s8.bf16 %v332
    %v873 = vunpack.c.h.s8.bf16 %v333
    %v874 = vunpack.c.h.s8.bf16 %v334
    %v875 = vunpack.c.h.s8.bf16 %v335
    %v876 = vunpack.c.h.s8.bf16 %v336
    %v877 = vunpack.c.h.s8.bf16 %v337
    %v878 = vunpack.c.h.s8.bf16 %v338
    %v879 = vunpack.c.h.s8.bf16 %v339
    %v880 = vunpack.c.h.s8.bf16 %v340
    %v881 = vunpack.c.h.s8.bf16 %v341
    %v882 = vunpack.c.h.s8.bf16 %v342
    %v883 = vunpack.c.h.s8.bf16 %v343
    %v884 = vunpack.c.h.s8.bf16 %v344
    %v885 = vunpack.c.h.s8.bf16 %v345
    %v886 = vunpack.c.h.s8.bf16 %v346
    %v887 = vunpack.c.l.s8.bf16 %v347
    %v888 = vunpack.c.l.s8.bf16 %v348
    %v889 = vunpack.c.l.s8.bf16 %v349
    %v890 = vunpack.c.l.s8.bf16 %v350
    %v891 = vunpack.c.l.s8.bf16 %v351
    %v892 = vunpack.c.l.s8.bf16 %v352
    %v893 = vunpack.c.l.s8.bf16 %v353
    %v894 = vunpack.c.l.s8.bf16 %v354
    %v895 = vunpack.c.l.s8.bf16 %v355
    %v896 = vunpack.c.l.s8.bf16 %v356
    %v897 = vunpack.c.l.s8.bf16 %v357
    %v898 = vunpack.c.l.s8.bf16 %v358
    %v899 = vunpack.c.l.s8.bf16 %v359
    %v900 = vunpack.c.l.s8.bf16 %v360
    %v901 = vunpack.c.l.s8.bf16 %v361
    %v902 = vunpack.c.h.s8.bf16 %v347
    %v903 = vunpack.c.h.s8.bf16 %v348
    %v904 = vunpack.c.h.s8.bf16 %v349
    %v905 = vunpack.c.h.s8.bf16 %v350
    %v906 = vunpack.c.h.s8.bf16 %v351
    %v907 = vunpack.c.h.s8.bf16 %v352
    %v908 = vunpack.c.h.s8.bf16 %v353
    %v909 = vunpack.c.h.s8.bf16 %v354
    %v910 = vunpack.c.h.s8.bf16 %v355
    %v911 = vunpack.c.h.s8.bf16 %v356
    %v912 = vunpack.c.h.s8.bf16 %v357
    %v913 = vunpack.c.h.s8.bf16 %v358
    %v914 = vunpack.c.h.s8.bf16 %v359
    %v915 = vunpack.c.h.s8.bf16 %v360
    %v916 = vunpack.c.h.s8.bf16 %v361
    %v917 = vunpack.c.l.s8.bf16 %v362
    %v918 = vunpack.c.l.s8.bf16 %v363
    %v919 = vunpack.c.l.s8.bf16 %v364
    %v920 = vunpack.c.l.s8.bf16 %v365
    %v921 = vunpack.c.l.s8.bf16 %v366
    %v922 = vunpack.c.l.s8.bf16 %v367
    %v923 = vunpack.c.l.s8.bf16 %v368
    %v924 = vunpack.c.l.s8.bf16 %v369
    %v925 = vunpack.c.l.s8.bf16 %v370
    %v926 = vunpack.c.l.s8.bf16 %v371
    %v927 = vunpack.c.l.s8.bf16 %v372
    %v928 = vunpack.c.l.s8.bf16 %v373
    %v929 = vunpack.c.l.s8.bf16 %v374
    %v930 = vunpack.c.l.s8.bf16 %v375
    %v931 = vunpack.c.l.s8.bf16 %v376
    %v932 = vunpack.c.h.s8.bf16 %v362
    %v933 = vunpack.c.h.s8.bf16 %v363
    %v934 = vunpack.c.h.s8.bf16 %v364
    %v935 = vunpack.c.h.s8.bf16 %v365
    %v936 = vunpack.c.h.s8.bf16 %v366
    %v937 = vunpack.c.h.s8.bf16 %v367
    %v938 = vunpack.c.h.s8.bf16 %v368
    %v939 = vunpack.c.h.s8.bf16 %v369
    %v940 = vunpack.c.h.s8.bf16 %v370
    %v941 = vunpack.c.h.s8.bf16 %v371
    %v942 = vunpack.c.h.s8.bf16 %v372
    %v943 = vunpack.c.h.s8.bf16 %v373
    %v944 = vunpack.c.h.s8.bf16 %v374
    %v945 = vunpack.c.h.s8.bf16 %v375
    %v946 = vunpack.c.h.s8.bf16 %v376
    %v947 = vunpack.c.l.s8.bf16 %v377
    %v948 = vunpack.c.l.s8.bf16 %v378
    %v949 = vunpack.c.l.s8.bf16 %v379
    %v950 = vunpack.c.l.s8.bf16 %v380
    %v951 = vunpack.c.l.s8.bf16 %v381
    %v952 = vunpack.c.l.s8.bf16 %v382
    %v953 = vunpack.c.l.s8.bf16 %v383
    %v954 = vunpack.c.l.s8.bf16 %v384
    %v955 = vunpack.c.l.s8.bf16 %v385
    %v956 = vunpack.c.l.s8.bf16 %v386
    %v957 = vunpack.c.l.s8.bf16 %v387
    %v958 = vunpack.c.l.s8.bf16 %v388
    %v959 = vunpack.c.l.s8.bf16 %v389
    %v960 = vunpack.c.l.s8.bf16 %v390
    %v961 = vunpack.c.l.s8.bf16 %v391
    %v962 = vunpack.c.h.s8.bf16 %v377
    %v963 = vunpack.c.h.s8.bf16 %v378
    %v964 = vunpack.c.h.s8.bf16 %v379
    %v965 = vunpack.c.h.s8.bf16 %v380
    %v966 = vunpack.c.h.s8.bf16 %v381
    %v967 = vunpack.c.h.s8.bf16 %v382
    %v968 = vunpack.c.h.s8.bf16 %v383
    %v969 = vunpack.c.h.s8.bf16 %v384
    %v970 = vunpack.c.h.s8.bf16 %v385
    %v971 = vunpack.c.h.s8.bf16 %v386
    %v972 = vunpack.c.h.s8.bf16 %v387
    %v973 = vunpack.c.h.s8.bf16 %v388
    %v974 = vunpack.c.h.s8.bf16 %v389
    %v975 = vunpack.c.h.s8.bf16 %v390
    %v976 = vunpack.c.h.s8.bf16 %v391
    %v977 = vunpack.c.l.s8.bf16 %v392
    %v978 = vunpack.c.l.s8.bf16 %v393
    %v979 = vunpack.c.l.s8.bf16 %v394
    %v980 = vunpack.c.l.s8.bf16 %v395
    %v981 = vunpack.c.l.s8.bf16 %v396
    %v982 = vunpack.c.l.s8.bf16 %v397
    %v983 = vunpack.c.l.s8.bf16 %v398
    %v984 = vunpack.c.l.s8.bf16 %v399
    %v985 = vunpack.c.l.s8.bf16 %v400
    %v986 = vunpack.c.l.s8.bf16 %v401
    %v987 = vunpack.c.l.s8.bf16 %v402
    %v988 = vunpack.c.l.s8.bf16 %v403
    %v989 = vunpack.c.l.s8.bf16 %v404
    %v990 = vunpack.c.l.s8.bf16 %v405
    %v991 = vunpack.c.l.s8.bf16 %v406
    %v992 = vunpack.c.h.s8.bf16 %v392
    %v993 = vunpack.c.h.s8.bf16 %v393
    %v994 = vunpack.c.h.s8.bf16 %v394
    %v995 = vunpack.c.h.s8.bf16 %v395
    %v996 = vunpack.c.h.s8.bf16 %v396
    %v997 = vunpack.c.h.s8.bf16 %v397
    %v998 = vunpack.c.h.s8.bf16 %v398
    %v999 = vunpack.c.h.s8.bf16 %v399
    %v1000 = vunpack.c.h.s8.bf16 %v400
    %v1001 = vunpack.c.h.s8.bf16 %v401
    %v1002 = vunpack.c.h.s8.bf16 %v402
    %v1003 = vunpack.c.h.s8.bf16 %v403
    %v1004 = vunpack.c.h.s8.bf16 %v404
    %v1005 = vunpack.c.h.s8.bf16 %v405
    %v1006 = vunpack.c.h.s8.bf16 %v406
    %v1007 = vunpack.c.l.s8.bf16 %v407
    %v1008 = vunpack.c.l.s8.bf16 %v408
    %v1009 = vunpack.c.l.s8.bf16 %v409
    %v1010 = vunpack.c.l.s8.bf16 %v410
    %v1011 = vunpack.c.l.s8.bf16 %v411
    %v1012 = vunpack.c.l.s8.bf16 %v412
    %v1013 = vunpack.c.l.s8.bf16 %v413
    %v1014 = vunpack.c.l.s8.bf16 %v414
    %v1015 = vunpack.c.l.s8.bf16 %v415
    %v1016 = vunpack.c.l.s8.bf16 %v416
    %v1017 = vunpack.c.l.s8.bf16 %v417
    %v1018 = vunpack.c.l.s8.bf16 %v418
    %v1019 = vunpack.c.l.s8.bf16 %v419
    %v1020 = vunpack.c.l.s8.bf16 %v420
    %v1021 = vunpack.c.l.s8.bf16 %v421
    %v1022 = vunpack.c.h.s8.bf16 %v407
    %v1023 = vunpack.c.h.s8.bf16 %v408
    %v1024 = vunpack.c.h.s8.bf16 %v409
    %v1025 = vunpack.c.h.s8.bf16 %v410
    %v1026 = vunpack.c.h.s8.bf16 %v411
    %v1027 = vunpack.c.h.s8.bf16 %v412
    %v1028 = vunpack.c.h.s8.bf16 %v413
    %v1029 = vunpack.c.h.s8.bf16 %v414
    %v1030 = vunpack.c.h.s8.bf16 %v415
    %v1031 = vunpack.c.h.s8.bf16 %v416
    %v1032 = vunpack.c.h.s8.bf16 %v417
    %v1033 = vunpack.c.h.s8.bf16 %v418
    %v1034 = vunpack.c.h.s8.bf16 %v419
    %v1035 = vunpack.c.h.s8.bf16 %v420
    %v1036 = vunpack.c.h.s8.bf16 %v421
    %v1037 = vunpack.c.l.s8.bf16 %v422
    %v1038 = vunpack.c.l.s8.bf16 %v423
    %v1039 = vunpack.c.l.s8.bf16 %v424
    %v1040 = vunpack.c.l.s8.bf16 %v425
    %v1041 = vunpack.c.l.s8.bf16 %v426
    %v1042 = vunpack.c.l.s8.bf16 %v427
    %v1043 = vunpack.c.l.s8.bf16 %v428
    %v1044 = vunpack.c.l.s8.bf16 %v429
    %v1045 = vunpack.c.l.s8.bf16 %v430
    %v1046 = vunpack.c.l.s8.bf16 %v431
    %v1047 = vunpack.c.l.s8.bf16 %v432
    %v1048 = vunpack.c.l.s8.bf16 %v433
    %v1049 = vunpack.c.l.s8.bf16 %v434
    %v1050 = vunpack.c.l.s8.bf16 %v435
    %v1051 = vunpack.c.l.s8.bf16 %v436
    %v1052 = vunpack.c.h.s8.bf16 %v422
    %v1053 = vunpack.c.h.s8.bf16 %v423
    %v1054 = vunpack.c.h.s8.bf16 %v424
    %v1055 = vunpack.c.h.s8.bf16 %v425
    %v1056 = vunpack.c.h.s8.bf16 %v426
    %v1057 = vunpack.c.h.s8.bf16 %v427
    %v1058 = vunpack.c.h.s8.bf16 %v428
    %v1059 = vunpack.c.h.s8.bf16 %v429
    %v1060 = vunpack.c.h.s8.bf16 %v430
    %v1061 = vunpack.c.h.s8.bf16 %v431
    %v1062 = vunpack.c.h.s8.bf16 %v432
    %v1063 = vunpack.c.h.s8.bf16 %v433
    %v1064 = vunpack.c.h.s8.bf16 %v434
    %v1065 = vunpack.c.h.s8.bf16 %v435
    %v1066 = vunpack.c.h.s8.bf16 %v436
    %v1067 = vunpack.c.l.s8.bf16 %v437
    %v1068 = vunpack.c.l.s8.bf16 %v438
    %v1069 = vunpack.c.l.s8.bf16 %v439
    %v1070 = vunpack.c.l.s8.bf16 %v440
    %v1071 = vunpack.c.l.s8.bf16 %v441
    %v1072 = vunpack.c.l.s8.bf16 %v442
    %v1073 = vunpack.c.l.s8.bf16 %v443
    %v1074 = vunpack.c.l.s8.bf16 %v444
    %v1075 = vunpack.c.l.s8.bf16 %v445
    %v1076 = vunpack.c.l.s8.bf16 %v446
    %v1077 = vunpack.c.l.s8.bf16 %v447
    %v1078 = vunpack.c.l.s8.bf16 %v448
    %v1079 = vunpack.c.l.s8.bf16 %v449
    %v1080 = vunpack.c.l.s8.bf16 %v450
    %v1081 = vunpack.c.l.s8.bf16 %v451
    %v1082 = vunpack.c.h.s8.bf16 %v437
    %v1083 = vunpack.c.h.s8.bf16 %v438
    %v1084 = vunpack.c.h.s8.bf16 %v439
    %v1085 = vunpack.c.h.s8.bf16 %v440
    %v1086 = vunpack.c.h.s8.bf16 %v441
    %v1087 = vunpack.c.h.s8.bf16 %v442
    %v1088 = vunpack.c.h.s8.bf16 %v443
    %v1089 = vunpack.c.h.s8.bf16 %v444
    %v1090 = vunpack.c.h.s8.bf16 %v445
    %v1091 = vunpack.c.h.s8.bf16 %v446
    %v1092 = vunpack.c.h.s8.bf16 %v447
    %v1093 = vunpack.c.h.s8.bf16 %v448
    %v1094 = vunpack.c.h.s8.bf16 %v449
    %v1095 = vunpack.c.h.s8.bf16 %v450
    %v1096 = vunpack.c.h.s8.bf16 %v451
    %v1097 = vunpack.c.l.s8.bf16 %v452
    %v1098 = vunpack.c.l.s8.bf16 %v453
    %v1099 = vunpack.c.l.s8.bf16 %v454
    %v1100 = vunpack.c.l.s8.bf16 %v455
    %v1101 = vunpack.c.l.s8.bf16 %v456
    %v1102 = vunpack.c.l.s8.bf16 %v457
    %v1103 = vunpack.c.l.s8.bf16 %v458
    %v1104 = vunpack.c.l.s8.bf16 %v459
    %v1105 = vunpack.c.l.s8.bf16 %v460
    %v1106 = vunpack.c.l.s8.bf16 %v461
    %v1107 = vunpack.c.l.s8.bf16 %v462
    %v1108 = vunpack.c.l.s8.bf16 %v463
    %v1109 = vunpack.c.l.s8.bf16 %v464
    %v1110 = vunpack.c.l.s8.bf16 %v465
    %v1111 = vunpack.c.l.s8.bf16 %v466
    %v1112 = vunpack.c.h.s8.bf16 %v452
    %v1113 = vunpack.c.h.s8.bf16 %v453
    %v1114 = vunpack.c.h.s8.bf16 %v454
    %v1115 = vunpack.c.h.s8.bf16 %v455
    %v1116 = vunpack.c.h.s8.bf16 %v456
    %v1117 = vunpack.c.h.s8.bf16 %v457
    %v1118 = vunpack.c.h.s8.bf16 %v458
    %v1119 = vunpack.c.h.s8.bf16 %v459
    %v1120 = vunpack.c.h.s8.bf16 %v460
    %v1121 = vunpack.c.h.s8.bf16 %v461
    %v1122 = vunpack.c.h.s8.bf16 %v462
    %v1123 = vunpack.c.h.s8.bf16 %v463
    %v1124 = vunpack.c.h.s8.bf16 %v464
    %v1125 = vunpack.c.h.s8.bf16 %v465
    %v1126 = vunpack.c.h.s8.bf16 %v466
    %v1127 = vunpack.c.l.s8.bf16 %v467
    %v1128 = vunpack.c.l.s8.bf16 %v468
    %v1129 = vunpack.c.l.s8.bf16 %v469
    %v1130 = vunpack.c.l.s8.bf16 %v470
    %v1131 = vunpack.c.l.s8.bf16 %v471
    %v1132 = vunpack.c.l.s8.bf16 %v472
    %v1133 = vunpack.c.l.s8.bf16 %v473
    %v1134 = vunpack.c.l.s8.bf16 %v474
    %v1135 = vunpack.c.l.s8.bf16 %v475
    %v1136 = vunpack.c.l.s8.bf16 %v476
    %v1137 = vunpack.c.l.s8.bf16 %v477
    %v1138 = vunpack.c.l.s8.bf16 %v478
    %v1139 = vunpack.c.l.s8.bf16 %v479
    %v1140 = vunpack.c.l.s8.bf16 %v480
    %v1141 = vunpack.c.l.s8.bf16 %v481
    %v1142 = vunpack.c.h.s8.bf16 %v467
    %v1143 = vunpack.c.h.s8.bf16 %v468
    %v1144 = vunpack.c.h.s8.bf16 %v469
    %v1145 = vunpack.c.h.s8.bf16 %v470
    %v1146 = vunpack.c.h.s8.bf16 %v471
    %v1147 = vunpack.c.h.s8.bf16 %v472
    %v1148 = vunpack.c.h.s8.bf16 %v473
    %v1149 = vunpack.c.h.s8.bf16 %v474
    %v1150 = vunpack.c.h.s8.bf16 %v475
    %v1151 = vunpack.c.h.s8.bf16 %v476
    %v1152 = vunpack.c.h.s8.bf16 %v477
    %v1153 = vunpack.c.h.s8.bf16 %v478
    %v1154 = vunpack.c.h.s8.bf16 %v479
    %v1155 = vunpack.c.h.s8.bf16 %v480
    %v1156 = vunpack.c.h.s8.bf16 %v481
    %v1157 = vunpack.c.l.s8.bf16 %v482
    %v1158 = vunpack.c.l.s8.bf16 %v483
    %v1159 = vunpack.c.l.s8.bf16 %v484
    %v1160 = vunpack.c.l.s8.bf16 %v485
    %v1161 = vunpack.c.l.s8.bf16 %v486
    %v1162 = vunpack.c.l.s8.bf16 %v487
    %v1163 = vunpack.c.l.s8.bf16 %v488
    %v1164 = vunpack.c.l.s8.bf16 %v489
    %v1165 = vunpack.c.l.s8.bf16 %v490
    %v1166 = vunpack.c.l.s8.bf16 %v491
    %v1167 = vunpack.c.l.s8.bf16 %v492
    %v1168 = vunpack.c.l.s8.bf16 %v493
    %v1169 = vunpack.c.l.s8.bf16 %v494
    %v1170 = vunpack.c.l.s8.bf16 %v495
    %v1171 = vunpack.c.l.s8.bf16 %v496
    %v1172 = vunpack.c.h.s8.bf16 %v482
    %v1173 = vunpack.c.h.s8.bf16 %v483
    %v1174 = vunpack.c.h.s8.bf16 %v484
    %v1175 = vunpack.c.h.s8.bf16 %v485
    %v1176 = vunpack.c.h.s8.bf16 %v486
    %v1177 = vunpack.c.h.s8.bf16 %v487
    %v1178 = vunpack.c.h.s8.bf16 %v488
    %v1179 = vunpack.c.h.s8.bf16 %v489
    %v1180 = vunpack.c.h.s8.bf16 %v490
    %v1181 = vunpack.c.h.s8.bf16 %v491
    %v1182 = vunpack.c.h.s8.bf16 %v492
    %v1183 = vunpack.c.h.s8.bf16 %v493
    %v1184 = vunpack.c.h.s8.bf16 %v494
    %v1185 = vunpack.c.h.s8.bf16 %v495
    %v1186 = vunpack.c.h.s8.bf16 %v496
    %v1187 = vunpack.c.l.s8.bf16 %v497
    %v1188 = vunpack.c.l.s8.bf16 %v498
    %v1189 = vunpack.c.l.s8.bf16 %v499
    %v1190 = vunpack.c.l.s8.bf16 %v500
    %v1191 = vunpack.c.l.s8.bf16 %v501
    %v1192 = vunpack.c.l.s8.bf16 %v502
    %v1193 = vunpack.c.l.s8.bf16 %v503
    %v1194 = vunpack.c.l.s8.bf16 %v504
    %v1195 = vunpack.c.l.s8.bf16 %v505
    %v1196 = vunpack.c.l.s8.bf16 %v506
    %v1197 = vunpack.c.l.s8.bf16 %v507
    %v1198 = vunpack.c.l.s8.bf16 %v508
    %v1199 = vunpack.c.l.s8.bf16 %v509
    %v1200 = vunpack.c.l.s8.bf16 %v510
    %v1201 = vunpack.c.l.s8.bf16 %v511
    %v1202 = vunpack.c.h.s8.bf16 %v497
    %v1203 = vunpack.c.h.s8.bf16 %v498
    %v1204 = vunpack.c.h.s8.bf16 %v499
    %v1205 = vunpack.c.h.s8.bf16 %v500
    %v1206 = vunpack.c.h.s8.bf16 %v501
    %v1207 = vunpack.c.h.s8.bf16 %v502
    %v1208 = vunpack.c.h.s8.bf16 %v503
    %v1209 = vunpack.c.h.s8.bf16 %v504
    %v1210 = vunpack.c.h.s8.bf16 %v505
    %v1211 = vunpack.c.h.s8.bf16 %v506
    %v1212 = vunpack.c.h.s8.bf16 %v507
    %v1213 = vunpack.c.h.s8.bf16 %v508
    %v1214 = vunpack.c.h.s8.bf16 %v509
    %v1215 = vunpack.c.h.s8.bf16 %v510
    %v1216 = vunpack.c.h.s8.bf16 %v511
    %v1217 = vunpack.c.l.s8.bf16 %v512
    %v1218 = vunpack.c.l.s8.bf16 %v513
    %v1219 = vunpack.c.l.s8.bf16 %v514
    %v1220 = vunpack.c.l.s8.bf16 %v515
    %v1221 = vunpack.c.l.s8.bf16 %v516
    %v1222 = vunpack.c.l.s8.bf16 %v517
    %v1223 = vunpack.c.l.s8.bf16 %v518
    %v1224 = vunpack.c.l.s8.bf16 %v519
    %v1225 = vunpack.c.l.s8.bf16 %v520
    %v1226 = vunpack.c.l.s8.bf16 %v521
    %v1227 = vunpack.c.l.s8.bf16 %v522
    %v1228 = vunpack.c.l.s8.bf16 %v523
    %v1229 = vunpack.c.l.s8.bf16 %v524
    %v1230 = vunpack.c.l.s8.bf16 %v525
    %v1231 = vunpack.c.l.s8.bf16 %v526
    %v1232 = vunpack.c.h.s8.bf16 %v512
    %v1233 = vunpack.c.h.s8.bf16 %v513
    %v1234 = vunpack.c.h.s8.bf16 %v514
    %v1235 = vunpack.c.h.s8.bf16 %v515
    %v1236 = vunpack.c.h.s8.bf16 %v516
    %v1237 = vunpack.c.h.s8.bf16 %v517
    %v1238 = vunpack.c.h.s8.bf16 %v518
    %v1239 = vunpack.c.h.s8.bf16 %v519
    %v1240 = vunpack.c.h.s8.bf16 %v520
    %v1241 = vunpack.c.h.s8.bf16 %v521
    %v1242 = vunpack.c.h.s8.bf16 %v522
    %v1243 = vunpack.c.h.s8.bf16 %v523
    %v1244 = vunpack.c.h.s8.bf16 %v524
    %v1245 = vunpack.c.h.s8.bf16 %v525
    %v1246 = vunpack.c.h.s8.bf16 %v526
    %v1247 = vpack.c.bf16 %v155, %v155
    %v1248 = vpack.c.bf16 %v156, %v156
    %v1249 = vpack.c.bf16 %v157, %v157
    %v1250 = vpack.c.bf16 %v158, %v158
    %v1251 = vpack.c.bf16 %v159, %v159
    %v1252 = vpack.c.bf16 %v160, %v160
    %1253 = vmatprep.subr.bf16.mxu0 %v528
    %1254 = vmatpush1.bf16.msra.mxu0 %v527
    %1255 = vmatprep.subr.bf16.mxu0 %v543
    %1256 = vmatpush1.bf16.msra.mxu0 %v542
    %1257 = vmatprep.subr.bf16.mxu0 %v558
    %1258 = vmatpush1.bf16.msra.mxu0 %v557
    %1259 = vmatprep.subr.bf16.mxu0 %v573
    %1260 = vmatpush1.bf16.msra.mxu0 %v572
    %1261 = vmatprep.subr.bf16.mxu0 %v588
    %1262 = vmatpush1.bf16.msra.mxu0 %v587
    %1263 = vmatprep.subr.bf16.mxu0 %v603
    %1264 = vmatpush1.bf16.msra.mxu0 %v602
    %1265 = vmatprep.subr.bf16.mxu0 %v618
    %1266 = vmatpush1.bf16.msra.mxu0 %v617
    %1267 = vmatprep.subr.bf16.mxu0 %v633
    %1268 = vmatpush1.bf16.msra.mxu0 %v632
    %1269 = vmatprep.subr.bf16.mxu0 %v648
    %1270 = vmatpush1.bf16.msra.mxu0 %v647
    %1271 = vmatprep.subr.bf16.mxu0 %v663
    %1272 = vmatpush1.bf16.msra.mxu0 %v662
    %1273 = vmatprep.subr.bf16.mxu0 %v678
    %1274 = vmatpush1.bf16.msra.mxu0 %v677
    %1275 = vmatprep.subr.bf16.mxu0 %v693
    %1276 = vmatpush1.bf16.msra.mxu0 %v692
    %1277 = vmatprep.subr.bf16.mxu0 %v708
    %1278 = vmatpush1.bf16.msra.mxu0 %v707
    %1279 = vmatprep.subr.bf16.mxu0 %v723
    %1280 = vmatpush1.bf16.msra.mxu0 %v722
    %1281 = vmatprep.subr.bf16.mxu0 %v738
    %1282 = vmatpush1.bf16.msra.mxu0 %v737
    %1283 = vmatprep.subr.bf16.mxu0 %v753
    %1284 = vmatpush1.bf16.msra.mxu0 %v752
    %1285 = vmatprep.mubr.bf16.mxu0 %v1248
    %1286 = vmatmul.mubr.bf16.gmra.mrb[0].mxu0 %v1247
    %v1287 = vpop.f32.mrb[0].mxu0
    %v1288 = vadd.f32 0.0, %v1287
    %v1289 = vpop.f32.mrb[0].mxu0
    %v1290 = vadd.f32 0.0, %v1289
    %v1291 = vpop.f32.mrb[0].mxu0
    %v1292 = vpop.f32.mrb[0].mxu0
    %1293 = vdwg.mxu0
    %1294 = vmatprep.subr.bf16.mxu0 %v768
    %1295 = vmatpush1.bf16.msra.mxu0 %v767
    %1296 = vmatprep.subr.bf16.mxu0 %v783
    %1297 = vmatpush1.bf16.msra.mxu0 %v782
    %1298 = vmatprep.subr.bf16.mxu0 %v798
    %1299 = vmatpush1.bf16.msra.mxu0 %v797
    %1300 = vmatprep.subr.bf16.mxu0 %v813
    %1301 = vmatpush1.bf16.msra.mxu0 %v812
    %1302 = vmatprep.subr.bf16.mxu0 %v828
    %1303 = vmatpush1.bf16.msra.mxu0 %v827
    %1304 = vmatprep.subr.bf16.mxu0 %v843
    %1305 = vmatpush1.bf16.msra.mxu0 %v842
    %1306 = vmatprep.subr.bf16.mxu0 %v858
    %1307 = vmatpush1.bf16.msra.mxu0 %v857
    %1308 = vmatprep.subr.bf16.mxu0 %v873
    %1309 = vmatpush1.bf16.msra.mxu0 %v872
    %1310 = vmatprep.subr.bf16.mxu0 %v888
    %1311 = vmatpush1.bf16.msra.mxu0 %v887
    %1312 = vmatprep.subr.bf16.mxu0 %v903
    %1313 = vmatpush1.bf16.msra.mxu0 %v902
    %1314 = vmatprep.subr.bf16.mxu0 %v918
    %1315 = vmatpush1.bf16.msra.mxu0 %v917
    %1316 = vmatprep.subr.bf16.mxu0 %v933
    %1317 = vmatpush1.bf16.msra.mxu0 %v932
    %1318 = vmatprep.subr.bf16.mxu0 %v948
    %1319 = vmatpush1.bf16.msra.mxu0 %v947
    %1320 = vmatprep.subr.bf16.mxu0 %v963
    %1321 = vmatpush1.bf16.msra.mxu0 %v962
    %1322 = vmatprep.subr.bf16.mxu0 %v978
    %1323 = vmatpush1.bf16.msra.mxu0 %v977
    %1324 = vmatprep.subr.bf16.mxu0 %v993
    %1325 = vmatpush1.bf16.msra.mxu0 %v992
    %1326 = vmatprep.mubr.bf16.mxu0 %v1250
    %1327 = vmatmul.mubr.bf16.gmra.mrb[0].mxu0 %v1249
    %v1328 = vpop.f32.mrb[0].mxu0
    %v1329 = vadd.f32 %v1288, %v1328
    %v1330 = vpop.f32.mrb[0].mxu0
    %v1331 = vadd.f32 %v1290, %v1330
    %v1332 = vpop.f32.mrb[0].mxu0
    %v1333 = vpop.f32.mrb[0].mxu0
    %1334 = vdwg.mxu0
    %1335 = vmatprep.subr.bf16.mxu0 %v1008
    %1336 = vmatpush1.bf16.msra.mxu0 %v1007
    %1337 = vmatprep.subr.bf16.mxu0 %v1023
    %1338 = vmatpush1.bf16.msra.mxu0 %v1022
    %1339 = vmatprep.subr.bf16.mxu0 %v1038
    %1340 = vmatpush1.bf16.msra.mxu0 %v1037
    %1341 = vmatprep.subr.bf16.mxu0 %v1053
    %1342 = vmatpush1.bf16.msra.mxu0 %v1052
    %1343 = vmatprep.subr.bf16.mxu0 %v1068
    %1344 = vmatpush1.bf16.msra.mxu0 %v1067
    %1345 = vmatprep.subr.bf16.mxu0 %v1083
    %1346 = vmatpush1.bf16.msra.mxu0 %v1082
    %1347 = vmatprep.subr.bf16.mxu0 %v1098
    %1348 = vmatpush1.bf16.msra.mxu0 %v1097
    %1349 = vmatprep.subr.bf16.mxu0 %v1113
    %1350 = vmatpush1.bf16.msra.mxu0 %v1112
    %1351 = vmatprep.subr.bf16.mxu0 %v1128
    %1352 = vmatpush1.bf16.msra.mxu0 %v1127
    %1353 = vmatprep.subr.bf16.mxu0 %v1143
    %1354 = vmatpush1.bf16.msra.mxu0 %v1142
    %1355 = vmatprep.subr.bf16.mxu0 %v1158
    %1356 = vmatpush1.bf16.msra.mxu0 %v1157
    %1357 = vmatprep.subr.bf16.mxu0 %v1173
    %1358 = vmatpush1.bf16.msra.mxu0 %v1172
    %1359 = vmatprep.subr.bf16.mxu0 %v1188
    %1360 = vmatpush1.bf16.msra.mxu0 %v1187
    %1361 = vmatprep.subr.bf16.mxu0 %v1203
    %1362 = vmatpush1.bf16.msra.mxu0 %v1202
    %1363 = vmatprep.subr.bf16.mxu0 %v1218
    %1364 = vmatpush1.bf16.msra.mxu0 %v1217
    %1365 = vmatprep.subr.bf16.mxu0 %v1233
    %1366 = vmatpush1.bf16.msra.mxu0 %v1232
    %1367 = vmatprep.mubr.bf16.mxu0 %v1252
    %1368 = vmatmul.mubr.bf16.gmra.mrb[0].mxu0 %v1251
    %v1369 = vpop.f32.mrb[0].mxu0
    %v1370 = vadd.f32 %v1329, %v1369
    %v1371 = vpop.f32.mrb[0].mxu0
    %v1372 = vadd.f32 %v1331, %v1371
    %v1373 = vpop.f32.mrb[0].mxu0
    %v1374 = vpop.f32.mrb[0].mxu0
    %1375 = vdwg.mxu0
    %1376 = vmatprep.subr.bf16.mxu0 %v530
    %1377 = vmatpush1.bf16.msra.mxu0 %v529
    %1378 = vmatprep.subr.bf16.mxu0 %v545
    %1379 = vmatpush1.bf16.msra.mxu0 %v544
    %1380 = vmatprep.subr.bf16.mxu0 %v560
    %1381 = vmatpush1.bf16.msra.mxu0 %v559
    %1382 = vmatprep.subr.bf16.mxu0 %v575
    %1383 = vmatpush1.bf16.msra.mxu0 %v574
    %1384 = vmatprep.subr.bf16.mxu0 %v590
    %1385 = vmatpush1.bf16.msra.mxu0 %v589
    %1386 = vmatprep.subr.bf16.mxu0 %v605
    %1387 = vmatpush1.bf16.msra.mxu0 %v604
    %1388 = vmatprep.subr.bf16.mxu0 %v620
    %1389 = vmatpush1.bf16.msra.mxu0 %v619
    %1390 = vmatprep.subr.bf16.mxu0 %v635
    %1391 = vmatpush1.bf16.msra.mxu0 %v634
    %1392 = vmatprep.subr.bf16.mxu0 %v650
    %1393 = vmatpush1.bf16.msra.mxu0 %v649
    %1394 = vmatprep.subr.bf16.mxu0 %v665
    %1395 = vmatpush1.bf16.msra.mxu0 %v664
    %1396 = vmatprep.subr.bf16.mxu0 %v680
    %1397 = vmatpush1.bf16.msra.mxu0 %v679
    %1398 = vmatprep.subr.bf16.mxu0 %v695
    %1399 = vmatpush1.bf16.msra.mxu0 %v694
    %1400 = vmatprep.subr.bf16.mxu0 %v710
    %1401 = vmatpush1.bf16.msra.mxu0 %v709
    %1402 = vmatprep.subr.bf16.mxu0 %v725
    %1403 = vmatpush1.bf16.msra.mxu0 %v724
    %1404 = vmatprep.subr.bf16.mxu0 %v740
    %1405 = vmatpush1.bf16.msra.mxu0 %v739
    %1406 = vmatprep.subr.bf16.mxu0 %v755
    %1407 = vmatpush1.bf16.msra.mxu0 %v754
    %1408 = vmatprep.mubr.bf16.mxu0 %v1248
    %1409 = vmatmul.mubr.bf16.gmra.mrb[0].mxu0 %v1247
    %v1410 = vpop.f32.mrb[0].mxu0
    %v1411 = vadd.f32 0.0, %v1410
    %v1412 = vpop.f32.mrb[0].mxu0
    %v1413 = vadd.f32 0.0, %v1412
    %v1414 = vpop.f32.mrb[0].mxu0
    %v1415 = vpop.f32.mrb[0].mxu0
    %1416 = vdwg.mxu0
    %1417 = vmatprep.subr.bf16.mxu0 %v770
    %1418 = vmatpush1.bf16.msra.mxu0 %v769
    %1419 = vmatprep.subr.bf16.mxu0 %v785
    %1420 = vmatpush1.bf16.msra.mxu0 %v784
    %1421 = vmatprep.subr.bf16.mxu0 %v800
    %1422 = vmatpush1.bf16.msra.mxu0 %v799
    %1423 = vmatprep.subr.bf16.mxu0 %v815
    %1424 = vmatpush1.bf16.msra.mxu0 %v814
    %1425 = vmatprep.subr.bf16.mxu0 %v830
    %1426 = vmatpush1.bf16.msra.mxu0 %v829
    %1427 = vmatprep.subr.bf16.mxu0 %v845
    %1428 = vmatpush1.bf16.msra.mxu0 %v844
    %1429 = vmatprep.subr.bf16.mxu0 %v860
    %1430 = vmatpush1.bf16.msra.mxu0 %v859
    %1431 = vmatprep.subr.bf16.mxu0 %v875
    %1432 = vmatpush1.bf16.msra.mxu0 %v874
    %1433 = vmatprep.subr.bf16.mxu0 %v890
    %1434 = vmatpush1.bf16.msra.mxu0 %v889
    %1435 = vmatprep.subr.bf16.mxu0 %v905
    %1436 = vmatpush1.bf16.msra.mxu0 %v904
    %1437 = vmatprep.subr.bf16.mxu0 %v920
    %1438 = vmatpush1.bf16.msra.mxu0 %v919
    %1439 = vmatprep.subr.bf16.mxu0 %v935
    %1440 = vmatpush1.bf16.msra.mxu0 %v934
    %1441 = vmatprep.subr.bf16.mxu0 %v950
    %1442 = vmatpush1.bf16.msra.mxu0 %v949
    %1443 = vmatprep.subr.bf16.mxu0 %v965
    %1444 = vmatpush1.bf16.msra.mxu0 %v964
    %1445 = vmatprep.subr.bf16.mxu0 %v980
    %1446 = vmatpush1.bf16.msra.mxu0 %v979
    %1447 = vmatprep.subr.bf16.mxu0 %v995
    %1448 = vmatpush1.bf16.msra.mxu0 %v994
    %1449 = vmatprep.mubr.bf16.mxu0 %v1250
    %1450 = vmatmul.mubr.bf16.gmra.mrb[0].mxu0 %v1249
    %v1451 = vpop.f32.mrb[0].mxu0
    %v1452 = vadd.f32 %v1411, %v1451
    %v1453 = vpop.f32.mrb[0].mxu0
    %v1454 = vadd.f32 %v1413, %v1453
    %v1455 = vpop.f32.mrb[0].mxu0
    %v1456 = vpop.f32.mrb[0].mxu0
    %1457 = vdwg.mxu0
    %1458 = vmatprep.subr.bf16.mxu0 %v1010
    %1459 = vmatpush1.bf16.msra.mxu0 %v1009
    %1460 = vmatprep.subr.bf16.mxu0 %v1025
    %1461 = vmatpush1.bf16.msra.mxu0 %v1024
    %1462 = vmatprep.subr.bf16.mxu0 %v1040
    %1463 = vmatpush1.bf16.msra.mxu0 %v1039
    %1464 = vmatprep.subr.bf16.mxu0 %v1055
    %1465 = vmatpush1.bf16.msra.mxu0 %v1054
    %1466 = vmatprep.subr.bf16.mxu0 %v1070
    %1467 = vmatpush1.bf16.msra.mxu0 %v1069
    %1468 = vmatprep.subr.bf16.mxu0 %v1085
    %1469 = vmatpush1.bf16.msra.mxu0 %v1084
    %1470 = vmatprep.subr.bf16.mxu0 %v1100
    %1471 = vmatpush1.bf16.msra.mxu0 %v1099
    %1472 = vmatprep.subr.bf16.mxu0 %v1115
    %1473 = vmatpush1.bf16.msra.mxu0 %v1114
    %1474 = vmatprep.subr.bf16.mxu0 %v1130
    %1475 = vmatpush1.bf16.msra.mxu0 %v1129
    %1476 = vmatprep.subr.bf16.mxu0 %v1145
    %1477 = vmatpush1.bf16.msra.mxu0 %v1144
    %1478 = vmatprep.subr.bf16.mxu0 %v1160
    %1479 = vmatpush1.bf16.msra.mxu0 %v1159
    %1480 = vmatprep.subr.bf16.mxu0 %v1175
    %1481 = vmatpush1.bf16.msra.mxu0 %v1174
    %1482 = vmatprep.subr.bf16.mxu0 %v1190
    %1483 = vmatpush1.bf16.msra.mxu0 %v1189
    %1484 = vmatprep.subr.bf16.mxu0 %v1205
    %1485 = vmatpush1.bf16.msra.mxu0 %v1204
    %1486 = vmatprep.subr.bf16.mxu0 %v1220
    %1487 = vmatpush1.bf16.msra.mxu0 %v1219
    %1488 = vmatprep.subr.bf16.mxu0 %v1235
    %1489 = vmatpush1.bf16.msra.mxu0 %v1234
    %1490 = vmatprep.mubr.bf16.mxu0 %v1252
    %1491 = vmatmul.mubr.bf16.gmra.mrb[0].mxu0 %v1251
    %v1492 = vpop.f32.mrb[0].mxu0
    %v1493 = vadd.f32 %v1452, %v1492
    %v1494 = vpop.f32.mrb[0].mxu0
    %v1495 = vadd.f32 %v1454, %v1494
    %v1496 = vpop.f32.mrb[0].mxu0
    %v1497 = vpop.f32.mrb[0].mxu0
    %1498 = vdwg.mxu0
    %1499 = vmatprep.subr.bf16.mxu0 %v532
    %1500 = vmatpush1.bf16.msra.mxu0 %v531
    %1501 = vmatprep.subr.bf16.mxu0 %v547
    %1502 = vmatpush1.bf16.msra.mxu0 %v546
    %1503 = vmatprep.subr.bf16.mxu0 %v562
    %1504 = vmatpush1.bf16.msra.mxu0 %v561
    %1505 = vmatprep.subr.bf16.mxu0 %v577
    %1506 = vmatpush1.bf16.msra.mxu0 %v576
    %1507 = vmatprep.subr.bf16.mxu0 %v592
    %1508 = vmatpush1.bf16.msra.mxu0 %v591
    %1509 = vmatprep.subr.bf16.mxu0 %v607
    %1510 = vmatpush1.bf16.msra.mxu0 %v606
    %1511 = vmatprep.subr.bf16.mxu0 %v622
    %1512 = vmatpush1.bf16.msra.mxu0 %v621
    %1513 = vmatprep.subr.bf16.mxu0 %v637
    %1514 = vmatpush1.bf16.msra.mxu0 %v636
    %1515 = vmatprep.subr.bf16.mxu0 %v652
    %1516 = vmatpush1.bf16.msra.mxu0 %v651
    %1517 = vmatprep.subr.bf16.mxu0 %v667
    %1518 = vmatpush1.bf16.msra.mxu0 %v666
    %1519 = vmatprep.subr.bf16.mxu0 %v682
    %1520 = vmatpush1.bf16.msra.mxu0 %v681
    %1521 = vmatprep.subr.bf16.mxu0 %v697
    %1522 = vmatpush1.bf16.msra.mxu0 %v696
    %1523 = vmatprep.subr.bf16.mxu0 %v712
    %1524 = vmatpush1.bf16.msra.mxu0 %v711
    %1525 = vmatprep.subr.bf16.mxu0 %v727
    %1526 = vmatpush1.bf16.msra.mxu0 %v726
    %1527 = vmatprep.subr.bf16.mxu0 %v742
    %1528 = vmatpush1.bf16.msra.mxu0 %v741
    %1529 = vmatprep.subr.bf16.mxu0 %v757
    %1530 = vmatpush1.bf16.msra.mxu0 %v756
    %1531 = vmatprep.mubr.bf16.mxu0 %v1248
    %1532 = vmatmul.mubr.bf16.gmra.mrb[0].mxu0 %v1247
    %v1533 = vpop.f32.mrb[0].mxu0
    %v1534 = vadd.f32 0.0, %v1533
    %v1535 = vpop.f32.mrb[0].mxu0
    %v1536 = vadd.f32 0.0, %v1535
    %v1537 = vpop.f32.mrb[0].mxu0
    %v1538 = vpop.f32.mrb[0].mxu0
    %1539 = vdwg.mxu0
    %1540 = vmatprep.subr.bf16.mxu0 %v772
    %1541 = vmatpush1.bf16.msra.mxu0 %v771
    %1542 = vmatprep.subr.bf16.mxu0 %v787
    %1543 = vmatpush1.bf16.msra.mxu0 %v786
    %1544 = vmatprep.subr.bf16.mxu0 %v802
    %1545 = vmatpush1.bf16.msra.mxu0 %v801
    %1546 = vmatprep.subr.bf16.mxu0 %v817
    %1547 = vmatpush1.bf16.msra.mxu0 %v816
    %1548 = vmatprep.subr.bf16.mxu0 %v832
    %1549 = vmatpush1.bf16.msra.mxu0 %v831
    %1550 = vmatprep.subr.bf16.mxu0 %v847
    %1551 = vmatpush1.bf16.msra.mxu0 %v846
    %1552 = vmatprep.subr.bf16.mxu0 %v862
    %1553 = vmatpush1.bf16.msra.mxu0 %v861
    %1554 = vmatprep.subr.bf16.mxu0 %v877
    %1555 = vmatpush1.bf16.msra.mxu0 %v876
    %1556 = vmatprep.subr.bf16.mxu0 %v892
    %1557 = vmatpush1.bf16.msra.mxu0 %v891
    %1558 = vmatprep.subr.bf16.mxu0 %v907
    %1559 = vmatpush1.bf16.msra.mxu0 %v906
    %1560 = vmatprep.subr.bf16.mxu0 %v922
    %1561 = vmatpush1.bf16.msra.mxu0 %v921
    %1562 = vmatprep.subr.bf16.mxu0 %v937
    %1563 = vmatpush1.bf16.msra.mxu0 %v936
    %1564 = vmatprep.subr.bf16.mxu0 %v952
    %1565 = vmatpush1.bf16.msra.mxu0 %v951
    %1566 = vmatprep.subr.bf16.mxu0 %v967
    %1567 = vmatpush1.bf16.msra.mxu0 %v966
    %1568 = vmatprep.subr.bf16.mxu0 %v982
    %1569 = vmatpush1.bf16.msra.mxu0 %v981
    %1570 = vmatprep.subr.bf16.mxu0 %v997
    %1571 = vmatpush1.bf16.msra.mxu0 %v996
    %1572 = vmatprep.mubr.bf16.mxu0 %v1250
    %1573 = vmatmul.mubr.bf16.gmra.mrb[0].mxu0 %v1249
    %v1574 = vpop.f32.mrb[0].mxu0
    %v1575 = vadd.f32 %v1534, %v1574
    %v1576 = vpop.f32.mrb[0].mxu0
    %v1577 = vadd.f32 %v1536, %v1576
    %v1578 = vpop.f32.mrb[0].mxu0
    %v1579 = vpop.f32.mrb[0].mxu0
    %1580 = vdwg.mxu0
    %1581 = vmatprep.subr.bf16.mxu0 %v1012
    %1582 = vmatpush1.bf16.msra.mxu0 %v1011
    %1583 = vmatprep.subr.bf16.mxu0 %v1027
    %1584 = vmatpush1.bf16.msra.mxu0 %v1026
    %1585 = vmatprep.subr.bf16.mxu0 %v1042
    %1586 = vmatpush1.bf16.msra.mxu0 %v1041
    %1587 = vmatprep.subr.bf16.mxu0 %v1057
    %1588 = vmatpush1.bf16.msra.mxu0 %v1056
    %1589 = vmatprep.subr.bf16.mxu0 %v1072
    %1590 = vmatpush1.bf16.msra.mxu0 %v1071
    %1591 = vmatprep.subr.bf16.mxu0 %v1087
    %1592 = vmatpush1.bf16.msra.mxu0 %v1086
    %1593 = vmatprep.subr.bf16.mxu0 %v1102
    %1594 = vmatpush1.bf16.msra.mxu0 %v1101
    %1595 = vmatprep.subr.bf16.mxu0 %v1117
    %1596 = vmatpush1.bf16.msra.mxu0 %v1116
    %1597 = vmatprep.subr.bf16.mxu0 %v1132
    %1598 = vmatpush1.bf16.msra.mxu0 %v1131
    %1599 = vmatprep.subr.bf16.mxu0 %v1147
    %1600 = vmatpush1.bf16.msra.mxu0 %v1146
    %1601 = vmatprep.subr.bf16.mxu0 %v1162
    %1602 = vmatpush1.bf16.msra.mxu0 %v1161
    %1603 = vmatprep.subr.bf16.mxu0 %v1177
    %1604 = vmatpush1.bf16.msra.mxu0 %v1176
    %1605 = vmatprep.subr.bf16.mxu0 %v1192
    %1606 = vmatpush1.bf16.msra.mxu0 %v1191
    %1607 = vmatprep.subr.bf16.mxu0 %v1207
    %1608 = vmatpush1.bf16.msra.mxu0 %v1206
    %1609 = vmatprep.subr.bf16.mxu0 %v1222
    %1610 = vmatpush1.bf16.msra.mxu0 %v1221
    %1611 = vmatprep.subr.bf16.mxu0 %v1237
    %1612 = vmatpush1.bf16.msra.mxu0 %v1236
    %1613 = vmatprep.mubr.bf16.mxu0 %v1252
    %1614 = vmatmul.mubr.bf16.gmra.mrb[0].mxu0 %v1251
    %v1615 = vpop.f32.mrb[0].mxu0
    %v1616 = vadd.f32 %v1575, %v1615
    %v1617 = vpop.f32.mrb[0].mxu0
    %v1618 = vadd.f32 %v1577, %v1617
    %v1619 = vpop.f32.mrb[0].mxu0
    %v1620 = vpop.f32.mrb[0].mxu0
    %1621 = vdwg.mxu0
    %1622 = vmatprep.subr.bf16.mxu0 %v534
    %1623 = vmatpush1.bf16.msra.mxu0 %v533
    %1624 = vmatprep.subr.bf16.mxu0 %v549
    %1625 = vmatpush1.bf16.msra.mxu0 %v548
    %1626 = vmatprep.subr.bf16.mxu0 %v564
    %1627 = vmatpush1.bf16.msra.mxu0 %v563
    %1628 = vmatprep.subr.bf16.mxu0 %v579
    %1629 = vmatpush1.bf16.msra.mxu0 %v578
    %1630 = vmatprep.subr.bf16.mxu0 %v594
    %1631 = vmatpush1.bf16.msra.mxu0 %v593
    %1632 = vmatprep.subr.bf16.mxu0 %v609
    %1633 = vmatpush1.bf16.msra.mxu0 %v608
    %1634 = vmatprep.subr.bf16.mxu0 %v624
    %1635 = vmatpush1.bf16.msra.mxu0 %v623
    %1636 = vmatprep.subr.bf16.mxu0 %v639
    %1637 = vmatpush1.bf16.msra.mxu0 %v638
    %1638 = vmatprep.subr.bf16.mxu0 %v654
    %1639 = vmatpush1.bf16.msra.mxu0 %v653
    %1640 = vmatprep.subr.bf16.mxu0 %v669
    %1641 = vmatpush1.bf16.msra.mxu0 %v668
    %1642 = vmatprep.subr.bf16.mxu0 %v684
    %1643 = vmatpush1.bf16.msra.mxu0 %v683
    %1644 = vmatprep.subr.bf16.mxu0 %v699
    %1645 = vmatpush1.bf16.msra.mxu0 %v698
    %1646 = vmatprep.subr.bf16.mxu0 %v714
    %1647 = vmatpush1.bf16.msra.mxu0 %v713
    %1648 = vmatprep.subr.bf16.mxu0 %v729
    %1649 = vmatpush1.bf16.msra.mxu0 %v728
    %1650 = vmatprep.subr.bf16.mxu0 %v744
    %1651 = vmatpush1.bf16.msra.mxu0 %v743
    %1652 = vmatprep.subr.bf16.mxu0 %v759
    %1653 = vmatpush1.bf16.msra.mxu0 %v758
    %1654 = vmatprep.mubr.bf16.mxu0 %v1248
    %1655 = vmatmul.mubr.bf16.gmra.mrb[0].mxu0 %v1247
    %v1656 = vpop.f32.mrb[0].mxu0
    %v1657 = vadd.f32 0.0, %v1656
    %v1658 = vpop.f32.mrb[0].mxu0
    %v1659 = vadd.f32 0.0, %v1658
    %v1660 = vpop.f32.mrb[0].mxu0
    %v1661 = vpop.f32.mrb[0].mxu0
    %1662 = vdwg.mxu0
    %1663 = vmatprep.subr.bf16.mxu0 %v774
    %1664 = vmatpush1.bf16.msra.mxu0 %v773
    %1665 = vmatprep.subr.bf16.mxu0 %v789
    %1666 = vmatpush1.bf16.msra.mxu0 %v788
    %1667 = vmatprep.subr.bf16.mxu0 %v804
    %1668 = vmatpush1.bf16.msra.mxu0 %v803
    %1669 = vmatprep.subr.bf16.mxu0 %v819
    %1670 = vmatpush1.bf16.msra.mxu0 %v818
    %1671 = vmatprep.subr.bf16.mxu0 %v834
    %1672 = vmatpush1.bf16.msra.mxu0 %v833
    %1673 = vmatprep.subr.bf16.mxu0 %v849
    %1674 = vmatpush1.bf16.msra.mxu0 %v848
    %1675 = vmatprep.subr.bf16.mxu0 %v864
    %1676 = vmatpush1.bf16.msra.mxu0 %v863
    %1677 = vmatprep.subr.bf16.mxu0 %v879
    %1678 = vmatpush1.bf16.msra.mxu0 %v878
    %1679 = vmatprep.subr.bf16.mxu0 %v894
    %1680 = vmatpush1.bf16.msra.mxu0 %v893
    %1681 = vmatprep.subr.bf16.mxu0 %v909
    %1682 = vmatpush1.bf16.msra.mxu0 %v908
    %1683 = vmatprep.subr.bf16.mxu0 %v924
    %1684 = vmatpush1.bf16.msra.mxu0 %v923
    %1685 = vmatprep.subr.bf16.mxu0 %v939
    %1686 = vmatpush1.bf16.msra.mxu0 %v938
    %1687 = vmatprep.subr.bf16.mxu0 %v954
    %1688 = vmatpush1.bf16.msra.mxu0 %v953
    %1689 = vmatprep.subr.bf16.mxu0 %v969
    %1690 = vmatpush1.bf16.msra.mxu0 %v968
    %1691 = vmatprep.subr.bf16.mxu0 %v984
    %1692 = vmatpush1.bf16.msra.mxu0 %v983
    %1693 = vmatprep.subr.bf16.mxu0 %v999
    %1694 = vmatpush1.bf16.msra.mxu0 %v998
    %1695 = vmatprep.mubr.bf16.mxu0 %v1250
    %1696 = vmatmul.mubr.bf16.gmra.mrb[0].mxu0 %v1249
    %v1697 = vpop.f32.mrb[0].mxu0
    %v1698 = vadd.f32 %v1657, %v1697
    %v1699 = vpop.f32.mrb[0].mxu0
    %v1700 = vadd.f32 %v1659, %v1699
    %v1701 = vpop.f32.mrb[0].mxu0
    %v1702 = vpop.f32.mrb[0].mxu0
    %1703 = vdwg.mxu0
    %1704 = vmatprep.subr.bf16.mxu0 %v1014
    %1705 = vmatpush1.bf16.msra.mxu0 %v1013
    %1706 = vmatprep.subr.bf16.mxu0 %v1029
    %1707 = vmatpush1.bf16.msra.mxu0 %v1028
    %1708 = vmatprep.subr.bf16.mxu0 %v1044
    %1709 = vmatpush1.bf16.msra.mxu0 %v1043
    %1710 = vmatprep.subr.bf16.mxu0 %v1059
    %1711 = vmatpush1.bf16.msra.mxu0 %v1058
    %1712 = vmatprep.subr.bf16.mxu0 %v1074
    %1713 = vmatpush1.bf16.msra.mxu0 %v1073
    %1714 = vmatprep.subr.bf16.mxu0 %v1089
    %1715 = vmatpush1.bf16.msra.mxu0 %v1088
    %1716 = vmatprep.subr.bf16.mxu0 %v1104
    %1717 = vmatpush1.bf16.msra.mxu0 %v1103
    %1718 = vmatprep.subr.bf16.mxu0 %v1119
    %1719 = vmatpush1.bf16.msra.mxu0 %v1118
    %1720 = vmatprep.subr.bf16.mxu0 %v1134
    %1721 = vmatpush1.bf16.msra.mxu0 %v1133
    %1722 = vmatprep.subr.bf16.mxu0 %v1149
    %1723 = vmatpush1.bf16.msra.mxu0 %v1148
    %1724 = vmatprep.subr.bf16.mxu0 %v1164
    %1725 = vmatpush1.bf16.msra.mxu0 %v1163
    %1726 = vmatprep.subr.bf16.mxu0 %v1179
    %1727 = vmatpush1.bf16.msra.mxu0 %v1178
    %1728 = vmatprep.subr.bf16.mxu0 %v1194
    %1729 = vmatpush1.bf16.msra.mxu0 %v1193
    %1730 = vmatprep.subr.bf16.mxu0 %v1209
    %1731 = vmatpush1.bf16.msra.mxu0 %v1208
    %1732 = vmatprep.subr.bf16.mxu0 %v1224
    %1733 = vmatpush1.bf16.msra.mxu0 %v1223
    %1734 = vmatprep.subr.bf16.mxu0 %v1239
    %1735 = vmatpush1.bf16.msra.mxu0 %v1238
    %1736 = vmatprep.mubr.bf16.mxu0 %v1252
    %1737 = vmatmul.mubr.bf16.gmra.mrb[0].mxu0 %v1251
    %v1738 = vpop.f32.mrb[0].mxu0
    %v1739 = vadd.f32 %v1698, %v1738
    %v1740 = vpop.f32.mrb[0].mxu0
    %v1741 = vadd.f32 %v1700, %v1740
    %v1742 = vpop.f32.mrb[0].mxu0
    %v1743 = vpop.f32.mrb[0].mxu0
    %1744 = vdwg.mxu0
    %1745 = vmatprep.subr.bf16.mxu0 %v536
    %1746 = vmatpush1.bf16.msra.mxu0 %v535
    %1747 = vmatprep.subr.bf16.mxu0 %v551
    %1748 = vmatpush1.bf16.msra.mxu0 %v550
    %1749 = vmatprep.subr.bf16.mxu0 %v566
    %1750 = vmatpush1.bf16.msra.mxu0 %v565
    %1751 = vmatprep.subr.bf16.mxu0 %v581
    %1752 = vmatpush1.bf16.msra.mxu0 %v580
    %1753 = vmatprep.subr.bf16.mxu0 %v596
    %1754 = vmatpush1.bf16.msra.mxu0 %v595
    %1755 = vmatprep.subr.bf16.mxu0 %v611
    %1756 = vmatpush1.bf16.msra.mxu0 %v610
    %1757 = vmatprep.subr.bf16.mxu0 %v626
    %1758 = vmatpush1.bf16.msra.mxu0 %v625
    %1759 = vmatprep.subr.bf16.mxu0 %v641
    %1760 = vmatpush1.bf16.msra.mxu0 %v640
    %1761 = vmatprep.subr.bf16.mxu0 %v656
    %1762 = vmatpush1.bf16.msra.mxu0 %v655
    %1763 = vmatprep.subr.bf16.mxu0 %v671
    %1764 = vmatpush1.bf16.msra.mxu0 %v670
    %1765 = vmatprep.subr.bf16.mxu0 %v686
    %1766 = vmatpush1.bf16.msra.mxu0 %v685
    %1767 = vmatprep.subr.bf16.mxu0 %v701
    %1768 = vmatpush1.bf16.msra.mxu0 %v700
    %1769 = vmatprep.subr.bf16.mxu0 %v716
    %1770 = vmatpush1.bf16.msra.mxu0 %v715
    %1771 = vmatprep.subr.bf16.mxu0 %v731
    %1772 = vmatpush1.bf16.msra.mxu0 %v730
    %1773 = vmatprep.subr.bf16.mxu0 %v746
    %1774 = vmatpush1.bf16.msra.mxu0 %v745
    %1775 = vmatprep.subr.bf16.mxu0 %v761
    %1776 = vmatpush1.bf16.msra.mxu0 %v760
    %1777 = vmatprep.mubr.bf16.mxu0 %v1248
    %1778 = vmatmul.mubr.bf16.gmra.mrb[0].mxu0 %v1247
    %v1779 = vpop.f32.mrb[0].mxu0
    %v1780 = vadd.f32 0.0, %v1779
    %v1781 = vpop.f32.mrb[0].mxu0
    %v1782 = vadd.f32 0.0, %v1781
    %v1783 = vpop.f32.mrb[0].mxu0
    %v1784 = vpop.f32.mrb[0].mxu0
    %1785 = vdwg.mxu0
    %1786 = vmatprep.subr.bf16.mxu0 %v776
    %1787 = vmatpush1.bf16.msra.mxu0 %v775
    %1788 = vmatprep.subr.bf16.mxu0 %v791
    %1789 = vmatpush1.bf16.msra.mxu0 %v790
    %1790 = vmatprep.subr.bf16.mxu0 %v806
    %1791 = vmatpush1.bf16.msra.mxu0 %v805
    %1792 = vmatprep.subr.bf16.mxu0 %v821
    %1793 = vmatpush1.bf16.msra.mxu0 %v820
    %1794 = vmatprep.subr.bf16.mxu0 %v836
    %1795 = vmatpush1.bf16.msra.mxu0 %v835
    %1796 = vmatprep.subr.bf16.mxu0 %v851
    %1797 = vmatpush1.bf16.msra.mxu0 %v850
    %1798 = vmatprep.subr.bf16.mxu0 %v866
    %1799 = vmatpush1.bf16.msra.mxu0 %v865
    %1800 = vmatprep.subr.bf16.mxu0 %v881
    %1801 = vmatpush1.bf16.msra.mxu0 %v880
    %1802 = vmatprep.subr.bf16.mxu0 %v896
    %1803 = vmatpush1.bf16.msra.mxu0 %v895
    %1804 = vmatprep.subr.bf16.mxu0 %v911
    %1805 = vmatpush1.bf16.msra.mxu0 %v910
    %1806 = vmatprep.subr.bf16.mxu0 %v926
    %1807 = vmatpush1.bf16.msra.mxu0 %v925
    %1808 = vmatprep.subr.bf16.mxu0 %v941
    %1809 = vmatpush1.bf16.msra.mxu0 %v940
    %1810 = vmatprep.subr.bf16.mxu0 %v956
    %1811 = vmatpush1.bf16.msra.mxu0 %v955
    %1812 = vmatprep.subr.bf16.mxu0 %v971
    %1813 = vmatpush1.bf16.msra.mxu0 %v970
    %1814 = vmatprep.subr.bf16.mxu0 %v986
    %1815 = vmatpush1.bf16.msra.mxu0 %v985
    %1816 = vmatprep.subr.bf16.mxu0 %v1001
    %1817 = vmatpush1.bf16.msra.mxu0 %v1000
    %1818 = vmatprep.mubr.bf16.mxu0 %v1250
    %1819 = vmatmul.mubr.bf16.gmra.mrb[0].mxu0 %v1249
    %v1820 = vpop.f32.mrb[0].mxu0
    %v1821 = vadd.f32 %v1780, %v1820
    %v1822 = vpop.f32.mrb[0].mxu0
    %v1823 = vadd.f32 %v1782, %v1822
    %v1824 = vpop.f32.mrb[0].mxu0
    %v1825 = vpop.f32.mrb[0].mxu0
    %1826 = vdwg.mxu0
    %1827 = vmatprep.subr.bf16.mxu0 %v1016
    %1828 = vmatpush1.bf16.msra.mxu0 %v1015
    %1829 = vmatprep.subr.bf16.mxu0 %v1031
    %1830 = vmatpush1.bf16.msra.mxu0 %v1030
    %1831 = vmatprep.subr.bf16.mxu0 %v1046
    %1832 = vmatpush1.bf16.msra.mxu0 %v1045
    %1833 = vmatprep.subr.bf16.mxu0 %v1061
    %1834 = vmatpush1.bf16.msra.mxu0 %v1060
    %1835 = vmatprep.subr.bf16.mxu0 %v1076
    %1836 = vmatpush1.bf16.msra.mxu0 %v1075
    %1837 = vmatprep.subr.bf16.mxu0 %v1091
    %1838 = vmatpush1.bf16.msra.mxu0 %v1090
    %1839 = vmatprep.subr.bf16.mxu0 %v1106
    %1840 = vmatpush1.bf16.msra.mxu0 %v1105
    %1841 = vmatprep.subr.bf16.mxu0 %v1121
    %1842 = vmatpush1.bf16.msra.mxu0 %v1120
    %1843 = vmatprep.subr.bf16.mxu0 %v1136
    %1844 = vmatpush1.bf16.msra.mxu0 %v1135
    %1845 = vmatprep.subr.bf16.mxu0 %v1151
    %1846 = vmatpush1.bf16.msra.mxu0 %v1150
    %1847 = vmatprep.subr.bf16.mxu0 %v1166
    %1848 = vmatpush1.bf16.msra.mxu0 %v1165
    %1849 = vmatprep.subr.bf16.mxu0 %v1181
    %1850 = vmatpush1.bf16.msra.mxu0 %v1180
    %1851 = vmatprep.subr.bf16.mxu0 %v1196
    %1852 = vmatpush1.bf16.msra.mxu0 %v1195
    %1853 = vmatprep.subr.bf16.mxu0 %v1211
    %1854 = vmatpush1.bf16.msra.mxu0 %v1210
    %1855 = vmatprep.subr.bf16.mxu0 %v1226
    %1856 = vmatpush1.bf16.msra.mxu0 %v1225
    %1857 = vmatprep.subr.bf16.mxu0 %v1241
    %1858 = vmatpush1.bf16.msra.mxu0 %v1240
    %1859 = vmatprep.mubr.bf16.mxu0 %v1252
    %1860 = vmatmul.mubr.bf16.gmra.mrb[0].mxu0 %v1251
    %v1861 = vpop.f32.mrb[0].mxu0
    %v1862 = vadd.f32 %v1821, %v1861
    %v1863 = vpop.f32.mrb[0].mxu0
    %v1864 = vadd.f32 %v1823, %v1863
    %v1865 = vpop.f32.mrb[0].mxu0
    %v1866 = vpop.f32.mrb[0].mxu0
    %1867 = vdwg.mxu0
    %1868 = vmatprep.subr.bf16.mxu0 %v538
    %1869 = vmatpush1.bf16.msra.mxu0 %v537
    %1870 = vmatprep.subr.bf16.mxu0 %v553
    %1871 = vmatpush1.bf16.msra.mxu0 %v552
    %1872 = vmatprep.subr.bf16.mxu0 %v568
    %1873 = vmatpush1.bf16.msra.mxu0 %v567
    %1874 = vmatprep.subr.bf16.mxu0 %v583
    %1875 = vmatpush1.bf16.msra.mxu0 %v582
    %1876 = vmatprep.subr.bf16.mxu0 %v598
    %1877 = vmatpush1.bf16.msra.mxu0 %v597
    %1878 = vmatprep.subr.bf16.mxu0 %v613
    %1879 = vmatpush1.bf16.msra.mxu0 %v612
    %1880 = vmatprep.subr.bf16.mxu0 %v628
    %1881 = vmatpush1.bf16.msra.mxu0 %v627
    %1882 = vmatprep.subr.bf16.mxu0 %v643
    %1883 = vmatpush1.bf16.msra.mxu0 %v642
    %1884 = vmatprep.subr.bf16.mxu0 %v658
    %1885 = vmatpush1.bf16.msra.mxu0 %v657
    %1886 = vmatprep.subr.bf16.mxu0 %v673
    %1887 = vmatpush1.bf16.msra.mxu0 %v672
    %1888 = vmatprep.subr.bf16.mxu0 %v688
    %1889 = vmatpush1.bf16.msra.mxu0 %v687
    %1890 = vmatprep.subr.bf16.mxu0 %v703
    %1891 = vmatpush1.bf16.msra.mxu0 %v702
    %1892 = vmatprep.subr.bf16.mxu0 %v718
    %1893 = vmatpush1.bf16.msra.mxu0 %v717
    %1894 = vmatprep.subr.bf16.mxu0 %v733
    %1895 = vmatpush1.bf16.msra.mxu0 %v732
    %1896 = vmatprep.subr.bf16.mxu0 %v748
    %1897 = vmatpush1.bf16.msra.mxu0 %v747
    %1898 = vmatprep.subr.bf16.mxu0 %v763
    %1899 = vmatpush1.bf16.msra.mxu0 %v762
    %1900 = vmatprep.mubr.bf16.mxu0 %v1248
    %1901 = vmatmul.mubr.bf16.gmra.mrb[0].mxu0 %v1247
    %v1902 = vpop.f32.mrb[0].mxu0
    %v1903 = vadd.f32 0.0, %v1902
    %v1904 = vpop.f32.mrb[0].mxu0
    %v1905 = vadd.f32 0.0, %v1904
    %v1906 = vpop.f32.mrb[0].mxu0
    %v1907 = vpop.f32.mrb[0].mxu0
    %1908 = vdwg.mxu0
    %1909 = vmatprep.subr.bf16.mxu0 %v778
    %1910 = vmatpush1.bf16.msra.mxu0 %v777
    %1911 = vmatprep.subr.bf16.mxu0 %v793
    %1912 = vmatpush1.bf16.msra.mxu0 %v792
    %1913 = vmatprep.subr.bf16.mxu0 %v808
    %1914 = vmatpush1.bf16.msra.mxu0 %v807
    %1915 = vmatprep.subr.bf16.mxu0 %v823
    %1916 = vmatpush1.bf16.msra.mxu0 %v822
    %1917 = vmatprep.subr.bf16.mxu0 %v838
    %1918 = vmatpush1.bf16.msra.mxu0 %v837
    %1919 = vmatprep.subr.bf16.mxu0 %v853
    %1920 = vmatpush1.bf16.msra.mxu0 %v852
    %1921 = vmatprep.subr.bf16.mxu0 %v868
    %1922 = vmatpush1.bf16.msra.mxu0 %v867
    %1923 = vmatprep.subr.bf16.mxu0 %v883
    %1924 = vmatpush1.bf16.msra.mxu0 %v882
    %1925 = vmatprep.subr.bf16.mxu0 %v898
    %1926 = vmatpush1.bf16.msra.mxu0 %v897
    %1927 = vmatprep.subr.bf16.mxu0 %v913
    %1928 = vmatpush1.bf16.msra.mxu0 %v912
    %1929 = vmatprep.subr.bf16.mxu0 %v928
    %1930 = vmatpush1.bf16.msra.mxu0 %v927
    %1931 = vmatprep.subr.bf16.mxu0 %v943
    %1932 = vmatpush1.bf16.msra.mxu0 %v942
    %1933 = vmatprep.subr.bf16.mxu0 %v958
    %1934 = vmatpush1.bf16.msra.mxu0 %v957
    %1935 = vmatprep.subr.bf16.mxu0 %v973
    %1936 = vmatpush1.bf16.msra.mxu0 %v972
    %1937 = vmatprep.subr.bf16.mxu0 %v988
    %1938 = vmatpush1.bf16.msra.mxu0 %v987
    %1939 = vmatprep.subr.bf16.mxu0 %v1003
    %1940 = vmatpush1.bf16.msra.mxu0 %v1002
    %1941 = vmatprep.mubr.bf16.mxu0 %v1250
    %1942 = vmatmul.mubr.bf16.gmra.mrb[0].mxu0 %v1249
    %v1943 = vpop.f32.mrb[0].mxu0
    %v1944 = vadd.f32 %v1903, %v1943
    %v1945 = vpop.f32.mrb[0].mxu0
    %v1946 = vadd.f32 %v1905, %v1945
    %v1947 = vpop.f32.mrb[0].mxu0
    %v1948 = vpop.f32.mrb[0].mxu0
    %1949 = vdwg.mxu0
    %1950 = vmatprep.subr.bf16.mxu0 %v1018
    %1951 = vmatpush1.bf16.msra.mxu0 %v1017
    %1952 = vmatprep.subr.bf16.mxu0 %v1033
    %1953 = vmatpush1.bf16.msra.mxu0 %v1032
    %1954 = vmatprep.subr.bf16.mxu0 %v1048
    %1955 = vmatpush1.bf16.msra.mxu0 %v1047
    %1956 = vmatprep.subr.bf16.mxu0 %v1063
    %1957 = vmatpush1.bf16.msra.mxu0 %v1062
    %1958 = vmatprep.subr.bf16.mxu0 %v1078
    %1959 = vmatpush1.bf16.msra.mxu0 %v1077
    %1960 = vmatprep.subr.bf16.mxu0 %v1093
    %1961 = vmatpush1.bf16.msra.mxu0 %v1092
    %1962 = vmatprep.subr.bf16.mxu0 %v1108
    %1963 = vmatpush1.bf16.msra.mxu0 %v1107
    %1964 = vmatprep.subr.bf16.mxu0 %v1123
    %1965 = vmatpush1.bf16.msra.mxu0 %v1122
    %1966 = vmatprep.subr.bf16.mxu0 %v1138
    %1967 = vmatpush1.bf16.msra.mxu0 %v1137
    %1968 = vmatprep.subr.bf16.mxu0 %v1153
    %1969 = vmatpush1.bf16.msra.mxu0 %v1152
    %1970 = vmatprep.subr.bf16.mxu0 %v1168
    %1971 = vmatpush1.bf16.msra.mxu0 %v1167
    %1972 = vmatprep.subr.bf16.mxu0 %v1183
    %1973 = vmatpush1.bf16.msra.mxu0 %v1182
    %1974 = vmatprep.subr.bf16.mxu0 %v1198
    %1975 = vmatpush1.bf16.msra.mxu0 %v1197
    %1976 = vmatprep.subr.bf16.mxu0 %v1213
    %1977 = vmatpush1.bf16.msra.mxu0 %v1212
    %1978 = vmatprep.subr.bf16.mxu0 %v1228
    %1979 = vmatpush1.bf16.msra.mxu0 %v1227
    %1980 = vmatprep.subr.bf16.mxu0 %v1243
    %1981 = vmatpush1.bf16.msra.mxu0 %v1242
    %1982 = vmatprep.mubr.bf16.mxu0 %v1252
    %1983 = vmatmul.mubr.bf16.gmra.mrb[0].mxu0 %v1251
    %v1984 = vpop.f32.mrb[0].mxu0
    %v1985 = vadd.f32 %v1944, %v1984
    %v1986 = vpop.f32.mrb[0].mxu0
    %v1987 = vadd.f32 %v1946, %v1986
    %v1988 = vpop.f32.mrb[0].mxu0
    %v1989 = vpop.f32.mrb[0].mxu0
    %1990 = vdwg.mxu0
    %1991 = vmatprep.subr.bf16.mxu0 %v540
    %1992 = vmatpush1.bf16.msra.mxu0 %v539
    %1993 = vmatprep.subr.bf16.mxu0 %v555
    %1994 = vmatpush1.bf16.msra.mxu0 %v554
    %1995 = vmatprep.subr.bf16.mxu0 %v570
    %1996 = vmatpush1.bf16.msra.mxu0 %v569
    %1997 = vmatprep.subr.bf16.mxu0 %v585
    %1998 = vmatpush1.bf16.msra.mxu0 %v584
    %1999 = vmatprep.subr.bf16.mxu0 %v600
    %2000 = vmatpush1.bf16.msra.mxu0 %v599
    %2001 = vmatprep.subr.bf16.mxu0 %v615
    %2002 = vmatpush1.bf16.msra.mxu0 %v614
    %2003 = vmatprep.subr.bf16.mxu0 %v630
    %2004 = vmatpush1.bf16.msra.mxu0 %v629
    %2005 = vmatprep.subr.bf16.mxu0 %v645
    %2006 = vmatpush1.bf16.msra.mxu0 %v644
    %2007 = vmatprep.subr.bf16.mxu0 %v660
    %2008 = vmatpush1.bf16.msra.mxu0 %v659
    %2009 = vmatprep.subr.bf16.mxu0 %v675
    %2010 = vmatpush1.bf16.msra.mxu0 %v674
    %2011 = vmatprep.subr.bf16.mxu0 %v690
    %2012 = vmatpush1.bf16.msra.mxu0 %v689
    %2013 = vmatprep.subr.bf16.mxu0 %v705
    %2014 = vmatpush1.bf16.msra.mxu0 %v704
    %2015 = vmatprep.subr.bf16.mxu0 %v720
    %2016 = vmatpush1.bf16.msra.mxu0 %v719
    %2017 = vmatprep.subr.bf16.mxu0 %v735
    %2018 = vmatpush1.bf16.msra.mxu0 %v734
    %2019 = vmatprep.subr.bf16.mxu0 %v750
    %2020 = vmatpush1.bf16.msra.mxu0 %v749
    %2021 = vmatprep.subr.bf16.mxu0 %v765
    %2022 = vmatpush1.bf16.msra.mxu0 %v764
    %2023 = vmatprep.mubr.bf16.mxu0 %v1248
    %2024 = vmatmul.mubr.bf16.gmra.mrb[0].mxu0 %v1247
    %v2025 = vpop.f32.mrb[0].mxu0
    %v2026 = vadd.f32 0.0, %v2025
    %v2027 = vpop.f32.mrb[0].mxu0
    %v2028 = vadd.f32 0.0, %v2027
    %v2029 = vpop.f32.mrb[0].mxu0
    %v2030 = vpop.f32.mrb[0].mxu0
    %2031 = vdwg.mxu0
    %2032 = vmatprep.subr.bf16.mxu0 %v780
    %2033 = vmatpush1.bf16.msra.mxu0 %v779
    %2034 = vmatprep.subr.bf16.mxu0 %v795
    %2035 = vmatpush1.bf16.msra.mxu0 %v794
    %2036 = vmatprep.subr.bf16.mxu0 %v810
    %2037 = vmatpush1.bf16.msra.mxu0 %v809
    %2038 = vmatprep.subr.bf16.mxu0 %v825
    %2039 = vmatpush1.bf16.msra.mxu0 %v824
    %2040 = vmatprep.subr.bf16.mxu0 %v840
    %2041 = vmatpush1.bf16.msra.mxu0 %v839
    %2042 = vmatprep.subr.bf16.mxu0 %v855
    %2043 = vmatpush1.bf16.msra.mxu0 %v854
    %2044 = vmatprep.subr.bf16.mxu0 %v870
    %2045 = vmatpush1.bf16.msra.mxu0 %v869
    %2046 = vmatprep.subr.bf16.mxu0 %v885
    %2047 = vmatpush1.bf16.msra.mxu0 %v884
    %2048 = vmatprep.subr.bf16.mxu0 %v900
    %2049 = vmatpush1.bf16.msra.mxu0 %v899
    %2050 = vmatprep.subr.bf16.mxu0 %v915
    %2051 = vmatpush1.bf16.msra.mxu0 %v914
    %2052 = vmatprep.subr.bf16.mxu0 %v930
    %2053 = vmatpush1.bf16.msra.mxu0 %v929
    %2054 = vmatprep.subr.bf16.mxu0 %v945
    %2055 = vmatpush1.bf16.msra.mxu0 %v944
    %2056 = vmatprep.subr.bf16.mxu0 %v960
    %2057 = vmatpush1.bf16.msra.mxu0 %v959
    %2058 = vmatprep.subr.bf16.mxu0 %v975
    %2059 = vmatpush1.bf16.msra.mxu0 %v974
    %2060 = vmatprep.subr.bf16.mxu0 %v990
    %2061 = vmatpush1.bf16.msra.mxu0 %v989
    %2062 = vmatprep.subr.bf16.mxu0 %v1005
    %2063 = vmatpush1.bf16.msra.mxu0 %v1004
    %2064 = vmatprep.mubr.bf16.mxu0 %v1250
    %2065 = vmatmul.mubr.bf16.gmra.mrb[0].mxu0 %v1249
    %v2066 = vpop.f32.mrb[0].mxu0
    %v2067 = vadd.f32 %v2026, %v2066
    %v2068 = vpop.f32.mrb[0].mxu0
    %v2069 = vadd.f32 %v2028, %v2068
    %v2070 = vpop.f32.mrb[0].mxu0
    %v2071 = vpop.f32.mrb[0].mxu0
    %2072 = vdwg.mxu0
    %2073 = vmatprep.subr.bf16.mxu0 %v1020
    %2074 = vmatpush1.bf16.msra.mxu0 %v1019
    %2075 = vmatprep.subr.bf16.mxu0 %v1035
    %2076 = vmatpush1.bf16.msra.mxu0 %v1034
    %2077 = vmatprep.subr.bf16.mxu0 %v1050
    %2078 = vmatpush1.bf16.msra.mxu0 %v1049
    %2079 = vmatprep.subr.bf16.mxu0 %v1065
    %2080 = vmatpush1.bf16.msra.mxu0 %v1064
    %2081 = vmatprep.subr.bf16.mxu0 %v1080
    %2082 = vmatpush1.bf16.msra.mxu0 %v1079
    %2083 = vmatprep.subr.bf16.mxu0 %v1095
    %2084 = vmatpush1.bf16.msra.mxu0 %v1094
    %2085 = vmatprep.subr.bf16.mxu0 %v1110
    %2086 = vmatpush1.bf16.msra.mxu0 %v1109
    %2087 = vmatprep.subr.bf16.mxu0 %v1125
    %2088 = vmatpush1.bf16.msra.mxu0 %v1124
    %2089 = vmatprep.subr.bf16.mxu0 %v1140
    %2090 = vmatpush1.bf16.msra.mxu0 %v1139
    %2091 = vmatprep.subr.bf16.mxu0 %v1155
    %2092 = vmatpush1.bf16.msra.mxu0 %v1154
    %2093 = vmatprep.subr.bf16.mxu0 %v1170
    %2094 = vmatpush1.bf16.msra.mxu0 %v1169
    %2095 = vmatprep.subr.bf16.mxu0 %v1185
    %2096 = vmatpush1.bf16.msra.mxu0 %v1184
    %2097 = vmatprep.subr.bf16.mxu0 %v1200
    %2098 = vmatpush1.bf16.msra.mxu0 %v1199
    %2099 = vmatprep.subr.bf16.mxu0 %v1215
    %2100 = vmatpush1.bf16.msra.mxu0 %v1214
    %2101 = vmatprep.subr.bf16.mxu0 %v1230
    %2102 = vmatpush1.bf16.msra.mxu0 %v1229
    %2103 = vmatprep.subr.bf16.mxu0 %v1245
    %2104 = vmatpush1.bf16.msra.mxu0 %v1244
    %2105 = vmatprep.mubr.bf16.mxu0 %v1252
    %2106 = vmatmul.mubr.bf16.gmra.mrb[0].mxu0 %v1251
    %v2107 = vpop.f32.mrb[0].mxu0
    %v2108 = vadd.f32 %v2067, %v2107
    %v2109 = vpop.f32.mrb[0].mxu0
    %v2110 = vadd.f32 %v2069, %v2109
    %v2111 = vpop.f32.mrb[0].mxu0
    %v2112 = vpop.f32.mrb[0].mxu0
    %2113 = vdwg.mxu0
    %2114 = vmatprep.subr.bf16.mxu0 0
    %2115 = vmatpush1.bf16.msra.mxu0 %v541
    %2116 = vmatprep.subr.bf16.mxu0 0
    %2117 = vmatpush1.bf16.msra.mxu0 %v556
    %2118 = vmatprep.subr.bf16.mxu0 0
    %2119 = vmatpush1.bf16.msra.mxu0 %v571
    %2120 = vmatprep.subr.bf16.mxu0 0
    %2121 = vmatpush1.bf16.msra.mxu0 %v586
    %2122 = vmatprep.subr.bf16.mxu0 0
    %2123 = vmatpush1.bf16.msra.mxu0 %v601
    %2124 = vmatprep.subr.bf16.mxu0 0
    %2125 = vmatpush1.bf16.msra.mxu0 %v616
    %2126 = vmatprep.subr.bf16.mxu0 0
    %2127 = vmatpush1.bf16.msra.mxu0 %v631
    %2128 = vmatprep.subr.bf16.mxu0 0
    %2129 = vmatpush1.bf16.msra.mxu0 %v646
    %2130 = vmatprep.subr.bf16.mxu0 0
    %2131 = vmatpush1.bf16.msra.mxu0 %v661
    %2132 = vmatprep.subr.bf16.mxu0 0
    %2133 = vmatpush1.bf16.msra.mxu0 %v676
    %2134 = vmatprep.subr.bf16.mxu0 0
    %2135 = vmatpush1.bf16.msra.mxu0 %v691
    %2136 = vmatprep.subr.bf16.mxu0 0
    %2137 = vmatpush1.bf16.msra.mxu0 %v706
    %2138 = vmatprep.subr.bf16.mxu0 0
    %2139 = vmatpush1.bf16.msra.mxu0 %v721
    %2140 = vmatprep.subr.bf16.mxu0 0
    %2141 = vmatpush1.bf16.msra.mxu0 %v736
    %2142 = vmatprep.subr.bf16.mxu0 0
    %2143 = vmatpush1.bf16.msra.mxu0 %v751
    %2144 = vmatprep.subr.bf16.mxu0 0
    %2145 = vmatpush1.bf16.msra.mxu0 %v766
    %2146 = vmatprep.mubr.bf16.mxu0 %v1248
    %2147 = vmatmul.mubr.bf16.gmra.mrb[0].mxu0 %v1247
    %v2148 = vpop.f32.mrb[0].mxu0
    %v2149 = vadd.f32 0.0, %v2148
    %v2150 = vpop.f32.mrb[0].mxu0
    %v2151 = vpop.f32.mrb[0].mxu0
    %v2152 = vpop.f32.mrb[0].mxu0
    %2153 = vdwg.mxu0
    %2154 = vmatprep.subr.bf16.mxu0 0
    %2155 = vmatpush1.bf16.msra.mxu0 %v781
    %2156 = vmatprep.subr.bf16.mxu0 0
    %2157 = vmatpush1.bf16.msra.mxu0 %v796
    %2158 = vmatprep.subr.bf16.mxu0 0
    %2159 = vmatpush1.bf16.msra.mxu0 %v811
    %2160 = vmatprep.subr.bf16.mxu0 0
    %2161 = vmatpush1.bf16.msra.mxu0 %v826
    %2162 = vmatprep.subr.bf16.mxu0 0
    %2163 = vmatpush1.bf16.msra.mxu0 %v841
    %2164 = vmatprep.subr.bf16.mxu0 0
    %2165 = vmatpush1.bf16.msra.mxu0 %v856
    %2166 = vmatprep.subr.bf16.mxu0 0
    %2167 = vmatpush1.bf16.msra.mxu0 %v871
    %2168 = vmatprep.subr.bf16.mxu0 0
    %2169 = vmatpush1.bf16.msra.mxu0 %v886
    %2170 = vmatprep.subr.bf16.mxu0 0
    %2171 = vmatpush1.bf16.msra.mxu0 %v901
    %2172 = vmatprep.subr.bf16.mxu0 0
    %2173 = vmatpush1.bf16.msra.mxu0 %v916
    %2174 = vmatprep.subr.bf16.mxu0 0
    %2175 = vmatpush1.bf16.msra.mxu0 %v931
    %2176 = vmatprep.subr.bf16.mxu0 0
    %2177 = vmatpush1.bf16.msra.mxu0 %v946
    %2178 = vmatprep.subr.bf16.mxu0 0
    %2179 = vmatpush1.bf16.msra.mxu0 %v961
    %2180 = vmatprep.subr.bf16.mxu0 0
    %2181 = vmatpush1.bf16.msra.mxu0 %v976
    %2182 = vmatprep.subr.bf16.mxu0 0
    %2183 = vmatpush1.bf16.msra.mxu0 %v991
    %2184 = vmatprep.subr.bf16.mxu0 0
    %2185 = vmatpush1.bf16.msra.mxu0 %v1006
    %2186 = vmatprep.mubr.bf16.mxu0 %v1250
    %2187 = vmatmul.mubr.bf16.gmra.mrb[0].mxu0 %v1249
    %v2188 = vpop.f32.mrb[0].mxu0
    %v2189 = vadd.f32 %v2149, %v2188
    %v2190 = vpop.f32.mrb[0].mxu0
    %v2191 = vpop.f32.mrb[0].mxu0
    %v2192 = vpop.f32.mrb[0].mxu0
    %2193 = vdwg.mxu0
    %2194 = vmatprep.subr.bf16.mxu0 0
    %2195 = vmatpush1.bf16.msra.mxu0 %v1021
    %2196 = vmatprep.subr.bf16.mxu0 0
    %2197 = vmatpush1.bf16.msra.mxu0 %v1036
    %2198 = vmatprep.subr.bf16.mxu0 0
    %2199 = vmatpush1.bf16.msra.mxu0 %v1051
    %2200 = vmatprep.subr.bf16.mxu0 0
    %2201 = vmatpush1.bf16.msra.mxu0 %v1066
    %2202 = vmatprep.subr.bf16.mxu0 0
    %2203 = vmatpush1.bf16.msra.mxu0 %v1081
    %2204 = vmatprep.subr.bf16.mxu0 0
    %2205 = vmatpush1.bf16.msra.mxu0 %v1096
    %2206 = vmatprep.subr.bf16.mxu0 0
    %2207 = vmatpush1.bf16.msra.mxu0 %v1111
    %2208 = vmatprep.subr.bf16.mxu0 0
    %2209 = vmatpush1.bf16.msra.mxu0 %v1126
    %2210 = vmatprep.subr.bf16.mxu0 0
    %2211 = vmatpush1.bf16.msra.mxu0 %v1141
    %2212 = vmatprep.subr.bf16.mxu0 0
    %2213 = vmatpush1.bf16.msra.mxu0 %v1156
    %2214 = vmatprep.subr.bf16.mxu0 0
    %2215 = vmatpush1.bf16.msra.mxu0 %v1171
    %2216 = vmatprep.subr.bf16.mxu0 0
    %2217 = vmatpush1.bf16.msra.mxu0 %v1186
    %2218 = vmatprep.subr.bf16.mxu0 0
    %2219 = vmatpush1.bf16.msra.mxu0 %v1201
    %2220 = vmatprep.subr.bf16.mxu0 0
    %2221 = vmatpush1.bf16.msra.mxu0 %v1216
    %2222 = vmatprep.subr.bf16.mxu0 0
    %2223 = vmatpush1.bf16.msra.mxu0 %v1231
    %2224 = vmatprep.subr.bf16.mxu0 0
    %2225 = vmatpush1.bf16.msra.mxu0 %v1246
    %2226 = vmatprep.mubr.bf16.mxu0 %v1252
    %2227 = vmatmul.mubr.bf16.gmra.mrb[0].mxu0 %v1251
    %v2228 = vpop.f32.mrb[0].mxu0
    %v2229 = vadd.f32 %v2189, %v2228
    %v2230 = vpop.f32.mrb[0].mxu0
    %v2231 = vpop.f32.mrb[0].mxu0
    %v2232 = vpop.f32.mrb[0].mxu0
    %2233 = vdwg.mxu0
    %v2234 = vld [vmem:[#allocation15] sm:$0xff]
    %v2235 = vld [vmem:[#allocation15 + $0x8] sm:$0xff]
    %v2238 = vlaneseq
    %v2239 = vshrl.u32 %v2238, 7
    %v2240 = vsub.s32 0, %v2239
    %v2241 = vrot.slane %v2234, %v2240
    %v2242 = vlaneseq
    %v2243 = vshrl.u32 %v2242, 7
    %v2244 = vsub.s32 1, %v2243
    %v2245 = vrot.slane %v2234, %v2244
    %v2246 = vlaneseq
    %v2247 = vshrl.u32 %v2246, 7
    %v2248 = vsub.s32 2, %v2247
    %v2249 = vrot.slane %v2234, %v2248
    %v2250 = vlaneseq
    %v2251 = vshrl.u32 %v2250, 7
    %v2252 = vsub.s32 3, %v2251
    %v2253 = vrot.slane %v2234, %v2252
    %v2254 = vlaneseq
    %v2255 = vshrl.u32 %v2254, 7
    %v2256 = vsub.s32 4, %v2255
    %v2257 = vrot.slane %v2234, %v2256
    %v2258 = vlaneseq
    %v2259 = vshrl.u32 %v2258, 7
    %v2260 = vsub.s32 5, %v2259
    %v2261 = vrot.slane %v2234, %v2260
    %v2262 = vlaneseq
    %v2263 = vshrl.u32 %v2262, 7
    %v2264 = vsub.s32 6, %v2263
    %v2265 = vrot.slane %v2234, %v2264
    %v2266 = vlaneseq
    %v2267 = vshrl.u32 %v2266, 7
    %v2268 = vsub.s32 7, %v2267
    %v2269 = vrot.slane %v2234, %v2268
    %v2270 = vlaneseq
    %v2271 = vshrl.u32 %v2270, 7
    %v2272 = vsub.s32 0, %v2271
    %v2273 = vrot.slane %v2235, %v2272
    %v2274 = vlaneseq
    %v2275 = vshrl.u32 %v2274, 7
    %v2276 = vsub.s32 1, %v2275
    %v2277 = vrot.slane %v2235, %v2276
    %v2278 = vlaneseq
    %v2279 = vshrl.u32 %v2278, 7
    %v2280 = vsub.s32 2, %v2279
    %v2281 = vrot.slane %v2235, %v2280
    %v2282 = vlaneseq
    %v2283 = vshrl.u32 %v2282, 7
    %v2284 = vsub.s32 3, %v2283
    %v2285 = vrot.slane %v2235, %v2284
    %v2286 = vlaneseq
    %v2287 = vshrl.u32 %v2286, 7
    %v2288 = vsub.s32 4, %v2287
    %v2289 = vrot.slane %v2235, %v2288
    %v2290 = vlaneseq
    %v2291 = vshrl.u32 %v2290, 7
    %v2292 = vsub.s32 5, %v2291
    %v2293 = vrot.slane %v2235, %v2292
    %v2294 = vlaneseq
    %v2295 = vshrl.u32 %v2294, 7
    %v2296 = vsub.s32 6, %v2295
    %v2297 = vrot.slane %v2235, %v2296
    %v2313 = vmul.f32 %v1370, %v2241
    %v2314 = vmul.f32 %v1372, %v2245
    %v2315 = vmul.f32 %v1493, %v2249
    %v2316 = vmul.f32 %v1495, %v2253
    %v2317 = vmul.f32 %v1616, %v2257
    %v2318 = vmul.f32 %v1618, %v2261
    %v2319 = vmul.f32 %v1739, %v2265
    %v2320 = vmul.f32 %v1741, %v2269
    %v2321 = vmul.f32 %v1862, %v2273
    %v2322 = vmul.f32 %v1864, %v2277
    %v2323 = vmul.f32 %v1985, %v2281
    %v2324 = vmul.f32 %v1987, %v2285
    %v2325 = vmul.f32 %v2108, %v2289
    %v2326 = vmul.f32 %v2110, %v2293
    %v2327 = vmul.f32 %v2229, %v2297
    %v2328 = vld [vmem:[#allocation7] sm:$0xff]
    %v2329 = vld [vmem:[#allocation7 + $0x8] sm:$0xff]
    %v2330 = vld [vmem:[#allocation7 + $0x10] sm:$0xff]
    %v2331 = vld [vmem:[#allocation7 + $0x18] sm:$0xff]
    %v2332 = vld [vmem:[#allocation7 + $0x20] sm:$0xff]
    %v2333 = vld [vmem:[#allocation7 + $0x28] sm:$0xff]
    %v2334 = vld [vmem:[#allocation7 + $0x30] sm:$0xff]
    %v2335 = vld [vmem:[#allocation7 + $0x38] sm:$0xff]
    %v2336 = vld [vmem:[#allocation7 + $0x40] sm:$0xff]
    %v2337 = vld [vmem:[#allocation7 + $0x48] sm:$0xff]
    %v2338 = vld [vmem:[#allocation7 + $0x50] sm:$0xff]
    %v2339 = vld [vmem:[#allocation7 + $0x58] sm:$0xff]
    %v2340 = vld [vmem:[#allocation7 + $0x60] sm:$0xff]
    %v2341 = vld [vmem:[#allocation7 + $0x68] sm:$0xff]
    %v2342 = vld [vmem:[#allocation7 + $0x70] sm:$0xff]
    %v2343 = vld [vmem:[#allocation7 + $0x78] sm:$0xff]
    %v2344 = vld [vmem:[#allocation7 + $0x80] sm:$0xff]
    %v2345 = vld [vmem:[#allocation7 + $0x88] sm:$0xff]
    %v2346 = vld [vmem:[#allocation7 + $0x90] sm:$0xff]
    %v2347 = vld [vmem:[#allocation7 + $0x98] sm:$0xff]
    %v2348 = vld [vmem:[#allocation7 + $0xa0] sm:$0xff]
    %v2349 = vld [vmem:[#allocation7 + $0xa8] sm:$0xff]
    %v2350 = vld [vmem:[#allocation7 + $0xb0] sm:$0xff]
    %v2351 = vld [vmem:[#allocation7 + $0xb8] sm:$0xff]
    %v2352 = vld [vmem:[#allocation7 + $0xc0] sm:$0xff]
    %v2353 = vld [vmem:[#allocation7 + $0xc8] sm:$0xff]
    %v2354 = vld [vmem:[#allocation7 + $0xd0] sm:$0xff]
    %v2355 = vld [vmem:[#allocation7 + $0xd8] sm:$0xff]
    %v2356 = vld [vmem:[#allocation7 + $0xe0] sm:$0xff]
    %v2357 = vld [vmem:[#allocation7 + $0xe8] sm:$0xff]
    %v2358 = vld [vmem:[#allocation7 + $0xf0] sm:$0xff]
    %v2359 = vld [vmem:[#allocation7 + $0xf8] sm:$0xff]
    %v2360 = vld [vmem:[#allocation7 + $0x100] sm:$0xff]
    %v2361 = vld [vmem:[#allocation7 + $0x108] sm:$0xff]
    %v2362 = vld [vmem:[#allocation7 + $0x110] sm:$0xff]
    %v2363 = vld [vmem:[#allocation7 + $0x118] sm:$0xff]
    %v2364 = vld [vmem:[#allocation7 + $0x120] sm:$0xff]
    %v2365 = vld [vmem:[#allocation7 + $0x128] sm:$0xff]
    %v2366 = vld [vmem:[#allocation7 + $0x130] sm:$0xff]
    %v2367 = vld [vmem:[#allocation7 + $0x138] sm:$0xff]
    %v2368 = vld [vmem:[#allocation7 + $0x140] sm:$0xff]
    %v2369 = vld [vmem:[#allocation7 + $0x148] sm:$0xff]
    %v2370 = vld [vmem:[#allocation7 + $0x150] sm:$0xff]
    %v2371 = vld [vmem:[#allocation7 + $0x158] sm:$0xff]
    %v2372 = vld [vmem:[#allocation7 + $0x160] sm:$0xff]
    %v2373 = vld [vmem:[#allocation7 + $0x168] sm:$0xff]
    %v2374 = vld [vmem:[#allocation7 + $0x170] sm:$0xff]
    %v2375 = vld [vmem:[#allocation7 + $0x178] sm:$0xff]
    %v2376 = vld [vmem:[#allocation7 + $0x180] sm:$0xff]
    %v2377 = vld [vmem:[#allocation7 + $0x188] sm:$0xff]
    %v2378 = vld [vmem:[#allocation7 + $0x190] sm:$0xff]
    %v2379 = vld [vmem:[#allocation7 + $0x198] sm:$0xff]
    %v2380 = vld [vmem:[#allocation7 + $0x1a0] sm:$0xff]
    %v2381 = vld [vmem:[#allocation7 + $0x1a8] sm:$0xff]
    %v2382 = vld [vmem:[#allocation7 + $0x1b0] sm:$0xff]
    %v2383 = vld [vmem:[#allocation7 + $0x1b8] sm:$0xff]
    %v2384 = vld [vmem:[#allocation7 + $0x1c0] sm:$0xff]
    %v2385 = vld [vmem:[#allocation7 + $0x1c8] sm:$0xff]
    %v2386 = vld [vmem:[#allocation7 + $0x1d0] sm:$0xff]
    %v2387 = vld [vmem:[#allocation7 + $0x1d8] sm:$0xff]
    %v2388 = vld [vmem:[#allocation7 + $0x1e0] sm:$0xff]
    %v2389 = vld [vmem:[#allocation7 + $0x1e8] sm:$0xff]
    %v2390 = vld [vmem:[#allocation7 + $0x1f0] sm:$0xff]
    %v2391 = vld [vmem:[#allocation7 + $0x1f8] sm:$0xff]
    %v2392 = vld [vmem:[#allocation7 + $0x200] sm:$0xff]
    %v2393 = vld [vmem:[#allocation7 + $0x208] sm:$0xff]
    %v2394 = vld [vmem:[#allocation7 + $0x210] sm:$0xff]
    %v2395 = vld [vmem:[#allocation7 + $0x218] sm:$0xff]
    %v2396 = vld [vmem:[#allocation7 + $0x220] sm:$0xff]
    %v2397 = vld [vmem:[#allocation7 + $0x228] sm:$0xff]
    %v2398 = vld [vmem:[#allocation7 + $0x230] sm:$0xff]
    %v2399 = vld [vmem:[#allocation7 + $0x238] sm:$0xff]
    %v2400 = vld [vmem:[#allocation7 + $0x240] sm:$0xff]
    %v2401 = vld [vmem:[#allocation7 + $0x248] sm:$0xff]
    %v2402 = vld [vmem:[#allocation7 + $0x250] sm:$0xff]
    %v2403 = vld [vmem:[#allocation7 + $0x258] sm:$0xff]
    %v2404 = vld [vmem:[#allocation7 + $0x260] sm:$0xff]
    %v2405 = vld [vmem:[#allocation7 + $0x268] sm:$0xff]
    %v2406 = vld [vmem:[#allocation7 + $0x270] sm:$0xff]
    %v2407 = vld [vmem:[#allocation7 + $0x278] sm:$0xff]
    %v2408 = vld [vmem:[#allocation7 + $0x280] sm:$0xff]
    %v2409 = vld [vmem:[#allocation7 + $0x288] sm:$0xff]
    %v2410 = vld [vmem:[#allocation7 + $0x290] sm:$0xff]
    %v2411 = vld [vmem:[#allocation7 + $0x298] sm:$0xff]
    %v2412 = vld [vmem:[#allocation7 + $0x2a0] sm:$0xff]
    %v2413 = vld [vmem:[#allocation7 + $0x2a8] sm:$0xff]
    %v2414 = vld [vmem:[#allocation7 + $0x2b0] sm:$0xff]
    %v2415 = vld [vmem:[#allocation7 + $0x2b8] sm:$0xff]
    %v2416 = vld [vmem:[#allocation7 + $0x2c0] sm:$0xff]
    %v2417 = vld [vmem:[#allocation7 + $0x2c8] sm:$0xff]
    %v2418 = vld [vmem:[#allocation7 + $0x2d0] sm:$0xff]
    %v2419 = vld [vmem:[#allocation7 + $0x2d8] sm:$0xff]
    %v2420 = vld [vmem:[#allocation7 + $0x2e0] sm:$0xff]
    %v2421 = vld [vmem:[#allocation7 + $0x2e8] sm:$0xff]
    %v2422 = vld [vmem:[#allocation7 + $0x2f0] sm:$0xff]
    %v2423 = vld [vmem:[#allocation7 + $0x2f8] sm:$0xff]
    %v2424 = vld [vmem:[#allocation7 + $0x300] sm:$0xff]
    %v2425 = vld [vmem:[#allocation7 + $0x308] sm:$0xff]
    %v2426 = vld [vmem:[#allocation7 + $0x310] sm:$0xff]
    %v2427 = vld [vmem:[#allocation7 + $0x318] sm:$0xff]
    %v2428 = vld [vmem:[#allocation7 + $0x320] sm:$0xff]
    %v2429 = vld [vmem:[#allocation7 + $0x328] sm:$0xff]
    %v2430 = vld [vmem:[#allocation7 + $0x330] sm:$0xff]
    %v2431 = vld [vmem:[#allocation7 + $0x338] sm:$0xff]
    %v2432 = vld [vmem:[#allocation7 + $0x340] sm:$0xff]
    %v2433 = vld [vmem:[#allocation7 + $0x348] sm:$0xff]
    %v2434 = vld [vmem:[#allocation7 + $0x350] sm:$0xff]
    %v2435 = vld [vmem:[#allocation7 + $0x358] sm:$0xff]
    %v2436 = vld [vmem:[#allocation7 + $0x360] sm:$0xff]
    %v2437 = vld [vmem:[#allocation7 + $0x368] sm:$0xff]
    %v2438 = vld [vmem:[#allocation7 + $0x370] sm:$0xff]
    %v2439 = vld [vmem:[#allocation7 + $0x378] sm:$0xff]
    %v2440 = vld [vmem:[#allocation7 + $0x380] sm:$0xff]
    %v2441 = vld [vmem:[#allocation7 + $0x388] sm:$0xff]
    %v2442 = vld [vmem:[#allocation7 + $0x390] sm:$0xff]
    %v2443 = vld [vmem:[#allocation7 + $0x398] sm:$0xff]
    %v2444 = vld [vmem:[#allocation7 + $0x3a0] sm:$0xff]
    %v2445 = vld [vmem:[#allocation7 + $0x3a8] sm:$0xff]
    %v2446 = vld [vmem:[#allocation7 + $0x3b0] sm:$0xff]
    %v2447 = vld [vmem:[#allocation7 + $0x3b8] sm:$0xff]
    %v2448 = vld [vmem:[#allocation7 + $0x3c0] sm:$0xff]
    %v2449 = vld [vmem:[#allocation7 + $0x3c8] sm:$0xff]
    %v2450 = vld [vmem:[#allocation7 + $0x3d0] sm:$0xff]
    %v2451 = vld [vmem:[#allocation7 + $0x3d8] sm:$0xff]
    %v2452 = vld [vmem:[#allocation7 + $0x3e0] sm:$0xff]
    %v2453 = vld [vmem:[#allocation7 + $0x3e8] sm:$0xff]
    %v2454 = vld [vmem:[#allocation7 + $0x3f0] sm:$0xff]
    %v2455 = vld [vmem:[#allocation7 + $0x3f8] sm:$0xff]
    %v2456 = vld [vmem:[#allocation7 + $0x400] sm:$0xff]
    %v2457 = vld [vmem:[#allocation7 + $0x408] sm:$0xff]
    %v2458 = vld [vmem:[#allocation7 + $0x410] sm:$0xff]
    %v2459 = vld [vmem:[#allocation7 + $0x418] sm:$0xff]
    %v2460 = vld [vmem:[#allocation7 + $0x420] sm:$0xff]
    %v2461 = vld [vmem:[#allocation7 + $0x428] sm:$0xff]
    %v2462 = vld [vmem:[#allocation7 + $0x430] sm:$0xff]
    %v2463 = vld [vmem:[#allocation7 + $0x438] sm:$0xff]
    %v2464 = vld [vmem:[#allocation7 + $0x440] sm:$0xff]
    %v2465 = vld [vmem:[#allocation7 + $0x448] sm:$0xff]
    %v2466 = vld [vmem:[#allocation7 + $0x450] sm:$0xff]
    %v2467 = vld [vmem:[#allocation7 + $0x458] sm:$0xff]
    %v2468 = vld [vmem:[#allocation7 + $0x460] sm:$0xff]
    %v2469 = vld [vmem:[#allocation7 + $0x468] sm:$0xff]
    %v2470 = vld [vmem:[#allocation7 + $0x470] sm:$0xff]
    %v2471 = vld [vmem:[#allocation7 + $0x478] sm:$0xff]
    %v2472 = vld [vmem:[#allocation7 + $0x480] sm:$0xff]
    %v2473 = vld [vmem:[#allocation7 + $0x488] sm:$0xff]
    %v2474 = vld [vmem:[#allocation7 + $0x490] sm:$0xff]
    %v2475 = vld [vmem:[#allocation7 + $0x498] sm:$0xff]
    %v2476 = vld [vmem:[#allocation7 + $0x4a0] sm:$0xff]
    %v2477 = vld [vmem:[#allocation7 + $0x4a8] sm:$0xff]
    %v2478 = vld [vmem:[#allocation7 + $0x4b0] sm:$0xff]
    %v2479 = vld [vmem:[#allocation7 + $0x4b8] sm:$0xff]
    %v2480 = vld [vmem:[#allocation7 + $0x4c0] sm:$0xff]
    %v2481 = vld [vmem:[#allocation7 + $0x4c8] sm:$0xff]
    %v2482 = vld [vmem:[#allocation7 + $0x4d0] sm:$0xff]
    %v2483 = vld [vmem:[#allocation7 + $0x4d8] sm:$0xff]
    %v2484 = vld [vmem:[#allocation7 + $0x4e0] sm:$0xff]
    %v2485 = vld [vmem:[#allocation7 + $0x4e8] sm:$0xff]
    %v2486 = vld [vmem:[#allocation7 + $0x4f0] sm:$0xff]
    %v2487 = vld [vmem:[#allocation7 + $0x4f8] sm:$0xff]
    %v2488 = vld [vmem:[#allocation7 + $0x500] sm:$0xff]
    %v2489 = vld [vmem:[#allocation7 + $0x508] sm:$0xff]
    %v2490 = vld [vmem:[#allocation7 + $0x510] sm:$0xff]
    %v2491 = vld [vmem:[#allocation7 + $0x518] sm:$0xff]
    %v2492 = vld [vmem:[#allocation7 + $0x520] sm:$0xff]
    %v2493 = vld [vmem:[#allocation7 + $0x528] sm:$0xff]
    %v2494 = vld [vmem:[#allocation7 + $0x530] sm:$0xff]
    %v2495 = vld [vmem:[#allocation7 + $0x538] sm:$0xff]
    %v2496 = vld [vmem:[#allocation7 + $0x540] sm:$0xff]
    %v2497 = vld [vmem:[#allocation7 + $0x548] sm:$0xff]
    %v2498 = vld [vmem:[#allocation7 + $0x550] sm:$0xff]
    %v2499 = vld [vmem:[#allocation7 + $0x558] sm:$0xff]
    %v2500 = vld [vmem:[#allocation7 + $0x560] sm:$0xff]
    %v2501 = vld [vmem:[#allocation7 + $0x568] sm:$0xff]
    %v2502 = vld [vmem:[#allocation7 + $0x570] sm:$0xff]
    %v2503 = vld [vmem:[#allocation7 + $0x578] sm:$0xff]
    %v2504 = vld [vmem:[#allocation7 + $0x580] sm:$0xff]
    %v2505 = vld [vmem:[#allocation7 + $0x588] sm:$0xff]
    %v2506 = vld [vmem:[#allocation7 + $0x590] sm:$0xff]
    %v2507 = vld [vmem:[#allocation7 + $0x598] sm:$0xff]
    %v2508 = vld [vmem:[#allocation7 + $0x5a0] sm:$0xff]
    %v2509 = vld [vmem:[#allocation7 + $0x5a8] sm:$0xff]
    %v2510 = vld [vmem:[#allocation7 + $0x5b0] sm:$0xff]
    %v2511 = vld [vmem:[#allocation7 + $0x5b8] sm:$0xff]
    %v2512 = vld [vmem:[#allocation7 + $0x5c0] sm:$0xff]
    %v2513 = vld [vmem:[#allocation7 + $0x5c8] sm:$0xff]
    %v2514 = vld [vmem:[#allocation7 + $0x5d0] sm:$0xff]
    %v2515 = vld [vmem:[#allocation7 + $0x5d8] sm:$0xff]
    %v2516 = vld [vmem:[#allocation7 + $0x5e0] sm:$0xff]
    %v2517 = vld [vmem:[#allocation7 + $0x5e8] sm:$0xff]
    %v2518 = vld [vmem:[#allocation7 + $0x5f0] sm:$0xff]
    %v2519 = vld [vmem:[#allocation7 + $0x5f8] sm:$0xff]
    %v2520 = vld [vmem:[#allocation7 + $0x600] sm:$0xff]
    %v2521 = vld [vmem:[#allocation7 + $0x608] sm:$0xff]
    %v2522 = vld [vmem:[#allocation7 + $0x610] sm:$0xff]
    %v2523 = vld [vmem:[#allocation7 + $0x618] sm:$0xff]
    %v2524 = vld [vmem:[#allocation7 + $0x620] sm:$0xff]
    %v2525 = vld [vmem:[#allocation7 + $0x628] sm:$0xff]
    %v2526 = vld [vmem:[#allocation7 + $0x630] sm:$0xff]
    %v2527 = vld [vmem:[#allocation7 + $0x638] sm:$0xff]
    %v2528 = vld [vmem:[#allocation7 + $0x640] sm:$0xff]
    %v2529 = vld [vmem:[#allocation7 + $0x648] sm:$0xff]
    %v2530 = vld [vmem:[#allocation7 + $0x650] sm:$0xff]
    %v2531 = vld [vmem:[#allocation7 + $0x658] sm:$0xff]
    %v2532 = vld [vmem:[#allocation7 + $0x660] sm:$0xff]
    %v2533 = vld [vmem:[#allocation7 + $0x668] sm:$0xff]
    %v2534 = vld [vmem:[#allocation7 + $0x670] sm:$0xff]
    %v2535 = vld [vmem:[#allocation7 + $0x678] sm:$0xff]
    %v2536 = vld [vmem:[#allocation7 + $0x680] sm:$0xff]
    %v2537 = vld [vmem:[#allocation7 + $0x688] sm:$0xff]
    %v2538 = vld [vmem:[#allocation7 + $0x690] sm:$0xff]
    %v2539 = vld [vmem:[#allocation7 + $0x698] sm:$0xff]
    %v2540 = vld [vmem:[#allocation7 + $0x6a0] sm:$0xff]
    %v2541 = vld [vmem:[#allocation7 + $0x6a8] sm:$0xff]
    %v2542 = vld [vmem:[#allocation7 + $0x6b0] sm:$0xff]
    %v2543 = vld [vmem:[#allocation7 + $0x6b8] sm:$0xff]
    %v2544 = vld [vmem:[#allocation7 + $0x6c0] sm:$0xff]
    %v2545 = vld [vmem:[#allocation7 + $0x6c8] sm:$0xff]
    %v2546 = vld [vmem:[#allocation7 + $0x6d0] sm:$0xff]
    %v2547 = vld [vmem:[#allocation7 + $0x6d8] sm:$0xff]
    %v2548 = vld [vmem:[#allocation7 + $0x6e0] sm:$0xff]
    %v2549 = vld [vmem:[#allocation7 + $0x6e8] sm:$0xff]
    %v2550 = vld [vmem:[#allocation7 + $0x6f0] sm:$0xff]
    %v2551 = vld [vmem:[#allocation7 + $0x6f8] sm:$0xff]
    %v2552 = vld [vmem:[#allocation7 + $0x700] sm:$0xff]
    %v2553 = vld [vmem:[#allocation7 + $0x708] sm:$0xff]
    %v2554 = vld [vmem:[#allocation7 + $0x710] sm:$0xff]
    %v2555 = vld [vmem:[#allocation7 + $0x718] sm:$0xff]
    %v2556 = vld [vmem:[#allocation7 + $0x720] sm:$0xff]
    %v2557 = vld [vmem:[#allocation7 + $0x728] sm:$0xff]
    %v2558 = vld [vmem:[#allocation7 + $0x730] sm:$0xff]
    %v2559 = vld [vmem:[#allocation7 + $0x738] sm:$0xff]
    %v2560 = vld [vmem:[#allocation7 + $0x740] sm:$0xff]
    %v2561 = vld [vmem:[#allocation7 + $0x748] sm:$0xff]
    %v2562 = vld [vmem:[#allocation7 + $0x750] sm:$0xff]
    %v2563 = vld [vmem:[#allocation7 + $0x758] sm:$0xff]
    %v2564 = vld [vmem:[#allocation7 + $0x760] sm:$0xff]
    %v2565 = vld [vmem:[#allocation7 + $0x768] sm:$0xff]
    %v2566 = vld [vmem:[#allocation7 + $0x770] sm:$0xff]
    %v2567 = vld [vmem:[#allocation7 + $0x778] sm:$0xff]
    %v2568 = vld [vmem:[#allocation7 + $0x780] sm:$0xff]
    %v2569 = vld [vmem:[#allocation7 + $0x788] sm:$0xff]
    %v2570 = vld [vmem:[#allocation7 + $0x790] sm:$0xff]
    %v2571 = vld [vmem:[#allocation7 + $0x798] sm:$0xff]
    %v2572 = vld [vmem:[#allocation7 + $0x7a0] sm:$0xff]
    %v2573 = vld [vmem:[#allocation7 + $0x7a8] sm:$0xff]
    %v2574 = vld [vmem:[#allocation7 + $0x7b0] sm:$0xff]
    %v2575 = vld [vmem:[#allocation7 + $0x7b8] sm:$0xff]
    %v2576 = vld [vmem:[#allocation7 + $0x7c0] sm:$0xff]
    %v2577 = vld [vmem:[#allocation7 + $0x7c8] sm:$0xff]
    %v2578 = vld [vmem:[#allocation7 + $0x7d0] sm:$0xff]
    %v2579 = vld [vmem:[#allocation7 + $0x7d8] sm:$0xff]
    %v2580 = vld [vmem:[#allocation7 + $0x7e0] sm:$0xff]
    %v2581 = vld [vmem:[#allocation7 + $0x7e8] sm:$0xff]
    %v2582 = vld [vmem:[#allocation7 + $0x7f0] sm:$0xff]
    %v2583 = vld [vmem:[#allocation7 + $0x7f8] sm:$0xff]
    %v2584 = vld [vmem:[#allocation7 + $0x800] sm:$0xff]
    %v2585 = vld [vmem:[#allocation7 + $0x808] sm:$0xff]
    %v2586 = vld [vmem:[#allocation7 + $0x810] sm:$0xff]
    %v2587 = vld [vmem:[#allocation7 + $0x818] sm:$0xff]
    %v2588 = vld [vmem:[#allocation7 + $0x820] sm:$0xff]
    %v2589 = vld [vmem:[#allocation7 + $0x828] sm:$0xff]
    %v2590 = vld [vmem:[#allocation7 + $0x830] sm:$0xff]
    %v2591 = vld [vmem:[#allocation7 + $0x838] sm:$0xff]
    %v2592 = vld [vmem:[#allocation7 + $0x840] sm:$0xff]
    %v2593 = vld [vmem:[#allocation7 + $0x848] sm:$0xff]
    %v2594 = vld [vmem:[#allocation7 + $0x850] sm:$0xff]
    %v2595 = vld [vmem:[#allocation7 + $0x858] sm:$0xff]
    %v2596 = vld [vmem:[#allocation7 + $0x860] sm:$0xff]
    %v2597 = vld [vmem:[#allocation7 + $0x868] sm:$0xff]
    %v2598 = vld [vmem:[#allocation7 + $0x870] sm:$0xff]
    %v2599 = vld [vmem:[#allocation7 + $0x878] sm:$0xff]
    %v2600 = vld [vmem:[#allocation7 + $0x880] sm:$0xff]
    %v2601 = vld [vmem:[#allocation7 + $0x888] sm:$0xff]
    %v2602 = vld [vmem:[#allocation7 + $0x890] sm:$0xff]
    %v2603 = vld [vmem:[#allocation7 + $0x898] sm:$0xff]
    %v2604 = vld [vmem:[#allocation7 + $0x8a0] sm:$0xff]
    %v2605 = vld [vmem:[#allocation7 + $0x8a8] sm:$0xff]
    %v2606 = vld [vmem:[#allocation7 + $0x8b0] sm:$0xff]
    %v2607 = vld [vmem:[#allocation7 + $0x8b8] sm:$0xff]
    %v2608 = vld [vmem:[#allocation7 + $0x8c0] sm:$0xff]
    %v2609 = vld [vmem:[#allocation7 + $0x8c8] sm:$0xff]
    %v2610 = vld [vmem:[#allocation7 + $0x8d0] sm:$0xff]
    %v2611 = vld [vmem:[#allocation7 + $0x8d8] sm:$0xff]
    %v2612 = vld [vmem:[#allocation7 + $0x8e0] sm:$0xff]
    %v2613 = vld [vmem:[#allocation7 + $0x8e8] sm:$0xff]
    %v2614 = vld [vmem:[#allocation7 + $0x8f0] sm:$0xff]
    %v2615 = vld [vmem:[#allocation7 + $0x8f8] sm:$0xff]
    %v2616 = vld [vmem:[#allocation7 + $0x900] sm:$0xff]
    %v2617 = vld [vmem:[#allocation7 + $0x908] sm:$0xff]
    %v2618 = vld [vmem:[#allocation7 + $0x910] sm:$0xff]
    %v2619 = vld [vmem:[#allocation7 + $0x918] sm:$0xff]
    %v2620 = vld [vmem:[#allocation7 + $0x920] sm:$0xff]
    %v2621 = vld [vmem:[#allocation7 + $0x928] sm:$0xff]
    %v2622 = vld [vmem:[#allocation7 + $0x930] sm:$0xff]
    %v2623 = vld [vmem:[#allocation7 + $0x938] sm:$0xff]
    %v2624 = vld [vmem:[#allocation7 + $0x940] sm:$0xff]
    %v2625 = vld [vmem:[#allocation7 + $0x948] sm:$0xff]
    %v2626 = vld [vmem:[#allocation7 + $0x950] sm:$0xff]
    %v2627 = vld [vmem:[#allocation7 + $0x958] sm:$0xff]
    %v2628 = vld [vmem:[#allocation7 + $0x960] sm:$0xff]
    %v2629 = vld [vmem:[#allocation7 + $0x968] sm:$0xff]
    %v2630 = vld [vmem:[#allocation7 + $0x970] sm:$0xff]
    %v2631 = vld [vmem:[#allocation7 + $0x978] sm:$0xff]
    %v2632 = vld [vmem:[#allocation7 + $0x980] sm:$0xff]
    %v2633 = vld [vmem:[#allocation7 + $0x988] sm:$0xff]
    %v2634 = vld [vmem:[#allocation7 + $0x990] sm:$0xff]
    %v2635 = vld [vmem:[#allocation7 + $0x998] sm:$0xff]
    %v2636 = vld [vmem:[#allocation7 + $0x9a0] sm:$0xff]
    %v2637 = vld [vmem:[#allocation7 + $0x9a8] sm:$0xff]
    %v2638 = vld [vmem:[#allocation7 + $0x9b0] sm:$0xff]
    %v2639 = vld [vmem:[#allocation7 + $0x9b8] sm:$0xff]
    %v2640 = vld [vmem:[#allocation7 + $0x9c0] sm:$0xff]
    %v2641 = vld [vmem:[#allocation7 + $0x9c8] sm:$0xff]
    %v2642 = vld [vmem:[#allocation7 + $0x9d0] sm:$0xff]
    %v2643 = vld [vmem:[#allocation7 + $0x9d8] sm:$0xff]
    %v2644 = vld [vmem:[#allocation7 + $0x9e0] sm:$0xff]
    %v2645 = vld [vmem:[#allocation7 + $0x9e8] sm:$0xff]
    %v2646 = vld [vmem:[#allocation7 + $0x9f0] sm:$0xff]
    %v2647 = vld [vmem:[#allocation7 + $0x9f8] sm:$0xff]
    %v2648 = vld [vmem:[#allocation7 + $0xa00] sm:$0xff]
    %v2649 = vld [vmem:[#allocation7 + $0xa08] sm:$0xff]
    %v2650 = vld [vmem:[#allocation7 + $0xa10] sm:$0xff]
    %v2651 = vld [vmem:[#allocation7 + $0xa18] sm:$0xff]
    %v2652 = vld [vmem:[#allocation7 + $0xa20] sm:$0xff]
    %v2653 = vld [vmem:[#allocation7 + $0xa28] sm:$0xff]
    %v2654 = vld [vmem:[#allocation7 + $0xa30] sm:$0xff]
    %v2655 = vld [vmem:[#allocation7 + $0xa38] sm:$0xff]
    %v2656 = vld [vmem:[#allocation7 + $0xa40] sm:$0xff]
    %v2657 = vld [vmem:[#allocation7 + $0xa48] sm:$0xff]
    %v2658 = vld [vmem:[#allocation7 + $0xa50] sm:$0xff]
    %v2659 = vld [vmem:[#allocation7 + $0xa58] sm:$0xff]
    %v2660 = vld [vmem:[#allocation7 + $0xa60] sm:$0xff]
    %v2661 = vld [vmem:[#allocation7 + $0xa68] sm:$0xff]
    %v2662 = vld [vmem:[#allocation7 + $0xa70] sm:$0xff]
    %v2663 = vld [vmem:[#allocation7 + $0xa78] sm:$0xff]
    %v2664 = vld [vmem:[#allocation7 + $0xa80] sm:$0xff]
    %v2665 = vld [vmem:[#allocation7 + $0xa88] sm:$0xff]
    %v2666 = vld [vmem:[#allocation7 + $0xa90] sm:$0xff]
    %v2667 = vld [vmem:[#allocation7 + $0xa98] sm:$0xff]
    %v2668 = vld [vmem:[#allocation7 + $0xaa0] sm:$0xff]
    %v2669 = vld [vmem:[#allocation7 + $0xaa8] sm:$0xff]
    %v2670 = vld [vmem:[#allocation7 + $0xab0] sm:$0xff]
    %v2671 = vld [vmem:[#allocation7 + $0xab8] sm:$0xff]
    %v2672 = vld [vmem:[#allocation7 + $0xac0] sm:$0xff]
    %v2673 = vld [vmem:[#allocation7 + $0xac8] sm:$0xff]
    %v2674 = vld [vmem:[#allocation7 + $0xad0] sm:$0xff]
    %v2675 = vld [vmem:[#allocation7 + $0xad8] sm:$0xff]
    %v2676 = vld [vmem:[#allocation7 + $0xae0] sm:$0xff]
    %v2677 = vld [vmem:[#allocation7 + $0xae8] sm:$0xff]
    %v2678 = vld [vmem:[#allocation7 + $0xaf0] sm:$0xff]
    %v2679 = vld [vmem:[#allocation7 + $0xaf8] sm:$0xff]
    %v2680 = vld [vmem:[#allocation7 + $0xb00] sm:$0xff]
    %v2681 = vld [vmem:[#allocation7 + $0xb08] sm:$0xff]
    %v2682 = vld [vmem:[#allocation7 + $0xb10] sm:$0xff]
    %v2683 = vld [vmem:[#allocation7 + $0xb18] sm:$0xff]
    %v2684 = vld [vmem:[#allocation7 + $0xb20] sm:$0xff]
    %v2685 = vld [vmem:[#allocation7 + $0xb28] sm:$0xff]
    %v2686 = vld [vmem:[#allocation7 + $0xb30] sm:$0xff]
    %v2687 = vld [vmem:[#allocation7 + $0xb38] sm:$0xff]
    %v2688 = vunpack.c.l.s8.bf16 %v2328
    %v2689 = vunpack.c.l.s8.bf16 %v2329
    %v2690 = vunpack.c.l.s8.bf16 %v2330
    %v2691 = vunpack.c.l.s8.bf16 %v2331
    %v2692 = vunpack.c.l.s8.bf16 %v2332
    %v2693 = vunpack.c.l.s8.bf16 %v2333
    %v2694 = vunpack.c.l.s8.bf16 %v2334
    %v2695 = vunpack.c.l.s8.bf16 %v2335
    %v2696 = vunpack.c.l.s8.bf16 %v2336
    %v2697 = vunpack.c.l.s8.bf16 %v2337
    %v2698 = vunpack.c.l.s8.bf16 %v2338
    %v2699 = vunpack.c.l.s8.bf16 %v2339
    %v2700 = vunpack.c.l.s8.bf16 %v2340
    %v2701 = vunpack.c.l.s8.bf16 %v2341
    %v2702 = vunpack.c.l.s8.bf16 %v2342
    %v2703 = vunpack.c.h.s8.bf16 %v2328
    %v2704 = vunpack.c.h.s8.bf16 %v2329
    %v2705 = vunpack.c.h.s8.bf16 %v2330
    %v2706 = vunpack.c.h.s8.bf16 %v2331
    %v2707 = vunpack.c.h.s8.bf16 %v2332
    %v2708 = vunpack.c.h.s8.bf16 %v2333
    %v2709 = vunpack.c.h.s8.bf16 %v2334
    %v2710 = vunpack.c.h.s8.bf16 %v2335
    %v2711 = vunpack.c.h.s8.bf16 %v2336
    %v2712 = vunpack.c.h.s8.bf16 %v2337
    %v2713 = vunpack.c.h.s8.bf16 %v2338
    %v2714 = vunpack.c.h.s8.bf16 %v2339
    %v2715 = vunpack.c.h.s8.bf16 %v2340
    %v2716 = vunpack.c.h.s8.bf16 %v2341
    %v2717 = vunpack.c.h.s8.bf16 %v2342
    %v2718 = vunpack.c.l.s8.bf16 %v2343
    %v2719 = vunpack.c.l.s8.bf16 %v2344
    %v2720 = vunpack.c.l.s8.bf16 %v2345
    %v2721 = vunpack.c.l.s8.bf16 %v2346
    %v2722 = vunpack.c.l.s8.bf16 %v2347
    %v2723 = vunpack.c.l.s8.bf16 %v2348
    %v2724 = vunpack.c.l.s8.bf16 %v2349
    %v2725 = vunpack.c.l.s8.bf16 %v2350
    %v2726 = vunpack.c.l.s8.bf16 %v2351
    %v2727 = vunpack.c.l.s8.bf16 %v2352
    %v2728 = vunpack.c.l.s8.bf16 %v2353
    %v2729 = vunpack.c.l.s8.bf16 %v2354
    %v2730 = vunpack.c.l.s8.bf16 %v2355
    %v2731 = vunpack.c.l.s8.bf16 %v2356
    %v2732 = vunpack.c.l.s8.bf16 %v2357
    %v2733 = vunpack.c.h.s8.bf16 %v2343
    %v2734 = vunpack.c.h.s8.bf16 %v2344
    %v2735 = vunpack.c.h.s8.bf16 %v2345
    %v2736 = vunpack.c.h.s8.bf16 %v2346
    %v2737 = vunpack.c.h.s8.bf16 %v2347
    %v2738 = vunpack.c.h.s8.bf16 %v2348
    %v2739 = vunpack.c.h.s8.bf16 %v2349
    %v2740 = vunpack.c.h.s8.bf16 %v2350
    %v2741 = vunpack.c.h.s8.bf16 %v2351
    %v2742 = vunpack.c.h.s8.bf16 %v2352
    %v2743 = vunpack.c.h.s8.bf16 %v2353
    %v2744 = vunpack.c.h.s8.bf16 %v2354
    %v2745 = vunpack.c.h.s8.bf16 %v2355
    %v2746 = vunpack.c.h.s8.bf16 %v2356
    %v2747 = vunpack.c.h.s8.bf16 %v2357
    %v2748 = vunpack.c.l.s8.bf16 %v2358
    %v2749 = vunpack.c.l.s8.bf16 %v2359
    %v2750 = vunpack.c.l.s8.bf16 %v2360
    %v2751 = vunpack.c.l.s8.bf16 %v2361
    %v2752 = vunpack.c.l.s8.bf16 %v2362
    %v2753 = vunpack.c.l.s8.bf16 %v2363
    %v2754 = vunpack.c.l.s8.bf16 %v2364
    %v2755 = vunpack.c.l.s8.bf16 %v2365
    %v2756 = vunpack.c.l.s8.bf16 %v2366
    %v2757 = vunpack.c.l.s8.bf16 %v2367
    %v2758 = vunpack.c.l.s8.bf16 %v2368
    %v2759 = vunpack.c.l.s8.bf16 %v2369
    %v2760 = vunpack.c.l.s8.bf16 %v2370
    %v2761 = vunpack.c.l.s8.bf16 %v2371
    %v2762 = vunpack.c.l.s8.bf16 %v2372
    %v2763 = vunpack.c.h.s8.bf16 %v2358
    %v2764 = vunpack.c.h.s8.bf16 %v2359
    %v2765 = vunpack.c.h.s8.bf16 %v2360
    %v2766 = vunpack.c.h.s8.bf16 %v2361
    %v2767 = vunpack.c.h.s8.bf16 %v2362
    %v2768 = vunpack.c.h.s8.bf16 %v2363
    %v2769 = vunpack.c.h.s8.bf16 %v2364
    %v2770 = vunpack.c.h.s8.bf16 %v2365
    %v2771 = vunpack.c.h.s8.bf16 %v2366
    %v2772 = vunpack.c.h.s8.bf16 %v2367
    %v2773 = vunpack.c.h.s8.bf16 %v2368
    %v2774 = vunpack.c.h.s8.bf16 %v2369
    %v2775 = vunpack.c.h.s8.bf16 %v2370
    %v2776 = vunpack.c.h.s8.bf16 %v2371
    %v2777 = vunpack.c.h.s8.bf16 %v2372
    %v2778 = vunpack.c.l.s8.bf16 %v2373
    %v2779 = vunpack.c.l.s8.bf16 %v2374
    %v2780 = vunpack.c.l.s8.bf16 %v2375
    %v2781 = vunpack.c.l.s8.bf16 %v2376
    %v2782 = vunpack.c.l.s8.bf16 %v2377
    %v2783 = vunpack.c.l.s8.bf16 %v2378
    %v2784 = vunpack.c.l.s8.bf16 %v2379
    %v2785 = vunpack.c.l.s8.bf16 %v2380
    %v2786 = vunpack.c.l.s8.bf16 %v2381
    %v2787 = vunpack.c.l.s8.bf16 %v2382
    %v2788 = vunpack.c.l.s8.bf16 %v2383
    %v2789 = vunpack.c.l.s8.bf16 %v2384
    %v2790 = vunpack.c.l.s8.bf16 %v2385
    %v2791 = vunpack.c.l.s8.bf16 %v2386
    %v2792 = vunpack.c.l.s8.bf16 %v2387
    %v2793 = vunpack.c.h.s8.bf16 %v2373
    %v2794 = vunpack.c.h.s8.bf16 %v2374
    %v2795 = vunpack.c.h.s8.bf16 %v2375
    %v2796 = vunpack.c.h.s8.bf16 %v2376
    %v2797 = vunpack.c.h.s8.bf16 %v2377
    %v2798 = vunpack.c.h.s8.bf16 %v2378
    %v2799 = vunpack.c.h.s8.bf16 %v2379
    %v2800 = vunpack.c.h.s8.bf16 %v2380
    %v2801 = vunpack.c.h.s8.bf16 %v2381
    %v2802 = vunpack.c.h.s8.bf16 %v2382
    %v2803 = vunpack.c.h.s8.bf16 %v2383
    %v2804 = vunpack.c.h.s8.bf16 %v2384
    %v2805 = vunpack.c.h.s8.bf16 %v2385
    %v2806 = vunpack.c.h.s8.bf16 %v2386
    %v2807 = vunpack.c.h.s8.bf16 %v2387
    %v2808 = vunpack.c.l.s8.bf16 %v2388
    %v2809 = vunpack.c.l.s8.bf16 %v2389
    %v2810 = vunpack.c.l.s8.bf16 %v2390
    %v2811 = vunpack.c.l.s8.bf16 %v2391
    %v2812 = vunpack.c.l.s8.bf16 %v2392
    %v2813 = vunpack.c.l.s8.bf16 %v2393
    %v2814 = vunpack.c.l.s8.bf16 %v2394
    %v2815 = vunpack.c.l.s8.bf16 %v2395
    %v2816 = vunpack.c.l.s8.bf16 %v2396
    %v2817 = vunpack.c.l.s8.bf16 %v2397
    %v2818 = vunpack.c.l.s8.bf16 %v2398
    %v2819 = vunpack.c.l.s8.bf16 %v2399
    %v2820 = vunpack.c.l.s8.bf16 %v2400
    %v2821 = vunpack.c.l.s8.bf16 %v2401
    %v2822 = vunpack.c.l.s8.bf16 %v2402
    %v2823 = vunpack.c.h.s8.bf16 %v2388
    %v2824 = vunpack.c.h.s8.bf16 %v2389
    %v2825 = vunpack.c.h.s8.bf16 %v2390
    %v2826 = vunpack.c.h.s8.bf16 %v2391
    %v2827 = vunpack.c.h.s8.bf16 %v2392
    %v2828 = vunpack.c.h.s8.bf16 %v2393
    %v2829 = vunpack.c.h.s8.bf16 %v2394
    %v2830 = vunpack.c.h.s8.bf16 %v2395
    %v2831 = vunpack.c.h.s8.bf16 %v2396
    %v2832 = vunpack.c.h.s8.bf16 %v2397
    %v2833 = vunpack.c.h.s8.bf16 %v2398
    %v2834 = vunpack.c.h.s8.bf16 %v2399
    %v2835 = vunpack.c.h.s8.bf16 %v2400
    %v2836 = vunpack.c.h.s8.bf16 %v2401
    %v2837 = vunpack.c.h.s8.bf16 %v2402
    %v2838 = vunpack.c.l.s8.bf16 %v2403
    %v2839 = vunpack.c.l.s8.bf16 %v2404
    %v2840 = vunpack.c.l.s8.bf16 %v2405
    %v2841 = vunpack.c.l.s8.bf16 %v2406
    %v2842 = vunpack.c.l.s8.bf16 %v2407
    %v2843 = vunpack.c.l.s8.bf16 %v2408
    %v2844 = vunpack.c.l.s8.bf16 %v2409
    %v2845 = vunpack.c.l.s8.bf16 %v2410
    %v2846 = vunpack.c.l.s8.bf16 %v2411
    %v2847 = vunpack.c.l.s8.bf16 %v2412
    %v2848 = vunpack.c.l.s8.bf16 %v2413
    %v2849 = vunpack.c.l.s8.bf16 %v2414
    %v2850 = vunpack.c.l.s8.bf16 %v2415
    %v2851 = vunpack.c.l.s8.bf16 %v2416
    %v2852 = vunpack.c.l.s8.bf16 %v2417
    %v2853 = vunpack.c.h.s8.bf16 %v2403
    %v2854 = vunpack.c.h.s8.bf16 %v2404
    %v2855 = vunpack.c.h.s8.bf16 %v2405
    %v2856 = vunpack.c.h.s8.bf16 %v2406
    %v2857 = vunpack.c.h.s8.bf16 %v2407
    %v2858 = vunpack.c.h.s8.bf16 %v2408
    %v2859 = vunpack.c.h.s8.bf16 %v2409
    %v2860 = vunpack.c.h.s8.bf16 %v2410
    %v2861 = vunpack.c.h.s8.bf16 %v2411
    %v2862 = vunpack.c.h.s8.bf16 %v2412
    %v2863 = vunpack.c.h.s8.bf16 %v2413
    %v2864 = vunpack.c.h.s8.bf16 %v2414
    %v2865 = vunpack.c.h.s8.bf16 %v2415
    %v2866 = vunpack.c.h.s8.bf16 %v2416
    %v2867 = vunpack.c.h.s8.bf16 %v2417
    %v2868 = vunpack.c.l.s8.bf16 %v2418
    %v2869 = vunpack.c.l.s8.bf16 %v2419
    %v2870 = vunpack.c.l.s8.bf16 %v2420
    %v2871 = vunpack.c.l.s8.bf16 %v2421
    %v2872 = vunpack.c.l.s8.bf16 %v2422
    %v2873 = vunpack.c.l.s8.bf16 %v2423
    %v2874 = vunpack.c.l.s8.bf16 %v2424
    %v2875 = vunpack.c.l.s8.bf16 %v2425
    %v2876 = vunpack.c.l.s8.bf16 %v2426
    %v2877 = vunpack.c.l.s8.bf16 %v2427
    %v2878 = vunpack.c.l.s8.bf16 %v2428
    %v2879 = vunpack.c.l.s8.bf16 %v2429
    %v2880 = vunpack.c.l.s8.bf16 %v2430
    %v2881 = vunpack.c.l.s8.bf16 %v2431
    %v2882 = vunpack.c.l.s8.bf16 %v2432
    %v2883 = vunpack.c.h.s8.bf16 %v2418
    %v2884 = vunpack.c.h.s8.bf16 %v2419
    %v2885 = vunpack.c.h.s8.bf16 %v2420
    %v2886 = vunpack.c.h.s8.bf16 %v2421
    %v2887 = vunpack.c.h.s8.bf16 %v2422
    %v2888 = vunpack.c.h.s8.bf16 %v2423
    %v2889 = vunpack.c.h.s8.bf16 %v2424
    %v2890 = vunpack.c.h.s8.bf16 %v2425
    %v2891 = vunpack.c.h.s8.bf16 %v2426
    %v2892 = vunpack.c.h.s8.bf16 %v2427
    %v2893 = vunpack.c.h.s8.bf16 %v2428
    %v2894 = vunpack.c.h.s8.bf16 %v2429
    %v2895 = vunpack.c.h.s8.bf16 %v2430
    %v2896 = vunpack.c.h.s8.bf16 %v2431
    %v2897 = vunpack.c.h.s8.bf16 %v2432
    %v2898 = vunpack.c.l.s8.bf16 %v2433
    %v2899 = vunpack.c.l.s8.bf16 %v2434
    %v2900 = vunpack.c.l.s8.bf16 %v2435
    %v2901 = vunpack.c.l.s8.bf16 %v2436
    %v2902 = vunpack.c.l.s8.bf16 %v2437
    %v2903 = vunpack.c.l.s8.bf16 %v2438
    %v2904 = vunpack.c.l.s8.bf16 %v2439
    %v2905 = vunpack.c.l.s8.bf16 %v2440
    %v2906 = vunpack.c.l.s8.bf16 %v2441
    %v2907 = vunpack.c.l.s8.bf16 %v2442
    %v2908 = vunpack.c.l.s8.bf16 %v2443
    %v2909 = vunpack.c.l.s8.bf16 %v2444
    %v2910 = vunpack.c.l.s8.bf16 %v2445
    %v2911 = vunpack.c.l.s8.bf16 %v2446
    %v2912 = vunpack.c.l.s8.bf16 %v2447
    %v2913 = vunpack.c.h.s8.bf16 %v2433
    %v2914 = vunpack.c.h.s8.bf16 %v2434
    %v2915 = vunpack.c.h.s8.bf16 %v2435
    %v2916 = vunpack.c.h.s8.bf16 %v2436
    %v2917 = vunpack.c.h.s8.bf16 %v2437
    %v2918 = vunpack.c.h.s8.bf16 %v2438
    %v2919 = vunpack.c.h.s8.bf16 %v2439
    %v2920 = vunpack.c.h.s8.bf16 %v2440
    %v2921 = vunpack.c.h.s8.bf16 %v2441
    %v2922 = vunpack.c.h.s8.bf16 %v2442
    %v2923 = vunpack.c.h.s8.bf16 %v2443
    %v2924 = vunpack.c.h.s8.bf16 %v2444
    %v2925 = vunpack.c.h.s8.bf16 %v2445
    %v2926 = vunpack.c.h.s8.bf16 %v2446
    %v2927 = vunpack.c.h.s8.bf16 %v2447
    %v2928 = vunpack.c.l.s8.bf16 %v2448
    %v2929 = vunpack.c.l.s8.bf16 %v2449
    %v2930 = vunpack.c.l.s8.bf16 %v2450
    %v2931 = vunpack.c.l.s8.bf16 %v2451
    %v2932 = vunpack.c.l.s8.bf16 %v2452
    %v2933 = vunpack.c.l.s8.bf16 %v2453
    %v2934 = vunpack.c.l.s8.bf16 %v2454
    %v2935 = vunpack.c.l.s8.bf16 %v2455
    %v2936 = vunpack.c.l.s8.bf16 %v2456
    %v2937 = vunpack.c.l.s8.bf16 %v2457
    %v2938 = vunpack.c.l.s8.bf16 %v2458
    %v2939 = vunpack.c.l.s8.bf16 %v2459
    %v2940 = vunpack.c.l.s8.bf16 %v2460
    %v2941 = vunpack.c.l.s8.bf16 %v2461
    %v2942 = vunpack.c.l.s8.bf16 %v2462
    %v2943 = vunpack.c.h.s8.bf16 %v2448
    %v2944 = vunpack.c.h.s8.bf16 %v2449
    %v2945 = vunpack.c.h.s8.bf16 %v2450
    %v2946 = vunpack.c.h.s8.bf16 %v2451
    %v2947 = vunpack.c.h.s8.bf16 %v2452
    %v2948 = vunpack.c.h.s8.bf16 %v2453
    %v2949 = vunpack.c.h.s8.bf16 %v2454
    %v2950 = vunpack.c.h.s8.bf16 %v2455
    %v2951 = vunpack.c.h.s8.bf16 %v2456
    %v2952 = vunpack.c.h.s8.bf16 %v2457
    %v2953 = vunpack.c.h.s8.bf16 %v2458
    %v2954 = vunpack.c.h.s8.bf16 %v2459
    %v2955 = vunpack.c.h.s8.bf16 %v2460
    %v2956 = vunpack.c.h.s8.bf16 %v2461
    %v2957 = vunpack.c.h.s8.bf16 %v2462
    %v2958 = vunpack.c.l.s8.bf16 %v2463
    %v2959 = vunpack.c.l.s8.bf16 %v2464
    %v2960 = vunpack.c.l.s8.bf16 %v2465
    %v2961 = vunpack.c.l.s8.bf16 %v2466
    %v2962 = vunpack.c.l.s8.bf16 %v2467
    %v2963 = vunpack.c.l.s8.bf16 %v2468
    %v2964 = vunpack.c.l.s8.bf16 %v2469
    %v2965 = vunpack.c.l.s8.bf16 %v2470
    %v2966 = vunpack.c.l.s8.bf16 %v2471
    %v2967 = vunpack.c.l.s8.bf16 %v2472
    %v2968 = vunpack.c.l.s8.bf16 %v2473
    %v2969 = vunpack.c.l.s8.bf16 %v2474
    %v2970 = vunpack.c.l.s8.bf16 %v2475
    %v2971 = vunpack.c.l.s8.bf16 %v2476
    %v2972 = vunpack.c.l.s8.bf16 %v2477
    %v2973 = vunpack.c.h.s8.bf16 %v2463
    %v2974 = vunpack.c.h.s8.bf16 %v2464
    %v2975 = vunpack.c.h.s8.bf16 %v2465
    %v2976 = vunpack.c.h.s8.bf16 %v2466
    %v2977 = vunpack.c.h.s8.bf16 %v2467
    %v2978 = vunpack.c.h.s8.bf16 %v2468
    %v2979 = vunpack.c.h.s8.bf16 %v2469
    %v2980 = vunpack.c.h.s8.bf16 %v2470
    %v2981 = vunpack.c.h.s8.bf16 %v2471
    %v2982 = vunpack.c.h.s8.bf16 %v2472
    %v2983 = vunpack.c.h.s8.bf16 %v2473
    %v2984 = vunpack.c.h.s8.bf16 %v2474
    %v2985 = vunpack.c.h.s8.bf16 %v2475
    %v2986 = vunpack.c.h.s8.bf16 %v2476
    %v2987 = vunpack.c.h.s8.bf16 %v2477
    %v2988 = vunpack.c.l.s8.bf16 %v2478
    %v2989 = vunpack.c.l.s8.bf16 %v2479
    %v2990 = vunpack.c.l.s8.bf16 %v2480
    %v2991 = vunpack.c.l.s8.bf16 %v2481
    %v2992 = vunpack.c.l.s8.bf16 %v2482
    %v2993 = vunpack.c.l.s8.bf16 %v2483
    %v2994 = vunpack.c.l.s8.bf16 %v2484
    %v2995 = vunpack.c.l.s8.bf16 %v2485
    %v2996 = vunpack.c.l.s8.bf16 %v2486
    %v2997 = vunpack.c.l.s8.bf16 %v2487
    %v2998 = vunpack.c.l.s8.bf16 %v2488
    %v2999 = vunpack.c.l.s8.bf16 %v2489
    %v3000 = vunpack.c.l.s8.bf16 %v2490
    %v3001 = vunpack.c.l.s8.bf16 %v2491
    %v3002 = vunpack.c.l.s8.bf16 %v2492
    %v3003 = vunpack.c.h.s8.bf16 %v2478
    %v3004 = vunpack.c.h.s8.bf16 %v2479
    %v3005 = vunpack.c.h.s8.bf16 %v2480
    %v3006 = vunpack.c.h.s8.bf16 %v2481
    %v3007 = vunpack.c.h.s8.bf16 %v2482
    %v3008 = vunpack.c.h.s8.bf16 %v2483
    %v3009 = vunpack.c.h.s8.bf16 %v2484
    %v3010 = vunpack.c.h.s8.bf16 %v2485
    %v3011 = vunpack.c.h.s8.bf16 %v2486
    %v3012 = vunpack.c.h.s8.bf16 %v2487
    %v3013 = vunpack.c.h.s8.bf16 %v2488
    %v3014 = vunpack.c.h.s8.bf16 %v2489
    %v3015 = vunpack.c.h.s8.bf16 %v2490
    %v3016 = vunpack.c.h.s8.bf16 %v2491
    %v3017 = vunpack.c.h.s8.bf16 %v2492
    %v3018 = vunpack.c.l.s8.bf16 %v2493
    %v3019 = vunpack.c.l.s8.bf16 %v2494
    %v3020 = vunpack.c.l.s8.bf16 %v2495
    %v3021 = vunpack.c.l.s8.bf16 %v2496
    %v3022 = vunpack.c.l.s8.bf16 %v2497
    %v3023 = vunpack.c.l.s8.bf16 %v2498
    %v3024 = vunpack.c.l.s8.bf16 %v2499
    %v3025 = vunpack.c.l.s8.bf16 %v2500
    %v3026 = vunpack.c.l.s8.bf16 %v2501
    %v3027 = vunpack.c.l.s8.bf16 %v2502
    %v3028 = vunpack.c.l.s8.bf16 %v2503
    %v3029 = vunpack.c.l.s8.bf16 %v2504
    %v3030 = vunpack.c.l.s8.bf16 %v2505
    %v3031 = vunpack.c.l.s8.bf16 %v2506
    %v3032 = vunpack.c.l.s8.bf16 %v2507
    %v3033 = vunpack.c.h.s8.bf16 %v2493
    %v3034 = vunpack.c.h.s8.bf16 %v2494
    %v3035 = vunpack.c.h.s8.bf16 %v2495
    %v3036 = vunpack.c.h.s8.bf16 %v2496
    %v3037 = vunpack.c.h.s8.bf16 %v2497
    %v3038 = vunpack.c.h.s8.bf16 %v2498
    %v3039 = vunpack.c.h.s8.bf16 %v2499
    %v3040 = vunpack.c.h.s8.bf16 %v2500
    %v3041 = vunpack.c.h.s8.bf16 %v2501
    %v3042 = vunpack.c.h.s8.bf16 %v2502
    %v3043 = vunpack.c.h.s8.bf16 %v2503
    %v3044 = vunpack.c.h.s8.bf16 %v2504
    %v3045 = vunpack.c.h.s8.bf16 %v2505
    %v3046 = vunpack.c.h.s8.bf16 %v2506
    %v3047 = vunpack.c.h.s8.bf16 %v2507
    %v3048 = vunpack.c.l.s8.bf16 %v2508
    %v3049 = vunpack.c.l.s8.bf16 %v2509
    %v3050 = vunpack.c.l.s8.bf16 %v2510
    %v3051 = vunpack.c.l.s8.bf16 %v2511
    %v3052 = vunpack.c.l.s8.bf16 %v2512
    %v3053 = vunpack.c.l.s8.bf16 %v2513
    %v3054 = vunpack.c.l.s8.bf16 %v2514
    %v3055 = vunpack.c.l.s8.bf16 %v2515
    %v3056 = vunpack.c.l.s8.bf16 %v2516
    %v3057 = vunpack.c.l.s8.bf16 %v2517
    %v3058 = vunpack.c.l.s8.bf16 %v2518
    %v3059 = vunpack.c.l.s8.bf16 %v2519
    %v3060 = vunpack.c.l.s8.bf16 %v2520
    %v3061 = vunpack.c.l.s8.bf16 %v2521
    %v3062 = vunpack.c.l.s8.bf16 %v2522
    %v3063 = vunpack.c.h.s8.bf16 %v2508
    %v3064 = vunpack.c.h.s8.bf16 %v2509
    %v3065 = vunpack.c.h.s8.bf16 %v2510
    %v3066 = vunpack.c.h.s8.bf16 %v2511
    %v3067 = vunpack.c.h.s8.bf16 %v2512
    %v3068 = vunpack.c.h.s8.bf16 %v2513
    %v3069 = vunpack.c.h.s8.bf16 %v2514
    %v3070 = vunpack.c.h.s8.bf16 %v2515
    %v3071 = vunpack.c.h.s8.bf16 %v2516
    %v3072 = vunpack.c.h.s8.bf16 %v2517
    %v3073 = vunpack.c.h.s8.bf16 %v2518
    %v3074 = vunpack.c.h.s8.bf16 %v2519
    %v3075 = vunpack.c.h.s8.bf16 %v2520
    %v3076 = vunpack.c.h.s8.bf16 %v2521
    %v3077 = vunpack.c.h.s8.bf16 %v2522
    %v3078 = vunpack.c.l.s8.bf16 %v2523
    %v3079 = vunpack.c.l.s8.bf16 %v2524
    %v3080 = vunpack.c.l.s8.bf16 %v2525
    %v3081 = vunpack.c.l.s8.bf16 %v2526
    %v3082 = vunpack.c.l.s8.bf16 %v2527
    %v3083 = vunpack.c.l.s8.bf16 %v2528
    %v3084 = vunpack.c.l.s8.bf16 %v2529
    %v3085 = vunpack.c.l.s8.bf16 %v2530
    %v3086 = vunpack.c.l.s8.bf16 %v2531
    %v3087 = vunpack.c.l.s8.bf16 %v2532
    %v3088 = vunpack.c.l.s8.bf16 %v2533
    %v3089 = vunpack.c.l.s8.bf16 %v2534
    %v3090 = vunpack.c.l.s8.bf16 %v2535
    %v3091 = vunpack.c.l.s8.bf16 %v2536
    %v3092 = vunpack.c.l.s8.bf16 %v2537
    %v3093 = vunpack.c.h.s8.bf16 %v2523
    %v3094 = vunpack.c.h.s8.bf16 %v2524
    %v3095 = vunpack.c.h.s8.bf16 %v2525
    %v3096 = vunpack.c.h.s8.bf16 %v2526
    %v3097 = vunpack.c.h.s8.bf16 %v2527
    %v3098 = vunpack.c.h.s8.bf16 %v2528
    %v3099 = vunpack.c.h.s8.bf16 %v2529
    %v3100 = vunpack.c.h.s8.bf16 %v2530
    %v3101 = vunpack.c.h.s8.bf16 %v2531
    %v3102 = vunpack.c.h.s8.bf16 %v2532
    %v3103 = vunpack.c.h.s8.bf16 %v2533
    %v3104 = vunpack.c.h.s8.bf16 %v2534
    %v3105 = vunpack.c.h.s8.bf16 %v2535
    %v3106 = vunpack.c.h.s8.bf16 %v2536
    %v3107 = vunpack.c.h.s8.bf16 %v2537
    %v3108 = vunpack.c.l.s8.bf16 %v2538
    %v3109 = vunpack.c.l.s8.bf16 %v2539
    %v3110 = vunpack.c.l.s8.bf16 %v2540
    %v3111 = vunpack.c.l.s8.bf16 %v2541
    %v3112 = vunpack.c.l.s8.bf16 %v2542
    %v3113 = vunpack.c.l.s8.bf16 %v2543
    %v3114 = vunpack.c.l.s8.bf16 %v2544
    %v3115 = vunpack.c.l.s8.bf16 %v2545
    %v3116 = vunpack.c.l.s8.bf16 %v2546
    %v3117 = vunpack.c.l.s8.bf16 %v2547
    %v3118 = vunpack.c.l.s8.bf16 %v2548
    %v3119 = vunpack.c.l.s8.bf16 %v2549
    %v3120 = vunpack.c.l.s8.bf16 %v2550
    %v3121 = vunpack.c.l.s8.bf16 %v2551
    %v3122 = vunpack.c.l.s8.bf16 %v2552
    %v3123 = vunpack.c.h.s8.bf16 %v2538
    %v3124 = vunpack.c.h.s8.bf16 %v2539
    %v3125 = vunpack.c.h.s8.bf16 %v2540
    %v3126 = vunpack.c.h.s8.bf16 %v2541
    %v3127 = vunpack.c.h.s8.bf16 %v2542
    %v3128 = vunpack.c.h.s8.bf16 %v2543
    %v3129 = vunpack.c.h.s8.bf16 %v2544
    %v3130 = vunpack.c.h.s8.bf16 %v2545
    %v3131 = vunpack.c.h.s8.bf16 %v2546
    %v3132 = vunpack.c.h.s8.bf16 %v2547
    %v3133 = vunpack.c.h.s8.bf16 %v2548
    %v3134 = vunpack.c.h.s8.bf16 %v2549
    %v3135 = vunpack.c.h.s8.bf16 %v2550
    %v3136 = vunpack.c.h.s8.bf16 %v2551
    %v3137 = vunpack.c.h.s8.bf16 %v2552
    %v3138 = vunpack.c.l.s8.bf16 %v2553
    %v3139 = vunpack.c.l.s8.bf16 %v2554
    %v3140 = vunpack.c.l.s8.bf16 %v2555
    %v3141 = vunpack.c.l.s8.bf16 %v2556
    %v3142 = vunpack.c.l.s8.bf16 %v2557
    %v3143 = vunpack.c.l.s8.bf16 %v2558
    %v3144 = vunpack.c.l.s8.bf16 %v2559
    %v3145 = vunpack.c.l.s8.bf16 %v2560
    %v3146 = vunpack.c.l.s8.bf16 %v2561
    %v3147 = vunpack.c.l.s8.bf16 %v2562
    %v3148 = vunpack.c.l.s8.bf16 %v2563
    %v3149 = vunpack.c.l.s8.bf16 %v2564
    %v3150 = vunpack.c.l.s8.bf16 %v2565
    %v3151 = vunpack.c.l.s8.bf16 %v2566
    %v3152 = vunpack.c.l.s8.bf16 %v2567
    %v3153 = vunpack.c.h.s8.bf16 %v2553
    %v3154 = vunpack.c.h.s8.bf16 %v2554
    %v3155 = vunpack.c.h.s8.bf16 %v2555
    %v3156 = vunpack.c.h.s8.bf16 %v2556
    %v3157 = vunpack.c.h.s8.bf16 %v2557
    %v3158 = vunpack.c.h.s8.bf16 %v2558
    %v3159 = vunpack.c.h.s8.bf16 %v2559
    %v3160 = vunpack.c.h.s8.bf16 %v2560
    %v3161 = vunpack.c.h.s8.bf16 %v2561
    %v3162 = vunpack.c.h.s8.bf16 %v2562
    %v3163 = vunpack.c.h.s8.bf16 %v2563
    %v3164 = vunpack.c.h.s8.bf16 %v2564
    %v3165 = vunpack.c.h.s8.bf16 %v2565
    %v3166 = vunpack.c.h.s8.bf16 %v2566
    %v3167 = vunpack.c.h.s8.bf16 %v2567
    %v3168 = vunpack.c.l.s8.bf16 %v2568
    %v3169 = vunpack.c.l.s8.bf16 %v2569
    %v3170 = vunpack.c.l.s8.bf16 %v2570
    %v3171 = vunpack.c.l.s8.bf16 %v2571
    %v3172 = vunpack.c.l.s8.bf16 %v2572
    %v3173 = vunpack.c.l.s8.bf16 %v2573
    %v3174 = vunpack.c.l.s8.bf16 %v2574
    %v3175 = vunpack.c.l.s8.bf16 %v2575
    %v3176 = vunpack.c.l.s8.bf16 %v2576
    %v3177 = vunpack.c.l.s8.bf16 %v2577
    %v3178 = vunpack.c.l.s8.bf16 %v2578
    %v3179 = vunpack.c.l.s8.bf16 %v2579
    %v3180 = vunpack.c.l.s8.bf16 %v2580
    %v3181 = vunpack.c.l.s8.bf16 %v2581
    %v3182 = vunpack.c.l.s8.bf16 %v2582
    %v3183 = vunpack.c.h.s8.bf16 %v2568
    %v3184 = vunpack.c.h.s8.bf16 %v2569
    %v3185 = vunpack.c.h.s8.bf16 %v2570
    %v3186 = vunpack.c.h.s8.bf16 %v2571
    %v3187 = vunpack.c.h.s8.bf16 %v2572
    %v3188 = vunpack.c.h.s8.bf16 %v2573
    %v3189 = vunpack.c.h.s8.bf16 %v2574
    %v3190 = vunpack.c.h.s8.bf16 %v2575
    %v3191 = vunpack.c.h.s8.bf16 %v2576
    %v3192 = vunpack.c.h.s8.bf16 %v2577
    %v3193 = vunpack.c.h.s8.bf16 %v2578
    %v3194 = vunpack.c.h.s8.bf16 %v2579
    %v3195 = vunpack.c.h.s8.bf16 %v2580
    %v3196 = vunpack.c.h.s8.bf16 %v2581
    %v3197 = vunpack.c.h.s8.bf16 %v2582
    %v3198 = vunpack.c.l.s8.bf16 %v2583
    %v3199 = vunpack.c.l.s8.bf16 %v2584
    %v3200 = vunpack.c.l.s8.bf16 %v2585
    %v3201 = vunpack.c.l.s8.bf16 %v2586
    %v3202 = vunpack.c.l.s8.bf16 %v2587
    %v3203 = vunpack.c.l.s8.bf16 %v2588
    %v3204 = vunpack.c.l.s8.bf16 %v2589
    %v3205 = vunpack.c.l.s8.bf16 %v2590
    %v3206 = vunpack.c.l.s8.bf16 %v2591
    %v3207 = vunpack.c.l.s8.bf16 %v2592
    %v3208 = vunpack.c.l.s8.bf16 %v2593
    %v3209 = vunpack.c.l.s8.bf16 %v2594
    %v3210 = vunpack.c.l.s8.bf16 %v2595
    %v3211 = vunpack.c.l.s8.bf16 %v2596
    %v3212 = vunpack.c.l.s8.bf16 %v2597
    %v3213 = vunpack.c.h.s8.bf16 %v2583
    %v3214 = vunpack.c.h.s8.bf16 %v2584
    %v3215 = vunpack.c.h.s8.bf16 %v2585
    %v3216 = vunpack.c.h.s8.bf16 %v2586
    %v3217 = vunpack.c.h.s8.bf16 %v2587
    %v3218 = vunpack.c.h.s8.bf16 %v2588
    %v3219 = vunpack.c.h.s8.bf16 %v2589
    %v3220 = vunpack.c.h.s8.bf16 %v2590
    %v3221 = vunpack.c.h.s8.bf16 %v2591
    %v3222 = vunpack.c.h.s8.bf16 %v2592
    %v3223 = vunpack.c.h.s8.bf16 %v2593
    %v3224 = vunpack.c.h.s8.bf16 %v2594
    %v3225 = vunpack.c.h.s8.bf16 %v2595
    %v3226 = vunpack.c.h.s8.bf16 %v2596
    %v3227 = vunpack.c.h.s8.bf16 %v2597
    %v3228 = vunpack.c.l.s8.bf16 %v2598
    %v3229 = vunpack.c.l.s8.bf16 %v2599
    %v3230 = vunpack.c.l.s8.bf16 %v2600
    %v3231 = vunpack.c.l.s8.bf16 %v2601
    %v3232 = vunpack.c.l.s8.bf16 %v2602
    %v3233 = vunpack.c.l.s8.bf16 %v2603
    %v3234 = vunpack.c.l.s8.bf16 %v2604
    %v3235 = vunpack.c.l.s8.bf16 %v2605
    %v3236 = vunpack.c.l.s8.bf16 %v2606
    %v3237 = vunpack.c.l.s8.bf16 %v2607
    %v3238 = vunpack.c.l.s8.bf16 %v2608
    %v3239 = vunpack.c.l.s8.bf16 %v2609
    %v3240 = vunpack.c.l.s8.bf16 %v2610
    %v3241 = vunpack.c.l.s8.bf16 %v2611
    %v3242 = vunpack.c.l.s8.bf16 %v2612
    %v3243 = vunpack.c.h.s8.bf16 %v2598
    %v3244 = vunpack.c.h.s8.bf16 %v2599
    %v3245 = vunpack.c.h.s8.bf16 %v2600
    %v3246 = vunpack.c.h.s8.bf16 %v2601
    %v3247 = vunpack.c.h.s8.bf16 %v2602
    %v3248 = vunpack.c.h.s8.bf16 %v2603
    %v3249 = vunpack.c.h.s8.bf16 %v2604
    %v3250 = vunpack.c.h.s8.bf16 %v2605
    %v3251 = vunpack.c.h.s8.bf16 %v2606
    %v3252 = vunpack.c.h.s8.bf16 %v2607
    %v3253 = vunpack.c.h.s8.bf16 %v2608
    %v3254 = vunpack.c.h.s8.bf16 %v2609
    %v3255 = vunpack.c.h.s8.bf16 %v2610
    %v3256 = vunpack.c.h.s8.bf16 %v2611
    %v3257 = vunpack.c.h.s8.bf16 %v2612
    %v3258 = vunpack.c.l.s8.bf16 %v2613
    %v3259 = vunpack.c.l.s8.bf16 %v2614
    %v3260 = vunpack.c.l.s8.bf16 %v2615
    %v3261 = vunpack.c.l.s8.bf16 %v2616
    %v3262 = vunpack.c.l.s8.bf16 %v2617
    %v3263 = vunpack.c.l.s8.bf16 %v2618
    %v3264 = vunpack.c.l.s8.bf16 %v2619
    %v3265 = vunpack.c.l.s8.bf16 %v2620
    %v3266 = vunpack.c.l.s8.bf16 %v2621
    %v3267 = vunpack.c.l.s8.bf16 %v2622
    %v3268 = vunpack.c.l.s8.bf16 %v2623
    %v3269 = vunpack.c.l.s8.bf16 %v2624
    %v3270 = vunpack.c.l.s8.bf16 %v2625
    %v3271 = vunpack.c.l.s8.bf16 %v2626
    %v3272 = vunpack.c.l.s8.bf16 %v2627
    %v3273 = vunpack.c.h.s8.bf16 %v2613
    %v3274 = vunpack.c.h.s8.bf16 %v2614
    %v3275 = vunpack.c.h.s8.bf16 %v2615
    %v3276 = vunpack.c.h.s8.bf16 %v2616
    %v3277 = vunpack.c.h.s8.bf16 %v2617
    %v3278 = vunpack.c.h.s8.bf16 %v2618
    %v3279 = vunpack.c.h.s8.bf16 %v2619
    %v3280 = vunpack.c.h.s8.bf16 %v2620
    %v3281 = vunpack.c.h.s8.bf16 %v2621
    %v3282 = vunpack.c.h.s8.bf16 %v2622
    %v3283 = vunpack.c.h.s8.bf16 %v2623
    %v3284 = vunpack.c.h.s8.bf16 %v2624
    %v3285 = vunpack.c.h.s8.bf16 %v2625
    %v3286 = vunpack.c.h.s8.bf16 %v2626
    %v3287 = vunpack.c.h.s8.bf16 %v2627
    %v3288 = vunpack.c.l.s8.bf16 %v2628
    %v3289 = vunpack.c.l.s8.bf16 %v2629
    %v3290 = vunpack.c.l.s8.bf16 %v2630
    %v3291 = vunpack.c.l.s8.bf16 %v2631
    %v3292 = vunpack.c.l.s8.bf16 %v2632
    %v3293 = vunpack.c.l.s8.bf16 %v2633
    %v3294 = vunpack.c.l.s8.bf16 %v2634
    %v3295 = vunpack.c.l.s8.bf16 %v2635
    %v3296 = vunpack.c.l.s8.bf16 %v2636
    %v3297 = vunpack.c.l.s8.bf16 %v2637
    %v3298 = vunpack.c.l.s8.bf16 %v2638
    %v3299 = vunpack.c.l.s8.bf16 %v2639
    %v3300 = vunpack.c.l.s8.bf16 %v2640
    %v3301 = vunpack.c.l.s8.bf16 %v2641
    %v3302 = vunpack.c.l.s8.bf16 %v2642
    %v3303 = vunpack.c.h.s8.bf16 %v2628
    %v3304 = vunpack.c.h.s8.bf16 %v2629
    %v3305 = vunpack.c.h.s8.bf16 %v2630
    %v3306 = vunpack.c.h.s8.bf16 %v2631
    %v3307 = vunpack.c.h.s8.bf16 %v2632
    %v3308 = vunpack.c.h.s8.bf16 %v2633
    %v3309 = vunpack.c.h.s8.bf16 %v2634
    %v3310 = vunpack.c.h.s8.bf16 %v2635
    %v3311 = vunpack.c.h.s8.bf16 %v2636
    %v3312 = vunpack.c.h.s8.bf16 %v2637
    %v3313 = vunpack.c.h.s8.bf16 %v2638
    %v3314 = vunpack.c.h.s8.bf16 %v2639
    %v3315 = vunpack.c.h.s8.bf16 %v2640
    %v3316 = vunpack.c.h.s8.bf16 %v2641
    %v3317 = vunpack.c.h.s8.bf16 %v2642
    %v3318 = vunpack.c.l.s8.bf16 %v2643
    %v3319 = vunpack.c.l.s8.bf16 %v2644
    %v3320 = vunpack.c.l.s8.bf16 %v2645
    %v3321 = vunpack.c.l.s8.bf16 %v2646
    %v3322 = vunpack.c.l.s8.bf16 %v2647
    %v3323 = vunpack.c.l.s8.bf16 %v2648
    %v3324 = vunpack.c.l.s8.bf16 %v2649
    %v3325 = vunpack.c.l.s8.bf16 %v2650
    %v3326 = vunpack.c.l.s8.bf16 %v2651
    %v3327 = vunpack.c.l.s8.bf16 %v2652
    %v3328 = vunpack.c.l.s8.bf16 %v2653
    %v3329 = vunpack.c.l.s8.bf16 %v2654
    %v3330 = vunpack.c.l.s8.bf16 %v2655
    %v3331 = vunpack.c.l.s8.bf16 %v2656
    %v3332 = vunpack.c.l.s8.bf16 %v2657
    %v3333 = vunpack.c.h.s8.bf16 %v2643
    %v3334 = vunpack.c.h.s8.bf16 %v2644
    %v3335 = vunpack.c.h.s8.bf16 %v2645
    %v3336 = vunpack.c.h.s8.bf16 %v2646
    %v3337 = vunpack.c.h.s8.bf16 %v2647
    %v3338 = vunpack.c.h.s8.bf16 %v2648
    %v3339 = vunpack.c.h.s8.bf16 %v2649
    %v3340 = vunpack.c.h.s8.bf16 %v2650
    %v3341 = vunpack.c.h.s8.bf16 %v2651
    %v3342 = vunpack.c.h.s8.bf16 %v2652
    %v3343 = vunpack.c.h.s8.bf16 %v2653
    %v3344 = vunpack.c.h.s8.bf16 %v2654
    %v3345 = vunpack.c.h.s8.bf16 %v2655
    %v3346 = vunpack.c.h.s8.bf16 %v2656
    %v3347 = vunpack.c.h.s8.bf16 %v2657
    %v3348 = vunpack.c.l.s8.bf16 %v2658
    %v3349 = vunpack.c.l.s8.bf16 %v2659
    %v3350 = vunpack.c.l.s8.bf16 %v2660
    %v3351 = vunpack.c.l.s8.bf16 %v2661
    %v3352 = vunpack.c.l.s8.bf16 %v2662
    %v3353 = vunpack.c.l.s8.bf16 %v2663
    %v3354 = vunpack.c.l.s8.bf16 %v2664
    %v3355 = vunpack.c.l.s8.bf16 %v2665
    %v3356 = vunpack.c.l.s8.bf16 %v2666
    %v3357 = vunpack.c.l.s8.bf16 %v2667
    %v3358 = vunpack.c.l.s8.bf16 %v2668
    %v3359 = vunpack.c.l.s8.bf16 %v2669
    %v3360 = vunpack.c.l.s8.bf16 %v2670
    %v3361 = vunpack.c.l.s8.bf16 %v2671
    %v3362 = vunpack.c.l.s8.bf16 %v2672
    %v3363 = vunpack.c.h.s8.bf16 %v2658
    %v3364 = vunpack.c.h.s8.bf16 %v2659
    %v3365 = vunpack.c.h.s8.bf16 %v2660
    %v3366 = vunpack.c.h.s8.bf16 %v2661
    %v3367 = vunpack.c.h.s8.bf16 %v2662
    %v3368 = vunpack.c.h.s8.bf16 %v2663
    %v3369 = vunpack.c.h.s8.bf16 %v2664
    %v3370 = vunpack.c.h.s8.bf16 %v2665
    %v3371 = vunpack.c.h.s8.bf16 %v2666
    %v3372 = vunpack.c.h.s8.bf16 %v2667
    %v3373 = vunpack.c.h.s8.bf16 %v2668
    %v3374 = vunpack.c.h.s8.bf16 %v2669
    %v3375 = vunpack.c.h.s8.bf16 %v2670
    %v3376 = vunpack.c.h.s8.bf16 %v2671
    %v3377 = vunpack.c.h.s8.bf16 %v2672
    %v3378 = vunpack.c.l.s8.bf16 %v2673
    %v3379 = vunpack.c.l.s8.bf16 %v2674
    %v3380 = vunpack.c.l.s8.bf16 %v2675
    %v3381 = vunpack.c.l.s8.bf16 %v2676
    %v3382 = vunpack.c.l.s8.bf16 %v2677
    %v3383 = vunpack.c.l.s8.bf16 %v2678
    %v3384 = vunpack.c.l.s8.bf16 %v2679
    %v3385 = vunpack.c.l.s8.bf16 %v2680
    %v3386 = vunpack.c.l.s8.bf16 %v2681
    %v3387 = vunpack.c.l.s8.bf16 %v2682
    %v3388 = vunpack.c.l.s8.bf16 %v2683
    %v3389 = vunpack.c.l.s8.bf16 %v2684
    %v3390 = vunpack.c.l.s8.bf16 %v2685
    %v3391 = vunpack.c.l.s8.bf16 %v2686
    %v3392 = vunpack.c.l.s8.bf16 %v2687
    %v3393 = vunpack.c.h.s8.bf16 %v2673
    %v3394 = vunpack.c.h.s8.bf16 %v2674
    %v3395 = vunpack.c.h.s8.bf16 %v2675
    %v3396 = vunpack.c.h.s8.bf16 %v2676
    %v3397 = vunpack.c.h.s8.bf16 %v2677
    %v3398 = vunpack.c.h.s8.bf16 %v2678
    %v3399 = vunpack.c.h.s8.bf16 %v2679
    %v3400 = vunpack.c.h.s8.bf16 %v2680
    %v3401 = vunpack.c.h.s8.bf16 %v2681
    %v3402 = vunpack.c.h.s8.bf16 %v2682
    %v3403 = vunpack.c.h.s8.bf16 %v2683
    %v3404 = vunpack.c.h.s8.bf16 %v2684
    %v3405 = vunpack.c.h.s8.bf16 %v2685
    %v3406 = vunpack.c.h.s8.bf16 %v2686
    %v3407 = vunpack.c.h.s8.bf16 %v2687
    %v3408 = vpack.c.bf16 %v161, %v161
    %v3409 = vpack.c.bf16 %v162, %v162
    %v3410 = vpack.c.bf16 %v163, %v163
    %v3411 = vpack.c.bf16 %v164, %v164
    %v3412 = vpack.c.bf16 %v165, %v165
    %v3413 = vpack.c.bf16 %v166, %v166
    %3414 = vmatprep.subr.bf16.mxu0 %v2689
    %3415 = vmatpush1.bf16.msra.mxu0 %v2688
    %3416 = vmatprep.subr.bf16.mxu0 %v2704
    %3417 = vmatpush1.bf16.msra.mxu0 %v2703
    %3418 = vmatprep.subr.bf16.mxu0 %v2719
    %3419 = vmatpush1.bf16.msra.mxu0 %v2718
    %3420 = vmatprep.subr.bf16.mxu0 %v2734
    %3421 = vmatpush1.bf16.msra.mxu0 %v2733
    %3422 = vmatprep.subr.bf16.mxu0 %v2749
    %3423 = vmatpush1.bf16.msra.mxu0 %v2748
    %3424 = vmatprep.subr.bf16.mxu0 %v2764
    %3425 = vmatpush1.bf16.msra.mxu0 %v2763
    %3426 = vmatprep.subr.bf16.mxu0 %v2779
    %3427 = vmatpush1.bf16.msra.mxu0 %v2778
    %3428 = vmatprep.subr.bf16.mxu0 %v2794
    %3429 = vmatpush1.bf16.msra.mxu0 %v2793
    %3430 = vmatprep.subr.bf16.mxu0 %v2809
    %3431 = vmatpush1.bf16.msra.mxu0 %v2808
    %3432 = vmatprep.subr.bf16.mxu0 %v2824
    %3433 = vmatpush1.bf16.msra.mxu0 %v2823
    %3434 = vmatprep.subr.bf16.mxu0 %v2839
    %3435 = vmatpush1.bf16.msra.mxu0 %v2838
    %3436 = vmatprep.subr.bf16.mxu0 %v2854
    %3437 = vmatpush1.bf16.msra.mxu0 %v2853
    %3438 = vmatprep.subr.bf16.mxu0 %v2869
    %3439 = vmatpush1.bf16.msra.mxu0 %v2868
    %3440 = vmatprep.subr.bf16.mxu0 %v2884
    %3441 = vmatpush1.bf16.msra.mxu0 %v2883
    %3442 = vmatprep.subr.bf16.mxu0 %v2899
    %3443 = vmatpush1.bf16.msra.mxu0 %v2898
    %3444 = vmatprep.subr.bf16.mxu0 %v2914
    %3445 = vmatpush1.bf16.msra.mxu0 %v2913
    %3446 = vmatprep.mubr.bf16.mxu0 %v3409
    %3447 = vmatmul.mubr.bf16.gmra.mrb[0].mxu0 %v3408
    %v3448 = vpop.f32.mrb[0].mxu0
    %v3449 = vadd.f32 0.0, %v3448
    %v3450 = vpop.f32.mrb[0].mxu0
    %v3451 = vadd.f32 0.0, %v3450
    %v3452 = vpop.f32.mrb[0].mxu0
    %v3453 = vpop.f32.mrb[0].mxu0
    %3454 = vdwg.mxu0
    %3455 = vmatprep.subr.bf16.mxu0 %v2929
    %3456 = vmatpush1.bf16.msra.mxu0 %v2928
    %3457 = vmatprep.subr.bf16.mxu0 %v2944
    %3458 = vmatpush1.bf16.msra.mxu0 %v2943
    %3459 = vmatprep.subr.bf16.mxu0 %v2959
    %3460 = vmatpush1.bf16.msra.mxu0 %v2958
    %3461 = vmatprep.subr.bf16.mxu0 %v2974
    %3462 = vmatpush1.bf16.msra.mxu0 %v2973
    %3463 = vmatprep.subr.bf16.mxu0 %v2989
    %3464 = vmatpush1.bf16.msra.mxu0 %v2988
    %3465 = vmatprep.subr.bf16.mxu0 %v3004
    %3466 = vmatpush1.bf16.msra.mxu0 %v3003
    %3467 = vmatprep.subr.bf16.mxu0 %v3019
    %3468 = vmatpush1.bf16.msra.mxu0 %v3018
    %3469 = vmatprep.subr.bf16.mxu0 %v3034
    %3470 = vmatpush1.bf16.msra.mxu0 %v3033
    %3471 = vmatprep.subr.bf16.mxu0 %v3049
    %3472 = vmatpush1.bf16.msra.mxu0 %v3048
    %3473 = vmatprep.subr.bf16.mxu0 %v3064
    %3474 = vmatpush1.bf16.msra.mxu0 %v3063
    %3475 = vmatprep.subr.bf16.mxu0 %v3079
    %3476 = vmatpush1.bf16.msra.mxu0 %v3078
    %3477 = vmatprep.subr.bf16.mxu0 %v3094
    %3478 = vmatpush1.bf16.msra.mxu0 %v3093
    %3479 = vmatprep.subr.bf16.mxu0 %v3109
    %3480 = vmatpush1.bf16.msra.mxu0 %v3108
    %3481 = vmatprep.subr.bf16.mxu0 %v3124
    %3482 = vmatpush1.bf16.msra.mxu0 %v3123
    %3483 = vmatprep.subr.bf16.mxu0 %v3139
    %3484 = vmatpush1.bf16.msra.mxu0 %v3138
    %3485 = vmatprep.subr.bf16.mxu0 %v3154
    %3486 = vmatpush1.bf16.msra.mxu0 %v3153
    %3487 = vmatprep.mubr.bf16.mxu0 %v3411
    %3488 = vmatmul.mubr.bf16.gmra.mrb[0].mxu0 %v3410
    %v3489 = vpop.f32.mrb[0].mxu0
    %v3490 = vadd.f32 %v3449, %v3489
    %v3491 = vpop.f32.mrb[0].mxu0
    %v3492 = vadd.f32 %v3451, %v3491
    %v3493 = vpop.f32.mrb[0].mxu0
    %v3494 = vpop.f32.mrb[0].mxu0
    %3495 = vdwg.mxu0
    %3496 = vmatprep.subr.bf16.mxu0 %v3169
    %3497 = vmatpush1.bf16.msra.mxu0 %v3168
    %3498 = vmatprep.subr.bf16.mxu0 %v3184
    %3499 = vmatpush1.bf16.msra.mxu0 %v3183
    %3500 = vmatprep.subr.bf16.mxu0 %v3199
    %3501 = vmatpush1.bf16.msra.mxu0 %v3198
    %3502 = vmatprep.subr.bf16.mxu0 %v3214
    %3503 = vmatpush1.bf16.msra.mxu0 %v3213
    %3504 = vmatprep.subr.bf16.mxu0 %v3229
    %3505 = vmatpush1.bf16.msra.mxu0 %v3228
    %3506 = vmatprep.subr.bf16.mxu0 %v3244
    %3507 = vmatpush1.bf16.msra.mxu0 %v3243
    %3508 = vmatprep.subr.bf16.mxu0 %v3259
    %3509 = vmatpush1.bf16.msra.mxu0 %v3258
    %3510 = vmatprep.subr.bf16.mxu0 %v3274
    %3511 = vmatpush1.bf16.msra.mxu0 %v3273
    %3512 = vmatprep.subr.bf16.mxu0 %v3289
    %3513 = vmatpush1.bf16.msra.mxu0 %v3288
    %3514 = vmatprep.subr.bf16.mxu0 %v3304
    %3515 = vmatpush1.bf16.msra.mxu0 %v3303
    %3516 = vmatprep.subr.bf16.mxu0 %v3319
    %3517 = vmatpush1.bf16.msra.mxu0 %v3318
    %3518 = vmatprep.subr.bf16.mxu0 %v3334
    %3519 = vmatpush1.bf16.msra.mxu0 %v3333
    %3520 = vmatprep.subr.bf16.mxu0 %v3349
    %3521 = vmatpush1.bf16.msra.mxu0 %v3348
    %3522 = vmatprep.subr.bf16.mxu0 %v3364
    %3523 = vmatpush1.bf16.msra.mxu0 %v3363
    %3524 = vmatprep.subr.bf16.mxu0 %v3379
    %3525 = vmatpush1.bf16.msra.mxu0 %v3378
    %3526 = vmatprep.subr.bf16.mxu0 %v3394
    %3527 = vmatpush1.bf16.msra.mxu0 %v3393
    %3528 = vmatprep.mubr.bf16.mxu0 %v3413
    %3529 = vmatmul.mubr.bf16.gmra.mrb[0].mxu0 %v3412
    %v3530 = vpop.f32.mrb[0].mxu0
    %v3531 = vadd.f32 %v3490, %v3530
    %v3532 = vpop.f32.mrb[0].mxu0
    %v3533 = vadd.f32 %v3492, %v3532
    %v3534 = vpop.f32.mrb[0].mxu0
    %v3535 = vpop.f32.mrb[0].mxu0
    %3536 = vdwg.mxu0
    %3537 = vmatprep.subr.bf16.mxu0 %v2691
    %3538 = vmatpush1.bf16.msra.mxu0 %v2690
    %3539 = vmatprep.subr.bf16.mxu0 %v2706
    %3540 = vmatpush1.bf16.msra.mxu0 %v2705
    %3541 = vmatprep.subr.bf16.mxu0 %v2721
    %3542 = vmatpush1.bf16.msra.mxu0 %v2720
    %3543 = vmatprep.subr.bf16.mxu0 %v2736
    %3544 = vmatpush1.bf16.msra.mxu0 %v2735
    %3545 = vmatprep.subr.bf16.mxu0 %v2751
    %3546 = vmatpush1.bf16.msra.mxu0 %v2750
    %3547 = vmatprep.subr.bf16.mxu0 %v2766
    %3548 = vmatpush1.bf16.msra.mxu0 %v2765
    %3549 = vmatprep.subr.bf16.mxu0 %v2781
    %3550 = vmatpush1.bf16.msra.mxu0 %v2780
    %3551 = vmatprep.subr.bf16.mxu0 %v2796
    %3552 = vmatpush1.bf16.msra.mxu0 %v2795
    %3553 = vmatprep.subr.bf16.mxu0 %v2811
    %3554 = vmatpush1.bf16.msra.mxu0 %v2810
    %3555 = vmatprep.subr.bf16.mxu0 %v2826
    %3556 = vmatpush1.bf16.msra.mxu0 %v2825
    %3557 = vmatprep.subr.bf16.mxu0 %v2841
    %3558 = vmatpush1.bf16.msra.mxu0 %v2840
    %3559 = vmatprep.subr.bf16.mxu0 %v2856
    %3560 = vmatpush1.bf16.msra.mxu0 %v2855
    %3561 = vmatprep.subr.bf16.mxu0 %v2871
    %3562 = vmatpush1.bf16.msra.mxu0 %v2870
    %3563 = vmatprep.subr.bf16.mxu0 %v2886
    %3564 = vmatpush1.bf16.msra.mxu0 %v2885
    %3565 = vmatprep.subr.bf16.mxu0 %v2901
    %3566 = vmatpush1.bf16.msra.mxu0 %v2900
    %3567 = vmatprep.subr.bf16.mxu0 %v2916
    %3568 = vmatpush1.bf16.msra.mxu0 %v2915
    %3569 = vmatprep.mubr.bf16.mxu0 %v3409
    %3570 = vmatmul.mubr.bf16.gmra.mrb[0].mxu0 %v3408
    %v3571 = vpop.f32.mrb[0].mxu0
    %v3572 = vadd.f32 0.0, %v3571
    %v3573 = vpop.f32.mrb[0].mxu0
    %v3574 = vadd.f32 0.0, %v3573
    %v3575 = vpop.f32.mrb[0].mxu0
    %v3576 = vpop.f32.mrb[0].mxu0
    %3577 = vdwg.mxu0
    %3578 = vmatprep.subr.bf16.mxu0 %v2931
    %3579 = vmatpush1.bf16.msra.mxu0 %v2930
    %3580 = vmatprep.subr.bf16.mxu0 %v2946
    %3581 = vmatpush1.bf16.msra.mxu0 %v2945
    %3582 = vmatprep.subr.bf16.mxu0 %v2961
    %3583 = vmatpush1.bf16.msra.mxu0 %v2960
    %3584 = vmatprep.subr.bf16.mxu0 %v2976
    %3585 = vmatpush1.bf16.msra.mxu0 %v2975
    %3586 = vmatprep.subr.bf16.mxu0 %v2991
    %3587 = vmatpush1.bf16.msra.mxu0 %v2990
    %3588 = vmatprep.subr.bf16.mxu0 %v3006
    %3589 = vmatpush1.bf16.msra.mxu0 %v3005
    %3590 = vmatprep.subr.bf16.mxu0 %v3021
    %3591 = vmatpush1.bf16.msra.mxu0 %v3020
    %3592 = vmatprep.subr.bf16.mxu0 %v3036
    %3593 = vmatpush1.bf16.msra.mxu0 %v3035
    %3594 = vmatprep.subr.bf16.mxu0 %v3051
    %3595 = vmatpush1.bf16.msra.mxu0 %v3050
    %3596 = vmatprep.subr.bf16.mxu0 %v3066
    %3597 = vmatpush1.bf16.msra.mxu0 %v3065
    %3598 = vmatprep.subr.bf16.mxu0 %v3081
    %3599 = vmatpush1.bf16.msra.mxu0 %v3080
    %3600 = vmatprep.subr.bf16.mxu0 %v3096
    %3601 = vmatpush1.bf16.msra.mxu0 %v3095
    %3602 = vmatprep.subr.bf16.mxu0 %v3111
    %3603 = vmatpush1.bf16.msra.mxu0 %v3110
    %3604 = vmatprep.subr.bf16.mxu0 %v3126
    %3605 = vmatpush1.bf16.msra.mxu0 %v3125
    %3606 = vmatprep.subr.bf16.mxu0 %v3141
    %3607 = vmatpush1.bf16.msra.mxu0 %v3140
    %3608 = vmatprep.subr.bf16.mxu0 %v3156
    %3609 = vmatpush1.bf16.msra.mxu0 %v3155
    %3610 = vmatprep.mubr.bf16.mxu0 %v3411
    %3611 = vmatmul.mubr.bf16.gmra.mrb[0].mxu0 %v3410
    %v3612 = vpop.f32.mrb[0].mxu0
    %v3613 = vadd.f32 %v3572, %v3612
    %v3614 = vpop.f32.mrb[0].mxu0
    %v3615 = vadd.f32 %v3574, %v3614
    %v3616 = vpop.f32.mrb[0].mxu0
    %v3617 = vpop.f32.mrb[0].mxu0
    %3618 = vdwg.mxu0
    %3619 = vmatprep.subr.bf16.mxu0 %v3171
    %3620 = vmatpush1.bf16.msra.mxu0 %v3170
    %3621 = vmatprep.subr.bf16.mxu0 %v3186
    %3622 = vmatpush1.bf16.msra.mxu0 %v3185
    %3623 = vmatprep.subr.bf16.mxu0 %v3201
    %3624 = vmatpush1.bf16.msra.mxu0 %v3200
    %3625 = vmatprep.subr.bf16.mxu0 %v3216
    %3626 = vmatpush1.bf16.msra.mxu0 %v3215
    %3627 = vmatprep.subr.bf16.mxu0 %v3231
    %3628 = vmatpush1.bf16.msra.mxu0 %v3230
    %3629 = vmatprep.subr.bf16.mxu0 %v3246
    %3630 = vmatpush1.bf16.msra.mxu0 %v3245
    %3631 = vmatprep.subr.bf16.mxu0 %v3261
    %3632 = vmatpush1.bf16.msra.mxu0 %v3260
    %3633 = vmatprep.subr.bf16.mxu0 %v3276
    %3634 = vmatpush1.bf16.msra.mxu0 %v3275
    %3635 = vmatprep.subr.bf16.mxu0 %v3291
    %3636 = vmatpush1.bf16.msra.mxu0 %v3290
    %3637 = vmatprep.subr.bf16.mxu0 %v3306
    %3638 = vmatpush1.bf16.msra.mxu0 %v3305
    %3639 = vmatprep.subr.bf16.mxu0 %v3321
    %3640 = vmatpush1.bf16.msra.mxu0 %v3320
    %3641 = vmatprep.subr.bf16.mxu0 %v3336
    %3642 = vmatpush1.bf16.msra.mxu0 %v3335
    %3643 = vmatprep.subr.bf16.mxu0 %v3351
    %3644 = vmatpush1.bf16.msra.mxu0 %v3350
    %3645 = vmatprep.subr.bf16.mxu0 %v3366
    %3646 = vmatpush1.bf16.msra.mxu0 %v3365
    %3647 = vmatprep.subr.bf16.mxu0 %v3381
    %3648 = vmatpush1.bf16.msra.mxu0 %v3380
    %3649 = vmatprep.subr.bf16.mxu0 %v3396
    %3650 = vmatpush1.bf16.msra.mxu0 %v3395
    %3651 = vmatprep.mubr.bf16.mxu0 %v3413
    %3652 = vmatmul.mubr.bf16.gmra.mrb[0].mxu0 %v3412
    %v3653 = vpop.f32.mrb[0].mxu0
    %v3654 = vadd.f32 %v3613, %v3653
    %v3655 = vpop.f32.mrb[0].mxu0
    %v3656 = vadd.f32 %v3615, %v3655
    %v3657 = vpop.f32.mrb[0].mxu0
    %v3658 = vpop.f32.mrb[0].mxu0
    %3659 = vdwg.mxu0
    %3660 = vmatprep.subr.bf16.mxu0 %v2693
    %3661 = vmatpush1.bf16.msra.mxu0 %v2692
    %3662 = vmatprep.subr.bf16.mxu0 %v2708
    %3663 = vmatpush1.bf16.msra.mxu0 %v2707
    %3664 = vmatprep.subr.bf16.mxu0 %v2723
    %3665 = vmatpush1.bf16.msra.mxu0 %v2722
    %3666 = vmatprep.subr.bf16.mxu0 %v2738
    %3667 = vmatpush1.bf16.msra.mxu0 %v2737
    %3668 = vmatprep.subr.bf16.mxu0 %v2753
    %3669 = vmatpush1.bf16.msra.mxu0 %v2752
    %3670 = vmatprep.subr.bf16.mxu0 %v2768
    %3671 = vmatpush1.bf16.msra.mxu0 %v2767
    %3672 = vmatprep.subr.bf16.mxu0 %v2783
    %3673 = vmatpush1.bf16.msra.mxu0 %v2782
    %3674 = vmatprep.subr.bf16.mxu0 %v2798
    %3675 = vmatpush1.bf16.msra.mxu0 %v2797
    %3676 = vmatprep.subr.bf16.mxu0 %v2813
    %3677 = vmatpush1.bf16.msra.mxu0 %v2812
    %3678 = vmatprep.subr.bf16.mxu0 %v2828
    %3679 = vmatpush1.bf16.msra.mxu0 %v2827
    %3680 = vmatprep.subr.bf16.mxu0 %v2843
    %3681 = vmatpush1.bf16.msra.mxu0 %v2842
    %3682 = vmatprep.subr.bf16.mxu0 %v2858
    %3683 = vmatpush1.bf16.msra.mxu0 %v2857
    %3684 = vmatprep.subr.bf16.mxu0 %v2873
    %3685 = vmatpush1.bf16.msra.mxu0 %v2872
    %3686 = vmatprep.subr.bf16.mxu0 %v2888
    %3687 = vmatpush1.bf16.msra.mxu0 %v2887
    %3688 = vmatprep.subr.bf16.mxu0 %v2903
    %3689 = vmatpush1.bf16.msra.mxu0 %v2902
    %3690 = vmatprep.subr.bf16.mxu0 %v2918
    %3691 = vmatpush1.bf16.msra.mxu0 %v2917
    %3692 = vmatprep.mubr.bf16.mxu0 %v3409
    %3693 = vmatmul.mubr.bf16.gmra.mrb[0].mxu0 %v3408
    %v3694 = vpop.f32.mrb[0].mxu0
    %v3695 = vadd.f32 0.0, %v3694
    %v3696 = vpop.f32.mrb[0].mxu0
    %v3697 = vadd.f32 0.0, %v3696
    %v3698 = vpop.f32.mrb[0].mxu0
    %v3699 = vpop.f32.mrb[0].mxu0
    %3700 = vdwg.mxu0
    %3701 = vmatprep.subr.bf16.mxu0 %v2933
    %3702 = vmatpush1.bf16.msra.mxu0 %v2932
    %3703 = vmatprep.subr.bf16.mxu0 %v2948
    %3704 = vmatpush1.bf16.msra.mxu0 %v2947
    %3705 = vmatprep.subr.bf16.mxu0 %v2963
    %3706 = vmatpush1.bf16.msra.mxu0 %v2962
    %3707 = vmatprep.subr.bf16.mxu0 %v2978
    %3708 = vmatpush1.bf16.msra.mxu0 %v2977
    %3709 = vmatprep.subr.bf16.mxu0 %v2993
    %3710 = vmatpush1.bf16.msra.mxu0 %v2992
    %3711 = vmatprep.subr.bf16.mxu0 %v3008
    %3712 = vmatpush1.bf16.msra.mxu0 %v3007
    %3713 = vmatprep.subr.bf16.mxu0 %v3023
    %3714 = vmatpush1.bf16.msra.mxu0 %v3022
    %3715 = vmatprep.subr.bf16.mxu0 %v3038
    %3716 = vmatpush1.bf16.msra.mxu0 %v3037
    %3717 = vmatprep.subr.bf16.mxu0 %v3053
    %3718 = vmatpush1.bf16.msra.mxu0 %v3052
    %3719 = vmatprep.subr.bf16.mxu0 %v3068
    %3720 = vmatpush1.bf16.msra.mxu0 %v3067
    %3721 = vmatprep.subr.bf16.mxu0 %v3083
    %3722 = vmatpush1.bf16.msra.mxu0 %v3082
    %3723 = vmatprep.subr.bf16.mxu0 %v3098
    %3724 = vmatpush1.bf16.msra.mxu0 %v3097
    %3725 = vmatprep.subr.bf16.mxu0 %v3113
    %3726 = vmatpush1.bf16.msra.mxu0 %v3112
    %3727 = vmatprep.subr.bf16.mxu0 %v3128
    %3728 = vmatpush1.bf16.msra.mxu0 %v3127
    %3729 = vmatprep.subr.bf16.mxu0 %v3143
    %3730 = vmatpush1.bf16.msra.mxu0 %v3142
    %3731 = vmatprep.subr.bf16.mxu0 %v3158
    %3732 = vmatpush1.bf16.msra.mxu0 %v3157
    %3733 = vmatprep.mubr.bf16.mxu0 %v3411
    %3734 = vmatmul.mubr.bf16.gmra.mrb[0].mxu0 %v3410
    %v3735 = vpop.f32.mrb[0].mxu0
    %v3736 = vadd.f32 %v3695, %v3735
    %v3737 = vpop.f32.mrb[0].mxu0
    %v3738 = vadd.f32 %v3697, %v3737
    %v3739 = vpop.f32.mrb[0].mxu0
    %v3740 = vpop.f32.mrb[0].mxu0
    %3741 = vdwg.mxu0
    %3742 = vmatprep.subr.bf16.mxu0 %v3173
    %3743 = vmatpush1.bf16.msra.mxu0 %v3172
    %3744 = vmatprep.subr.bf16.mxu0 %v3188
    %3745 = vmatpush1.bf16.msra.mxu0 %v3187
    %3746 = vmatprep.subr.bf16.mxu0 %v3203
    %3747 = vmatpush1.bf16.msra.mxu0 %v3202
    %3748 = vmatprep.subr.bf16.mxu0 %v3218
    %3749 = vmatpush1.bf16.msra.mxu0 %v3217
    %3750 = vmatprep.subr.bf16.mxu0 %v3233
    %3751 = vmatpush1.bf16.msra.mxu0 %v3232
    %3752 = vmatprep.subr.bf16.mxu0 %v3248
    %3753 = vmatpush1.bf16.msra.mxu0 %v3247
    %3754 = vmatprep.subr.bf16.mxu0 %v3263
    %3755 = vmatpush1.bf16.msra.mxu0 %v3262
    %3756 = vmatprep.subr.bf16.mxu0 %v3278
    %3757 = vmatpush1.bf16.msra.mxu0 %v3277
    %3758 = vmatprep.subr.bf16.mxu0 %v3293
    %3759 = vmatpush1.bf16.msra.mxu0 %v3292
    %3760 = vmatprep.subr.bf16.mxu0 %v3308
    %3761 = vmatpush1.bf16.msra.mxu0 %v3307
    %3762 = vmatprep.subr.bf16.mxu0 %v3323
    %3763 = vmatpush1.bf16.msra.mxu0 %v3322
    %3764 = vmatprep.subr.bf16.mxu0 %v3338
    %3765 = vmatpush1.bf16.msra.mxu0 %v3337
    %3766 = vmatprep.subr.bf16.mxu0 %v3353
    %3767 = vmatpush1.bf16.msra.mxu0 %v3352
    %3768 = vmatprep.subr.bf16.mxu0 %v3368
    %3769 = vmatpush1.bf16.msra.mxu0 %v3367
    %3770 = vmatprep.subr.bf16.mxu0 %v3383
    %3771 = vmatpush1.bf16.msra.mxu0 %v3382
    %3772 = vmatprep.subr.bf16.mxu0 %v3398
    %3773 = vmatpush1.bf16.msra.mxu0 %v3397
    %3774 = vmatprep.mubr.bf16.mxu0 %v3413
    %3775 = vmatmul.mubr.bf16.gmra.mrb[0].mxu0 %v3412
    %v3776 = vpop.f32.mrb[0].mxu0
    %v3777 = vadd.f32 %v3736, %v3776
    %v3778 = vpop.f32.mrb[0].mxu0
    %v3779 = vadd.f32 %v3738, %v3778
    %v3780 = vpop.f32.mrb[0].mxu0
    %v3781 = vpop.f32.mrb[0].mxu0
    %3782 = vdwg.mxu0
    %3783 = vmatprep.subr.bf16.mxu0 %v2695
    %3784 = vmatpush1.bf16.msra.mxu0 %v2694
    %3785 = vmatprep.subr.bf16.mxu0 %v2710
    %3786 = vmatpush1.bf16.msra.mxu0 %v2709
    %3787 = vmatprep.subr.bf16.mxu0 %v2725
    %3788 = vmatpush1.bf16.msra.mxu0 %v2724
    %3789 = vmatprep.subr.bf16.mxu0 %v2740
    %3790 = vmatpush1.bf16.msra.mxu0 %v2739
    %3791 = vmatprep.subr.bf16.mxu0 %v2755
    %3792 = vmatpush1.bf16.msra.mxu0 %v2754
    %3793 = vmatprep.subr.bf16.mxu0 %v2770
    %3794 = vmatpush1.bf16.msra.mxu0 %v2769
    %3795 = vmatprep.subr.bf16.mxu0 %v2785
    %3796 = vmatpush1.bf16.msra.mxu0 %v2784
    %3797 = vmatprep.subr.bf16.mxu0 %v2800
    %3798 = vmatpush1.bf16.msra.mxu0 %v2799
    %3799 = vmatprep.subr.bf16.mxu0 %v2815
    %3800 = vmatpush1.bf16.msra.mxu0 %v2814
    %3801 = vmatprep.subr.bf16.mxu0 %v2830
    %3802 = vmatpush1.bf16.msra.mxu0 %v2829
    %3803 = vmatprep.subr.bf16.mxu0 %v2845
    %3804 = vmatpush1.bf16.msra.mxu0 %v2844
    %3805 = vmatprep.subr.bf16.mxu0 %v2860
    %3806 = vmatpush1.bf16.msra.mxu0 %v2859
    %3807 = vmatprep.subr.bf16.mxu0 %v2875
    %3808 = vmatpush1.bf16.msra.mxu0 %v2874
    %3809 = vmatprep.subr.bf16.mxu0 %v2890
    %3810 = vmatpush1.bf16.msra.mxu0 %v2889
    %3811 = vmatprep.subr.bf16.mxu0 %v2905
    %3812 = vmatpush1.bf16.msra.mxu0 %v2904
    %3813 = vmatprep.subr.bf16.mxu0 %v2920
    %3814 = vmatpush1.bf16.msra.mxu0 %v2919
    %3815 = vmatprep.mubr.bf16.mxu0 %v3409
    %3816 = vmatmul.mubr.bf16.gmra.mrb[0].mxu0 %v3408
    %v3817 = vpop.f32.mrb[0].mxu0
    %v3818 = vadd.f32 0.0, %v3817
    %v3819 = vpop.f32.mrb[0].mxu0
    %v3820 = vadd.f32 0.0, %v3819
    %v3821 = vpop.f32.mrb[0].mxu0
    %v3822 = vpop.f32.mrb[0].mxu0
    %3823 = vdwg.mxu0
    %3824 = vmatprep.subr.bf16.mxu0 %v2935
    %3825 = vmatpush1.bf16.msra.mxu0 %v2934
    %3826 = vmatprep.subr.bf16.mxu0 %v2950
    %3827 = vmatpush1.bf16.msra.mxu0 %v2949
    %3828 = vmatprep.subr.bf16.mxu0 %v2965
    %3829 = vmatpush1.bf16.msra.mxu0 %v2964
    %3830 = vmatprep.subr.bf16.mxu0 %v2980
    %3831 = vmatpush1.bf16.msra.mxu0 %v2979
    %3832 = vmatprep.subr.bf16.mxu0 %v2995
    %3833 = vmatpush1.bf16.msra.mxu0 %v2994
    %3834 = vmatprep.subr.bf16.mxu0 %v3010
    %3835 = vmatpush1.bf16.msra.mxu0 %v3009
    %3836 = vmatprep.subr.bf16.mxu0 %v3025
    %3837 = vmatpush1.bf16.msra.mxu0 %v3024
    %3838 = vmatprep.subr.bf16.mxu0 %v3040
    %3839 = vmatpush1.bf16.msra.mxu0 %v3039
    %3840 = vmatprep.subr.bf16.mxu0 %v3055
    %3841 = vmatpush1.bf16.msra.mxu0 %v3054
    %3842 = vmatprep.subr.bf16.mxu0 %v3070
    %3843 = vmatpush1.bf16.msra.mxu0 %v3069
    %3844 = vmatprep.subr.bf16.mxu0 %v3085
    %3845 = vmatpush1.bf16.msra.mxu0 %v3084
    %3846 = vmatprep.subr.bf16.mxu0 %v3100
    %3847 = vmatpush1.bf16.msra.mxu0 %v3099
    %3848 = vmatprep.subr.bf16.mxu0 %v3115
    %3849 = vmatpush1.bf16.msra.mxu0 %v3114
    %3850 = vmatprep.subr.bf16.mxu0 %v3130
    %3851 = vmatpush1.bf16.msra.mxu0 %v3129
    %3852 = vmatprep.subr.bf16.mxu0 %v3145
    %3853 = vmatpush1.bf16.msra.mxu0 %v3144
    %3854 = vmatprep.subr.bf16.mxu0 %v3160
    %3855 = vmatpush1.bf16.msra.mxu0 %v3159
    %3856 = vmatprep.mubr.bf16.mxu0 %v3411
    %3857 = vmatmul.mubr.bf16.gmra.mrb[0].mxu0 %v3410
    %v3858 = vpop.f32.mrb[0].mxu0
    %v3859 = vadd.f32 %v3818, %v3858
    %v3860 = vpop.f32.mrb[0].mxu0
    %v3861 = vadd.f32 %v3820, %v3860
    %v3862 = vpop.f32.mrb[0].mxu0
    %v3863 = vpop.f32.mrb[0].mxu0
    %3864 = vdwg.mxu0
    %3865 = vmatprep.subr.bf16.mxu0 %v3175
    %3866 = vmatpush1.bf16.msra.mxu0 %v3174
    %3867 = vmatprep.subr.bf16.mxu0 %v3190
    %3868 = vmatpush1.bf16.msra.mxu0 %v3189
    %3869 = vmatprep.subr.bf16.mxu0 %v3205
    %3870 = vmatpush1.bf16.msra.mxu0 %v3204
    %3871 = vmatprep.subr.bf16.mxu0 %v3220
    %3872 = vmatpush1.bf16.msra.mxu0 %v3219
    %3873 = vmatprep.subr.bf16.mxu0 %v3235
    %3874 = vmatpush1.bf16.msra.mxu0 %v3234
    %3875 = vmatprep.subr.bf16.mxu0 %v3250
    %3876 = vmatpush1.bf16.msra.mxu0 %v3249
    %3877 = vmatprep.subr.bf16.mxu0 %v3265
    %3878 = vmatpush1.bf16.msra.mxu0 %v3264
    %3879 = vmatprep.subr.bf16.mxu0 %v3280
    %3880 = vmatpush1.bf16.msra.mxu0 %v3279
    %3881 = vmatprep.subr.bf16.mxu0 %v3295
    %3882 = vmatpush1.bf16.msra.mxu0 %v3294
    %3883 = vmatprep.subr.bf16.mxu0 %v3310
    %3884 = vmatpush1.bf16.msra.mxu0 %v3309
    %3885 = vmatprep.subr.bf16.mxu0 %v3325
    %3886 = vmatpush1.bf16.msra.mxu0 %v3324
    %3887 = vmatprep.subr.bf16.mxu0 %v3340
    %3888 = vmatpush1.bf16.msra.mxu0 %v3339
    %3889 = vmatprep.subr.bf16.mxu0 %v3355
    %3890 = vmatpush1.bf16.msra.mxu0 %v3354
    %3891 = vmatprep.subr.bf16.mxu0 %v3370
    %3892 = vmatpush1.bf16.msra.mxu0 %v3369
    %3893 = vmatprep.subr.bf16.mxu0 %v3385
    %3894 = vmatpush1.bf16.msra.mxu0 %v3384
    %3895 = vmatprep.subr.bf16.mxu0 %v3400
    %3896 = vmatpush1.bf16.msra.mxu0 %v3399
    %3897 = vmatprep.mubr.bf16.mxu0 %v3413
    %3898 = vmatmul.mubr.bf16.gmra.mrb[0].mxu0 %v3412
    %v3899 = vpop.f32.mrb[0].mxu0
    %v3900 = vadd.f32 %v3859, %v3899
    %v3901 = vpop.f32.mrb[0].mxu0
    %v3902 = vadd.f32 %v3861, %v3901
    %v3903 = vpop.f32.mrb[0].mxu0
    %v3904 = vpop.f32.mrb[0].mxu0
    %3905 = vdwg.mxu0
    %3906 = vmatprep.subr.bf16.mxu0 %v2697
    %3907 = vmatpush1.bf16.msra.mxu0 %v2696
    %3908 = vmatprep.subr.bf16.mxu0 %v2712
    %3909 = vmatpush1.bf16.msra.mxu0 %v2711
    %3910 = vmatprep.subr.bf16.mxu0 %v2727
    %3911 = vmatpush1.bf16.msra.mxu0 %v2726
    %3912 = vmatprep.subr.bf16.mxu0 %v2742
    %3913 = vmatpush1.bf16.msra.mxu0 %v2741
    %3914 = vmatprep.subr.bf16.mxu0 %v2757
    %3915 = vmatpush1.bf16.msra.mxu0 %v2756
    %3916 = vmatprep.subr.bf16.mxu0 %v2772
    %3917 = vmatpush1.bf16.msra.mxu0 %v2771
    %3918 = vmatprep.subr.bf16.mxu0 %v2787
    %3919 = vmatpush1.bf16.msra.mxu0 %v2786
    %3920 = vmatprep.subr.bf16.mxu0 %v2802
    %3921 = vmatpush1.bf16.msra.mxu0 %v2801
    %3922 = vmatprep.subr.bf16.mxu0 %v2817
    %3923 = vmatpush1.bf16.msra.mxu0 %v2816
    %3924 = vmatprep.subr.bf16.mxu0 %v2832
    %3925 = vmatpush1.bf16.msra.mxu0 %v2831
    %3926 = vmatprep.subr.bf16.mxu0 %v2847
    %3927 = vmatpush1.bf16.msra.mxu0 %v2846
    %3928 = vmatprep.subr.bf16.mxu0 %v2862
    %3929 = vmatpush1.bf16.msra.mxu0 %v2861
    %3930 = vmatprep.subr.bf16.mxu0 %v2877
    %3931 = vmatpush1.bf16.msra.mxu0 %v2876
    %3932 = vmatprep.subr.bf16.mxu0 %v2892
    %3933 = vmatpush1.bf16.msra.mxu0 %v2891
    %3934 = vmatprep.subr.bf16.mxu0 %v2907
    %3935 = vmatpush1.bf16.msra.mxu0 %v2906
    %3936 = vmatprep.subr.bf16.mxu0 %v2922
    %3937 = vmatpush1.bf16.msra.mxu0 %v2921
    %3938 = vmatprep.mubr.bf16.mxu0 %v3409
    %3939 = vmatmul.mubr.bf16.gmra.mrb[0].mxu0 %v3408
    %v3940 = vpop.f32.mrb[0].mxu0
    %v3941 = vadd.f32 0.0, %v3940
    %v3942 = vpop.f32.mrb[0].mxu0
    %v3943 = vadd.f32 0.0, %v3942
    %v3944 = vpop.f32.mrb[0].mxu0
    %v3945 = vpop.f32.mrb[0].mxu0
    %3946 = vdwg.mxu0
    %3947 = vmatprep.subr.bf16.mxu0 %v2937
    %3948 = vmatpush1.bf16.msra.mxu0 %v2936
    %3949 = vmatprep.subr.bf16.mxu0 %v2952
    %3950 = vmatpush1.bf16.msra.mxu0 %v2951
    %3951 = vmatprep.subr.bf16.mxu0 %v2967
    %3952 = vmatpush1.bf16.msra.mxu0 %v2966
    %3953 = vmatprep.subr.bf16.mxu0 %v2982
    %3954 = vmatpush1.bf16.msra.mxu0 %v2981
    %3955 = vmatprep.subr.bf16.mxu0 %v2997
    %3956 = vmatpush1.bf16.msra.mxu0 %v2996
    %3957 = vmatprep.subr.bf16.mxu0 %v3012
    %3958 = vmatpush1.bf16.msra.mxu0 %v3011
    %3959 = vmatprep.subr.bf16.mxu0 %v3027
    %3960 = vmatpush1.bf16.msra.mxu0 %v3026
    %3961 = vmatprep.subr.bf16.mxu0 %v3042
    %3962 = vmatpush1.bf16.msra.mxu0 %v3041
    %3963 = vmatprep.subr.bf16.mxu0 %v3057
    %3964 = vmatpush1.bf16.msra.mxu0 %v3056
    %3965 = vmatprep.subr.bf16.mxu0 %v3072
    %3966 = vmatpush1.bf16.msra.mxu0 %v3071
    %3967 = vmatprep.subr.bf16.mxu0 %v3087
    %3968 = vmatpush1.bf16.msra.mxu0 %v3086
    %3969 = vmatprep.subr.bf16.mxu0 %v3102
    %3970 = vmatpush1.bf16.msra.mxu0 %v3101
    %3971 = vmatprep.subr.bf16.mxu0 %v3117
    %3972 = vmatpush1.bf16.msra.mxu0 %v3116
    %3973 = vmatprep.subr.bf16.mxu0 %v3132
    %3974 = vmatpush1.bf16.msra.mxu0 %v3131
    %3975 = vmatprep.subr.bf16.mxu0 %v3147
    %3976 = vmatpush1.bf16.msra.mxu0 %v3146
    %3977 = vmatprep.subr.bf16.mxu0 %v3162
    %3978 = vmatpush1.bf16.msra.mxu0 %v3161
    %3979 = vmatprep.mubr.bf16.mxu0 %v3411
    %3980 = vmatmul.mubr.bf16.gmra.mrb[0].mxu0 %v3410
    %v3981 = vpop.f32.mrb[0].mxu0
    %v3982 = vadd.f32 %v3941, %v3981
    %v3983 = vpop.f32.mrb[0].mxu0
    %v3984 = vadd.f32 %v3943, %v3983
    %v3985 = vpop.f32.mrb[0].mxu0
    %v3986 = vpop.f32.mrb[0].mxu0
    %3987 = vdwg.mxu0
    %3988 = vmatprep.subr.bf16.mxu0 %v3177
    %3989 = vmatpush1.bf16.msra.mxu0 %v3176
    %3990 = vmatprep.subr.bf16.mxu0 %v3192
    %3991 = vmatpush1.bf16.msra.mxu0 %v3191
    %3992 = vmatprep.subr.bf16.mxu0 %v3207
    %3993 = vmatpush1.bf16.msra.mxu0 %v3206
    %3994 = vmatprep.subr.bf16.mxu0 %v3222
    %3995 = vmatpush1.bf16.msra.mxu0 %v3221
    %3996 = vmatprep.subr.bf16.mxu0 %v3237
    %3997 = vmatpush1.bf16.msra.mxu0 %v3236
    %3998 = vmatprep.subr.bf16.mxu0 %v3252
    %3999 = vmatpush1.bf16.msra.mxu0 %v3251
    %4000 = vmatprep.subr.bf16.mxu0 %v3267
    %4001 = vmatpush1.bf16.msra.mxu0 %v3266
    %4002 = vmatprep.subr.bf16.mxu0 %v3282
    %4003 = vmatpush1.bf16.msra.mxu0 %v3281
    %4004 = vmatprep.subr.bf16.mxu0 %v3297
    %4005 = vmatpush1.bf16.msra.mxu0 %v3296
    %4006 = vmatprep.subr.bf16.mxu0 %v3312
    %4007 = vmatpush1.bf16.msra.mxu0 %v3311
    %4008 = vmatprep.subr.bf16.mxu0 %v3327
    %4009 = vmatpush1.bf16.msra.mxu0 %v3326
    %4010 = vmatprep.subr.bf16.mxu0 %v3342
    %4011 = vmatpush1.bf16.msra.mxu0 %v3341
    %4012 = vmatprep.subr.bf16.mxu0 %v3357
    %4013 = vmatpush1.bf16.msra.mxu0 %v3356
    %4014 = vmatprep.subr.bf16.mxu0 %v3372
    %4015 = vmatpush1.bf16.msra.mxu0 %v3371
    %4016 = vmatprep.subr.bf16.mxu0 %v3387
    %4017 = vmatpush1.bf16.msra.mxu0 %v3386
    %4018 = vmatprep.subr.bf16.mxu0 %v3402
    %4019 = vmatpush1.bf16.msra.mxu0 %v3401
    %4020 = vmatprep.mubr.bf16.mxu0 %v3413
    %4021 = vmatmul.mubr.bf16.gmra.mrb[0].mxu0 %v3412
    %v4022 = vpop.f32.mrb[0].mxu0
    %v4023 = vadd.f32 %v3982, %v4022
    %v4024 = vpop.f32.mrb[0].mxu0
    %v4025 = vadd.f32 %v3984, %v4024
    %v4026 = vpop.f32.mrb[0].mxu0
    %v4027 = vpop.f32.mrb[0].mxu0
    %4028 = vdwg.mxu0
    %4029 = vmatprep.subr.bf16.mxu0 %v2699
    %4030 = vmatpush1.bf16.msra.mxu0 %v2698
    %4031 = vmatprep.subr.bf16.mxu0 %v2714
    %4032 = vmatpush1.bf16.msra.mxu0 %v2713
    %4033 = vmatprep.subr.bf16.mxu0 %v2729
    %4034 = vmatpush1.bf16.msra.mxu0 %v2728
    %4035 = vmatprep.subr.bf16.mxu0 %v2744
    %4036 = vmatpush1.bf16.msra.mxu0 %v2743
    %4037 = vmatprep.subr.bf16.mxu0 %v2759
    %4038 = vmatpush1.bf16.msra.mxu0 %v2758
    %4039 = vmatprep.subr.bf16.mxu0 %v2774
    %4040 = vmatpush1.bf16.msra.mxu0 %v2773
    %4041 = vmatprep.subr.bf16.mxu0 %v2789
    %4042 = vmatpush1.bf16.msra.mxu0 %v2788
    %4043 = vmatprep.subr.bf16.mxu0 %v2804
    %4044 = vmatpush1.bf16.msra.mxu0 %v2803
    %4045 = vmatprep.subr.bf16.mxu0 %v2819
    %4046 = vmatpush1.bf16.msra.mxu0 %v2818
    %4047 = vmatprep.subr.bf16.mxu0 %v2834
    %4048 = vmatpush1.bf16.msra.mxu0 %v2833
    %4049 = vmatprep.subr.bf16.mxu0 %v2849
    %4050 = vmatpush1.bf16.msra.mxu0 %v2848
    %4051 = vmatprep.subr.bf16.mxu0 %v2864
    %4052 = vmatpush1.bf16.msra.mxu0 %v2863
    %4053 = vmatprep.subr.bf16.mxu0 %v2879
    %4054 = vmatpush1.bf16.msra.mxu0 %v2878
    %4055 = vmatprep.subr.bf16.mxu0 %v2894
    %4056 = vmatpush1.bf16.msra.mxu0 %v2893
    %4057 = vmatprep.subr.bf16.mxu0 %v2909
    %4058 = vmatpush1.bf16.msra.mxu0 %v2908
    %4059 = vmatprep.subr.bf16.mxu0 %v2924
    %4060 = vmatpush1.bf16.msra.mxu0 %v2923
    %4061 = vmatprep.mubr.bf16.mxu0 %v3409
    %4062 = vmatmul.mubr.bf16.gmra.mrb[0].mxu0 %v3408
    %v4063 = vpop.f32.mrb[0].mxu0
    %v4064 = vadd.f32 0.0, %v4063
    %v4065 = vpop.f32.mrb[0].mxu0
    %v4066 = vadd.f32 0.0, %v4065
    %v4067 = vpop.f32.mrb[0].mxu0
    %v4068 = vpop.f32.mrb[0].mxu0
    %4069 = vdwg.mxu0
    %4070 = vmatprep.subr.bf16.mxu0 %v2939
    %4071 = vmatpush1.bf16.msra.mxu0 %v2938
    %4072 = vmatprep.subr.bf16.mxu0 %v2954
    %4073 = vmatpush1.bf16.msra.mxu0 %v2953
    %4074 = vmatprep.subr.bf16.mxu0 %v2969
    %4075 = vmatpush1.bf16.msra.mxu0 %v2968
    %4076 = vmatprep.subr.bf16.mxu0 %v2984
    %4077 = vmatpush1.bf16.msra.mxu0 %v2983
    %4078 = vmatprep.subr.bf16.mxu0 %v2999
    %4079 = vmatpush1.bf16.msra.mxu0 %v2998
    %4080 = vmatprep.subr.bf16.mxu0 %v3014
    %4081 = vmatpush1.bf16.msra.mxu0 %v3013
    %4082 = vmatprep.subr.bf16.mxu0 %v3029
    %4083 = vmatpush1.bf16.msra.mxu0 %v3028
    %4084 = vmatprep.subr.bf16.mxu0 %v3044
    %4085 = vmatpush1.bf16.msra.mxu0 %v3043
    %4086 = vmatprep.subr.bf16.mxu0 %v3059
    %4087 = vmatpush1.bf16.msra.mxu0 %v3058
    %4088 = vmatprep.subr.bf16.mxu0 %v3074
    %4089 = vmatpush1.bf16.msra.mxu0 %v3073
    %4090 = vmatprep.subr.bf16.mxu0 %v3089
    %4091 = vmatpush1.bf16.msra.mxu0 %v3088
    %4092 = vmatprep.subr.bf16.mxu0 %v3104
    %4093 = vmatpush1.bf16.msra.mxu0 %v3103
    %4094 = vmatprep.subr.bf16.mxu0 %v3119
    %4095 = vmatpush1.bf16.msra.mxu0 %v3118
    %4096 = vmatprep.subr.bf16.mxu0 %v3134
    %4097 = vmatpush1.bf16.msra.mxu0 %v3133
    %4098 = vmatprep.subr.bf16.mxu0 %v3149
    %4099 = vmatpush1.bf16.msra.mxu0 %v3148
    %4100 = vmatprep.subr.bf16.mxu0 %v3164
    %4101 = vmatpush1.bf16.msra.mxu0 %v3163
    %4102 = vmatprep.mubr.bf16.mxu0 %v3411
    %4103 = vmatmul.mubr.bf16.gmra.mrb[0].mxu0 %v3410
    %v4104 = vpop.f32.mrb[0].mxu0
    %v4105 = vadd.f32 %v4064, %v4104
    %v4106 = vpop.f32.mrb[0].mxu0
    %v4107 = vadd.f32 %v4066, %v4106
    %v4108 = vpop.f32.mrb[0].mxu0
    %v4109 = vpop.f32.mrb[0].mxu0
    %4110 = vdwg.mxu0
    %4111 = vmatprep.subr.bf16.mxu0 %v3179
    %4112 = vmatpush1.bf16.msra.mxu0 %v3178
    %4113 = vmatprep.subr.bf16.mxu0 %v3194
    %4114 = vmatpush1.bf16.msra.mxu0 %v3193
    %4115 = vmatprep.subr.bf16.mxu0 %v3209
    %4116 = vmatpush1.bf16.msra.mxu0 %v3208
    %4117 = vmatprep.subr.bf16.mxu0 %v3224
    %4118 = vmatpush1.bf16.msra.mxu0 %v3223
    %4119 = vmatprep.subr.bf16.mxu0 %v3239
    %4120 = vmatpush1.bf16.msra.mxu0 %v3238
    %4121 = vmatprep.subr.bf16.mxu0 %v3254
    %4122 = vmatpush1.bf16.msra.mxu0 %v3253
    %4123 = vmatprep.subr.bf16.mxu0 %v3269
    %4124 = vmatpush1.bf16.msra.mxu0 %v3268
    %4125 = vmatprep.subr.bf16.mxu0 %v3284
    %4126 = vmatpush1.bf16.msra.mxu0 %v3283
    %4127 = vmatprep.subr.bf16.mxu0 %v3299
    %4128 = vmatpush1.bf16.msra.mxu0 %v3298
    %4129 = vmatprep.subr.bf16.mxu0 %v3314
    %4130 = vmatpush1.bf16.msra.mxu0 %v3313
    %4131 = vmatprep.subr.bf16.mxu0 %v3329
    %4132 = vmatpush1.bf16.msra.mxu0 %v3328
    %4133 = vmatprep.subr.bf16.mxu0 %v3344
    %4134 = vmatpush1.bf16.msra.mxu0 %v3343
    %4135 = vmatprep.subr.bf16.mxu0 %v3359
    %4136 = vmatpush1.bf16.msra.mxu0 %v3358
    %4137 = vmatprep.subr.bf16.mxu0 %v3374
    %4138 = vmatpush1.bf16.msra.mxu0 %v3373
    %4139 = vmatprep.subr.bf16.mxu0 %v3389
    %4140 = vmatpush1.bf16.msra.mxu0 %v3388
    %4141 = vmatprep.subr.bf16.mxu0 %v3404
    %4142 = vmatpush1.bf16.msra.mxu0 %v3403
    %4143 = vmatprep.mubr.bf16.mxu0 %v3413
    %4144 = vmatmul.mubr.bf16.gmra.mrb[0].mxu0 %v3412
    %v4145 = vpop.f32.mrb[0].mxu0
    %v4146 = vadd.f32 %v4105, %v4145
    %v4147 = vpop.f32.mrb[0].mxu0
    %v4148 = vadd.f32 %v4107, %v4147
    %v4149 = vpop.f32.mrb[0].mxu0
    %v4150 = vpop.f32.mrb[0].mxu0
    %4151 = vdwg.mxu0
    %4152 = vmatprep.subr.bf16.mxu0 %v2701
    %4153 = vmatpush1.bf16.msra.mxu0 %v2700
    %4154 = vmatprep.subr.bf16.mxu0 %v2716
    %4155 = vmatpush1.bf16.msra.mxu0 %v2715
    %4156 = vmatprep.subr.bf16.mxu0 %v2731
    %4157 = vmatpush1.bf16.msra.mxu0 %v2730
    %4158 = vmatprep.subr.bf16.mxu0 %v2746
    %4159 = vmatpush1.bf16.msra.mxu0 %v2745
    %4160 = vmatprep.subr.bf16.mxu0 %v2761
    %4161 = vmatpush1.bf16.msra.mxu0 %v2760
    %4162 = vmatprep.subr.bf16.mxu0 %v2776
    %4163 = vmatpush1.bf16.msra.mxu0 %v2775
    %4164 = vmatprep.subr.bf16.mxu0 %v2791
    %4165 = vmatpush1.bf16.msra.mxu0 %v2790
    %4166 = vmatprep.subr.bf16.mxu0 %v2806
    %4167 = vmatpush1.bf16.msra.mxu0 %v2805
    %4168 = vmatprep.subr.bf16.mxu0 %v2821
    %4169 = vmatpush1.bf16.msra.mxu0 %v2820
    %4170 = vmatprep.subr.bf16.mxu0 %v2836
    %4171 = vmatpush1.bf16.msra.mxu0 %v2835
    %4172 = vmatprep.subr.bf16.mxu0 %v2851
    %4173 = vmatpush1.bf16.msra.mxu0 %v2850
    %4174 = vmatprep.subr.bf16.mxu0 %v2866
    %4175 = vmatpush1.bf16.msra.mxu0 %v2865
    %4176 = vmatprep.subr.bf16.mxu0 %v2881
    %4177 = vmatpush1.bf16.msra.mxu0 %v2880
    %4178 = vmatprep.subr.bf16.mxu0 %v2896
    %4179 = vmatpush1.bf16.msra.mxu0 %v2895
    %4180 = vmatprep.subr.bf16.mxu0 %v2911
    %4181 = vmatpush1.bf16.msra.mxu0 %v2910
    %4182 = vmatprep.subr.bf16.mxu0 %v2926
    %4183 = vmatpush1.bf16.msra.mxu0 %v2925
    %4184 = vmatprep.mubr.bf16.mxu0 %v3409
    %4185 = vmatmul.mubr.bf16.gmra.mrb[0].mxu0 %v3408
    %v4186 = vpop.f32.mrb[0].mxu0
    %v4187 = vadd.f32 0.0, %v4186
    %v4188 = vpop.f32.mrb[0].mxu0
    %v4189 = vadd.f32 0.0, %v4188
    %v4190 = vpop.f32.mrb[0].mxu0
    %v4191 = vpop.f32.mrb[0].mxu0
    %4192 = vdwg.mxu0
    %4193 = vmatprep.subr.bf16.mxu0 %v2941
    %4194 = vmatpush1.bf16.msra.mxu0 %v2940
    %4195 = vmatprep.subr.bf16.mxu0 %v2956
    %4196 = vmatpush1.bf16.msra.mxu0 %v2955
    %4197 = vmatprep.subr.bf16.mxu0 %v2971
    %4198 = vmatpush1.bf16.msra.mxu0 %v2970
    %4199 = vmatprep.subr.bf16.mxu0 %v2986
    %4200 = vmatpush1.bf16.msra.mxu0 %v2985
    %4201 = vmatprep.subr.bf16.mxu0 %v3001
    %4202 = vmatpush1.bf16.msra.mxu0 %v3000
    %4203 = vmatprep.subr.bf16.mxu0 %v3016
    %4204 = vmatpush1.bf16.msra.mxu0 %v3015
    %4205 = vmatprep.subr.bf16.mxu0 %v3031
    %4206 = vmatpush1.bf16.msra.mxu0 %v3030
    %4207 = vmatprep.subr.bf16.mxu0 %v3046
    %4208 = vmatpush1.bf16.msra.mxu0 %v3045
    %4209 = vmatprep.subr.bf16.mxu0 %v3061
    %4210 = vmatpush1.bf16.msra.mxu0 %v3060
    %4211 = vmatprep.subr.bf16.mxu0 %v3076
    %4212 = vmatpush1.bf16.msra.mxu0 %v3075
    %4213 = vmatprep.subr.bf16.mxu0 %v3091
    %4214 = vmatpush1.bf16.msra.mxu0 %v3090
    %4215 = vmatprep.subr.bf16.mxu0 %v3106
    %4216 = vmatpush1.bf16.msra.mxu0 %v3105
    %4217 = vmatprep.subr.bf16.mxu0 %v3121
    %4218 = vmatpush1.bf16.msra.mxu0 %v3120
    %4219 = vmatprep.subr.bf16.mxu0 %v3136
    %4220 = vmatpush1.bf16.msra.mxu0 %v3135
    %4221 = vmatprep.subr.bf16.mxu0 %v3151
    %4222 = vmatpush1.bf16.msra.mxu0 %v3150
    %4223 = vmatprep.subr.bf16.mxu0 %v3166
    %4224 = vmatpush1.bf16.msra.mxu0 %v3165
    %4225 = vmatprep.mubr.bf16.mxu0 %v3411
    %4226 = vmatmul.mubr.bf16.gmra.mrb[0].mxu0 %v3410
    %v4227 = vpop.f32.mrb[0].mxu0
    %v4228 = vadd.f32 %v4187, %v4227
    %v4229 = vpop.f32.mrb[0].mxu0
    %v4230 = vadd.f32 %v4189, %v4229
    %v4231 = vpop.f32.mrb[0].mxu0
    %v4232 = vpop.f32.mrb[0].mxu0
    %4233 = vdwg.mxu0
    %4234 = vmatprep.subr.bf16.mxu0 %v3181
    %4235 = vmatpush1.bf16.msra.mxu0 %v3180
    %4236 = vmatprep.subr.bf16.mxu0 %v3196
    %4237 = vmatpush1.bf16.msra.mxu0 %v3195
    %4238 = vmatprep.subr.bf16.mxu0 %v3211
    %4239 = vmatpush1.bf16.msra.mxu0 %v3210
    %4240 = vmatprep.subr.bf16.mxu0 %v3226
    %4241 = vmatpush1.bf16.msra.mxu0 %v3225
    %4242 = vmatprep.subr.bf16.mxu0 %v3241
    %4243 = vmatpush1.bf16.msra.mxu0 %v3240
    %4244 = vmatprep.subr.bf16.mxu0 %v3256
    %4245 = vmatpush1.bf16.msra.mxu0 %v3255
    %4246 = vmatprep.subr.bf16.mxu0 %v3271
    %4247 = vmatpush1.bf16.msra.mxu0 %v3270
    %4248 = vmatprep.subr.bf16.mxu0 %v3286
    %4249 = vmatpush1.bf16.msra.mxu0 %v3285
    %4250 = vmatprep.subr.bf16.mxu0 %v3301
    %4251 = vmatpush1.bf16.msra.mxu0 %v3300
    %4252 = vmatprep.subr.bf16.mxu0 %v3316
    %4253 = vmatpush1.bf16.msra.mxu0 %v3315
    %4254 = vmatprep.subr.bf16.mxu0 %v3331
    %4255 = vmatpush1.bf16.msra.mxu0 %v3330
    %4256 = vmatprep.subr.bf16.mxu0 %v3346
    %4257 = vmatpush1.bf16.msra.mxu0 %v3345
    %4258 = vmatprep.subr.bf16.mxu0 %v3361
    %4259 = vmatpush1.bf16.msra.mxu0 %v3360
    %4260 = vmatprep.subr.bf16.mxu0 %v3376
    %4261 = vmatpush1.bf16.msra.mxu0 %v3375
    %4262 = vmatprep.subr.bf16.mxu0 %v3391
    %4263 = vmatpush1.bf16.msra.mxu0 %v3390
    %4264 = vmatprep.subr.bf16.mxu0 %v3406
    %4265 = vmatpush1.bf16.msra.mxu0 %v3405
    %4266 = vmatprep.mubr.bf16.mxu0 %v3413
    %4267 = vmatmul.mubr.bf16.gmra.mrb[0].mxu0 %v3412
    %v4268 = vpop.f32.mrb[0].mxu0
    %v4269 = vadd.f32 %v4228, %v4268
    %v4270 = vpop.f32.mrb[0].mxu0
    %v4271 = vadd.f32 %v4230, %v4270
    %v4272 = vpop.f32.mrb[0].mxu0
    %v4273 = vpop.f32.mrb[0].mxu0
    %4274 = vdwg.mxu0
    %4275 = vmatprep.subr.bf16.mxu0 0
    %4276 = vmatpush1.bf16.msra.mxu0 %v2702
    %4277 = vmatprep.subr.bf16.mxu0 0
    %4278 = vmatpush1.bf16.msra.mxu0 %v2717
    %4279 = vmatprep.subr.bf16.mxu0 0
    %4280 = vmatpush1.bf16.msra.mxu0 %v2732
    %4281 = vmatprep.subr.bf16.mxu0 0
    %4282 = vmatpush1.bf16.msra.mxu0 %v2747
    %4283 = vmatprep.subr.bf16.mxu0 0
    %4284 = vmatpush1.bf16.msra.mxu0 %v2762
    %4285 = vmatprep.subr.bf16.mxu0 0
    %4286 = vmatpush1.bf16.msra.mxu0 %v2777
    %4287 = vmatprep.subr.bf16.mxu0 0
    %4288 = vmatpush1.bf16.msra.mxu0 %v2792
    %4289 = vmatprep.subr.bf16.mxu0 0
    %4290 = vmatpush1.bf16.msra.mxu0 %v2807
    %4291 = vmatprep.subr.bf16.mxu0 0
    %4292 = vmatpush1.bf16.msra.mxu0 %v2822
    %4293 = vmatprep.subr.bf16.mxu0 0
    %4294 = vmatpush1.bf16.msra.mxu0 %v2837
    %4295 = vmatprep.subr.bf16.mxu0 0
    %4296 = vmatpush1.bf16.msra.mxu0 %v2852
    %4297 = vmatprep.subr.bf16.mxu0 0
    %4298 = vmatpush1.bf16.msra.mxu0 %v2867
    %4299 = vmatprep.subr.bf16.mxu0 0
    %4300 = vmatpush1.bf16.msra.mxu0 %v2882
    %4301 = vmatprep.subr.bf16.mxu0 0
    %4302 = vmatpush1.bf16.msra.mxu0 %v2897
    %4303 = vmatprep.subr.bf16.mxu0 0
    %4304 = vmatpush1.bf16.msra.mxu0 %v2912
    %4305 = vmatprep.subr.bf16.mxu0 0
    %4306 = vmatpush1.bf16.msra.mxu0 %v2927
    %4307 = vmatprep.mubr.bf16.mxu0 %v3409
    %4308 = vmatmul.mubr.bf16.gmra.mrb[0].mxu0 %v3408
    %v4309 = vpop.f32.mrb[0].mxu0
    %v4310 = vadd.f32 0.0, %v4309
    %v4311 = vpop.f32.mrb[0].mxu0
    %v4312 = vpop.f32.mrb[0].mxu0
    %v4313 = vpop.f32.mrb[0].mxu0
    %4314 = vdwg.mxu0
    %4315 = vmatprep.subr.bf16.mxu0 0
    %4316 = vmatpush1.bf16.msra.mxu0 %v2942
    %4317 = vmatprep.subr.bf16.mxu0 0
    %4318 = vmatpush1.bf16.msra.mxu0 %v2957
    %4319 = vmatprep.subr.bf16.mxu0 0
    %4320 = vmatpush1.bf16.msra.mxu0 %v2972
    %4321 = vmatprep.subr.bf16.mxu0 0
    %4322 = vmatpush1.bf16.msra.mxu0 %v2987
    %4323 = vmatprep.subr.bf16.mxu0 0
    %4324 = vmatpush1.bf16.msra.mxu0 %v3002
    %4325 = vmatprep.subr.bf16.mxu0 0
    %4326 = vmatpush1.bf16.msra.mxu0 %v3017
    %4327 = vmatprep.subr.bf16.mxu0 0
    %4328 = vmatpush1.bf16.msra.mxu0 %v3032
    %4329 = vmatprep.subr.bf16.mxu0 0
    %4330 = vmatpush1.bf16.msra.mxu0 %v3047
    %4331 = vmatprep.subr.bf16.mxu0 0
    %4332 = vmatpush1.bf16.msra.mxu0 %v3062
    %4333 = vmatprep.subr.bf16.mxu0 0
    %4334 = vmatpush1.bf16.msra.mxu0 %v3077
    %4335 = vmatprep.subr.bf16.mxu0 0
    %4336 = vmatpush1.bf16.msra.mxu0 %v3092
    %4337 = vmatprep.subr.bf16.mxu0 0
    %4338 = vmatpush1.bf16.msra.mxu0 %v3107
    %4339 = vmatprep.subr.bf16.mxu0 0
    %4340 = vmatpush1.bf16.msra.mxu0 %v3122
    %4341 = vmatprep.subr.bf16.mxu0 0
    %4342 = vmatpush1.bf16.msra.mxu0 %v3137
    %4343 = vmatprep.subr.bf16.mxu0 0
    %4344 = vmatpush1.bf16.msra.mxu0 %v3152
    %4345 = vmatprep.subr.bf16.mxu0 0
    %4346 = vmatpush1.bf16.msra.mxu0 %v3167
    %4347 = vmatprep.mubr.bf16.mxu0 %v3411
    %4348 = vmatmul.mubr.bf16.gmra.mrb[0].mxu0 %v3410
    %v4349 = vpop.f32.mrb[0].mxu0
    %v4350 = vadd.f32 %v4310, %v4349
    %v4351 = vpop.f32.mrb[0].mxu0
    %v4352 = vpop.f32.mrb[0].mxu0
    %v4353 = vpop.f32.mrb[0].mxu0
    %4354 = vdwg.mxu0
    %4355 = vmatprep.subr.bf16.mxu0 0
    %4356 = vmatpush1.bf16.msra.mxu0 %v3182
    %4357 = vmatprep.subr.bf16.mxu0 0
    %4358 = vmatpush1.bf16.msra.mxu0 %v3197
    %4359 = vmatprep.subr.bf16.mxu0 0
    %4360 = vmatpush1.bf16.msra.mxu0 %v3212
    %4361 = vmatprep.subr.bf16.mxu0 0
    %4362 = vmatpush1.bf16.msra.mxu0 %v3227
    %4363 = vmatprep.subr.bf16.mxu0 0
    %4364 = vmatpush1.bf16.msra.mxu0 %v3242
    %4365 = vmatprep.subr.bf16.mxu0 0
    %4366 = vmatpush1.bf16.msra.mxu0 %v3257
    %4367 = vmatprep.subr.bf16.mxu0 0
    %4368 = vmatpush1.bf16.msra.mxu0 %v3272
    %4369 = vmatprep.subr.bf16.mxu0 0
    %4370 = vmatpush1.bf16.msra.mxu0 %v3287
    %4371 = vmatprep.subr.bf16.mxu0 0
    %4372 = vmatpush1.bf16.msra.mxu0 %v3302
    %4373 = vmatprep.subr.bf16.mxu0 0
    %4374 = vmatpush1.bf16.msra.mxu0 %v3317
    %4375 = vmatprep.subr.bf16.mxu0 0
    %4376 = vmatpush1.bf16.msra.mxu0 %v3332
    %4377 = vmatprep.subr.bf16.mxu0 0
    %4378 = vmatpush1.bf16.msra.mxu0 %v3347
    %4379 = vmatprep.subr.bf16.mxu0 0
    %4380 = vmatpush1.bf16.msra.mxu0 %v3362
    %4381 = vmatprep.subr.bf16.mxu0 0
    %4382 = vmatpush1.bf16.msra.mxu0 %v3377
    %4383 = vmatprep.subr.bf16.mxu0 0
    %4384 = vmatpush1.bf16.msra.mxu0 %v3392
    %4385 = vmatprep.subr.bf16.mxu0 0
    %4386 = vmatpush1.bf16.msra.mxu0 %v3407
    %4387 = vmatprep.mubr.bf16.mxu0 %v3413
    %4388 = vmatmul.mubr.bf16.gmra.mrb[0].mxu0 %v3412
    %v4389 = vpop.f32.mrb[0].mxu0
    %v4390 = vadd.f32 %v4350, %v4389
    %v4391 = vpop.f32.mrb[0].mxu0
    %v4392 = vpop.f32.mrb[0].mxu0
    %v4393 = vpop.f32.mrb[0].mxu0
    %4394 = vdwg.mxu0
    %v4395 = vld [vmem:[#allocation15 + $0xf] sm:$0xff]
    %v4396 = vld [vmem:[#allocation15 + $0x17] sm:$0xff]
    %v4399 = vlaneseq
    %v4400 = vshrl.u32 %v4399, 7
    %v4401 = vsub.s32 0, %v4400
    %v4402 = vrot.slane %v4395, %v4401
    %v4403 = vlaneseq
    %v4404 = vshrl.u32 %v4403, 7
    %v4405 = vsub.s32 1, %v4404
    %v4406 = vrot.slane %v4395, %v4405
    %v4407 = vlaneseq
    %v4408 = vshrl.u32 %v4407, 7
    %v4409 = vsub.s32 2, %v4408
    %v4410 = vrot.slane %v4395, %v4409
    %v4411 = vlaneseq
    %v4412 = vshrl.u32 %v4411, 7
    %v4413 = vsub.s32 3, %v4412
    %v4414 = vrot.slane %v4395, %v4413
    %v4415 = vlaneseq
    %v4416 = vshrl.u32 %v4415, 7
    %v4417 = vsub.s32 4, %v4416
    %v4418 = vrot.slane %v4395, %v4417
    %v4419 = vlaneseq
    %v4420 = vshrl.u32 %v4419, 7
    %v4421 = vsub.s32 5, %v4420
    %v4422 = vrot.slane %v4395, %v4421
    %v4423 = vlaneseq
    %v4424 = vshrl.u32 %v4423, 7
    %v4425 = vsub.s32 6, %v4424
    %v4426 = vrot.slane %v4395, %v4425
    %v4427 = vlaneseq
    %v4428 = vshrl.u32 %v4427, 7
    %v4429 = vsub.s32 7, %v4428
    %v4430 = vrot.slane %v4395, %v4429
    %v4431 = vlaneseq
    %v4432 = vshrl.u32 %v4431, 7
    %v4433 = vsub.s32 0, %v4432
    %v4434 = vrot.slane %v4396, %v4433
    %v4435 = vlaneseq
    %v4436 = vshrl.u32 %v4435, 7
    %v4437 = vsub.s32 1, %v4436
    %v4438 = vrot.slane %v4396, %v4437
    %v4439 = vlaneseq
    %v4440 = vshrl.u32 %v4439, 7
    %v4441 = vsub.s32 2, %v4440
    %v4442 = vrot.slane %v4396, %v4441
    %v4443 = vlaneseq
    %v4444 = vshrl.u32 %v4443, 7
    %v4445 = vsub.s32 3, %v4444
    %v4446 = vrot.slane %v4396, %v4445
    %v4447 = vlaneseq
    %v4448 = vshrl.u32 %v4447, 7
    %v4449 = vsub.s32 4, %v4448
    %v4450 = vrot.slane %v4396, %v4449
    %v4451 = vlaneseq
    %v4452 = vshrl.u32 %v4451, 7
    %v4453 = vsub.s32 5, %v4452
    %v4454 = vrot.slane %v4396, %v4453
    %v4455 = vlaneseq
    %v4456 = vshrl.u32 %v4455, 7
    %v4457 = vsub.s32 6, %v4456
    %v4458 = vrot.slane %v4396, %v4457
    %v4474 = vmul.f32 %v3531, %v4402
    %v4475 = vmul.f32 %v3533, %v4406
    %v4476 = vmul.f32 %v3654, %v4410
    %v4477 = vmul.f32 %v3656, %v4414
    %v4478 = vmul.f32 %v3777, %v4418
    %v4479 = vmul.f32 %v3779, %v4422
    %v4480 = vmul.f32 %v3900, %v4426
    %v4481 = vmul.f32 %v3902, %v4430
    %v4482 = vmul.f32 %v4023, %v4434
    %v4483 = vmul.f32 %v4025, %v4438
    %v4484 = vmul.f32 %v4146, %v4442
    %v4485 = vmul.f32 %v4148, %v4446
    %v4486 = vmul.f32 %v4269, %v4450
    %v4487 = vmul.f32 %v4271, %v4454
    %v4488 = vmul.f32 %v4390, %v4458
    %v4489 = vld [vmem:[#allocation15 + $0x32] sm:$0x3f]
    %v4491 = vlaneseq
    %v4492 = vshrl.u32 %v4491, 7
    %v4493 = vsub.s32 0, %v4492
    %v4494 = vrot.slane %v4489, %v4493
    %v4495 = vlaneseq
    %v4496 = vshrl.u32 %v4495, 7
    %v4497 = vsub.s32 1, %v4496
    %v4498 = vrot.slane %v4489, %v4497
    %v4499 = vlaneseq
    %v4500 = vshrl.u32 %v4499, 7
    %v4501 = vsub.s32 2, %v4500
    %v4502 = vrot.slane %v4489, %v4501
    %v4503 = vlaneseq
    %v4504 = vshrl.u32 %v4503, 7
    %v4505 = vsub.s32 3, %v4504
    %v4506 = vrot.slane %v4489, %v4505
    %v4507 = vlaneseq
    %v4508 = vshrl.u32 %v4507, 7
    %v4509 = vsub.s32 4, %v4508
    %v4510 = vrot.slane %v4489, %v4509
    %v4511 = vlaneseq
    %v4512 = vshrl.u32 %v4511, 7
    %v4513 = vsub.s32 5, %v4512
    %v4514 = vrot.slane %v4489, %v4513
    %v4521 = vadd.f32 %v2322, %v4494
    %v4522 = vadd.f32 %v2323, %v4498
    %v4523 = vadd.f32 %v2324, %v4502
    %v4524 = vadd.f32 %v2325, %v4506
    %v4525 = vadd.f32 %v2326, %v4510
    %v4526 = vadd.f32 %v2327, %v4514
    %v4527 = vld [vmem:[#allocation15 + $0x38] sm:$0x3f]
    %v4529 = vlaneseq
    %v4530 = vshrl.u32 %v4529, 7
    %v4531 = vsub.s32 0, %v4530
    %v4532 = vrot.slane %v4527, %v4531
    %v4533 = vlaneseq
    %v4534 = vshrl.u32 %v4533, 7
    %v4535 = vsub.s32 1, %v4534
    %v4536 = vrot.slane %v4527, %v4535
    %v4537 = vlaneseq
    %v4538 = vshrl.u32 %v4537, 7
    %v4539 = vsub.s32 2, %v4538
    %v4540 = vrot.slane %v4527, %v4539
    %v4541 = vlaneseq
    %v4542 = vshrl.u32 %v4541, 7
    %v4543 = vsub.s32 3, %v4542
    %v4544 = vrot.slane %v4527, %v4543
    %v4545 = vlaneseq
    %v4546 = vshrl.u32 %v4545, 7
    %v4547 = vsub.s32 4, %v4546
    %v4548 = vrot.slane %v4527, %v4547
    %v4549 = vlaneseq
    %v4550 = vshrl.u32 %v4549, 7
    %v4551 = vsub.s32 5, %v4550
    %v4552 = vrot.slane %v4527, %v4551
    %v4559 = vadd.f32 %v4483, %v4532
    %v4560 = vadd.f32 %v4484, %v4536
    %v4561 = vadd.f32 %v4485, %v4540
    %v4562 = vadd.f32 %v4486, %v4544
    %v4563 = vadd.f32 %v4487, %v4548
    %v4564 = vadd.f32 %v4488, %v4552
    %v4565 = vmul.f32 %v4521, %v4559
    %v4566 = vmul.f32 %v4522, %v4560
    %v4567 = vmul.f32 %v4523, %v4561
    %v4568 = vmul.f32 %v4524, %v4562
    %v4569 = vmul.f32 %v4525, %v4563
    %v4570 = vmul.f32 %v4526, %v4564
    %v4571 = vadd.f32 %v2313, %v4474
    %v4572 = vadd.f32 %v2314, %v4475
    %v4573 = vadd.f32 %v2315, %v4476
    %v4574 = vadd.f32 %v2316, %v4477
    %v4575 = vadd.f32 %v2317, %v4478
    %v4576 = vadd.f32 %v2318, %v4479
    %v4577 = vadd.f32 %v2319, %v4480
    %v4578 = vadd.f32 %v2320, %v4481
    %v4579 = vadd.f32 %v2321, %v4482
    %v4580 = vld [vmem:[#allocation15 + $0x3e] sm:$0xff]
    %v4581 = vld [vmem:[#allocation15 + $0x46] sm:$0x1]
    %v4584 = vlaneseq
    %v4585 = vshrl.u32 %v4584, 7
    %v4586 = vsub.s32 0, %v4585
    %v4587 = vrot.slane %v4580, %v4586
    %v4588 = vlaneseq
    %v4589 = vshrl.u32 %v4588, 7
    %v4590 = vsub.s32 1, %v4589
    %v4591 = vrot.slane %v4580, %v4590
    %v4592 = vlaneseq
    %v4593 = vshrl.u32 %v4592, 7
    %v4594 = vsub.s32 2, %v4593
    %v4595 = vrot.slane %v4580, %v4594
    %v4596 = vlaneseq
    %v4597 = vshrl.u32 %v4596, 7
    %v4598 = vsub.s32 3, %v4597
    %v4599 = vrot.slane %v4580, %v4598
    %v4600 = vlaneseq
    %v4601 = vshrl.u32 %v4600, 7
    %v4602 = vsub.s32 4, %v4601
    %v4603 = vrot.slane %v4580, %v4602
    %v4604 = vlaneseq
    %v4605 = vshrl.u32 %v4604, 7
    %v4606 = vsub.s32 5, %v4605
    %v4607 = vrot.slane %v4580, %v4606
    %v4608 = vlaneseq
    %v4609 = vshrl.u32 %v4608, 7
    %v4610 = vsub.s32 6, %v4609
    %v4611 = vrot.slane %v4580, %v4610
    %v4612 = vlaneseq
    %v4613 = vshrl.u32 %v4612, 7
    %v4614 = vsub.s32 7, %v4613
    %v4615 = vrot.slane %v4580, %v4614
    %v4616 = vlaneseq
    %v4617 = vshrl.u32 %v4616, 7
    %v4618 = vsub.s32 0, %v4617
    %v4619 = vrot.slane %v4581, %v4618
    %v4629 = vadd.f32 %v4571, %v4587
    %v4630 = vadd.f32 %v4572, %v4591
    %v4631 = vadd.f32 %v4573, %v4595
    %v4632 = vadd.f32 %v4574, %v4599
    %v4633 = vadd.f32 %v4575, %v4603
    %v4634 = vadd.f32 %v4576, %v4607
    %v4635 = vadd.f32 %v4577, %v4611
    %v4636 = vadd.f32 %v4578, %v4615
    %v4637 = vadd.f32 %v4579, %v4619
    %v4638 = vmax.f32 %v4629, 0.0
    %v4639 = vmax.f32 %v4630, 0.0
    %v4640 = vmax.f32 %v4631, 0.0
    %v4641 = vmax.f32 %v4632, 0.0
    %v4642 = vmax.f32 %v4633, 0.0
    %v4643 = vmax.f32 %v4634, 0.0
    %v4644 = vmax.f32 %v4635, 0.0
    %v4645 = vmax.f32 %v4636, 0.0
    %v4646 = vmax.f32 %v4637, 0.0
    %v4647 = vld [vmem:[#allocation9] sm:$0xff]
    %v4648 = vld [vmem:[#allocation9 + $0x8] sm:$0xff]
    %v4649 = vld [vmem:[#allocation9 + $0x10] sm:$0xff]
    %v4650 = vld [vmem:[#allocation9 + $0x18] sm:$0xff]
    %v4651 = vld [vmem:[#allocation9 + $0x20] sm:$0xff]
    %v4652 = vld [vmem:[#allocation9 + $0x28] sm:$0xff]
    %v4653 = vld [vmem:[#allocation9 + $0x30] sm:$0xff]
    %v4654 = vld [vmem:[#allocation9 + $0x38] sm:$0xff]
    %v4655 = vld [vmem:[#allocation9 + $0x40] sm:$0xff]
    %v4656 = vld [vmem:[#allocation9 + $0x48] sm:$0xff]
    %v4657 = vld [vmem:[#allocation9 + $0x50] sm:$0xff]
    %v4658 = vld [vmem:[#allocation9 + $0x58] sm:$0xff]
    %v4659 = vld [vmem:[#allocation9 + $0x60] sm:$0xff]
    %v4660 = vld [vmem:[#allocation9 + $0x68] sm:$0xff]
    %v4661 = vld [vmem:[#allocation9 + $0x70] sm:$0xff]
    %v4662 = vld [vmem:[#allocation9 + $0x78] sm:$0xff]
    %v4663 = vld [vmem:[#allocation9 + $0x80] sm:$0xff]
    %v4664 = vld [vmem:[#allocation9 + $0x88] sm:$0xff]
    %v4665 = vld [vmem:[#allocation9 + $0x90] sm:$0xff]
    %v4666 = vld [vmem:[#allocation9 + $0x98] sm:$0xff]
    %v4667 = vld [vmem:[#allocation9 + $0xa0] sm:$0xff]
    %v4668 = vld [vmem:[#allocation9 + $0xa8] sm:$0xff]
    %v4669 = vld [vmem:[#allocation9 + $0xb0] sm:$0xff]
    %v4670 = vld [vmem:[#allocation9 + $0xb8] sm:$0xff]
    %v4671 = vld [vmem:[#allocation9 + $0xc0] sm:$0xff]
    %v4672 = vld [vmem:[#allocation9 + $0xc8] sm:$0xff]
    %v4673 = vld [vmem:[#allocation9 + $0xd0] sm:$0xff]
    %v4674 = vld [vmem:[#allocation9 + $0xd8] sm:$0xff]
    %v4675 = vld [vmem:[#allocation9 + $0xe0] sm:$0xff]
    %v4676 = vld [vmem:[#allocation9 + $0xe8] sm:$0xff]
    %v4677 = vld [vmem:[#allocation9 + $0xf0] sm:$0xff]
    %v4678 = vld [vmem:[#allocation9 + $0xf8] sm:$0xff]
    %v4679 = vld [vmem:[#allocation9 + $0x100] sm:$0xff]
    %v4680 = vld [vmem:[#allocation9 + $0x108] sm:$0xff]
    %v4681 = vld [vmem:[#allocation9 + $0x110] sm:$0xff]
    %v4682 = vld [vmem:[#allocation9 + $0x118] sm:$0xff]
    %v4683 = vld [vmem:[#allocation9 + $0x120] sm:$0xff]
    %v4684 = vld [vmem:[#allocation9 + $0x128] sm:$0xff]
    %v4685 = vld [vmem:[#allocation9 + $0x130] sm:$0xff]
    %v4686 = vld [vmem:[#allocation9 + $0x138] sm:$0xff]
    %v4687 = vld [vmem:[#allocation9 + $0x140] sm:$0xff]
    %v4688 = vld [vmem:[#allocation9 + $0x148] sm:$0xff]
    %v4689 = vld [vmem:[#allocation9 + $0x150] sm:$0xff]
    %v4690 = vld [vmem:[#allocation9 + $0x158] sm:$0xff]
    %v4691 = vld [vmem:[#allocation9 + $0x160] sm:$0xff]
    %v4692 = vld [vmem:[#allocation9 + $0x168] sm:$0xff]
    %v4693 = vld [vmem:[#allocation9 + $0x170] sm:$0xff]
    %v4694 = vld [vmem:[#allocation9 + $0x178] sm:$0xff]
    %v4695 = vld [vmem:[#allocation9 + $0x180] sm:$0xff]
    %v4696 = vld [vmem:[#allocation9 + $0x188] sm:$0xff]
    %v4697 = vld [vmem:[#allocation9 + $0x190] sm:$0xff]
    %v4698 = vld [vmem:[#allocation9 + $0x198] sm:$0xff]
    %v4699 = vld [vmem:[#allocation9 + $0x1a0] sm:$0xff]
    %v4700 = vld [vmem:[#allocation9 + $0x1a8] sm:$0xff]
    %v4701 = vld [vmem:[#allocation9 + $0x1b0] sm:$0xff]
    %v4702 = vld [vmem:[#allocation9 + $0x1b8] sm:$0xff]
    %v4703 = vld [vmem:[#allocation9 + $0x1c0] sm:$0xff]
    %v4704 = vld [vmem:[#allocation9 + $0x1c8] sm:$0xff]
    %v4705 = vld [vmem:[#allocation9 + $0x1d0] sm:$0xff]
    %v4706 = vld [vmem:[#allocation9 + $0x1d8] sm:$0xff]
    %v4707 = vld [vmem:[#allocation9 + $0x1e0] sm:$0xff]
    %v4708 = vld [vmem:[#allocation9 + $0x1e8] sm:$0xff]
    %v4709 = vld [vmem:[#allocation9 + $0x1f0] sm:$0xff]
    %v4710 = vld [vmem:[#allocation9 + $0x1f8] sm:$0xff]
    %v4711 = vld [vmem:[#allocation9 + $0x200] sm:$0xff]
    %v4712 = vld [vmem:[#allocation9 + $0x208] sm:$0xff]
    %v4713 = vld [vmem:[#allocation9 + $0x210] sm:$0xff]
    %v4714 = vld [vmem:[#allocation9 + $0x218] sm:$0xff]
    %v4715 = vld [vmem:[#allocation9 + $0x220] sm:$0xff]
    %v4716 = vld [vmem:[#allocation9 + $0x228] sm:$0xff]
    %v4717 = vld [vmem:[#allocation9 + $0x230] sm:$0xff]
    %v4718 = vld [vmem:[#allocation9 + $0x238] sm:$0xff]
    %v4719 = vld [vmem:[#allocation9 + $0x240] sm:$0xff]
    %v4720 = vld [vmem:[#allocation9 + $0x248] sm:$0xff]
    %v4721 = vld [vmem:[#allocation9 + $0x250] sm:$0xff]
    %v4722 = vld [vmem:[#allocation9 + $0x258] sm:$0xff]
    %v4723 = vld [vmem:[#allocation9 + $0x260] sm:$0xff]
    %v4724 = vld [vmem:[#allocation9 + $0x268] sm:$0xff]
    %v4725 = vld [vmem:[#allocation9 + $0x270] sm:$0xff]
    %v4726 = vld [vmem:[#allocation9 + $0x278] sm:$0xff]
    %v4727 = vld [vmem:[#allocation9 + $0x280] sm:$0xff]
    %v4728 = vld [vmem:[#allocation9 + $0x288] sm:$0xff]
    %v4729 = vld [vmem:[#allocation9 + $0x290] sm:$0xff]
    %v4730 = vld [vmem:[#allocation9 + $0x298] sm:$0xff]
    %v4731 = vld [vmem:[#allocation9 + $0x2a0] sm:$0xff]
    %v4732 = vld [vmem:[#allocation9 + $0x2a8] sm:$0xff]
    %v4733 = vld [vmem:[#allocation9 + $0x2b0] sm:$0xff]
    %v4734 = vld [vmem:[#allocation9 + $0x2b8] sm:$0xff]
    %v4735 = vld [vmem:[#allocation9 + $0x2c0] sm:$0xff]
    %v4736 = vld [vmem:[#allocation9 + $0x2c8] sm:$0xff]
    %v4737 = vld [vmem:[#allocation9 + $0x2d0] sm:$0xff]
    %v4738 = vld [vmem:[#allocation9 + $0x2d8] sm:$0xff]
    %v4739 = vld [vmem:[#allocation9 + $0x2e0] sm:$0xff]
    %v4740 = vld [vmem:[#allocation9 + $0x2e8] sm:$0xff]
    %v4741 = vld [vmem:[#allocation9 + $0x2f0] sm:$0xff]
    %v4742 = vld [vmem:[#allocation9 + $0x2f8] sm:$0xff]
    %v4743 = vld [vmem:[#allocation9 + $0x300] sm:$0xff]
    %v4744 = vld [vmem:[#allocation9 + $0x308] sm:$0xff]
    %v4745 = vld [vmem:[#allocation9 + $0x310] sm:$0xff]
    %v4746 = vld [vmem:[#allocation9 + $0x318] sm:$0xff]
    %v4747 = vld [vmem:[#allocation9 + $0x320] sm:$0xff]
    %v4748 = vld [vmem:[#allocation9 + $0x328] sm:$0xff]
    %v4749 = vld [vmem:[#allocation9 + $0x330] sm:$0xff]
    %v4750 = vld [vmem:[#allocation9 + $0x338] sm:$0xff]
    %v4751 = vld [vmem:[#allocation9 + $0x340] sm:$0xff]
    %v4752 = vld [vmem:[#allocation9 + $0x348] sm:$0xff]
    %v4753 = vld [vmem:[#allocation9 + $0x350] sm:$0xff]
    %v4754 = vld [vmem:[#allocation9 + $0x358] sm:$0xff]
    %v4755 = vld [vmem:[#allocation9 + $0x360] sm:$0xff]
    %v4756 = vld [vmem:[#allocation9 + $0x368] sm:$0xff]
    %v4757 = vld [vmem:[#allocation9 + $0x370] sm:$0xff]
    %v4758 = vld [vmem:[#allocation9 + $0x378] sm:$0xff]
    %v4759 = vld [vmem:[#allocation9 + $0x380] sm:$0xff]
    %v4760 = vld [vmem:[#allocation9 + $0x388] sm:$0xff]
    %v4761 = vld [vmem:[#allocation9 + $0x390] sm:$0xff]
    %v4762 = vld [vmem:[#allocation9 + $0x398] sm:$0xff]
    %v4763 = vld [vmem:[#allocation9 + $0x3a0] sm:$0xff]
    %v4764 = vld [vmem:[#allocation9 + $0x3a8] sm:$0xff]
    %v4765 = vld [vmem:[#allocation9 + $0x3b0] sm:$0xff]
    %v4766 = vld [vmem:[#allocation9 + $0x3b8] sm:$0xff]
    %v4767 = vld [vmem:[#allocation9 + $0x3c0] sm:$0xff]
    %v4768 = vld [vmem:[#allocation9 + $0x3c8] sm:$0xff]
    %v4769 = vld [vmem:[#allocation9 + $0x3d0] sm:$0xff]
    %v4770 = vld [vmem:[#allocation9 + $0x3d8] sm:$0xff]
    %v4771 = vld [vmem:[#allocation9 + $0x3e0] sm:$0xff]
    %v4772 = vld [vmem:[#allocation9 + $0x3e8] sm:$0xff]
    %v4773 = vld [vmem:[#allocation9 + $0x3f0] sm:$0xff]
    %v4774 = vld [vmem:[#allocation9 + $0x3f8] sm:$0xff]
    %v4775 = vld [vmem:[#allocation9 + $0x400] sm:$0xff]
    %v4776 = vld [vmem:[#allocation9 + $0x408] sm:$0xff]
    %v4777 = vld [vmem:[#allocation9 + $0x410] sm:$0xff]
    %v4778 = vld [vmem:[#allocation9 + $0x418] sm:$0xff]
    %v4779 = vld [vmem:[#allocation9 + $0x420] sm:$0xff]
    %v4780 = vld [vmem:[#allocation9 + $0x428] sm:$0xff]
    %v4781 = vld [vmem:[#allocation9 + $0x430] sm:$0xff]
    %v4782 = vld [vmem:[#allocation9 + $0x438] sm:$0xff]
    %v4783 = vld [vmem:[#allocation9 + $0x440] sm:$0xff]
    %v4784 = vld [vmem:[#allocation9 + $0x448] sm:$0xff]
    %v4785 = vld [vmem:[#allocation9 + $0x450] sm:$0xff]
    %v4786 = vld [vmem:[#allocation9 + $0x458] sm:$0xff]
    %v4787 = vld [vmem:[#allocation9 + $0x460] sm:$0xff]
    %v4788 = vld [vmem:[#allocation9 + $0x468] sm:$0xff]
    %v4789 = vld [vmem:[#allocation9 + $0x470] sm:$0xff]
    %v4790 = vld [vmem:[#allocation9 + $0x478] sm:$0xff]
    %v4791 = vld [vmem:[#allocation9 + $0x480] sm:$0xff]
    %v4792 = vld [vmem:[#allocation9 + $0x488] sm:$0xff]
    %v4793 = vld [vmem:[#allocation9 + $0x490] sm:$0xff]
    %v4794 = vld [vmem:[#allocation9 + $0x498] sm:$0xff]
    %v4795 = vld [vmem:[#allocation9 + $0x4a0] sm:$0xff]
    %v4796 = vld [vmem:[#allocation9 + $0x4a8] sm:$0xff]
    %v4797 = vld [vmem:[#allocation9 + $0x4b0] sm:$0xff]
    %v4798 = vld [vmem:[#allocation9 + $0x4b8] sm:$0xff]
    %v4799 = vld [vmem:[#allocation9 + $0x4c0] sm:$0xff]
    %v4800 = vld [vmem:[#allocation9 + $0x4c8] sm:$0xff]
    %v4801 = vld [vmem:[#allocation9 + $0x4d0] sm:$0xff]
    %v4802 = vld [vmem:[#allocation9 + $0x4d8] sm:$0xff]
    %v4803 = vld [vmem:[#allocation9 + $0x4e0] sm:$0xff]
    %v4804 = vld [vmem:[#allocation9 + $0x4e8] sm:$0xff]
    %v4805 = vld [vmem:[#allocation9 + $0x4f0] sm:$0xff]
    %v4806 = vld [vmem:[#allocation9 + $0x4f8] sm:$0xff]
    %v4807 = vld [vmem:[#allocation9 + $0x500] sm:$0xff]
    %v4808 = vld [vmem:[#allocation9 + $0x508] sm:$0xff]
    %v4809 = vld [vmem:[#allocation9 + $0x510] sm:$0xff]
    %v4810 = vld [vmem:[#allocation9 + $0x518] sm:$0xff]
    %v4811 = vld [vmem:[#allocation9 + $0x520] sm:$0xff]
    %v4812 = vld [vmem:[#allocation9 + $0x528] sm:$0xff]
    %v4813 = vld [vmem:[#allocation9 + $0x530] sm:$0xff]
    %v4814 = vld [vmem:[#allocation9 + $0x538] sm:$0xff]
    %v4815 = vld [vmem:[#allocation9 + $0x540] sm:$0xff]
    %v4816 = vld [vmem:[#allocation9 + $0x548] sm:$0xff]
    %v4817 = vld [vmem:[#allocation9 + $0x550] sm:$0xff]
    %v4818 = vld [vmem:[#allocation9 + $0x558] sm:$0xff]
    %v4819 = vld [vmem:[#allocation9 + $0x560] sm:$0xff]
    %v4820 = vld [vmem:[#allocation9 + $0x568] sm:$0xff]
    %v4821 = vld [vmem:[#allocation9 + $0x570] sm:$0xff]
    %v4822 = vld [vmem:[#allocation9 + $0x578] sm:$0xff]
    %v4823 = vld [vmem:[#allocation9 + $0x580] sm:$0xff]
    %v4824 = vld [vmem:[#allocation9 + $0x588] sm:$0xff]
    %v4825 = vld [vmem:[#allocation9 + $0x590] sm:$0xff]
    %v4826 = vld [vmem:[#allocation9 + $0x598] sm:$0xff]
    %v4827 = vld [vmem:[#allocation9 + $0x5a0] sm:$0xff]
    %v4828 = vld [vmem:[#allocation9 + $0x5a8] sm:$0xff]
    %v4829 = vld [vmem:[#allocation9 + $0x5b0] sm:$0xff]
    %v4830 = vld [vmem:[#allocation9 + $0x5b8] sm:$0xff]
    %v4831 = vld [vmem:[#allocation9 + $0x5c0] sm:$0xff]
    %v4832 = vld [vmem:[#allocation9 + $0x5c8] sm:$0xff]
    %v4833 = vld [vmem:[#allocation9 + $0x5d0] sm:$0xff]
    %v4834 = vld [vmem:[#allocation9 + $0x5d8] sm:$0xff]
    %v4835 = vld [vmem:[#allocation9 + $0x5e0] sm:$0xff]
    %v4836 = vld [vmem:[#allocation9 + $0x5e8] sm:$0xff]
    %v4837 = vld [vmem:[#allocation9 + $0x5f0] sm:$0xff]
    %v4838 = vld [vmem:[#allocation9 + $0x5f8] sm:$0xff]
    %v4839 = vld [vmem:[#allocation9 + $0x600] sm:$0xff]
    %v4840 = vld [vmem:[#allocation9 + $0x608] sm:$0xff]
    %v4841 = vld [vmem:[#allocation9 + $0x610] sm:$0xff]
    %v4842 = vld [vmem:[#allocation9 + $0x618] sm:$0xff]
    %v4843 = vld [vmem:[#allocation9 + $0x620] sm:$0xff]
    %v4844 = vld [vmem:[#allocation9 + $0x628] sm:$0xff]
    %v4845 = vld [vmem:[#allocation9 + $0x630] sm:$0xff]
    %v4846 = vld [vmem:[#allocation9 + $0x638] sm:$0xff]
    %v4847 = vld [vmem:[#allocation9 + $0x640] sm:$0xff]
    %v4848 = vld [vmem:[#allocation9 + $0x648] sm:$0xff]
    %v4849 = vld [vmem:[#allocation9 + $0x650] sm:$0xff]
    %v4850 = vld [vmem:[#allocation9 + $0x658] sm:$0xff]
    %v4851 = vld [vmem:[#allocation9 + $0x660] sm:$0xff]
    %v4852 = vld [vmem:[#allocation9 + $0x668] sm:$0xff]
    %v4853 = vld [vmem:[#allocation9 + $0x670] sm:$0xff]
    %v4854 = vld [vmem:[#allocation9 + $0x678] sm:$0xff]
    %v4855 = vld [vmem:[#allocation9 + $0x680] sm:$0xff]
    %v4856 = vld [vmem:[#allocation9 + $0x688] sm:$0xff]
    %v4857 = vld [vmem:[#allocation9 + $0x690] sm:$0xff]
    %v4858 = vld [vmem:[#allocation9 + $0x698] sm:$0xff]
    %v4859 = vld [vmem:[#allocation9 + $0x6a0] sm:$0xff]
    %v4860 = vld [vmem:[#allocation9 + $0x6a8] sm:$0xff]
    %v4861 = vld [vmem:[#allocation9 + $0x6b0] sm:$0xff]
    %v4862 = vld [vmem:[#allocation9 + $0x6b8] sm:$0xff]
    %v4863 = vunpack.c.l.s8.bf16 %v4647
    %v4864 = vunpack.c.l.s8.bf16 %v4648
    %v4865 = vunpack.c.l.s8.bf16 %v4649
    %v4866 = vunpack.c.l.s8.bf16 %v4650
    %v4867 = vunpack.c.l.s8.bf16 %v4651
    %v4868 = vunpack.c.l.s8.bf16 %v4652
    %v4869 = vunpack.c.h.s8.bf16 %v4647
    %v4870 = vunpack.c.h.s8.bf16 %v4648
    %v4871 = vunpack.c.h.s8.bf16 %v4649
    %v4872 = vunpack.c.h.s8.bf16 %v4650
    %v4873 = vunpack.c.h.s8.bf16 %v4651
    %v4874 = vunpack.c.h.s8.bf16 %v4652
    %v4875 = vunpack.c.l.s8.bf16 %v4653
    %v4876 = vunpack.c.l.s8.bf16 %v4654
    %v4877 = vunpack.c.l.s8.bf16 %v4655
    %v4878 = vunpack.c.l.s8.bf16 %v4656
    %v4879 = vunpack.c.l.s8.bf16 %v4657
    %v4880 = vunpack.c.l.s8.bf16 %v4658
    %v4881 = vunpack.c.h.s8.bf16 %v4653
    %v4882 = vunpack.c.h.s8.bf16 %v4654
    %v4883 = vunpack.c.h.s8.bf16 %v4655
    %v4884 = vunpack.c.h.s8.bf16 %v4656
    %v4885 = vunpack.c.h.s8.bf16 %v4657
    %v4886 = vunpack.c.h.s8.bf16 %v4658
    %v4887 = vunpack.c.l.s8.bf16 %v4659
    %v4888 = vunpack.c.l.s8.bf16 %v4660
    %v4889 = vunpack.c.l.s8.bf16 %v4661
    %v4890 = vunpack.c.l.s8.bf16 %v4662
    %v4891 = vunpack.c.l.s8.bf16 %v4663
    %v4892 = vunpack.c.l.s8.bf16 %v4664
    %v4893 = vunpack.c.h.s8.bf16 %v4659
    %v4894 = vunpack.c.h.s8.bf16 %v4660
    %v4895 = vunpack.c.h.s8.bf16 %v4661
    %v4896 = vunpack.c.h.s8.bf16 %v4662
    %v4897 = vunpack.c.h.s8.bf16 %v4663
    %v4898 = vunpack.c.h.s8.bf16 %v4664
    %v4899 = vunpack.c.l.s8.bf16 %v4665
    %v4900 = vunpack.c.l.s8.bf16 %v4666
    %v4901 = vunpack.c.l.s8.bf16 %v4667
    %v4902 = vunpack.c.l.s8.bf16 %v4668
    %v4903 = vunpack.c.l.s8.bf16 %v4669
    %v4904 = vunpack.c.l.s8.bf16 %v4670
    %v4905 = vunpack.c.h.s8.bf16 %v4665
    %v4906 = vunpack.c.h.s8.bf16 %v4666
    %v4907 = vunpack.c.h.s8.bf16 %v4667
    %v4908 = vunpack.c.h.s8.bf16 %v4668
    %v4909 = vunpack.c.h.s8.bf16 %v4669
    %v4910 = vunpack.c.h.s8.bf16 %v4670
    %v4911 = vunpack.c.l.s8.bf16 %v4671
    %v4912 = vunpack.c.l.s8.bf16 %v4672
    %v4913 = vunpack.c.l.s8.bf16 %v4673
    %v4914 = vunpack.c.l.s8.bf16 %v4674
    %v4915 = vunpack.c.l.s8.bf16 %v4675
    %v4916 = vunpack.c.l.s8.bf16 %v4676
    %v4917 = vunpack.c.h.s8.bf16 %v4671
    %v4918 = vunpack.c.h.s8.bf16 %v4672
    %v4919 = vunpack.c.h.s8.bf16 %v4673
    %v4920 = vunpack.c.h.s8.bf16 %v4674
    %v4921 = vunpack.c.h.s8.bf16 %v4675
    %v4922 = vunpack.c.h.s8.bf16 %v4676
    %v4923 = vunpack.c.l.s8.bf16 %v4677
    %v4924 = vunpack.c.l.s8.bf16 %v4678
    %v4925 = vunpack.c.l.s8.bf16 %v4679
    %v4926 = vunpack.c.l.s8.bf16 %v4680
    %v4927 = vunpack.c.l.s8.bf16 %v4681
    %v4928 = vunpack.c.l.s8.bf16 %v4682
    %v4929 = vunpack.c.h.s8.bf16 %v4677
    %v4930 = vunpack.c.h.s8.bf16 %v4678
    %v4931 = vunpack.c.h.s8.bf16 %v4679
    %v4932 = vunpack.c.h.s8.bf16 %v4680
    %v4933 = vunpack.c.h.s8.bf16 %v4681
    %v4934 = vunpack.c.h.s8.bf16 %v4682
    %v4935 = vunpack.c.l.s8.bf16 %v4683
    %v4936 = vunpack.c.l.s8.bf16 %v4684
    %v4937 = vunpack.c.l.s8.bf16 %v4685
    %v4938 = vunpack.c.l.s8.bf16 %v4686
    %v4939 = vunpack.c.l.s8.bf16 %v4687
    %v4940 = vunpack.c.l.s8.bf16 %v4688
    %v4941 = vunpack.c.h.s8.bf16 %v4683
    %v4942 = vunpack.c.h.s8.bf16 %v4684
    %v4943 = vunpack.c.h.s8.bf16 %v4685
    %v4944 = vunpack.c.h.s8.bf16 %v4686
    %v4945 = vunpack.c.h.s8.bf16 %v4687
    %v4946 = vunpack.c.h.s8.bf16 %v4688
    %v4947 = vunpack.c.l.s8.bf16 %v4689
    %v4948 = vunpack.c.l.s8.bf16 %v4690
    %v4949 = vunpack.c.l.s8.bf16 %v4691
    %v4950 = vunpack.c.l.s8.bf16 %v4692
    %v4951 = vunpack.c.l.s8.bf16 %v4693
    %v4952 = vunpack.c.l.s8.bf16 %v4694
    %v4953 = vunpack.c.h.s8.bf16 %v4689
    %v4954 = vunpack.c.h.s8.bf16 %v4690
    %v4955 = vunpack.c.h.s8.bf16 %v4691
    %v4956 = vunpack.c.h.s8.bf16 %v4692
    %v4957 = vunpack.c.h.s8.bf16 %v4693
    %v4958 = vunpack.c.h.s8.bf16 %v4694
    %v4959 = vunpack.c.l.s8.bf16 %v4695
    %v4960 = vunpack.c.l.s8.bf16 %v4696
    %v4961 = vunpack.c.l.s8.bf16 %v4697
    %v4962 = vunpack.c.l.s8.bf16 %v4698
    %v4963 = vunpack.c.l.s8.bf16 %v4699
    %v4964 = vunpack.c.l.s8.bf16 %v4700
    %v4965 = vunpack.c.h.s8.bf16 %v4695
    %v4966 = vunpack.c.h.s8.bf16 %v4696
    %v4967 = vunpack.c.h.s8.bf16 %v4697
    %v4968 = vunpack.c.h.s8.bf16 %v4698
    %v4969 = vunpack.c.h.s8.bf16 %v4699
    %v4970 = vunpack.c.h.s8.bf16 %v4700
    %v4971 = vunpack.c.l.s8.bf16 %v4701
    %v4972 = vunpack.c.l.s8.bf16 %v4702
    %v4973 = vunpack.c.l.s8.bf16 %v4703
    %v4974 = vunpack.c.l.s8.bf16 %v4704
    %v4975 = vunpack.c.l.s8.bf16 %v4705
    %v4976 = vunpack.c.l.s8.bf16 %v4706
    %v4977 = vunpack.c.h.s8.bf16 %v4701
    %v4978 = vunpack.c.h.s8.bf16 %v4702
    %v4979 = vunpack.c.h.s8.bf16 %v4703
    %v4980 = vunpack.c.h.s8.bf16 %v4704
    %v4981 = vunpack.c.h.s8.bf16 %v4705
    %v4982 = vunpack.c.h.s8.bf16 %v4706
    %v4983 = vunpack.c.l.s8.bf16 %v4707
    %v4984 = vunpack.c.l.s8.bf16 %v4708
    %v4985 = vunpack.c.l.s8.bf16 %v4709
    %v4986 = vunpack.c.l.s8.bf16 %v4710
    %v4987 = vunpack.c.l.s8.bf16 %v4711
    %v4988 = vunpack.c.l.s8.bf16 %v4712
    %v4989 = vunpack.c.h.s8.bf16 %v4707
    %v4990 = vunpack.c.h.s8.bf16 %v4708
    %v4991 = vunpack.c.h.s8.bf16 %v4709
    %v4992 = vunpack.c.h.s8.bf16 %v4710
    %v4993 = vunpack.c.h.s8.bf16 %v4711
    %v4994 = vunpack.c.h.s8.bf16 %v4712
    %v4995 = vunpack.c.l.s8.bf16 %v4713
    %v4996 = vunpack.c.l.s8.bf16 %v4714
    %v4997 = vunpack.c.l.s8.bf16 %v4715
    %v4998 = vunpack.c.l.s8.bf16 %v4716
    %v4999 = vunpack.c.l.s8.bf16 %v4717
    %v5000 = vunpack.c.l.s8.bf16 %v4718
    %v5001 = vunpack.c.h.s8.bf16 %v4713
    %v5002 = vunpack.c.h.s8.bf16 %v4714
    %v5003 = vunpack.c.h.s8.bf16 %v4715
    %v5004 = vunpack.c.h.s8.bf16 %v4716
    %v5005 = vunpack.c.h.s8.bf16 %v4717
    %v5006 = vunpack.c.h.s8.bf16 %v4718
    %v5007 = vunpack.c.l.s8.bf16 %v4719
    %v5008 = vunpack.c.l.s8.bf16 %v4720
    %v5009 = vunpack.c.l.s8.bf16 %v4721
    %v5010 = vunpack.c.l.s8.bf16 %v4722
    %v5011 = vunpack.c.l.s8.bf16 %v4723
    %v5012 = vunpack.c.l.s8.bf16 %v4724
    %v5013 = vunpack.c.h.s8.bf16 %v4719
    %v5014 = vunpack.c.h.s8.bf16 %v4720
    %v5015 = vunpack.c.h.s8.bf16 %v4721
    %v5016 = vunpack.c.h.s8.bf16 %v4722
    %v5017 = vunpack.c.h.s8.bf16 %v4723
    %v5018 = vunpack.c.h.s8.bf16 %v4724
    %v5019 = vunpack.c.l.s8.bf16 %v4725
    %v5020 = vunpack.c.l.s8.bf16 %v4726
    %v5021 = vunpack.c.l.s8.bf16 %v4727
    %v5022 = vunpack.c.l.s8.bf16 %v4728
    %v5023 = vunpack.c.l.s8.bf16 %v4729
    %v5024 = vunpack.c.l.s8.bf16 %v4730
    %v5025 = vunpack.c.h.s8.bf16 %v4725
    %v5026 = vunpack.c.h.s8.bf16 %v4726
    %v5027 = vunpack.c.h.s8.bf16 %v4727
    %v5028 = vunpack.c.h.s8.bf16 %v4728
    %v5029 = vunpack.c.h.s8.bf16 %v4729
    %v5030 = vunpack.c.h.s8.bf16 %v4730
    %v5031 = vunpack.c.l.s8.bf16 %v4731
    %v5032 = vunpack.c.l.s8.bf16 %v4732
    %v5033 = vunpack.c.l.s8.bf16 %v4733
    %v5034 = vunpack.c.l.s8.bf16 %v4734
    %v5035 = vunpack.c.l.s8.bf16 %v4735
    %v5036 = vunpack.c.l.s8.bf16 %v4736
    %v5037 = vunpack.c.h.s8.bf16 %v4731
    %v5038 = vunpack.c.h.s8.bf16 %v4732
    %v5039 = vunpack.c.h.s8.bf16 %v4733
    %v5040 = vunpack.c.h.s8.bf16 %v4734
    %v5041 = vunpack.c.h.s8.bf16 %v4735
    %v5042 = vunpack.c.h.s8.bf16 %v4736
    %v5043 = vunpack.c.l.s8.bf16 %v4737
    %v5044 = vunpack.c.l.s8.bf16 %v4738
    %v5045 = vunpack.c.l.s8.bf16 %v4739
    %v5046 = vunpack.c.l.s8.bf16 %v4740
    %v5047 = vunpack.c.l.s8.bf16 %v4741
    %v5048 = vunpack.c.l.s8.bf16 %v4742
    %v5049 = vunpack.c.h.s8.bf16 %v4737
    %v5050 = vunpack.c.h.s8.bf16 %v4738
    %v5051 = vunpack.c.h.s8.bf16 %v4739
    %v5052 = vunpack.c.h.s8.bf16 %v4740
    %v5053 = vunpack.c.h.s8.bf16 %v4741
    %v5054 = vunpack.c.h.s8.bf16 %v4742
    %v5055 = vunpack.c.l.s8.bf16 %v4743
    %v5056 = vunpack.c.l.s8.bf16 %v4744
    %v5057 = vunpack.c.l.s8.bf16 %v4745
    %v5058 = vunpack.c.l.s8.bf16 %v4746
    %v5059 = vunpack.c.l.s8.bf16 %v4747
    %v5060 = vunpack.c.l.s8.bf16 %v4748
    %v5061 = vunpack.c.h.s8.bf16 %v4743
    %v5062 = vunpack.c.h.s8.bf16 %v4744
    %v5063 = vunpack.c.h.s8.bf16 %v4745
    %v5064 = vunpack.c.h.s8.bf16 %v4746
    %v5065 = vunpack.c.h.s8.bf16 %v4747
    %v5066 = vunpack.c.h.s8.bf16 %v4748
    %v5067 = vunpack.c.l.s8.bf16 %v4749
    %v5068 = vunpack.c.l.s8.bf16 %v4750
    %v5069 = vunpack.c.l.s8.bf16 %v4751
    %v5070 = vunpack.c.l.s8.bf16 %v4752
    %v5071 = vunpack.c.l.s8.bf16 %v4753
    %v5072 = vunpack.c.l.s8.bf16 %v4754
    %v5073 = vunpack.c.h.s8.bf16 %v4749
    %v5074 = vunpack.c.h.s8.bf16 %v4750
    %v5075 = vunpack.c.h.s8.bf16 %v4751
    %v5076 = vunpack.c.h.s8.bf16 %v4752
    %v5077 = vunpack.c.h.s8.bf16 %v4753
    %v5078 = vunpack.c.h.s8.bf16 %v4754
    %v5079 = vunpack.c.l.s8.bf16 %v4755
    %v5080 = vunpack.c.l.s8.bf16 %v4756
    %v5081 = vunpack.c.l.s8.bf16 %v4757
    %v5082 = vunpack.c.l.s8.bf16 %v4758
    %v5083 = vunpack.c.l.s8.bf16 %v4759
    %v5084 = vunpack.c.l.s8.bf16 %v4760
    %v5085 = vunpack.c.h.s8.bf16 %v4755
    %v5086 = vunpack.c.h.s8.bf16 %v4756
    %v5087 = vunpack.c.h.s8.bf16 %v4757
    %v5088 = vunpack.c.h.s8.bf16 %v4758
    %v5089 = vunpack.c.h.s8.bf16 %v4759
    %v5090 = vunpack.c.h.s8.bf16 %v4760
    %v5091 = vunpack.c.l.s8.bf16 %v4761
    %v5092 = vunpack.c.l.s8.bf16 %v4762
    %v5093 = vunpack.c.l.s8.bf16 %v4763
    %v5094 = vunpack.c.l.s8.bf16 %v4764
    %v5095 = vunpack.c.l.s8.bf16 %v4765
    %v5096 = vunpack.c.l.s8.bf16 %v4766
    %v5097 = vunpack.c.h.s8.bf16 %v4761
    %v5098 = vunpack.c.h.s8.bf16 %v4762
    %v5099 = vunpack.c.h.s8.bf16 %v4763
    %v5100 = vunpack.c.h.s8.bf16 %v4764
    %v5101 = vunpack.c.h.s8.bf16 %v4765
    %v5102 = vunpack.c.h.s8.bf16 %v4766
    %v5103 = vunpack.c.l.s8.bf16 %v4767
    %v5104 = vunpack.c.l.s8.bf16 %v4768
    %v5105 = vunpack.c.l.s8.bf16 %v4769
    %v5106 = vunpack.c.l.s8.bf16 %v4770
    %v5107 = vunpack.c.l.s8.bf16 %v4771
    %v5108 = vunpack.c.l.s8.bf16 %v4772
    %v5109 = vunpack.c.h.s8.bf16 %v4767
    %v5110 = vunpack.c.h.s8.bf16 %v4768
    %v5111 = vunpack.c.h.s8.bf16 %v4769
    %v5112 = vunpack.c.h.s8.bf16 %v4770
    %v5113 = vunpack.c.h.s8.bf16 %v4771
    %v5114 = vunpack.c.h.s8.bf16 %v4772
    %v5115 = vunpack.c.l.s8.bf16 %v4773
    %v5116 = vunpack.c.l.s8.bf16 %v4774
    %v5117 = vunpack.c.l.s8.bf16 %v4775
    %v5118 = vunpack.c.l.s8.bf16 %v4776
    %v5119 = vunpack.c.l.s8.bf16 %v4777
    %v5120 = vunpack.c.l.s8.bf16 %v4778
    %v5121 = vunpack.c.h.s8.bf16 %v4773
    %v5122 = vunpack.c.h.s8.bf16 %v4774
    %v5123 = vunpack.c.h.s8.bf16 %v4775
    %v5124 = vunpack.c.h.s8.bf16 %v4776
    %v5125 = vunpack.c.h.s8.bf16 %v4777
    %v5126 = vunpack.c.h.s8.bf16 %v4778
    %v5127 = vunpack.c.l.s8.bf16 %v4779
    %v5128 = vunpack.c.l.s8.bf16 %v4780
    %v5129 = vunpack.c.l.s8.bf16 %v4781
    %v5130 = vunpack.c.l.s8.bf16 %v4782
    %v5131 = vunpack.c.l.s8.bf16 %v4783
    %v5132 = vunpack.c.l.s8.bf16 %v4784
    %v5133 = vunpack.c.h.s8.bf16 %v4779
    %v5134 = vunpack.c.h.s8.bf16 %v4780
    %v5135 = vunpack.c.h.s8.bf16 %v4781
    %v5136 = vunpack.c.h.s8.bf16 %v4782
    %v5137 = vunpack.c.h.s8.bf16 %v4783
    %v5138 = vunpack.c.h.s8.bf16 %v4784
    %v5139 = vunpack.c.l.s8.bf16 %v4785
    %v5140 = vunpack.c.l.s8.bf16 %v4786
    %v5141 = vunpack.c.l.s8.bf16 %v4787
    %v5142 = vunpack.c.l.s8.bf16 %v4788
    %v5143 = vunpack.c.l.s8.bf16 %v4789
    %v5144 = vunpack.c.l.s8.bf16 %v4790
    %v5145 = vunpack.c.h.s8.bf16 %v4785
    %v5146 = vunpack.c.h.s8.bf16 %v4786
    %v5147 = vunpack.c.h.s8.bf16 %v4787
    %v5148 = vunpack.c.h.s8.bf16 %v4788
    %v5149 = vunpack.c.h.s8.bf16 %v4789
    %v5150 = vunpack.c.h.s8.bf16 %v4790
    %v5151 = vunpack.c.l.s8.bf16 %v4791
    %v5152 = vunpack.c.l.s8.bf16 %v4792
    %v5153 = vunpack.c.l.s8.bf16 %v4793
    %v5154 = vunpack.c.l.s8.bf16 %v4794
    %v5155 = vunpack.c.l.s8.bf16 %v4795
    %v5156 = vunpack.c.l.s8.bf16 %v4796
    %v5157 = vunpack.c.h.s8.bf16 %v4791
    %v5158 = vunpack.c.h.s8.bf16 %v4792
    %v5159 = vunpack.c.h.s8.bf16 %v4793
    %v5160 = vunpack.c.h.s8.bf16 %v4794
    %v5161 = vunpack.c.h.s8.bf16 %v4795
    %v5162 = vunpack.c.h.s8.bf16 %v4796
    %v5163 = vunpack.c.l.s8.bf16 %v4797
    %v5164 = vunpack.c.l.s8.bf16 %v4798
    %v5165 = vunpack.c.l.s8.bf16 %v4799
    %v5166 = vunpack.c.l.s8.bf16 %v4800
    %v5167 = vunpack.c.l.s8.bf16 %v4801
    %v5168 = vunpack.c.l.s8.bf16 %v4802
    %v5169 = vunpack.c.h.s8.bf16 %v4797
    %v5170 = vunpack.c.h.s8.bf16 %v4798
    %v5171 = vunpack.c.h.s8.bf16 %v4799
    %v5172 = vunpack.c.h.s8.bf16 %v4800
    %v5173 = vunpack.c.h.s8.bf16 %v4801
    %v5174 = vunpack.c.h.s8.bf16 %v4802
    %v5175 = vunpack.c.l.s8.bf16 %v4803
    %v5176 = vunpack.c.l.s8.bf16 %v4804
    %v5177 = vunpack.c.l.s8.bf16 %v4805
    %v5178 = vunpack.c.l.s8.bf16 %v4806
    %v5179 = vunpack.c.l.s8.bf16 %v4807
    %v5180 = vunpack.c.l.s8.bf16 %v4808
    %v5181 = vunpack.c.h.s8.bf16 %v4803
    %v5182 = vunpack.c.h.s8.bf16 %v4804
    %v5183 = vunpack.c.h.s8.bf16 %v4805
    %v5184 = vunpack.c.h.s8.bf16 %v4806
    %v5185 = vunpack.c.h.s8.bf16 %v4807
    %v5186 = vunpack.c.h.s8.bf16 %v4808
    %v5187 = vunpack.c.l.s8.bf16 %v4809
    %v5188 = vunpack.c.l.s8.bf16 %v4810
    %v5189 = vunpack.c.l.s8.bf16 %v4811
    %v5190 = vunpack.c.l.s8.bf16 %v4812
    %v5191 = vunpack.c.l.s8.bf16 %v4813
    %v5192 = vunpack.c.l.s8.bf16 %v4814
    %v5193 = vunpack.c.h.s8.bf16 %v4809
    %v5194 = vunpack.c.h.s8.bf16 %v4810
    %v5195 = vunpack.c.h.s8.bf16 %v4811
    %v5196 = vunpack.c.h.s8.bf16 %v4812
    %v5197 = vunpack.c.h.s8.bf16 %v4813
    %v5198 = vunpack.c.h.s8.bf16 %v4814
    %v5199 = vunpack.c.l.s8.bf16 %v4815
    %v5200 = vunpack.c.l.s8.bf16 %v4816
    %v5201 = vunpack.c.l.s8.bf16 %v4817
    %v5202 = vunpack.c.l.s8.bf16 %v4818
    %v5203 = vunpack.c.l.s8.bf16 %v4819
    %v5204 = vunpack.c.l.s8.bf16 %v4820
    %v5205 = vunpack.c.h.s8.bf16 %v4815
    %v5206 = vunpack.c.h.s8.bf16 %v4816
    %v5207 = vunpack.c.h.s8.bf16 %v4817
    %v5208 = vunpack.c.h.s8.bf16 %v4818
    %v5209 = vunpack.c.h.s8.bf16 %v4819
    %v5210 = vunpack.c.h.s8.bf16 %v4820
    %v5211 = vunpack.c.l.s8.bf16 %v4821
    %v5212 = vunpack.c.l.s8.bf16 %v4822
    %v5213 = vunpack.c.l.s8.bf16 %v4823
    %v5214 = vunpack.c.l.s8.bf16 %v4824
    %v5215 = vunpack.c.l.s8.bf16 %v4825
    %v5216 = vunpack.c.l.s8.bf16 %v4826
    %v5217 = vunpack.c.h.s8.bf16 %v4821
    %v5218 = vunpack.c.h.s8.bf16 %v4822
    %v5219 = vunpack.c.h.s8.bf16 %v4823
    %v5220 = vunpack.c.h.s8.bf16 %v4824
    %v5221 = vunpack.c.h.s8.bf16 %v4825
    %v5222 = vunpack.c.h.s8.bf16 %v4826
    %v5223 = vunpack.c.l.s8.bf16 %v4827
    %v5224 = vunpack.c.l.s8.bf16 %v4828
    %v5225 = vunpack.c.l.s8.bf16 %v4829
    %v5226 = vunpack.c.l.s8.bf16 %v4830
    %v5227 = vunpack.c.l.s8.bf16 %v4831
    %v5228 = vunpack.c.l.s8.bf16 %v4832
    %v5229 = vunpack.c.h.s8.bf16 %v4827
    %v5230 = vunpack.c.h.s8.bf16 %v4828
    %v5231 = vunpack.c.h.s8.bf16 %v4829
    %v5232 = vunpack.c.h.s8.bf16 %v4830
    %v5233 = vunpack.c.h.s8.bf16 %v4831
    %v5234 = vunpack.c.h.s8.bf16 %v4832
    %v5235 = vunpack.c.l.s8.bf16 %v4833
    %v5236 = vunpack.c.l.s8.bf16 %v4834
    %v5237 = vunpack.c.l.s8.bf16 %v4835
    %v5238 = vunpack.c.l.s8.bf16 %v4836
    %v5239 = vunpack.c.l.s8.bf16 %v4837
    %v5240 = vunpack.c.l.s8.bf16 %v4838
    %v5241 = vunpack.c.h.s8.bf16 %v4833
    %v5242 = vunpack.c.h.s8.bf16 %v4834
    %v5243 = vunpack.c.h.s8.bf16 %v4835
    %v5244 = vunpack.c.h.s8.bf16 %v4836
    %v5245 = vunpack.c.h.s8.bf16 %v4837
    %v5246 = vunpack.c.h.s8.bf16 %v4838
    %v5247 = vunpack.c.l.s8.bf16 %v4839
    %v5248 = vunpack.c.l.s8.bf16 %v4840
    %v5249 = vunpack.c.l.s8.bf16 %v4841
    %v5250 = vunpack.c.l.s8.bf16 %v4842
    %v5251 = vunpack.c.l.s8.bf16 %v4843
    %v5252 = vunpack.c.l.s8.bf16 %v4844
    %v5253 = vunpack.c.h.s8.bf16 %v4839
    %v5254 = vunpack.c.h.s8.bf16 %v4840
    %v5255 = vunpack.c.h.s8.bf16 %v4841
    %v5256 = vunpack.c.h.s8.bf16 %v4842
    %v5257 = vunpack.c.h.s8.bf16 %v4843
    %v5258 = vunpack.c.h.s8.bf16 %v4844
    %v5259 = vunpack.c.l.s8.bf16 %v4845
    %v5260 = vunpack.c.l.s8.bf16 %v4846
    %v5261 = vunpack.c.l.s8.bf16 %v4847
    %v5262 = vunpack.c.l.s8.bf16 %v4848
    %v5263 = vunpack.c.l.s8.bf16 %v4849
    %v5264 = vunpack.c.l.s8.bf16 %v4850
    %v5265 = vunpack.c.h.s8.bf16 %v4845
    %v5266 = vunpack.c.h.s8.bf16 %v4846
    %v5267 = vunpack.c.h.s8.bf16 %v4847
    %v5268 = vunpack.c.h.s8.bf16 %v4848
    %v5269 = vunpack.c.h.s8.bf16 %v4849
    %v5270 = vunpack.c.h.s8.bf16 %v4850
    %v5271 = vunpack.c.l.s8.bf16 %v4851
    %v5272 = vunpack.c.l.s8.bf16 %v4852
    %v5273 = vunpack.c.l.s8.bf16 %v4853
    %v5274 = vunpack.c.l.s8.bf16 %v4854
    %v5275 = vunpack.c.l.s8.bf16 %v4855
    %v5276 = vunpack.c.l.s8.bf16 %v4856
    %v5277 = vunpack.c.h.s8.bf16 %v4851
    %v5278 = vunpack.c.h.s8.bf16 %v4852
    %v5279 = vunpack.c.h.s8.bf16 %v4853
    %v5280 = vunpack.c.h.s8.bf16 %v4854
    %v5281 = vunpack.c.h.s8.bf16 %v4855
    %v5282 = vunpack.c.h.s8.bf16 %v4856
    %v5283 = vunpack.c.l.s8.bf16 %v4857
    %v5284 = vunpack.c.l.s8.bf16 %v4858
    %v5285 = vunpack.c.l.s8.bf16 %v4859
    %v5286 = vunpack.c.l.s8.bf16 %v4860
    %v5287 = vunpack.c.l.s8.bf16 %v4861
    %v5288 = vunpack.c.l.s8.bf16 %v4862
    %v5289 = vunpack.c.h.s8.bf16 %v4857
    %v5290 = vunpack.c.h.s8.bf16 %v4858
    %v5291 = vunpack.c.h.s8.bf16 %v4859
    %v5292 = vunpack.c.h.s8.bf16 %v4860
    %v5293 = vunpack.c.h.s8.bf16 %v4861
    %v5294 = vunpack.c.h.s8.bf16 %v4862
    %v5295 = vpack.c.bf16 %v4638, %v4638
    %v5296 = vpack.c.bf16 %v4639, %v4639
    %v5297 = vpack.c.bf16 %v4640, %v4640
    %v5298 = vpack.c.bf16 %v4641, %v4641
    %v5299 = vpack.c.bf16 %v4642, %v4642
    %v5300 = vpack.c.bf16 %v4643, %v4643
    %v5301 = vpack.c.bf16 %v4644, %v4644
    %v5302 = vpack.c.bf16 %v4645, %v4645
    %v5303 = vpack.c.bf16 %v4646, %v4646
    %5304 = vmatprep.subr.bf16.mxu0 %v4864
    %5305 = vmatpush1.bf16.msra.mxu0 %v4863
    %5306 = vmatprep.subr.bf16.mxu0 %v4870
    %5307 = vmatpush1.bf16.msra.mxu0 %v4869
    %5308 = vmatprep.subr.bf16.mxu0 %v4876
    %5309 = vmatpush1.bf16.msra.mxu0 %v4875
    %5310 = vmatprep.subr.bf16.mxu0 %v4882
    %5311 = vmatpush1.bf16.msra.mxu0 %v4881
    %5312 = vmatprep.subr.bf16.mxu0 %v4888
    %5313 = vmatpush1.bf16.msra.mxu0 %v4887
    %5314 = vmatprep.subr.bf16.mxu0 %v4894
    %5315 = vmatpush1.bf16.msra.mxu0 %v4893
    %5316 = vmatprep.subr.bf16.mxu0 %v4900
    %5317 = vmatpush1.bf16.msra.mxu0 %v4899
    %5318 = vmatprep.subr.bf16.mxu0 %v4906
    %5319 = vmatpush1.bf16.msra.mxu0 %v4905
    %5320 = vmatprep.subr.bf16.mxu0 %v4912
    %5321 = vmatpush1.bf16.msra.mxu0 %v4911
    %5322 = vmatprep.subr.bf16.mxu0 %v4918
    %5323 = vmatpush1.bf16.msra.mxu0 %v4917
    %5324 = vmatprep.subr.bf16.mxu0 %v4924
    %5325 = vmatpush1.bf16.msra.mxu0 %v4923
    %5326 = vmatprep.subr.bf16.mxu0 %v4930
    %5327 = vmatpush1.bf16.msra.mxu0 %v4929
    %5328 = vmatprep.subr.bf16.mxu0 %v4936
    %5329 = vmatpush1.bf16.msra.mxu0 %v4935
    %5330 = vmatprep.subr.bf16.mxu0 %v4942
    %5331 = vmatpush1.bf16.msra.mxu0 %v4941
    %5332 = vmatprep.subr.bf16.mxu0 %v4948
    %5333 = vmatpush1.bf16.msra.mxu0 %v4947
    %5334 = vmatprep.subr.bf16.mxu0 %v4954
    %5335 = vmatpush1.bf16.msra.mxu0 %v4953
    %5336 = vmatprep.mubr.bf16.mxu0 %v5296
    %5337 = vmatmul.mubr.bf16.gmra.mrb[0].mxu0 %v5295
    %v5338 = vpop.f32.mrb[0].mxu0
    %v5339 = vadd.f32 0.0, %v5338
    %v5340 = vpop.f32.mrb[0].mxu0
    %v5341 = vadd.f32 0.0, %v5340
    %v5342 = vpop.f32.mrb[0].mxu0
    %v5343 = vpop.f32.mrb[0].mxu0
    %5344 = vdwg.mxu0
    %5345 = vmatprep.subr.bf16.mxu0 %v4960
    %5346 = vmatpush1.bf16.msra.mxu0 %v4959
    %5347 = vmatprep.subr.bf16.mxu0 %v4966
    %5348 = vmatpush1.bf16.msra.mxu0 %v4965
    %5349 = vmatprep.subr.bf16.mxu0 %v4972
    %5350 = vmatpush1.bf16.msra.mxu0 %v4971
    %5351 = vmatprep.subr.bf16.mxu0 %v4978
    %5352 = vmatpush1.bf16.msra.mxu0 %v4977
    %5353 = vmatprep.subr.bf16.mxu0 %v4984
    %5354 = vmatpush1.bf16.msra.mxu0 %v4983
    %5355 = vmatprep.subr.bf16.mxu0 %v4990
    %5356 = vmatpush1.bf16.msra.mxu0 %v4989
    %5357 = vmatprep.subr.bf16.mxu0 %v4996
    %5358 = vmatpush1.bf16.msra.mxu0 %v4995
    %5359 = vmatprep.subr.bf16.mxu0 %v5002
    %5360 = vmatpush1.bf16.msra.mxu0 %v5001
    %5361 = vmatprep.subr.bf16.mxu0 %v5008
    %5362 = vmatpush1.bf16.msra.mxu0 %v5007
    %5363 = vmatprep.subr.bf16.mxu0 %v5014
    %5364 = vmatpush1.bf16.msra.mxu0 %v5013
    %5365 = vmatprep.subr.bf16.mxu0 %v5020
    %5366 = vmatpush1.bf16.msra.mxu0 %v5019
    %5367 = vmatprep.subr.bf16.mxu0 %v5026
    %5368 = vmatpush1.bf16.msra.mxu0 %v5025
    %5369 = vmatprep.subr.bf16.mxu0 %v5032
    %5370 = vmatpush1.bf16.msra.mxu0 %v5031
    %5371 = vmatprep.subr.bf16.mxu0 %v5038
    %5372 = vmatpush1.bf16.msra.mxu0 %v5037
    %5373 = vmatprep.subr.bf16.mxu0 %v5044
    %5374 = vmatpush1.bf16.msra.mxu0 %v5043
    %5375 = vmatprep.subr.bf16.mxu0 %v5050
    %5376 = vmatpush1.bf16.msra.mxu0 %v5049
    %5377 = vmatprep.mubr.bf16.mxu0 %v5298
    %5378 = vmatmul.mubr.bf16.gmra.mrb[0].mxu0 %v5297
    %v5379 = vpop.f32.mrb[0].mxu0
    %v5380 = vadd.f32 %v5339, %v5379
    %v5381 = vpop.f32.mrb[0].mxu0
    %v5382 = vadd.f32 %v5341, %v5381
    %v5383 = vpop.f32.mrb[0].mxu0
    %v5384 = vpop.f32.mrb[0].mxu0
    %5385 = vdwg.mxu0
    %5386 = vmatprep.subr.bf16.mxu0 %v5056
    %5387 = vmatpush1.bf16.msra.mxu0 %v5055
    %5388 = vmatprep.subr.bf16.mxu0 %v5062
    %5389 = vmatpush1.bf16.msra.mxu0 %v5061
    %5390 = vmatprep.subr.bf16.mxu0 %v5068
    %5391 = vmatpush1.bf16.msra.mxu0 %v5067
    %5392 = vmatprep.subr.bf16.mxu0 %v5074
    %5393 = vmatpush1.bf16.msra.mxu0 %v5073
    %5394 = vmatprep.subr.bf16.mxu0 %v5080
    %5395 = vmatpush1.bf16.msra.mxu0 %v5079
    %5396 = vmatprep.subr.bf16.mxu0 %v5086
    %5397 = vmatpush1.bf16.msra.mxu0 %v5085
    %5398 = vmatprep.subr.bf16.mxu0 %v5092
    %5399 = vmatpush1.bf16.msra.mxu0 %v5091
    %5400 = vmatprep.subr.bf16.mxu0 %v5098
    %5401 = vmatpush1.bf16.msra.mxu0 %v5097
    %5402 = vmatprep.subr.bf16.mxu0 %v5104
    %5403 = vmatpush1.bf16.msra.mxu0 %v5103
    %5404 = vmatprep.subr.bf16.mxu0 %v5110
    %5405 = vmatpush1.bf16.msra.mxu0 %v5109
    %5406 = vmatprep.subr.bf16.mxu0 %v5116
    %5407 = vmatpush1.bf16.msra.mxu0 %v5115
    %5408 = vmatprep.subr.bf16.mxu0 %v5122
    %5409 = vmatpush1.bf16.msra.mxu0 %v5121
    %5410 = vmatprep.subr.bf16.mxu0 %v5128
    %5411 = vmatpush1.bf16.msra.mxu0 %v5127
    %5412 = vmatprep.subr.bf16.mxu0 %v5134
    %5413 = vmatpush1.bf16.msra.mxu0 %v5133
    %5414 = vmatprep.subr.bf16.mxu0 %v5140
    %5415 = vmatpush1.bf16.msra.mxu0 %v5139
    %5416 = vmatprep.subr.bf16.mxu0 %v5146
    %5417 = vmatpush1.bf16.msra.mxu0 %v5145
    %5418 = vmatprep.mubr.bf16.mxu0 %v5300
    %5419 = vmatmul.mubr.bf16.gmra.mrb[0].mxu0 %v5299
    %v5420 = vpop.f32.mrb[0].mxu0
    %v5421 = vadd.f32 %v5380, %v5420
    %v5422 = vpop.f32.mrb[0].mxu0
    %v5423 = vadd.f32 %v5382, %v5422
    %v5424 = vpop.f32.mrb[0].mxu0
    %v5425 = vpop.f32.mrb[0].mxu0
    %5426 = vdwg.mxu0
    %5427 = vmatprep.subr.bf16.mxu0 %v5152
    %5428 = vmatpush1.bf16.msra.mxu0 %v5151
    %5429 = vmatprep.subr.bf16.mxu0 %v5158
    %5430 = vmatpush1.bf16.msra.mxu0 %v5157
    %5431 = vmatprep.subr.bf16.mxu0 %v5164
    %5432 = vmatpush1.bf16.msra.mxu0 %v5163
    %5433 = vmatprep.subr.bf16.mxu0 %v5170
    %5434 = vmatpush1.bf16.msra.mxu0 %v5169
    %5435 = vmatprep.subr.bf16.mxu0 %v5176
    %5436 = vmatpush1.bf16.msra.mxu0 %v5175
    %5437 = vmatprep.subr.bf16.mxu0 %v5182
    %5438 = vmatpush1.bf16.msra.mxu0 %v5181
    %5439 = vmatprep.subr.bf16.mxu0 %v5188
    %5440 = vmatpush1.bf16.msra.mxu0 %v5187
    %5441 = vmatprep.subr.bf16.mxu0 %v5194
    %5442 = vmatpush1.bf16.msra.mxu0 %v5193
    %5443 = vmatprep.subr.bf16.mxu0 %v5200
    %5444 = vmatpush1.bf16.msra.mxu0 %v5199
    %5445 = vmatprep.subr.bf16.mxu0 %v5206
    %5446 = vmatpush1.bf16.msra.mxu0 %v5205
    %5447 = vmatprep.subr.bf16.mxu0 %v5212
    %5448 = vmatpush1.bf16.msra.mxu0 %v5211
    %5449 = vmatprep.subr.bf16.mxu0 %v5218
    %5450 = vmatpush1.bf16.msra.mxu0 %v5217
    %5451 = vmatprep.subr.bf16.mxu0 %v5224
    %5452 = vmatpush1.bf16.msra.mxu0 %v5223
    %5453 = vmatprep.subr.bf16.mxu0 %v5230
    %5454 = vmatpush1.bf16.msra.mxu0 %v5229
    %5455 = vmatprep.subr.bf16.mxu0 %v5236
    %5456 = vmatpush1.bf16.msra.mxu0 %v5235
    %5457 = vmatprep.subr.bf16.mxu0 %v5242
    %5458 = vmatpush1.bf16.msra.mxu0 %v5241
    %5459 = vmatprep.mubr.bf16.mxu0 %v5302
    %5460 = vmatmul.mubr.bf16.gmra.mrb[0].mxu0 %v5301
    %v5461 = vpop.f32.mrb[0].mxu0
    %v5462 = vadd.f32 %v5421, %v5461
    %v5463 = vpop.f32.mrb[0].mxu0
    %v5464 = vadd.f32 %v5423, %v5463
    %v5465 = vpop.f32.mrb[0].mxu0
    %v5466 = vpop.f32.mrb[0].mxu0
    %5467 = vdwg.mxu0
    %5468 = vmatprep.subr.bf16.mxu0 %v5248
    %5469 = vmatpush1.bf16.msra.mxu0 %v5247
    %5470 = vmatprep.subr.bf16.mxu0 %v5254
    %5471 = vmatpush1.bf16.msra.mxu0 %v5253
    %5472 = vmatprep.subr.bf16.mxu0 %v5260
    %5473 = vmatpush1.bf16.msra.mxu0 %v5259
    %5474 = vmatprep.subr.bf16.mxu0 %v5266
    %5475 = vmatpush1.bf16.msra.mxu0 %v5265
    %5476 = vmatprep.subr.bf16.mxu0 %v5272
    %5477 = vmatpush1.bf16.msra.mxu0 %v5271
    %5478 = vmatprep.subr.bf16.mxu0 %v5278
    %5479 = vmatpush1.bf16.msra.mxu0 %v5277
    %5480 = vmatprep.subr.bf16.mxu0 %v5284
    %5481 = vmatpush1.bf16.msra.mxu0 %v5283
    %5482 = vmatprep.subr.bf16.mxu0 %v5290
    %5483 = vmatpush1.bf16.msra.mxu0 %v5289
    %5484 = vmatprep.subr.bf16.mxu0 0
    %5485 = vmatpush1.bf16.msra.mxu0 0
    %5486 = vmatprep.subr.bf16.mxu0 0
    %5487 = vmatpush1.bf16.msra.mxu0 0
    %5488 = vmatprep.subr.bf16.mxu0 0
    %5489 = vmatpush1.bf16.msra.mxu0 0
    %5490 = vmatprep.subr.bf16.mxu0 0
    %5491 = vmatpush1.bf16.msra.mxu0 0
    %5492 = vmatprep.subr.bf16.mxu0 0
    %5493 = vmatpush1.bf16.msra.mxu0 0
    %5494 = vmatprep.subr.bf16.mxu0 0
    %5495 = vmatpush1.bf16.msra.mxu0 0
    %5496 = vmatprep.subr.bf16.mxu0 0
    %5497 = vmatpush1.bf16.msra.mxu0 0
    %5498 = vmatprep.subr.bf16.mxu0 0
    %5499 = vmatpush1.bf16.msra.mxu0 0
    %5500 = vmatprep.mubr.bf16.mxu0 0
    %5501 = vmatmul.mubr.bf16.gmra.mrb[0].mxu0 %v5303
    %v5502 = vpop.f32.mrb[0].mxu0
    %v5503 = vadd.f32 %v5462, %v5502
    %v5504 = vpop.f32.mrb[0].mxu0
    %v5505 = vadd.f32 %v5464, %v5504
    %v5506 = vpop.f32.mrb[0].mxu0
    %v5507 = vpop.f32.mrb[0].mxu0
    %5508 = vdwg.mxu0
    %5509 = vmatprep.subr.bf16.mxu0 %v4866
    %5510 = vmatpush1.bf16.msra.mxu0 %v4865
    %5511 = vmatprep.subr.bf16.mxu0 %v4872
    %5512 = vmatpush1.bf16.msra.mxu0 %v4871
    %5513 = vmatprep.subr.bf16.mxu0 %v4878
    %5514 = vmatpush1.bf16.msra.mxu0 %v4877
    %5515 = vmatprep.subr.bf16.mxu0 %v4884
    %5516 = vmatpush1.bf16.msra.mxu0 %v4883
    %5517 = vmatprep.subr.bf16.mxu0 %v4890
    %5518 = vmatpush1.bf16.msra.mxu0 %v4889
    %5519 = vmatprep.subr.bf16.mxu0 %v4896
    %5520 = vmatpush1.bf16.msra.mxu0 %v4895
    %5521 = vmatprep.subr.bf16.mxu0 %v4902
    %5522 = vmatpush1.bf16.msra.mxu0 %v4901
    %5523 = vmatprep.subr.bf16.mxu0 %v4908
    %5524 = vmatpush1.bf16.msra.mxu0 %v4907
    %5525 = vmatprep.subr.bf16.mxu0 %v4914
    %5526 = vmatpush1.bf16.msra.mxu0 %v4913
    %5527 = vmatprep.subr.bf16.mxu0 %v4920
    %5528 = vmatpush1.bf16.msra.mxu0 %v4919
    %5529 = vmatprep.subr.bf16.mxu0 %v4926
    %5530 = vmatpush1.bf16.msra.mxu0 %v4925
    %5531 = vmatprep.subr.bf16.mxu0 %v4932
    %5532 = vmatpush1.bf16.msra.mxu0 %v4931
    %5533 = vmatprep.subr.bf16.mxu0 %v4938
    %5534 = vmatpush1.bf16.msra.mxu0 %v4937
    %5535 = vmatprep.subr.bf16.mxu0 %v4944
    %5536 = vmatpush1.bf16.msra.mxu0 %v4943
    %5537 = vmatprep.subr.bf16.mxu0 %v4950
    %5538 = vmatpush1.bf16.msra.mxu0 %v4949
    %5539 = vmatprep.subr.bf16.mxu0 %v4956
    %5540 = vmatpush1.bf16.msra.mxu0 %v4955
    %5541 = vmatprep.mubr.bf16.mxu0 %v5296
    %5542 = vmatmul.mubr.bf16.gmra.mrb[0].mxu0 %v5295
    %v5543 = vpop.f32.mrb[0].mxu0
    %v5544 = vadd.f32 0.0, %v5543
    %v5545 = vpop.f32.mrb[0].mxu0
    %v5546 = vadd.f32 0.0, %v5545
    %v5547 = vpop.f32.mrb[0].mxu0
    %v5548 = vpop.f32.mrb[0].mxu0
    %5549 = vdwg.mxu0
    %5550 = vmatprep.subr.bf16.mxu0 %v4962
    %5551 = vmatpush1.bf16.msra.mxu0 %v4961
    %5552 = vmatprep.subr.bf16.mxu0 %v4968
    %5553 = vmatpush1.bf16.msra.mxu0 %v4967
    %5554 = vmatprep.subr.bf16.mxu0 %v4974
    %5555 = vmatpush1.bf16.msra.mxu0 %v4973
    %5556 = vmatprep.subr.bf16.mxu0 %v4980
    %5557 = vmatpush1.bf16.msra.mxu0 %v4979
    %5558 = vmatprep.subr.bf16.mxu0 %v4986
    %5559 = vmatpush1.bf16.msra.mxu0 %v4985
    %5560 = vmatprep.subr.bf16.mxu0 %v4992
    %5561 = vmatpush1.bf16.msra.mxu0 %v4991
    %5562 = vmatprep.subr.bf16.mxu0 %v4998
    %5563 = vmatpush1.bf16.msra.mxu0 %v4997
    %5564 = vmatprep.subr.bf16.mxu0 %v5004
    %5565 = vmatpush1.bf16.msra.mxu0 %v5003
    %5566 = vmatprep.subr.bf16.mxu0 %v5010
    %5567 = vmatpush1.bf16.msra.mxu0 %v5009
    %5568 = vmatprep.subr.bf16.mxu0 %v5016
    %5569 = vmatpush1.bf16.msra.mxu0 %v5015
    %5570 = vmatprep.subr.bf16.mxu0 %v5022
    %5571 = vmatpush1.bf16.msra.mxu0 %v5021
    %5572 = vmatprep.subr.bf16.mxu0 %v5028
    %5573 = vmatpush1.bf16.msra.mxu0 %v5027
    %5574 = vmatprep.subr.bf16.mxu0 %v5034
    %5575 = vmatpush1.bf16.msra.mxu0 %v5033
    %5576 = vmatprep.subr.bf16.mxu0 %v5040
    %5577 = vmatpush1.bf16.msra.mxu0 %v5039
    %5578 = vmatprep.subr.bf16.mxu0 %v5046
    %5579 = vmatpush1.bf16.msra.mxu0 %v5045
    %5580 = vmatprep.subr.bf16.mxu0 %v5052
    %5581 = vmatpush1.bf16.msra.mxu0 %v5051
    %5582 = vmatprep.mubr.bf16.mxu0 %v5298
    %5583 = vmatmul.mubr.bf16.gmra.mrb[0].mxu0 %v5297
    %v5584 = vpop.f32.mrb[0].mxu0
    %v5585 = vadd.f32 %v5544, %v5584
    %v5586 = vpop.f32.mrb[0].mxu0
    %v5587 = vadd.f32 %v5546, %v5586
    %v5588 = vpop.f32.mrb[0].mxu0
    %v5589 = vpop.f32.mrb[0].mxu0
    %5590 = vdwg.mxu0
    %5591 = vmatprep.subr.bf16.mxu0 %v5058
    %5592 = vmatpush1.bf16.msra.mxu0 %v5057
    %5593 = vmatprep.subr.bf16.mxu0 %v5064
    %5594 = vmatpush1.bf16.msra.mxu0 %v5063
    %5595 = vmatprep.subr.bf16.mxu0 %v5070
    %5596 = vmatpush1.bf16.msra.mxu0 %v5069
    %5597 = vmatprep.subr.bf16.mxu0 %v5076
    %5598 = vmatpush1.bf16.msra.mxu0 %v5075
    %5599 = vmatprep.subr.bf16.mxu0 %v5082
    %5600 = vmatpush1.bf16.msra.mxu0 %v5081
    %5601 = vmatprep.subr.bf16.mxu0 %v5088
    %5602 = vmatpush1.bf16.msra.mxu0 %v5087
    %5603 = vmatprep.subr.bf16.mxu0 %v5094
    %5604 = vmatpush1.bf16.msra.mxu0 %v5093
    %5605 = vmatprep.subr.bf16.mxu0 %v5100
    %5606 = vmatpush1.bf16.msra.mxu0 %v5099
    %5607 = vmatprep.subr.bf16.mxu0 %v5106
    %5608 = vmatpush1.bf16.msra.mxu0 %v5105
    %5609 = vmatprep.subr.bf16.mxu0 %v5112
    %5610 = vmatpush1.bf16.msra.mxu0 %v5111
    %5611 = vmatprep.subr.bf16.mxu0 %v5118
    %5612 = vmatpush1.bf16.msra.mxu0 %v5117
    %5613 = vmatprep.subr.bf16.mxu0 %v5124
    %5614 = vmatpush1.bf16.msra.mxu0 %v5123
    %5615 = vmatprep.subr.bf16.mxu0 %v5130
    %5616 = vmatpush1.bf16.msra.mxu0 %v5129
    %5617 = vmatprep.subr.bf16.mxu0 %v5136
    %5618 = vmatpush1.bf16.msra.mxu0 %v5135
    %5619 = vmatprep.subr.bf16.mxu0 %v5142
    %5620 = vmatpush1.bf16.msra.mxu0 %v5141
    %5621 = vmatprep.subr.bf16.mxu0 %v5148
    %5622 = vmatpush1.bf16.msra.mxu0 %v5147
    %5623 = vmatprep.mubr.bf16.mxu0 %v5300
    %5624 = vmatmul.mubr.bf16.gmra.mrb[0].mxu0 %v5299
    %v5625 = vpop.f32.mrb[0].mxu0
    %v5626 = vadd.f32 %v5585, %v5625
    %v5627 = vpop.f32.mrb[0].mxu0
    %v5628 = vadd.f32 %v5587, %v5627
    %v5629 = vpop.f32.mrb[0].mxu0
    %v5630 = vpop.f32.mrb[0].mxu0
    %5631 = vdwg.mxu0
    %5632 = vmatprep.subr.bf16.mxu0 %v5154
    %5633 = vmatpush1.bf16.msra.mxu0 %v5153
    %5634 = vmatprep.subr.bf16.mxu0 %v5160
    %5635 = vmatpush1.bf16.msra.mxu0 %v5159
    %5636 = vmatprep.subr.bf16.mxu0 %v5166
    %5637 = vmatpush1.bf16.msra.mxu0 %v5165
    %5638 = vmatprep.subr.bf16.mxu0 %v5172
    %5639 = vmatpush1.bf16.msra.mxu0 %v5171
    %5640 = vmatprep.subr.bf16.mxu0 %v5178
    %5641 = vmatpush1.bf16.msra.mxu0 %v5177
    %5642 = vmatprep.subr.bf16.mxu0 %v5184
    %5643 = vmatpush1.bf16.msra.mxu0 %v5183
    %5644 = vmatprep.subr.bf16.mxu0 %v5190
    %5645 = vmatpush1.bf16.msra.mxu0 %v5189
    %5646 = vmatprep.subr.bf16.mxu0 %v5196
    %5647 = vmatpush1.bf16.msra.mxu0 %v5195
    %5648 = vmatprep.subr.bf16.mxu0 %v5202
    %5649 = vmatpush1.bf16.msra.mxu0 %v5201
    %5650 = vmatprep.subr.bf16.mxu0 %v5208
    %5651 = vmatpush1.bf16.msra.mxu0 %v5207
    %5652 = vmatprep.subr.bf16.mxu0 %v5214
    %5653 = vmatpush1.bf16.msra.mxu0 %v5213
    %5654 = vmatprep.subr.bf16.mxu0 %v5220
    %5655 = vmatpush1.bf16.msra.mxu0 %v5219
    %5656 = vmatprep.subr.bf16.mxu0 %v5226
    %5657 = vmatpush1.bf16.msra.mxu0 %v5225
    %5658 = vmatprep.subr.bf16.mxu0 %v5232
    %5659 = vmatpush1.bf16.msra.mxu0 %v5231
    %5660 = vmatprep.subr.bf16.mxu0 %v5238
    %5661 = vmatpush1.bf16.msra.mxu0 %v5237
    %5662 = vmatprep.subr.bf16.mxu0 %v5244
    %5663 = vmatpush1.bf16.msra.mxu0 %v5243
    %5664 = vmatprep.mubr.bf16.mxu0 %v5302
    %5665 = vmatmul.mubr.bf16.gmra.mrb[0].mxu0 %v5301
    %v5666 = vpop.f32.mrb[0].mxu0
    %v5667 = vadd.f32 %v5626, %v5666
    %v5668 = vpop.f32.mrb[0].mxu0
    %v5669 = vadd.f32 %v5628, %v5668
    %v5670 = vpop.f32.mrb[0].mxu0
    %v5671 = vpop.f32.mrb[0].mxu0
    %5672 = vdwg.mxu0
    %5673 = vmatprep.subr.bf16.mxu0 %v5250
    %5674 = vmatpush1.bf16.msra.mxu0 %v5249
    %5675 = vmatprep.subr.bf16.mxu0 %v5256
    %5676 = vmatpush1.bf16.msra.mxu0 %v5255
    %5677 = vmatprep.subr.bf16.mxu0 %v5262
    %5678 = vmatpush1.bf16.msra.mxu0 %v5261
    %5679 = vmatprep.subr.bf16.mxu0 %v5268
    %5680 = vmatpush1.bf16.msra.mxu0 %v5267
    %5681 = vmatprep.subr.bf16.mxu0 %v5274
    %5682 = vmatpush1.bf16.msra.mxu0 %v5273
    %5683 = vmatprep.subr.bf16.mxu0 %v5280
    %5684 = vmatpush1.bf16.msra.mxu0 %v5279
    %5685 = vmatprep.subr.bf16.mxu0 %v5286
    %5686 = vmatpush1.bf16.msra.mxu0 %v5285
    %5687 = vmatprep.subr.bf16.mxu0 %v5292
    %5688 = vmatpush1.bf16.msra.mxu0 %v5291
    %5689 = vmatprep.subr.bf16.mxu0 0
    %5690 = vmatpush1.bf16.msra.mxu0 0
    %5691 = vmatprep.subr.bf16.mxu0 0
    %5692 = vmatpush1.bf16.msra.mxu0 0
    %5693 = vmatprep.subr.bf16.mxu0 0
    %5694 = vmatpush1.bf16.msra.mxu0 0
    %5695 = vmatprep.subr.bf16.mxu0 0
    %5696 = vmatpush1.bf16.msra.mxu0 0
    %5697 = vmatprep.subr.bf16.mxu0 0
    %5698 = vmatpush1.bf16.msra.mxu0 0
    %5699 = vmatprep.subr.bf16.mxu0 0
    %5700 = vmatpush1.bf16.msra.mxu0 0
    %5701 = vmatprep.subr.bf16.mxu0 0
    %5702 = vmatpush1.bf16.msra.mxu0 0
    %5703 = vmatprep.subr.bf16.mxu0 0
    %5704 = vmatpush1.bf16.msra.mxu0 0
    %5705 = vmatprep.mubr.bf16.mxu0 0
    %5706 = vmatmul.mubr.bf16.gmra.mrb[0].mxu0 %v5303
    %v5707 = vpop.f32.mrb[0].mxu0
    %v5708 = vadd.f32 %v5667, %v5707
    %v5709 = vpop.f32.mrb[0].mxu0
    %v5710 = vadd.f32 %v5669, %v5709
    %v5711 = vpop.f32.mrb[0].mxu0
    %v5712 = vpop.f32.mrb[0].mxu0
    %5713 = vdwg.mxu0
    %5714 = vmatprep.subr.bf16.mxu0 %v4868
    %5715 = vmatpush1.bf16.msra.mxu0 %v4867
    %5716 = vmatprep.subr.bf16.mxu0 %v4874
    %5717 = vmatpush1.bf16.msra.mxu0 %v4873
    %5718 = vmatprep.subr.bf16.mxu0 %v4880
    %5719 = vmatpush1.bf16.msra.mxu0 %v4879
    %5720 = vmatprep.subr.bf16.mxu0 %v4886
    %5721 = vmatpush1.bf16.msra.mxu0 %v4885
    %5722 = vmatprep.subr.bf16.mxu0 %v4892
    %5723 = vmatpush1.bf16.msra.mxu0 %v4891
    %5724 = vmatprep.subr.bf16.mxu0 %v4898
    %5725 = vmatpush1.bf16.msra.mxu0 %v4897
    %5726 = vmatprep.subr.bf16.mxu0 %v4904
    %5727 = vmatpush1.bf16.msra.mxu0 %v4903
    %5728 = vmatprep.subr.bf16.mxu0 %v4910
    %5729 = vmatpush1.bf16.msra.mxu0 %v4909
    %5730 = vmatprep.subr.bf16.mxu0 %v4916
    %5731 = vmatpush1.bf16.msra.mxu0 %v4915
    %5732 = vmatprep.subr.bf16.mxu0 %v4922
    %5733 = vmatpush1.bf16.msra.mxu0 %v4921
    %5734 = vmatprep.subr.bf16.mxu0 %v4928
    %5735 = vmatpush1.bf16.msra.mxu0 %v4927
    %5736 = vmatprep.subr.bf16.mxu0 %v4934
    %5737 = vmatpush1.bf16.msra.mxu0 %v4933
    %5738 = vmatprep.subr.bf16.mxu0 %v4940
    %5739 = vmatpush1.bf16.msra.mxu0 %v4939
    %5740 = vmatprep.subr.bf16.mxu0 %v4946
    %5741 = vmatpush1.bf16.msra.mxu0 %v4945
    %5742 = vmatprep.subr.bf16.mxu0 %v4952
    %5743 = vmatpush1.bf16.msra.mxu0 %v4951
    %5744 = vmatprep.subr.bf16.mxu0 %v4958
    %5745 = vmatpush1.bf16.msra.mxu0 %v4957
    %5746 = vmatprep.mubr.bf16.mxu0 %v5296
    %5747 = vmatmul.mubr.bf16.gmra.mrb[0].mxu0 %v5295
    %v5748 = vpop.f32.mrb[0].mxu0
    %v5749 = vadd.f32 0.0, %v5748
    %v5750 = vpop.f32.mrb[0].mxu0
    %v5751 = vadd.f32 0.0, %v5750
    %v5752 = vpop.f32.mrb[0].mxu0
    %v5753 = vpop.f32.mrb[0].mxu0
    %5754 = vdwg.mxu0
    %5755 = vmatprep.subr.bf16.mxu0 %v4964
    %5756 = vmatpush1.bf16.msra.mxu0 %v4963
    %5757 = vmatprep.subr.bf16.mxu0 %v4970
    %5758 = vmatpush1.bf16.msra.mxu0 %v4969
    %5759 = vmatprep.subr.bf16.mxu0 %v4976
    %5760 = vmatpush1.bf16.msra.mxu0 %v4975
    %5761 = vmatprep.subr.bf16.mxu0 %v4982
    %5762 = vmatpush1.bf16.msra.mxu0 %v4981
    %5763 = vmatprep.subr.bf16.mxu0 %v4988
    %5764 = vmatpush1.bf16.msra.mxu0 %v4987
    %5765 = vmatprep.subr.bf16.mxu0 %v4994
    %5766 = vmatpush1.bf16.msra.mxu0 %v4993
    %5767 = vmatprep.subr.bf16.mxu0 %v5000
    %5768 = vmatpush1.bf16.msra.mxu0 %v4999
    %5769 = vmatprep.subr.bf16.mxu0 %v5006
    %5770 = vmatpush1.bf16.msra.mxu0 %v5005
    %5771 = vmatprep.subr.bf16.mxu0 %v5012
    %5772 = vmatpush1.bf16.msra.mxu0 %v5011
    %5773 = vmatprep.subr.bf16.mxu0 %v5018
    %5774 = vmatpush1.bf16.msra.mxu0 %v5017
    %5775 = vmatprep.subr.bf16.mxu0 %v5024
    %5776 = vmatpush1.bf16.msra.mxu0 %v5023
    %5777 = vmatprep.subr.bf16.mxu0 %v5030
    %5778 = vmatpush1.bf16.msra.mxu0 %v5029
    %5779 = vmatprep.subr.bf16.mxu0 %v5036
    %5780 = vmatpush1.bf16.msra.mxu0 %v5035
    %5781 = vmatprep.subr.bf16.mxu0 %v5042
    %5782 = vmatpush1.bf16.msra.mxu0 %v5041
    %5783 = vmatprep.subr.bf16.mxu0 %v5048
    %5784 = vmatpush1.bf16.msra.mxu0 %v5047
    %5785 = vmatprep.subr.bf16.mxu0 %v5054
    %5786 = vmatpush1.bf16.msra.mxu0 %v5053
    %5787 = vmatprep.mubr.bf16.mxu0 %v5298
    %5788 = vmatmul.mubr.bf16.gmra.mrb[0].mxu0 %v5297
    %v5789 = vpop.f32.mrb[0].mxu0
    %v5790 = vadd.f32 %v5749, %v5789
    %v5791 = vpop.f32.mrb[0].mxu0
    %v5792 = vadd.f32 %v5751, %v5791
    %v5793 = vpop.f32.mrb[0].mxu0
    %v5794 = vpop.f32.mrb[0].mxu0
    %5795 = vdwg.mxu0
    %5796 = vmatprep.subr.bf16.mxu0 %v5060
    %5797 = vmatpush1.bf16.msra.mxu0 %v5059
    %5798 = vmatprep.subr.bf16.mxu0 %v5066
    %5799 = vmatpush1.bf16.msra.mxu0 %v5065
    %5800 = vmatprep.subr.bf16.mxu0 %v5072
    %5801 = vmatpush1.bf16.msra.mxu0 %v5071
    %5802 = vmatprep.subr.bf16.mxu0 %v5078
    %5803 = vmatpush1.bf16.msra.mxu0 %v5077
    %5804 = vmatprep.subr.bf16.mxu0 %v5084
    %5805 = vmatpush1.bf16.msra.mxu0 %v5083
    %5806 = vmatprep.subr.bf16.mxu0 %v5090
    %5807 = vmatpush1.bf16.msra.mxu0 %v5089
    %5808 = vmatprep.subr.bf16.mxu0 %v5096
    %5809 = vmatpush1.bf16.msra.mxu0 %v5095
    %5810 = vmatprep.subr.bf16.mxu0 %v5102
    %5811 = vmatpush1.bf16.msra.mxu0 %v5101
    %5812 = vmatprep.subr.bf16.mxu0 %v5108
    %5813 = vmatpush1.bf16.msra.mxu0 %v5107
    %5814 = vmatprep.subr.bf16.mxu0 %v5114
    %5815 = vmatpush1.bf16.msra.mxu0 %v5113
    %5816 = vmatprep.subr.bf16.mxu0 %v5120
    %5817 = vmatpush1.bf16.msra.mxu0 %v5119
    %5818 = vmatprep.subr.bf16.mxu0 %v5126
    %5819 = vmatpush1.bf16.msra.mxu0 %v5125
    %5820 = vmatprep.subr.bf16.mxu0 %v5132
    %5821 = vmatpush1.bf16.msra.mxu0 %v5131
    %5822 = vmatprep.subr.bf16.mxu0 %v5138
    %5823 = vmatpush1.bf16.msra.mxu0 %v5137
    %5824 = vmatprep.subr.bf16.mxu0 %v5144
    %5825 = vmatpush1.bf16.msra.mxu0 %v5143
    %5826 = vmatprep.subr.bf16.mxu0 %v5150
    %5827 = vmatpush1.bf16.msra.mxu0 %v5149
    %5828 = vmatprep.mubr.bf16.mxu0 %v5300
    %5829 = vmatmul.mubr.bf16.gmra.mrb[0].mxu0 %v5299
    %v5830 = vpop.f32.mrb[0].mxu0
    %v5831 = vadd.f32 %v5790, %v5830
    %v5832 = vpop.f32.mrb[0].mxu0
    %v5833 = vadd.f32 %v5792, %v5832
    %v5834 = vpop.f32.mrb[0].mxu0
    %v5835 = vpop.f32.mrb[0].mxu0
    %5836 = vdwg.mxu0
    %5837 = vmatprep.subr.bf16.mxu0 %v5156
    %5838 = vmatpush1.bf16.msra.mxu0 %v5155
    %5839 = vmatprep.subr.bf16.mxu0 %v5162
    %5840 = vmatpush1.bf16.msra.mxu0 %v5161
    %5841 = vmatprep.subr.bf16.mxu0 %v5168
    %5842 = vmatpush1.bf16.msra.mxu0 %v5167
    %5843 = vmatprep.subr.bf16.mxu0 %v5174
    %5844 = vmatpush1.bf16.msra.mxu0 %v5173
    %5845 = vmatprep.subr.bf16.mxu0 %v5180
    %5846 = vmatpush1.bf16.msra.mxu0 %v5179
    %5847 = vmatprep.subr.bf16.mxu0 %v5186
    %5848 = vmatpush1.bf16.msra.mxu0 %v5185
    %5849 = vmatprep.subr.bf16.mxu0 %v5192
    %5850 = vmatpush1.bf16.msra.mxu0 %v5191
    %5851 = vmatprep.subr.bf16.mxu0 %v5198
    %5852 = vmatpush1.bf16.msra.mxu0 %v5197
    %5853 = vmatprep.subr.bf16.mxu0 %v5204
    %5854 = vmatpush1.bf16.msra.mxu0 %v5203
    %5855 = vmatprep.subr.bf16.mxu0 %v5210
    %5856 = vmatpush1.bf16.msra.mxu0 %v5209
    %5857 = vmatprep.subr.bf16.mxu0 %v5216
    %5858 = vmatpush1.bf16.msra.mxu0 %v5215
    %5859 = vmatprep.subr.bf16.mxu0 %v5222
    %5860 = vmatpush1.bf16.msra.mxu0 %v5221
    %5861 = vmatprep.subr.bf16.mxu0 %v5228
    %5862 = vmatpush1.bf16.msra.mxu0 %v5227
    %5863 = vmatprep.subr.bf16.mxu0 %v5234
    %5864 = vmatpush1.bf16.msra.mxu0 %v5233
    %5865 = vmatprep.subr.bf16.mxu0 %v5240
    %5866 = vmatpush1.bf16.msra.mxu0 %v5239
    %5867 = vmatprep.subr.bf16.mxu0 %v5246
    %5868 = vmatpush1.bf16.msra.mxu0 %v5245
    %5869 = vmatprep.mubr.bf16.mxu0 %v5302
    %5870 = vmatmul.mubr.bf16.gmra.mrb[0].mxu0 %v5301
    %v5871 = vpop.f32.mrb[0].mxu0
    %v5872 = vadd.f32 %v5831, %v5871
    %v5873 = vpop.f32.mrb[0].mxu0
    %v5874 = vadd.f32 %v5833, %v5873
    %v5875 = vpop.f32.mrb[0].mxu0
    %v5876 = vpop.f32.mrb[0].mxu0
    %5877 = vdwg.mxu0
    %5878 = vmatprep.subr.bf16.mxu0 %v5252
    %5879 = vmatpush1.bf16.msra.mxu0 %v5251
    %5880 = vmatprep.subr.bf16.mxu0 %v5258
    %5881 = vmatpush1.bf16.msra.mxu0 %v5257
    %5882 = vmatprep.subr.bf16.mxu0 %v5264
    %5883 = vmatpush1.bf16.msra.mxu0 %v5263
    %5884 = vmatprep.subr.bf16.mxu0 %v5270
    %5885 = vmatpush1.bf16.msra.mxu0 %v5269
    %5886 = vmatprep.subr.bf16.mxu0 %v5276
    %5887 = vmatpush1.bf16.msra.mxu0 %v5275
    %5888 = vmatprep.subr.bf16.mxu0 %v5282
    %5889 = vmatpush1.bf16.msra.mxu0 %v5281
    %5890 = vmatprep.subr.bf16.mxu0 %v5288
    %5891 = vmatpush1.bf16.msra.mxu0 %v5287
    %5892 = vmatprep.subr.bf16.mxu0 %v5294
    %5893 = vmatpush1.bf16.msra.mxu0 %v5293
    %5894 = vmatprep.subr.bf16.mxu0 0
    %5895 = vmatpush1.bf16.msra.mxu0 0
    %5896 = vmatprep.subr.bf16.mxu0 0
    %5897 = vmatpush1.bf16.msra.mxu0 0
    %5898 = vmatprep.subr.bf16.mxu0 0
    %5899 = vmatpush1.bf16.msra.mxu0 0
    %5900 = vmatprep.subr.bf16.mxu0 0
    %5901 = vmatpush1.bf16.msra.mxu0 0
    %5902 = vmatprep.subr.bf16.mxu0 0
    %5903 = vmatpush1.bf16.msra.mxu0 0
    %5904 = vmatprep.subr.bf16.mxu0 0
    %5905 = vmatpush1.bf16.msra.mxu0 0
    %5906 = vmatprep.subr.bf16.mxu0 0
    %5907 = vmatpush1.bf16.msra.mxu0 0
    %5908 = vmatprep.subr.bf16.mxu0 0
    %5909 = vmatpush1.bf16.msra.mxu0 0
    %5910 = vmatprep.mubr.bf16.mxu0 0
    %5911 = vmatmul.mubr.bf16.gmra.mrb[0].mxu0 %v5303
    %v5912 = vpop.f32.mrb[0].mxu0
    %v5913 = vadd.f32 %v5872, %v5912
    %v5914 = vpop.f32.mrb[0].mxu0
    %v5915 = vadd.f32 %v5874, %v5914
    %v5916 = vpop.f32.mrb[0].mxu0
    %v5917 = vpop.f32.mrb[0].mxu0
    %5918 = vdwg.mxu0
    %v5919 = vld [vmem:[#allocation15 + $0x1e] sm:$0x3f]
    %v5921 = vlaneseq
    %v5922 = vshrl.u32 %v5921, 7
    %v5923 = vsub.s32 0, %v5922
    %v5924 = vrot.slane %v5919, %v5923
    %v5925 = vlaneseq
    %v5926 = vshrl.u32 %v5925, 7
    %v5927 = vsub.s32 1, %v5926
    %v5928 = vrot.slane %v5919, %v5927
    %v5929 = vlaneseq
    %v5930 = vshrl.u32 %v5929, 7
    %v5931 = vsub.s32 2, %v5930
    %v5932 = vrot.slane %v5919, %v5931
    %v5933 = vlaneseq
    %v5934 = vshrl.u32 %v5933, 7
    %v5935 = vsub.s32 3, %v5934
    %v5936 = vrot.slane %v5919, %v5935
    %v5937 = vlaneseq
    %v5938 = vshrl.u32 %v5937, 7
    %v5939 = vsub.s32 4, %v5938
    %v5940 = vrot.slane %v5919, %v5939
    %v5941 = vlaneseq
    %v5942 = vshrl.u32 %v5941, 7
    %v5943 = vsub.s32 5, %v5942
    %v5944 = vrot.slane %v5919, %v5943
    %v5951 = vmul.f32 %v5503, %v5924
    %v5952 = vmul.f32 %v5505, %v5928
    %v5953 = vmul.f32 %v5708, %v5932
    %v5954 = vmul.f32 %v5710, %v5936
    %v5955 = vmul.f32 %v5913, %v5940
    %v5956 = vmul.f32 %v5915, %v5944
    %v5957 = vld [vmem:[#allocation15 + $0x47] sm:$0x3f]
    %v5959 = vlaneseq
    %v5960 = vshrl.u32 %v5959, 7
    %v5961 = vsub.s32 0, %v5960
    %v5962 = vrot.slane %v5957, %v5961
    %v5963 = vlaneseq
    %v5964 = vshrl.u32 %v5963, 7
    %v5965 = vsub.s32 1, %v5964
    %v5966 = vrot.slane %v5957, %v5965
    %v5967 = vlaneseq
    %v5968 = vshrl.u32 %v5967, 7
    %v5969 = vsub.s32 2, %v5968
    %v5970 = vrot.slane %v5957, %v5969
    %v5971 = vlaneseq
    %v5972 = vshrl.u32 %v5971, 7
    %v5973 = vsub.s32 3, %v5972
    %v5974 = vrot.slane %v5957, %v5973
    %v5975 = vlaneseq
    %v5976 = vshrl.u32 %v5975, 7
    %v5977 = vsub.s32 4, %v5976
    %v5978 = vrot.slane %v5957, %v5977
    %v5979 = vlaneseq
    %v5980 = vshrl.u32 %v5979, 7
    %v5981 = vsub.s32 5, %v5980
    %v5982 = vrot.slane %v5957, %v5981
    %v5989 = vadd.f32 %v5951, %v5962
    %v5990 = vadd.f32 %v5952, %v5966
    %v5991 = vadd.f32 %v5953, %v5970
    %v5992 = vadd.f32 %v5954, %v5974
    %v5993 = vadd.f32 %v5955, %v5978
    %v5994 = vadd.f32 %v5956, %v5982
    %v5995 = vld [vmem:[#allocation15 + $0x4d] sm:$0x3f]
    %v5996 = vld [vmem:[#allocation15 + $0x53] sm:$0x3f]
    %v5997 = vadd.f32 %v5989, %v5990
    %v5998 = vadd.f32 %v5997, %v5991
    %v5999 = vadd.f32 %v5998, %v5992
    %v6000 = vadd.f32 %v5999, %v5993
    %v6001 = vadd.f32 %v6000, %v5994
    %6002 = vadd.xlane.f32.xlu0 %v6001
    %v6003 = vpop.xlane.xlu0 %6002
    %v6004 = vrcp.pop 768.0
    %v6005 = vmul.f32 %v6003, %v6004
    %v6006 = vsub.f32 %v5989, %v6005
    %v6007 = vsub.f32 %v5990, %v6005
    %v6008 = vsub.f32 %v5991, %v6005
    %v6009 = vsub.f32 %v5992, %v6005
    %v6010 = vsub.f32 %v5993, %v6005
    %v6011 = vsub.f32 %v5994, %v6005
    %v6012 = vmul.f32 %v6006, %v6006
    %v6013 = vmul.f32 %v6007, %v6007
    %v6014 = vmul.f32 %v6008, %v6008
    %v6015 = vmul.f32 %v6009, %v6009
    %v6016 = vmul.f32 %v6010, %v6010
    %v6017 = vmul.f32 %v6011, %v6011
    %v6018 = vadd.f32 %v6012, %v6013
    %v6019 = vadd.f32 %v6018, %v6014
    %v6020 = vadd.f32 %v6019, %v6015
    %v6021 = vadd.f32 %v6020, %v6016
    %v6022 = vadd.f32 %v6021, %v6017
    %6023 = vadd.xlane.f32.xlu0 %v6022
    %v6024 = vpop.xlane.xlu0 %6023
    %v6025 = vmul.f32 %v6024, %v6004
    %v6026 = vadd.f32 %v6025, 1e-05
    %v6027 = vrsqrt.pop %v6026
    %v6028 = vmul.f32 %v6006, %v6027
    %v6029 = vmul.f32 %v6007, %v6027
    %v6030 = vmul.f32 %v6008, %v6027
    %v6031 = vmul.f32 %v6009, %v6027
    %v6032 = vmul.f32 %v6010, %v6027
    %v6033 = vmul.f32 %v6011, %v6027
    %v6035 = vlaneseq
    %v6036 = vshrl.u32 %v6035, 7
    %v6037 = vsub.s32 0, %v6036
    %v6038 = vrot.slane %v5995, %v6037
    %v6039 = vlaneseq
    %v6040 = vshrl.u32 %v6039, 7
    %v6041 = vsub.s32 1, %v6040
    %v6042 = vrot.slane %v5995, %v6041
    %v6043 = vlaneseq
    %v6044 = vshrl.u32 %v6043, 7
    %v6045 = vsub.s32 2, %v6044
    %v6046 = vrot.slane %v5995, %v6045
    %v6047 = vlaneseq
    %v6048 = vshrl.u32 %v6047, 7
    %v6049 = vsub.s32 3, %v6048
    %v6050 = vrot.slane %v5995, %v6049
    %v6051 = vlaneseq
    %v6052 = vshrl.u32 %v6051, 7
    %v6053 = vsub.s32 4, %v6052
    %v6054 = vrot.slane %v5995, %v6053
    %v6055 = vlaneseq
    %v6056 = vshrl.u32 %v6055, 7
    %v6057 = vsub.s32 5, %v6056
    %v6058 = vrot.slane %v5995, %v6057
    %v6065 = vmul.f32 %v6028, %v6038
    %v6066 = vmul.f32 %v6029, %v6042
    %v6067 = vmul.f32 %v6030, %v6046
    %v6068 = vmul.f32 %v6031, %v6050
    %v6069 = vmul.f32 %v6032, %v6054
    %v6070 = vmul.f32 %v6033, %v6058
    %v6072 = vlaneseq
    %v6073 = vshrl.u32 %v6072, 7
    %v6074 = vsub.s32 0, %v6073
    %v6075 = vrot.slane %v5996, %v6074
    %v6076 = vlaneseq
    %v6077 = vshrl.u32 %v6076, 7
    %v6078 = vsub.s32 1, %v6077
    %v6079 = vrot.slane %v5996, %v6078
    %v6080 = vlaneseq
    %v6081 = vshrl.u32 %v6080, 7
    %v6082 = vsub.s32 2, %v6081
    %v6083 = vrot.slane %v5996, %v6082
    %v6084 = vlaneseq
    %v6085 = vshrl.u32 %v6084, 7
    %v6086 = vsub.s32 3, %v6085
    %v6087 = vrot.slane %v5996, %v6086
    %v6088 = vlaneseq
    %v6089 = vshrl.u32 %v6088, 7
    %v6090 = vsub.s32 4, %v6089
    %v6091 = vrot.slane %v5996, %v6090
    %v6092 = vlaneseq
    %v6093 = vshrl.u32 %v6092, 7
    %v6094 = vsub.s32 5, %v6093
    %v6095 = vrot.slane %v5996, %v6094
    %v6102 = vadd.f32 %v6065, %v6075
    %v6103 = vadd.f32 %v6066, %v6079
    %v6104 = vadd.f32 %v6067, %v6083
    %v6105 = vadd.f32 %v6068, %v6087
    %v6106 = vadd.f32 %v6069, %v6091
    %v6107 = vadd.f32 %v6070, %v6095
    %v6108 = vmax.f32 %v6102, 0.0
    %v6109 = vmax.f32 %v6103, 0.0
    %v6110 = vmax.f32 %v6104, 0.0
    %v6111 = vmax.f32 %v6105, 0.0
    %v6112 = vmax.f32 %v6106, 0.0
    %v6113 = vmax.f32 %v6107, 0.0
    %v6114 = vld [vmem:[#allocation10] sm:$0xff]
    %v6115 = vld [vmem:[#allocation10 + $0x8] sm:$0xff]
    %v6116 = vld [vmem:[#allocation10 + $0x10] sm:$0xff]
    %v6117 = vld [vmem:[#allocation10 + $0x18] sm:$0xff]
    %v6118 = vld [vmem:[#allocation10 + $0x20] sm:$0xff]
    %v6119 = vld [vmem:[#allocation10 + $0x28] sm:$0xff]
    %v6120 = vld [vmem:[#allocation10 + $0x30] sm:$0xff]
    %v6121 = vld [vmem:[#allocation10 + $0x38] sm:$0xff]
    %v6122 = vld [vmem:[#allocation10 + $0x40] sm:$0xff]
    %v6123 = vld [vmem:[#allocation10 + $0x48] sm:$0xff]
    %v6124 = vld [vmem:[#allocation10 + $0x50] sm:$0xff]
    %v6125 = vld [vmem:[#allocation10 + $0x58] sm:$0xff]
    %v6126 = vld [vmem:[#allocation10 + $0x60] sm:$0xff]
    %v6127 = vld [vmem:[#allocation10 + $0x68] sm:$0xff]
    %v6128 = vld [vmem:[#allocation10 + $0x70] sm:$0xff]
    %v6129 = vld [vmem:[#allocation10 + $0x78] sm:$0xff]
    %v6130 = vld [vmem:[#allocation10 + $0x80] sm:$0xff]
    %v6131 = vld [vmem:[#allocation10 + $0x88] sm:$0xff]
    %v6132 = vld [vmem:[#allocation10 + $0x90] sm:$0xff]
    %v6133 = vld [vmem:[#allocation10 + $0x98] sm:$0xff]
    %v6134 = vld [vmem:[#allocation10 + $0xa0] sm:$0xff]
    %v6135 = vld [vmem:[#allocation10 + $0xa8] sm:$0xff]
    %v6136 = vld [vmem:[#allocation10 + $0xb0] sm:$0xff]
    %v6137 = vld [vmem:[#allocation10 + $0xb8] sm:$0xff]
    %v6138 = vld [vmem:[#allocation10 + $0xc0] sm:$0xff]
    %v6139 = vld [vmem:[#allocation10 + $0xc8] sm:$0xff]
    %v6140 = vld [vmem:[#allocation10 + $0xd0] sm:$0xff]
    %v6141 = vld [vmem:[#allocation10 + $0xd8] sm:$0xff]
    %v6142 = vld [vmem:[#allocation10 + $0xe0] sm:$0xff]
    %v6143 = vld [vmem:[#allocation10 + $0xe8] sm:$0xff]
    %v6144 = vld [vmem:[#allocation10 + $0xf0] sm:$0xff]
    %v6145 = vld [vmem:[#allocation10 + $0xf8] sm:$0xff]
    %v6146 = vld [vmem:[#allocation10 + $0x100] sm:$0xff]
    %v6147 = vld [vmem:[#allocation10 + $0x108] sm:$0xff]
    %v6148 = vld [vmem:[#allocation10 + $0x110] sm:$0xff]
    %v6149 = vld [vmem:[#allocation10 + $0x118] sm:$0xff]
    %v6150 = vld [vmem:[#allocation10 + $0x120] sm:$0xff]
    %v6151 = vld [vmem:[#allocation10 + $0x128] sm:$0xff]
    %v6152 = vld [vmem:[#allocation10 + $0x130] sm:$0xff]
    %v6153 = vld [vmem:[#allocation10 + $0x138] sm:$0xff]
    %v6154 = vld [vmem:[#allocation10 + $0x140] sm:$0xff]
    %v6155 = vld [vmem:[#allocation10 + $0x148] sm:$0xff]
    %v6156 = vld [vmem:[#allocation10 + $0x150] sm:$0xff]
    %v6157 = vld [vmem:[#allocation10 + $0x158] sm:$0xff]
    %v6158 = vld [vmem:[#allocation10 + $0x160] sm:$0xff]
    %v6159 = vld [vmem:[#allocation10 + $0x168] sm:$0xff]
    %v6160 = vld [vmem:[#allocation10 + $0x170] sm:$0xff]
    %v6161 = vld [vmem:[#allocation10 + $0x178] sm:$0xff]
    %v6162 = vld [vmem:[#allocation10 + $0x180] sm:$0xff]
    %v6163 = vld [vmem:[#allocation10 + $0x188] sm:$0xff]
    %v6164 = vld [vmem:[#allocation10 + $0x190] sm:$0xff]
    %v6165 = vld [vmem:[#allocation10 + $0x198] sm:$0xff]
    %v6166 = vld [vmem:[#allocation10 + $0x1a0] sm:$0xff]
    %v6167 = vld [vmem:[#allocation10 + $0x1a8] sm:$0xff]
    %v6168 = vld [vmem:[#allocation10 + $0x1b0] sm:$0xff]
    %v6169 = vld [vmem:[#allocation10 + $0x1b8] sm:$0xff]
    %v6170 = vld [vmem:[#allocation10 + $0x1c0] sm:$0xff]
    %v6171 = vld [vmem:[#allocation10 + $0x1c8] sm:$0xff]
    %v6172 = vld [vmem:[#allocation10 + $0x1d0] sm:$0xff]
    %v6173 = vld [vmem:[#allocation10 + $0x1d8] sm:$0xff]
    %v6174 = vld [vmem:[#allocation10 + $0x1e0] sm:$0xff]
    %v6175 = vld [vmem:[#allocation10 + $0x1e8] sm:$0xff]
    %v6176 = vld [vmem:[#allocation10 + $0x1f0] sm:$0xff]
    %v6177 = vld [vmem:[#allocation10 + $0x1f8] sm:$0xff]
    %v6178 = vld [vmem:[#allocation10 + $0x200] sm:$0xff]
    %v6179 = vld [vmem:[#allocation10 + $0x208] sm:$0xff]
    %v6180 = vld [vmem:[#allocation10 + $0x210] sm:$0xff]
    %v6181 = vld [vmem:[#allocation10 + $0x218] sm:$0xff]
    %v6182 = vld [vmem:[#allocation10 + $0x220] sm:$0xff]
    %v6183 = vld [vmem:[#allocation10 + $0x228] sm:$0xff]
    %v6184 = vld [vmem:[#allocation10 + $0x230] sm:$0xff]
    %v6185 = vld [vmem:[#allocation10 + $0x238] sm:$0xff]
    %v6186 = vld [vmem:[#allocation10 + $0x240] sm:$0xff]
    %v6187 = vld [vmem:[#allocation10 + $0x248] sm:$0xff]
    %v6188 = vld [vmem:[#allocation10 + $0x250] sm:$0xff]
    %v6189 = vld [vmem:[#allocation10 + $0x258] sm:$0xff]
    %v6190 = vld [vmem:[#allocation10 + $0x260] sm:$0xff]
    %v6191 = vld [vmem:[#allocation10 + $0x268] sm:$0xff]
    %v6192 = vld [vmem:[#allocation10 + $0x270] sm:$0xff]
    %v6193 = vld [vmem:[#allocation10 + $0x278] sm:$0xff]
    %v6194 = vld [vmem:[#allocation10 + $0x280] sm:$0xff]
    %v6195 = vld [vmem:[#allocation10 + $0x288] sm:$0xff]
    %v6196 = vld [vmem:[#allocation10 + $0x290] sm:$0xff]
    %v6197 = vld [vmem:[#allocation10 + $0x298] sm:$0xff]
    %v6198 = vld [vmem:[#allocation10 + $0x2a0] sm:$0xff]
    %v6199 = vld [vmem:[#allocation10 + $0x2a8] sm:$0xff]
    %v6200 = vld [vmem:[#allocation10 + $0x2b0] sm:$0xff]
    %v6201 = vld [vmem:[#allocation10 + $0x2b8] sm:$0xff]
    %v6202 = vld [vmem:[#allocation10 + $0x2c0] sm:$0xff]
    %v6203 = vld [vmem:[#allocation10 + $0x2c8] sm:$0xff]
    %v6204 = vld [vmem:[#allocation10 + $0x2d0] sm:$0xff]
    %v6205 = vld [vmem:[#allocation10 + $0x2d8] sm:$0xff]
    %v6206 = vld [vmem:[#allocation10 + $0x2e0] sm:$0xff]
    %v6207 = vld [vmem:[#allocation10 + $0x2e8] sm:$0xff]
    %v6208 = vld [vmem:[#allocation10 + $0x2f0] sm:$0xff]
    %v6209 = vld [vmem:[#allocation10 + $0x2f8] sm:$0xff]
    %v6210 = vld [vmem:[#allocation10 + $0x300] sm:$0xff]
    %v6211 = vld [vmem:[#allocation10 + $0x308] sm:$0xff]
    %v6212 = vld [vmem:[#allocation10 + $0x310] sm:$0xff]
    %v6213 = vld [vmem:[#allocation10 + $0x318] sm:$0xff]
    %v6214 = vld [vmem:[#allocation10 + $0x320] sm:$0xff]
    %v6215 = vld [vmem:[#allocation10 + $0x328] sm:$0xff]
    %v6216 = vld [vmem:[#allocation10 + $0x330] sm:$0xff]
    %v6217 = vld [vmem:[#allocation10 + $0x338] sm:$0xff]
    %v6218 = vld [vmem:[#allocation10 + $0x340] sm:$0xff]
    %v6219 = vld [vmem:[#allocation10 + $0x348] sm:$0xff]
    %v6220 = vld [vmem:[#allocation10 + $0x350] sm:$0xff]
    %v6221 = vld [vmem:[#allocation10 + $0x358] sm:$0xff]
    %v6222 = vld [vmem:[#allocation10 + $0x360] sm:$0xff]
    %v6223 = vld [vmem:[#allocation10 + $0x368] sm:$0xff]
    %v6224 = vld [vmem:[#allocation10 + $0x370] sm:$0xff]
    %v6225 = vld [vmem:[#allocation10 + $0x378] sm:$0xff]
    %v6226 = vld [vmem:[#allocation10 + $0x380] sm:$0xff]
    %v6227 = vld [vmem:[#allocation10 + $0x388] sm:$0xff]
    %v6228 = vld [vmem:[#allocation10 + $0x390] sm:$0xff]
    %v6229 = vld [vmem:[#allocation10 + $0x398] sm:$0xff]
    %v6230 = vld [vmem:[#allocation10 + $0x3a0] sm:$0xff]
    %v6231 = vld [vmem:[#allocation10 + $0x3a8] sm:$0xff]
    %v6232 = vld [vmem:[#allocation10 + $0x3b0] sm:$0xff]
    %v6233 = vld [vmem:[#allocation10 + $0x3b8] sm:$0xff]
    %v6234 = vld [vmem:[#allocation10 + $0x3c0] sm:$0xff]
    %v6235 = vld [vmem:[#allocation10 + $0x3c8] sm:$0xff]
    %v6236 = vld [vmem:[#allocation10 + $0x3d0] sm:$0xff]
    %v6237 = vld [vmem:[#allocation10 + $0x3d8] sm:$0xff]
    %v6238 = vld [vmem:[#allocation10 + $0x3e0] sm:$0xff]
    %v6239 = vld [vmem:[#allocation10 + $0x3e8] sm:$0xff]
    %v6240 = vld [vmem:[#allocation10 + $0x3f0] sm:$0xff]
    %v6241 = vld [vmem:[#allocation10 + $0x3f8] sm:$0xff]
    %v6242 = vld [vmem:[#allocation10 + $0x400] sm:$0xff]
    %v6243 = vld [vmem:[#allocation10 + $0x408] sm:$0xff]
    %v6244 = vld [vmem:[#allocation10 + $0x410] sm:$0xff]
    %v6245 = vld [vmem:[#allocation10 + $0x418] sm:$0xff]
    %v6246 = vld [vmem:[#allocation10 + $0x420] sm:$0xff]
    %v6247 = vld [vmem:[#allocation10 + $0x428] sm:$0xff]
    %v6248 = vld [vmem:[#allocation10 + $0x430] sm:$0xff]
    %v6249 = vld [vmem:[#allocation10 + $0x438] sm:$0xff]
    %v6250 = vld [vmem:[#allocation10 + $0x440] sm:$0xff]
    %v6251 = vld [vmem:[#allocation10 + $0x448] sm:$0xff]
    %v6252 = vld [vmem:[#allocation10 + $0x450] sm:$0xff]
    %v6253 = vld [vmem:[#allocation10 + $0x458] sm:$0xff]
    %v6254 = vld [vmem:[#allocation10 + $0x460] sm:$0xff]
    %v6255 = vld [vmem:[#allocation10 + $0x468] sm:$0xff]
    %v6256 = vld [vmem:[#allocation10 + $0x470] sm:$0xff]
    %v6257 = vld [vmem:[#allocation10 + $0x478] sm:$0xff]
    %v6258 = vunpack.c.l.s8.bf16 %v6114
    %v6259 = vunpack.c.l.s8.bf16 %v6115
    %v6260 = vunpack.c.l.s8.bf16 %v6116
    %v6261 = vunpack.c.l.s8.bf16 %v6117
    %v6262 = vunpack.c.l.s8.bf16 %v6118
    %v6263 = vunpack.c.l.s8.bf16 %v6119
    %v6264 = vunpack.c.h.s8.bf16 %v6114
    %v6265 = vunpack.c.h.s8.bf16 %v6115
    %v6266 = vunpack.c.h.s8.bf16 %v6116
    %v6267 = vunpack.c.h.s8.bf16 %v6117
    %v6268 = vunpack.c.h.s8.bf16 %v6118
    %v6269 = vunpack.c.h.s8.bf16 %v6119
    %v6270 = vunpack.c.l.s8.bf16 %v6120
    %v6271 = vunpack.c.l.s8.bf16 %v6121
    %v6272 = vunpack.c.l.s8.bf16 %v6122
    %v6273 = vunpack.c.l.s8.bf16 %v6123
    %v6274 = vunpack.c.l.s8.bf16 %v6124
    %v6275 = vunpack.c.l.s8.bf16 %v6125
    %v6276 = vunpack.c.h.s8.bf16 %v6120
    %v6277 = vunpack.c.h.s8.bf16 %v6121
    %v6278 = vunpack.c.h.s8.bf16 %v6122
    %v6279 = vunpack.c.h.s8.bf16 %v6123
    %v6280 = vunpack.c.h.s8.bf16 %v6124
    %v6281 = vunpack.c.h.s8.bf16 %v6125
    %v6282 = vunpack.c.l.s8.bf16 %v6126
    %v6283 = vunpack.c.l.s8.bf16 %v6127
    %v6284 = vunpack.c.l.s8.bf16 %v6128
    %v6285 = vunpack.c.l.s8.bf16 %v6129
    %v6286 = vunpack.c.l.s8.bf16 %v6130
    %v6287 = vunpack.c.l.s8.bf16 %v6131
    %v6288 = vunpack.c.h.s8.bf16 %v6126
    %v6289 = vunpack.c.h.s8.bf16 %v6127
    %v6290 = vunpack.c.h.s8.bf16 %v6128
    %v6291 = vunpack.c.h.s8.bf16 %v6129
    %v6292 = vunpack.c.h.s8.bf16 %v6130
    %v6293 = vunpack.c.h.s8.bf16 %v6131
    %v6294 = vunpack.c.l.s8.bf16 %v6132
    %v6295 = vunpack.c.l.s8.bf16 %v6133
    %v6296 = vunpack.c.l.s8.bf16 %v6134
    %v6297 = vunpack.c.l.s8.bf16 %v6135
    %v6298 = vunpack.c.l.s8.bf16 %v6136
    %v6299 = vunpack.c.l.s8.bf16 %v6137
    %v6300 = vunpack.c.h.s8.bf16 %v6132
    %v6301 = vunpack.c.h.s8.bf16 %v6133
    %v6302 = vunpack.c.h.s8.bf16 %v6134
    %v6303 = vunpack.c.h.s8.bf16 %v6135
    %v6304 = vunpack.c.h.s8.bf16 %v6136
    %v6305 = vunpack.c.h.s8.bf16 %v6137
    %v6306 = vunpack.c.l.s8.bf16 %v6138
    %v6307 = vunpack.c.l.s8.bf16 %v6139
    %v6308 = vunpack.c.l.s8.bf16 %v6140
    %v6309 = vunpack.c.l.s8.bf16 %v6141
    %v6310 = vunpack.c.l.s8.bf16 %v6142
    %v6311 = vunpack.c.l.s8.bf16 %v6143
    %v6312 = vunpack.c.h.s8.bf16 %v6138
    %v6313 = vunpack.c.h.s8.bf16 %v6139
    %v6314 = vunpack.c.h.s8.bf16 %v6140
    %v6315 = vunpack.c.h.s8.bf16 %v6141
    %v6316 = vunpack.c.h.s8.bf16 %v6142
    %v6317 = vunpack.c.h.s8.bf16 %v6143
    %v6318 = vunpack.c.l.s8.bf16 %v6144
    %v6319 = vunpack.c.l.s8.bf16 %v6145
    %v6320 = vunpack.c.l.s8.bf16 %v6146
    %v6321 = vunpack.c.l.s8.bf16 %v6147
    %v6322 = vunpack.c.l.s8.bf16 %v6148
    %v6323 = vunpack.c.l.s8.bf16 %v6149
    %v6324 = vunpack.c.h.s8.bf16 %v6144
    %v6325 = vunpack.c.h.s8.bf16 %v6145
    %v6326 = vunpack.c.h.s8.bf16 %v6146
    %v6327 = vunpack.c.h.s8.bf16 %v6147
    %v6328 = vunpack.c.h.s8.bf16 %v6148
    %v6329 = vunpack.c.h.s8.bf16 %v6149
    %v6330 = vunpack.c.l.s8.bf16 %v6150
    %v6331 = vunpack.c.l.s8.bf16 %v6151
    %v6332 = vunpack.c.l.s8.bf16 %v6152
    %v6333 = vunpack.c.l.s8.bf16 %v6153
    %v6334 = vunpack.c.l.s8.bf16 %v6154
    %v6335 = vunpack.c.l.s8.bf16 %v6155
    %v6336 = vunpack.c.h.s8.bf16 %v6150
    %v6337 = vunpack.c.h.s8.bf16 %v6151
    %v6338 = vunpack.c.h.s8.bf16 %v6152
    %v6339 = vunpack.c.h.s8.bf16 %v6153
    %v6340 = vunpack.c.h.s8.bf16 %v6154
    %v6341 = vunpack.c.h.s8.bf16 %v6155
    %v6342 = vunpack.c.l.s8.bf16 %v6156
    %v6343 = vunpack.c.l.s8.bf16 %v6157
    %v6344 = vunpack.c.l.s8.bf16 %v6158
    %v6345 = vunpack.c.l.s8.bf16 %v6159
    %v6346 = vunpack.c.l.s8.bf16 %v6160
    %v6347 = vunpack.c.l.s8.bf16 %v6161
    %v6348 = vunpack.c.h.s8.bf16 %v6156
    %v6349 = vunpack.c.h.s8.bf16 %v6157
    %v6350 = vunpack.c.h.s8.bf16 %v6158
    %v6351 = vunpack.c.h.s8.bf16 %v6159
    %v6352 = vunpack.c.h.s8.bf16 %v6160
    %v6353 = vunpack.c.h.s8.bf16 %v6161
    %v6354 = vunpack.c.l.s8.bf16 %v6162
    %v6355 = vunpack.c.l.s8.bf16 %v6163
    %v6356 = vunpack.c.l.s8.bf16 %v6164
    %v6357 = vunpack.c.l.s8.bf16 %v6165
    %v6358 = vunpack.c.l.s8.bf16 %v6166
    %v6359 = vunpack.c.l.s8.bf16 %v6167
    %v6360 = vunpack.c.h.s8.bf16 %v6162
    %v6361 = vunpack.c.h.s8.bf16 %v6163
    %v6362 = vunpack.c.h.s8.bf16 %v6164
    %v6363 = vunpack.c.h.s8.bf16 %v6165
    %v6364 = vunpack.c.h.s8.bf16 %v6166
    %v6365 = vunpack.c.h.s8.bf16 %v6167
    %v6366 = vunpack.c.l.s8.bf16 %v6168
    %v6367 = vunpack.c.l.s8.bf16 %v6169
    %v6368 = vunpack.c.l.s8.bf16 %v6170
    %v6369 = vunpack.c.l.s8.bf16 %v6171
    %v6370 = vunpack.c.l.s8.bf16 %v6172
    %v6371 = vunpack.c.l.s8.bf16 %v6173
    %v6372 = vunpack.c.h.s8.bf16 %v6168
    %v6373 = vunpack.c.h.s8.bf16 %v6169
    %v6374 = vunpack.c.h.s8.bf16 %v6170
    %v6375 = vunpack.c.h.s8.bf16 %v6171
    %v6376 = vunpack.c.h.s8.bf16 %v6172
    %v6377 = vunpack.c.h.s8.bf16 %v6173
    %v6378 = vunpack.c.l.s8.bf16 %v6174
    %v6379 = vunpack.c.l.s8.bf16 %v6175
    %v6380 = vunpack.c.l.s8.bf16 %v6176
    %v6381 = vunpack.c.l.s8.bf16 %v6177
    %v6382 = vunpack.c.l.s8.bf16 %v6178
    %v6383 = vunpack.c.l.s8.bf16 %v6179
    %v6384 = vunpack.c.h.s8.bf16 %v6174
    %v6385 = vunpack.c.h.s8.bf16 %v6175
    %v6386 = vunpack.c.h.s8.bf16 %v6176
    %v6387 = vunpack.c.h.s8.bf16 %v6177
    %v6388 = vunpack.c.h.s8.bf16 %v6178
    %v6389 = vunpack.c.h.s8.bf16 %v6179
    %v6390 = vunpack.c.l.s8.bf16 %v6180
    %v6391 = vunpack.c.l.s8.bf16 %v6181
    %v6392 = vunpack.c.l.s8.bf16 %v6182
    %v6393 = vunpack.c.l.s8.bf16 %v6183
    %v6394 = vunpack.c.l.s8.bf16 %v6184
    %v6395 = vunpack.c.l.s8.bf16 %v6185
    %v6396 = vunpack.c.h.s8.bf16 %v6180
    %v6397 = vunpack.c.h.s8.bf16 %v6181
    %v6398 = vunpack.c.h.s8.bf16 %v6182
    %v6399 = vunpack.c.h.s8.bf16 %v6183
    %v6400 = vunpack.c.h.s8.bf16 %v6184
    %v6401 = vunpack.c.h.s8.bf16 %v6185
    %v6402 = vunpack.c.l.s8.bf16 %v6186
    %v6403 = vunpack.c.l.s8.bf16 %v6187
    %v6404 = vunpack.c.l.s8.bf16 %v6188
    %v6405 = vunpack.c.l.s8.bf16 %v6189
    %v6406 = vunpack.c.l.s8.bf16 %v6190
    %v6407 = vunpack.c.l.s8.bf16 %v6191
    %v6408 = vunpack.c.h.s8.bf16 %v6186
    %v6409 = vunpack.c.h.s8.bf16 %v6187
    %v6410 = vunpack.c.h.s8.bf16 %v6188
    %v6411 = vunpack.c.h.s8.bf16 %v6189
    %v6412 = vunpack.c.h.s8.bf16 %v6190
    %v6413 = vunpack.c.h.s8.bf16 %v6191
    %v6414 = vunpack.c.l.s8.bf16 %v6192
    %v6415 = vunpack.c.l.s8.bf16 %v6193
    %v6416 = vunpack.c.l.s8.bf16 %v6194
    %v6417 = vunpack.c.l.s8.bf16 %v6195
    %v6418 = vunpack.c.l.s8.bf16 %v6196
    %v6419 = vunpack.c.l.s8.bf16 %v6197
    %v6420 = vunpack.c.h.s8.bf16 %v6192
    %v6421 = vunpack.c.h.s8.bf16 %v6193
    %v6422 = vunpack.c.h.s8.bf16 %v6194
    %v6423 = vunpack.c.h.s8.bf16 %v6195
    %v6424 = vunpack.c.h.s8.bf16 %v6196
    %v6425 = vunpack.c.h.s8.bf16 %v6197
    %v6426 = vunpack.c.l.s8.bf16 %v6198
    %v6427 = vunpack.c.l.s8.bf16 %v6199
    %v6428 = vunpack.c.l.s8.bf16 %v6200
    %v6429 = vunpack.c.l.s8.bf16 %v6201
    %v6430 = vunpack.c.l.s8.bf16 %v6202
    %v6431 = vunpack.c.l.s8.bf16 %v6203
    %v6432 = vunpack.c.h.s8.bf16 %v6198
    %v6433 = vunpack.c.h.s8.bf16 %v6199
    %v6434 = vunpack.c.h.s8.bf16 %v6200
    %v6435 = vunpack.c.h.s8.bf16 %v6201
    %v6436 = vunpack.c.h.s8.bf16 %v6202
    %v6437 = vunpack.c.h.s8.bf16 %v6203
    %v6438 = vunpack.c.l.s8.bf16 %v6204
    %v6439 = vunpack.c.l.s8.bf16 %v6205
    %v6440 = vunpack.c.l.s8.bf16 %v6206
    %v6441 = vunpack.c.l.s8.bf16 %v6207
    %v6442 = vunpack.c.l.s8.bf16 %v6208
    %v6443 = vunpack.c.l.s8.bf16 %v6209
    %v6444 = vunpack.c.h.s8.bf16 %v6204
    %v6445 = vunpack.c.h.s8.bf16 %v6205
    %v6446 = vunpack.c.h.s8.bf16 %v6206
    %v6447 = vunpack.c.h.s8.bf16 %v6207
    %v6448 = vunpack.c.h.s8.bf16 %v6208
    %v6449 = vunpack.c.h.s8.bf16 %v6209
    %v6450 = vunpack.c.l.s8.bf16 %v6210
    %v6451 = vunpack.c.l.s8.bf16 %v6211
    %v6452 = vunpack.c.l.s8.bf16 %v6212
    %v6453 = vunpack.c.l.s8.bf16 %v6213
    %v6454 = vunpack.c.l.s8.bf16 %v6214
    %v6455 = vunpack.c.l.s8.bf16 %v6215
    %v6456 = vunpack.c.h.s8.bf16 %v6210
    %v6457 = vunpack.c.h.s8.bf16 %v6211
    %v6458 = vunpack.c.h.s8.bf16 %v6212
    %v6459 = vunpack.c.h.s8.bf16 %v6213
    %v6460 = vunpack.c.h.s8.bf16 %v6214
    %v6461 = vunpack.c.h.s8.bf16 %v6215
    %v6462 = vunpack.c.l.s8.bf16 %v6216
    %v6463 = vunpack.c.l.s8.bf16 %v6217
    %v6464 = vunpack.c.l.s8.bf16 %v6218
    %v6465 = vunpack.c.l.s8.bf16 %v6219
    %v6466 = vunpack.c.l.s8.bf16 %v6220
    %v6467 = vunpack.c.l.s8.bf16 %v6221
    %v6468 = vunpack.c.h.s8.bf16 %v6216
    %v6469 = vunpack.c.h.s8.bf16 %v6217
    %v6470 = vunpack.c.h.s8.bf16 %v6218
    %v6471 = vunpack.c.h.s8.bf16 %v6219
    %v6472 = vunpack.c.h.s8.bf16 %v6220
    %v6473 = vunpack.c.h.s8.bf16 %v6221
    %v6474 = vunpack.c.l.s8.bf16 %v6222
    %v6475 = vunpack.c.l.s8.bf16 %v6223
    %v6476 = vunpack.c.l.s8.bf16 %v6224
    %v6477 = vunpack.c.l.s8.bf16 %v6225
    %v6478 = vunpack.c.l.s8.bf16 %v6226
    %v6479 = vunpack.c.l.s8.bf16 %v6227
    %v6480 = vunpack.c.h.s8.bf16 %v6222
    %v6481 = vunpack.c.h.s8.bf16 %v6223
    %v6482 = vunpack.c.h.s8.bf16 %v6224
    %v6483 = vunpack.c.h.s8.bf16 %v6225
    %v6484 = vunpack.c.h.s8.bf16 %v6226
    %v6485 = vunpack.c.h.s8.bf16 %v6227
    %v6486 = vunpack.c.l.s8.bf16 %v6228
    %v6487 = vunpack.c.l.s8.bf16 %v6229
    %v6488 = vunpack.c.l.s8.bf16 %v6230
    %v6489 = vunpack.c.l.s8.bf16 %v6231
    %v6490 = vunpack.c.l.s8.bf16 %v6232
    %v6491 = vunpack.c.l.s8.bf16 %v6233
    %v6492 = vunpack.c.h.s8.bf16 %v6228
    %v6493 = vunpack.c.h.s8.bf16 %v6229
    %v6494 = vunpack.c.h.s8.bf16 %v6230
    %v6495 = vunpack.c.h.s8.bf16 %v6231
    %v6496 = vunpack.c.h.s8.bf16 %v6232
    %v6497 = vunpack.c.h.s8.bf16 %v6233
    %v6498 = vunpack.c.l.s8.bf16 %v6234
    %v6499 = vunpack.c.l.s8.bf16 %v6235
    %v6500 = vunpack.c.l.s8.bf16 %v6236
    %v6501 = vunpack.c.l.s8.bf16 %v6237
    %v6502 = vunpack.c.l.s8.bf16 %v6238
    %v6503 = vunpack.c.l.s8.bf16 %v6239
    %v6504 = vunpack.c.h.s8.bf16 %v6234
    %v6505 = vunpack.c.h.s8.bf16 %v6235
    %v6506 = vunpack.c.h.s8.bf16 %v6236
    %v6507 = vunpack.c.h.s8.bf16 %v6237
    %v6508 = vunpack.c.h.s8.bf16 %v6238
    %v6509 = vunpack.c.h.s8.bf16 %v6239
    %v6510 = vunpack.c.l.s8.bf16 %v6240
    %v6511 = vunpack.c.l.s8.bf16 %v6241
    %v6512 = vunpack.c.l.s8.bf16 %v6242
    %v6513 = vunpack.c.l.s8.bf16 %v6243
    %v6514 = vunpack.c.l.s8.bf16 %v6244
    %v6515 = vunpack.c.l.s8.bf16 %v6245
    %v6516 = vunpack.c.h.s8.bf16 %v6240
    %v6517 = vunpack.c.h.s8.bf16 %v6241
    %v6518 = vunpack.c.h.s8.bf16 %v6242
    %v6519 = vunpack.c.h.s8.bf16 %v6243
    %v6520 = vunpack.c.h.s8.bf16 %v6244
    %v6521 = vunpack.c.h.s8.bf16 %v6245
    %v6522 = vunpack.c.l.s8.bf16 %v6246
    %v6523 = vunpack.c.l.s8.bf16 %v6247
    %v6524 = vunpack.c.l.s8.bf16 %v6248
    %v6525 = vunpack.c.l.s8.bf16 %v6249
    %v6526 = vunpack.c.l.s8.bf16 %v6250
    %v6527 = vunpack.c.l.s8.bf16 %v6251
    %v6528 = vunpack.c.h.s8.bf16 %v6246
    %v6529 = vunpack.c.h.s8.bf16 %v6247
    %v6530 = vunpack.c.h.s8.bf16 %v6248
    %v6531 = vunpack.c.h.s8.bf16 %v6249
    %v6532 = vunpack.c.h.s8.bf16 %v6250
    %v6533 = vunpack.c.h.s8.bf16 %v6251
    %v6534 = vunpack.c.l.s8.bf16 %v6252
    %v6535 = vunpack.c.l.s8.bf16 %v6253
    %v6536 = vunpack.c.l.s8.bf16 %v6254
    %v6537 = vunpack.c.l.s8.bf16 %v6255
    %v6538 = vunpack.c.l.s8.bf16 %v6256
    %v6539 = vunpack.c.l.s8.bf16 %v6257
    %v6540 = vunpack.c.h.s8.bf16 %v6252
    %v6541 = vunpack.c.h.s8.bf16 %v6253
    %v6542 = vunpack.c.h.s8.bf16 %v6254
    %v6543 = vunpack.c.h.s8.bf16 %v6255
    %v6544 = vunpack.c.h.s8.bf16 %v6256
    %v6545 = vunpack.c.h.s8.bf16 %v6257
    %v6546 = vpack.c.bf16 %v6108, %v6108
    %v6547 = vpack.c.bf16 %v6109, %v6109
    %v6548 = vpack.c.bf16 %v6110, %v6110
    %v6549 = vpack.c.bf16 %v6111, %v6111
    %v6550 = vpack.c.bf16 %v6112, %v6112
    %v6551 = vpack.c.bf16 %v6113, %v6113
    %6552 = vmatprep.subr.bf16.mxu0 %v6259
    %6553 = vmatpush1.bf16.msra.mxu0 %v6258
    %6554 = vmatprep.subr.bf16.mxu0 %v6265
    %6555 = vmatpush1.bf16.msra.mxu0 %v6264
    %6556 = vmatprep.subr.bf16.mxu0 %v6271
    %6557 = vmatpush1.bf16.msra.mxu0 %v6270
    %6558 = vmatprep.subr.bf16.mxu0 %v6277
    %6559 = vmatpush1.bf16.msra.mxu0 %v6276
    %6560 = vmatprep.subr.bf16.mxu0 %v6283
    %6561 = vmatpush1.bf16.msra.mxu0 %v6282
    %6562 = vmatprep.subr.bf16.mxu0 %v6289
    %6563 = vmatpush1.bf16.msra.mxu0 %v6288
    %6564 = vmatprep.subr.bf16.mxu0 %v6295
    %6565 = vmatpush1.bf16.msra.mxu0 %v6294
    %6566 = vmatprep.subr.bf16.mxu0 %v6301
    %6567 = vmatpush1.bf16.msra.mxu0 %v6300
    %6568 = vmatprep.subr.bf16.mxu0 %v6307
    %6569 = vmatpush1.bf16.msra.mxu0 %v6306
    %6570 = vmatprep.subr.bf16.mxu0 %v6313
    %6571 = vmatpush1.bf16.msra.mxu0 %v6312
    %6572 = vmatprep.subr.bf16.mxu0 %v6319
    %6573 = vmatpush1.bf16.msra.mxu0 %v6318
    %6574 = vmatprep.subr.bf16.mxu0 %v6325
    %6575 = vmatpush1.bf16.msra.mxu0 %v6324
    %6576 = vmatprep.subr.bf16.mxu0 %v6331
    %6577 = vmatpush1.bf16.msra.mxu0 %v6330
    %6578 = vmatprep.subr.bf16.mxu0 %v6337
    %6579 = vmatpush1.bf16.msra.mxu0 %v6336
    %6580 = vmatprep.subr.bf16.mxu0 %v6343
    %6581 = vmatpush1.bf16.msra.mxu0 %v6342
    %6582 = vmatprep.subr.bf16.mxu0 %v6349
    %6583 = vmatpush1.bf16.msra.mxu0 %v6348
    %6584 = vmatprep.mubr.bf16.mxu0 %v6547
    %6585 = vmatmul.mubr.bf16.gmra.mrb[0].mxu0 %v6546
    %v6586 = vpop.f32.mrb[0].mxu0
    %v6587 = vadd.f32 0.0, %v6586
    %v6588 = vpop.f32.mrb[0].mxu0
    %v6589 = vadd.f32 0.0, %v6588
    %v6590 = vpop.f32.mrb[0].mxu0
    %v6591 = vpop.f32.mrb[0].mxu0
    %6592 = vdwg.mxu0
    %6593 = vmatprep.subr.bf16.mxu0 %v6355
    %6594 = vmatpush1.bf16.msra.mxu0 %v6354
    %6595 = vmatprep.subr.bf16.mxu0 %v6361
    %6596 = vmatpush1.bf16.msra.mxu0 %v6360
    %6597 = vmatprep.subr.bf16.mxu0 %v6367
    %6598 = vmatpush1.bf16.msra.mxu0 %v6366
    %6599 = vmatprep.subr.bf16.mxu0 %v6373
    %6600 = vmatpush1.bf16.msra.mxu0 %v6372
    %6601 = vmatprep.subr.bf16.mxu0 %v6379
    %6602 = vmatpush1.bf16.msra.mxu0 %v6378
    %6603 = vmatprep.subr.bf16.mxu0 %v6385
    %6604 = vmatpush1.bf16.msra.mxu0 %v6384
    %6605 = vmatprep.subr.bf16.mxu0 %v6391
    %6606 = vmatpush1.bf16.msra.mxu0 %v6390
    %6607 = vmatprep.subr.bf16.mxu0 %v6397
    %6608 = vmatpush1.bf16.msra.mxu0 %v6396
    %6609 = vmatprep.subr.bf16.mxu0 %v6403
    %6610 = vmatpush1.bf16.msra.mxu0 %v6402
    %6611 = vmatprep.subr.bf16.mxu0 %v6409
    %6612 = vmatpush1.bf16.msra.mxu0 %v6408
    %6613 = vmatprep.subr.bf16.mxu0 %v6415
    %6614 = vmatpush1.bf16.msra.mxu0 %v6414
    %6615 = vmatprep.subr.bf16.mxu0 %v6421
    %6616 = vmatpush1.bf16.msra.mxu0 %v6420
    %6617 = vmatprep.subr.bf16.mxu0 %v6427
    %6618 = vmatpush1.bf16.msra.mxu0 %v6426
    %6619 = vmatprep.subr.bf16.mxu0 %v6433
    %6620 = vmatpush1.bf16.msra.mxu0 %v6432
    %6621 = vmatprep.subr.bf16.mxu0 %v6439
    %6622 = vmatpush1.bf16.msra.mxu0 %v6438
    %6623 = vmatprep.subr.bf16.mxu0 %v6445
    %6624 = vmatpush1.bf16.msra.mxu0 %v6444
    %6625 = vmatprep.mubr.bf16.mxu0 %v6549
    %6626 = vmatmul.mubr.bf16.gmra.mrb[0].mxu0 %v6548
    %v6627 = vpop.f32.mrb[0].mxu0
    %v6628 = vadd.f32 %v6587, %v6627
    %v6629 = vpop.f32.mrb[0].mxu0
    %v6630 = vadd.f32 %v6589, %v6629
    %v6631 = vpop.f32.mrb[0].mxu0
    %v6632 = vpop.f32.mrb[0].mxu0
    %6633 = vdwg.mxu0
    %6634 = vmatprep.subr.bf16.mxu0 %v6451
    %6635 = vmatpush1.bf16.msra.mxu0 %v6450
    %6636 = vmatprep.subr.bf16.mxu0 %v6457
    %6637 = vmatpush1.bf16.msra.mxu0 %v6456
    %6638 = vmatprep.subr.bf16.mxu0 %v6463
    %6639 = vmatpush1.bf16.msra.mxu0 %v6462
    %6640 = vmatprep.subr.bf16.mxu0 %v6469
    %6641 = vmatpush1.bf16.msra.mxu0 %v6468
    %6642 = vmatprep.subr.bf16.mxu0 %v6475
    %6643 = vmatpush1.bf16.msra.mxu0 %v6474
    %6644 = vmatprep.subr.bf16.mxu0 %v6481
    %6645 = vmatpush1.bf16.msra.mxu0 %v6480
    %6646 = vmatprep.subr.bf16.mxu0 %v6487
    %6647 = vmatpush1.bf16.msra.mxu0 %v6486
    %6648 = vmatprep.subr.bf16.mxu0 %v6493
    %6649 = vmatpush1.bf16.msra.mxu0 %v6492
    %6650 = vmatprep.subr.bf16.mxu0 %v6499
    %6651 = vmatpush1.bf16.msra.mxu0 %v6498
    %6652 = vmatprep.subr.bf16.mxu0 %v6505
    %6653 = vmatpush1.bf16.msra.mxu0 %v6504
    %6654 = vmatprep.subr.bf16.mxu0 %v6511
    %6655 = vmatpush1.bf16.msra.mxu0 %v6510
    %6656 = vmatprep.subr.bf16.mxu0 %v6517
    %6657 = vmatpush1.bf16.msra.mxu0 %v6516
    %6658 = vmatprep.subr.bf16.mxu0 %v6523
    %6659 = vmatpush1.bf16.msra.mxu0 %v6522
    %6660 = vmatprep.subr.bf16.mxu0 %v6529
    %6661 = vmatpush1.bf16.msra.mxu0 %v6528
    %6662 = vmatprep.subr.bf16.mxu0 %v6535
    %6663 = vmatpush1.bf16.msra.mxu0 %v6534
    %6664 = vmatprep.subr.bf16.mxu0 %v6541
    %6665 = vmatpush1.bf16.msra.mxu0 %v6540
    %6666 = vmatprep.mubr.bf16.mxu0 %v6551
    %6667 = vmatmul.mubr.bf16.gmra.mrb[0].mxu0 %v6550
    %v6668 = vpop.f32.mrb[0].mxu0
    %v6669 = vadd.f32 %v6628, %v6668
    %v6670 = vpop.f32.mrb[0].mxu0
    %v6671 = vadd.f32 %v6630, %v6670
    %v6672 = vpop.f32.mrb[0].mxu0
    %v6673 = vpop.f32.mrb[0].mxu0
    %6674 = vdwg.mxu0
    %6675 = vmatprep.subr.bf16.mxu0 %v6261
    %6676 = vmatpush1.bf16.msra.mxu0 %v6260
    %6677 = vmatprep.subr.bf16.mxu0 %v6267
    %6678 = vmatpush1.bf16.msra.mxu0 %v6266
    %6679 = vmatprep.subr.bf16.mxu0 %v6273
    %6680 = vmatpush1.bf16.msra.mxu0 %v6272
    %6681 = vmatprep.subr.bf16.mxu0 %v6279
    %6682 = vmatpush1.bf16.msra.mxu0 %v6278
    %6683 = vmatprep.subr.bf16.mxu0 %v6285
    %6684 = vmatpush1.bf16.msra.mxu0 %v6284
    %6685 = vmatprep.subr.bf16.mxu0 %v6291
    %6686 = vmatpush1.bf16.msra.mxu0 %v6290
    %6687 = vmatprep.subr.bf16.mxu0 %v6297
    %6688 = vmatpush1.bf16.msra.mxu0 %v6296
    %6689 = vmatprep.subr.bf16.mxu0 %v6303
    %6690 = vmatpush1.bf16.msra.mxu0 %v6302
    %6691 = vmatprep.subr.bf16.mxu0 %v6309
    %6692 = vmatpush1.bf16.msra.mxu0 %v6308
    %6693 = vmatprep.subr.bf16.mxu0 %v6315
    %6694 = vmatpush1.bf16.msra.mxu0 %v6314
    %6695 = vmatprep.subr.bf16.mxu0 %v6321
    %6696 = vmatpush1.bf16.msra.mxu0 %v6320
    %6697 = vmatprep.subr.bf16.mxu0 %v6327
    %6698 = vmatpush1.bf16.msra.mxu0 %v6326
    %6699 = vmatprep.subr.bf16.mxu0 %v6333
    %6700 = vmatpush1.bf16.msra.mxu0 %v6332
    %6701 = vmatprep.subr.bf16.mxu0 %v6339
    %6702 = vmatpush1.bf16.msra.mxu0 %v6338
    %6703 = vmatprep.subr.bf16.mxu0 %v6345
    %6704 = vmatpush1.bf16.msra.mxu0 %v6344
    %6705 = vmatprep.subr.bf16.mxu0 %v6351
    %6706 = vmatpush1.bf16.msra.mxu0 %v6350
    %6707 = vmatprep.mubr.bf16.mxu0 %v6547
    %6708 = vmatmul.mubr.bf16.gmra.mrb[0].mxu0 %v6546
    %v6709 = vpop.f32.mrb[0].mxu0
    %v6710 = vadd.f32 0.0, %v6709
    %v6711 = vpop.f32.mrb[0].mxu0
    %v6712 = vadd.f32 0.0, %v6711
    %v6713 = vpop.f32.mrb[0].mxu0
    %v6714 = vpop.f32.mrb[0].mxu0
    %6715 = vdwg.mxu0
    %6716 = vmatprep.subr.bf16.mxu0 %v6357
    %6717 = vmatpush1.bf16.msra.mxu0 %v6356
    %6718 = vmatprep.subr.bf16.mxu0 %v6363
    %6719 = vmatpush1.bf16.msra.mxu0 %v6362
    %6720 = vmatprep.subr.bf16.mxu0 %v6369
    %6721 = vmatpush1.bf16.msra.mxu0 %v6368
    %6722 = vmatprep.subr.bf16.mxu0 %v6375
    %6723 = vmatpush1.bf16.msra.mxu0 %v6374
    %6724 = vmatprep.subr.bf16.mxu0 %v6381
    %6725 = vmatpush1.bf16.msra.mxu0 %v6380
    %6726 = vmatprep.subr.bf16.mxu0 %v6387
    %6727 = vmatpush1.bf16.msra.mxu0 %v6386
    %6728 = vmatprep.subr.bf16.mxu0 %v6393
    %6729 = vmatpush1.bf16.msra.mxu0 %v6392
    %6730 = vmatprep.subr.bf16.mxu0 %v6399
    %6731 = vmatpush1.bf16.msra.mxu0 %v6398
    %6732 = vmatprep.subr.bf16.mxu0 %v6405
    %6733 = vmatpush1.bf16.msra.mxu0 %v6404
    %6734 = vmatprep.subr.bf16.mxu0 %v6411
    %6735 = vmatpush1.bf16.msra.mxu0 %v6410
    %6736 = vmatprep.subr.bf16.mxu0 %v6417
    %6737 = vmatpush1.bf16.msra.mxu0 %v6416
    %6738 = vmatprep.subr.bf16.mxu0 %v6423
    %6739 = vmatpush1.bf16.msra.mxu0 %v6422
    %6740 = vmatprep.subr.bf16.mxu0 %v6429
    %6741 = vmatpush1.bf16.msra.mxu0 %v6428
    %6742 = vmatprep.subr.bf16.mxu0 %v6435
    %6743 = vmatpush1.bf16.msra.mxu0 %v6434
    %6744 = vmatprep.subr.bf16.mxu0 %v6441
    %6745 = vmatpush1.bf16.msra.mxu0 %v6440
    %6746 = vmatprep.subr.bf16.mxu0 %v6447
    %6747 = vmatpush1.bf16.msra.mxu0 %v6446
    %6748 = vmatprep.mubr.bf16.mxu0 %v6549
    %6749 = vmatmul.mubr.bf16.gmra.mrb[0].mxu0 %v6548
    %v6750 = vpop.f32.mrb[0].mxu0
    %v6751 = vadd.f32 %v6710, %v6750
    %v6752 = vpop.f32.mrb[0].mxu0
    %v6753 = vadd.f32 %v6712, %v6752
    %v6754 = vpop.f32.mrb[0].mxu0
    %v6755 = vpop.f32.mrb[0].mxu0
    %6756 = vdwg.mxu0
    %6757 = vmatprep.subr.bf16.mxu0 %v6453
    %6758 = vmatpush1.bf16.msra.mxu0 %v6452
    %6759 = vmatprep.subr.bf16.mxu0 %v6459
    %6760 = vmatpush1.bf16.msra.mxu0 %v6458
    %6761 = vmatprep.subr.bf16.mxu0 %v6465
    %6762 = vmatpush1.bf16.msra.mxu0 %v6464
    %6763 = vmatprep.subr.bf16.mxu0 %v6471
    %6764 = vmatpush1.bf16.msra.mxu0 %v6470
    %6765 = vmatprep.subr.bf16.mxu0 %v6477
    %6766 = vmatpush1.bf16.msra.mxu0 %v6476
    %6767 = vmatprep.subr.bf16.mxu0 %v6483
    %6768 = vmatpush1.bf16.msra.mxu0 %v6482
    %6769 = vmatprep.subr.bf16.mxu0 %v6489
    %6770 = vmatpush1.bf16.msra.mxu0 %v6488
    %6771 = vmatprep.subr.bf16.mxu0 %v6495
    %6772 = vmatpush1.bf16.msra.mxu0 %v6494
    %6773 = vmatprep.subr.bf16.mxu0 %v6501
    %6774 = vmatpush1.bf16.msra.mxu0 %v6500
    %6775 = vmatprep.subr.bf16.mxu0 %v6507
    %6776 = vmatpush1.bf16.msra.mxu0 %v6506
    %6777 = vmatprep.subr.bf16.mxu0 %v6513
    %6778 = vmatpush1.bf16.msra.mxu0 %v6512
    %6779 = vmatprep.subr.bf16.mxu0 %v6519
    %6780 = vmatpush1.bf16.msra.mxu0 %v6518
    %6781 = vmatprep.subr.bf16.mxu0 %v6525
    %6782 = vmatpush1.bf16.msra.mxu0 %v6524
    %6783 = vmatprep.subr.bf16.mxu0 %v6531
    %6784 = vmatpush1.bf16.msra.mxu0 %v6530
    %6785 = vmatprep.subr.bf16.mxu0 %v6537
    %6786 = vmatpush1.bf16.msra.mxu0 %v6536
    %6787 = vmatprep.subr.bf16.mxu0 %v6543
    %6788 = vmatpush1.bf16.msra.mxu0 %v6542
    %6789 = vmatprep.mubr.bf16.mxu0 %v6551
    %6790 = vmatmul.mubr.bf16.gmra.mrb[0].mxu0 %v6550
    %v6791 = vpop.f32.mrb[0].mxu0
    %v6792 = vadd.f32 %v6751, %v6791
    %v6793 = vpop.f32.mrb[0].mxu0
    %v6794 = vadd.f32 %v6753, %v6793
    %v6795 = vpop.f32.mrb[0].mxu0
    %v6796 = vpop.f32.mrb[0].mxu0
    %6797 = vdwg.mxu0
    %6798 = vmatprep.subr.bf16.mxu0 %v6263
    %6799 = vmatpush1.bf16.msra.mxu0 %v6262
    %6800 = vmatprep.subr.bf16.mxu0 %v6269
    %6801 = vmatpush1.bf16.msra.mxu0 %v6268
    %6802 = vmatprep.subr.bf16.mxu0 %v6275
    %6803 = vmatpush1.bf16.msra.mxu0 %v6274
    %6804 = vmatprep.subr.bf16.mxu0 %v6281
    %6805 = vmatpush1.bf16.msra.mxu0 %v6280
    %6806 = vmatprep.subr.bf16.mxu0 %v6287
    %6807 = vmatpush1.bf16.msra.mxu0 %v6286
    %6808 = vmatprep.subr.bf16.mxu0 %v6293
    %6809 = vmatpush1.bf16.msra.mxu0 %v6292
    %6810 = vmatprep.subr.bf16.mxu0 %v6299
    %6811 = vmatpush1.bf16.msra.mxu0 %v6298
    %6812 = vmatprep.subr.bf16.mxu0 %v6305
    %6813 = vmatpush1.bf16.msra.mxu0 %v6304
    %6814 = vmatprep.subr.bf16.mxu0 %v6311
    %6815 = vmatpush1.bf16.msra.mxu0 %v6310
    %6816 = vmatprep.subr.bf16.mxu0 %v6317
    %6817 = vmatpush1.bf16.msra.mxu0 %v6316
    %6818 = vmatprep.subr.bf16.mxu0 %v6323
    %6819 = vmatpush1.bf16.msra.mxu0 %v6322
    %6820 = vmatprep.subr.bf16.mxu0 %v6329
    %6821 = vmatpush1.bf16.msra.mxu0 %v6328
    %6822 = vmatprep.subr.bf16.mxu0 %v6335
    %6823 = vmatpush1.bf16.msra.mxu0 %v6334
    %6824 = vmatprep.subr.bf16.mxu0 %v6341
    %6825 = vmatpush1.bf16.msra.mxu0 %v6340
    %6826 = vmatprep.subr.bf16.mxu0 %v6347
    %6827 = vmatpush1.bf16.msra.mxu0 %v6346
    %6828 = vmatprep.subr.bf16.mxu0 %v6353
    %6829 = vmatpush1.bf16.msra.mxu0 %v6352
    %6830 = vmatprep.mubr.bf16.mxu0 %v6547
    %6831 = vmatmul.mubr.bf16.gmra.mrb[0].mxu0 %v6546
    %v6832 = vpop.f32.mrb[0].mxu0
    %v6833 = vadd.f32 0.0, %v6832
    %v6834 = vpop.f32.mrb[0].mxu0
    %v6835 = vadd.f32 0.0, %v6834
    %v6836 = vpop.f32.mrb[0].mxu0
    %v6837 = vpop.f32.mrb[0].mxu0
    %6838 = vdwg.mxu0
    %6839 = vmatprep.subr.bf16.mxu0 %v6359
    %6840 = vmatpush1.bf16.msra.mxu0 %v6358
    %6841 = vmatprep.subr.bf16.mxu0 %v6365
    %6842 = vmatpush1.bf16.msra.mxu0 %v6364
    %6843 = vmatprep.subr.bf16.mxu0 %v6371
    %6844 = vmatpush1.bf16.msra.mxu0 %v6370
    %6845 = vmatprep.subr.bf16.mxu0 %v6377
    %6846 = vmatpush1.bf16.msra.mxu0 %v6376
    %6847 = vmatprep.subr.bf16.mxu0 %v6383
    %6848 = vmatpush1.bf16.msra.mxu0 %v6382
    %6849 = vmatprep.subr.bf16.mxu0 %v6389
    %6850 = vmatpush1.bf16.msra.mxu0 %v6388
    %6851 = vmatprep.subr.bf16.mxu0 %v6395
    %6852 = vmatpush1.bf16.msra.mxu0 %v6394
    %6853 = vmatprep.subr.bf16.mxu0 %v6401
    %6854 = vmatpush1.bf16.msra.mxu0 %v6400
    %6855 = vmatprep.subr.bf16.mxu0 %v6407
    %6856 = vmatpush1.bf16.msra.mxu0 %v6406
    %6857 = vmatprep.subr.bf16.mxu0 %v6413
    %6858 = vmatpush1.bf16.msra.mxu0 %v6412
    %6859 = vmatprep.subr.bf16.mxu0 %v6419
    %6860 = vmatpush1.bf16.msra.mxu0 %v6418
    %6861 = vmatprep.subr.bf16.mxu0 %v6425
    %6862 = vmatpush1.bf16.msra.mxu0 %v6424
    %6863 = vmatprep.subr.bf16.mxu0 %v6431
    %6864 = vmatpush1.bf16.msra.mxu0 %v6430
    %6865 = vmatprep.subr.bf16.mxu0 %v6437
    %6866 = vmatpush1.bf16.msra.mxu0 %v6436
    %6867 = vmatprep.subr.bf16.mxu0 %v6443
    %6868 = vmatpush1.bf16.msra.mxu0 %v6442
    %6869 = vmatprep.subr.bf16.mxu0 %v6449
    %6870 = vmatpush1.bf16.msra.mxu0 %v6448
    %6871 = vmatprep.mubr.bf16.mxu0 %v6549
    %6872 = vmatmul.mubr.bf16.gmra.mrb[0].mxu0 %v6548
    %v6873 = vpop.f32.mrb[0].mxu0
    %v6874 = vadd.f32 %v6833, %v6873
    %v6875 = vpop.f32.mrb[0].mxu0
    %v6876 = vadd.f32 %v6835, %v6875
    %v6877 = vpop.f32.mrb[0].mxu0
    %v6878 = vpop.f32.mrb[0].mxu0
    %6879 = vdwg.mxu0
    %6880 = vmatprep.subr.bf16.mxu0 %v6455
    %6881 = vmatpush1.bf16.msra.mxu0 %v6454
    %6882 = vmatprep.subr.bf16.mxu0 %v6461
    %6883 = vmatpush1.bf16.msra.mxu0 %v6460
    %6884 = vmatprep.subr.bf16.mxu0 %v6467
    %6885 = vmatpush1.bf16.msra.mxu0 %v6466
    %6886 = vmatprep.subr.bf16.mxu0 %v6473
    %6887 = vmatpush1.bf16.msra.mxu0 %v6472
    %6888 = vmatprep.subr.bf16.mxu0 %v6479
    %6889 = vmatpush1.bf16.msra.mxu0 %v6478
    %6890 = vmatprep.subr.bf16.mxu0 %v6485
    %6891 = vmatpush1.bf16.msra.mxu0 %v6484
    %6892 = vmatprep.subr.bf16.mxu0 %v6491
    %6893 = vmatpush1.bf16.msra.mxu0 %v6490
    %6894 = vmatprep.subr.bf16.mxu0 %v6497
    %6895 = vmatpush1.bf16.msra.mxu0 %v6496
    %6896 = vmatprep.subr.bf16.mxu0 %v6503
    %6897 = vmatpush1.bf16.msra.mxu0 %v6502
    %6898 = vmatprep.subr.bf16.mxu0 %v6509
    %6899 = vmatpush1.bf16.msra.mxu0 %v6508
    %6900 = vmatprep.subr.bf16.mxu0 %v6515
    %6901 = vmatpush1.bf16.msra.mxu0 %v6514
    %6902 = vmatprep.subr.bf16.mxu0 %v6521
    %6903 = vmatpush1.bf16.msra.mxu0 %v6520
    %6904 = vmatprep.subr.bf16.mxu0 %v6527
    %6905 = vmatpush1.bf16.msra.mxu0 %v6526
    %6906 = vmatprep.subr.bf16.mxu0 %v6533
    %6907 = vmatpush1.bf16.msra.mxu0 %v6532
    %6908 = vmatprep.subr.bf16.mxu0 %v6539
    %6909 = vmatpush1.bf16.msra.mxu0 %v6538
    %6910 = vmatprep.subr.bf16.mxu0 %v6545
    %6911 = vmatpush1.bf16.msra.mxu0 %v6544
    %6912 = vmatprep.mubr.bf16.mxu0 %v6551
    %6913 = vmatmul.mubr.bf16.gmra.mrb[0].mxu0 %v6550
    %v6914 = vpop.f32.mrb[0].mxu0
    %v6915 = vadd.f32 %v6874, %v6914
    %v6916 = vpop.f32.mrb[0].mxu0
    %v6917 = vadd.f32 %v6876, %v6916
    %v6918 = vpop.f32.mrb[0].mxu0
    %v6919 = vpop.f32.mrb[0].mxu0
    %6920 = vdwg.mxu0
    %v6921 = vld [vmem:[#allocation15 + $0x24] sm:$0x3f]
    %v6923 = vlaneseq
    %v6924 = vshrl.u32 %v6923, 7
    %v6925 = vsub.s32 0, %v6924
    %v6926 = vrot.slane %v6921, %v6925
    %v6927 = vlaneseq
    %v6928 = vshrl.u32 %v6927, 7
    %v6929 = vsub.s32 1, %v6928
    %v6930 = vrot.slane %v6921, %v6929
    %v6931 = vlaneseq
    %v6932 = vshrl.u32 %v6931, 7
    %v6933 = vsub.s32 2, %v6932
    %v6934 = vrot.slane %v6921, %v6933
    %v6935 = vlaneseq
    %v6936 = vshrl.u32 %v6935, 7
    %v6937 = vsub.s32 3, %v6936
    %v6938 = vrot.slane %v6921, %v6937
    %v6939 = vlaneseq
    %v6940 = vshrl.u32 %v6939, 7
    %v6941 = vsub.s32 4, %v6940
    %v6942 = vrot.slane %v6921, %v6941
    %v6943 = vlaneseq
    %v6944 = vshrl.u32 %v6943, 7
    %v6945 = vsub.s32 5, %v6944
    %v6946 = vrot.slane %v6921, %v6945
    %v6953 = vmul.f32 %v6669, %v6926
    %v6954 = vmul.f32 %v6671, %v6930
    %v6955 = vmul.f32 %v6792, %v6934
    %v6956 = vmul.f32 %v6794, %v6938
    %v6957 = vmul.f32 %v6915, %v6942
    %v6958 = vmul.f32 %v6917, %v6946
    %v6959 = vld [vmem:[#allocation12] sm:$0xff]
    %v6960 = vld [vmem:[#allocation12 + $0x8] sm:$0xff]
    %v6961 = vld [vmem:[#allocation12 + $0x10] sm:$0xff]
    %v6962 = vld [vmem:[#allocation12 + $0x18] sm:$0xff]
    %v6963 = vld [vmem:[#allocation12 + $0x20] sm:$0xff]
    %v6964 = vld [vmem:[#allocation12 + $0x28] sm:$0xff]
    %v6965 = vld [vmem:[#allocation12 + $0x30] sm:$0xff]
    %v6966 = vld [vmem:[#allocation12 + $0x38] sm:$0xff]
    %v6967 = vld [vmem:[#allocation12 + $0x40] sm:$0xff]
    %v6968 = vld [vmem:[#allocation12 + $0x48] sm:$0xff]
    %v6969 = vld [vmem:[#allocation12 + $0x50] sm:$0xff]
    %v6970 = vld [vmem:[#allocation12 + $0x58] sm:$0xff]
    %v6971 = vld [vmem:[#allocation12 + $0x60] sm:$0xff]
    %v6972 = vld [vmem:[#allocation12 + $0x68] sm:$0xff]
    %v6973 = vld [vmem:[#allocation12 + $0x70] sm:$0xff]
    %v6974 = vld [vmem:[#allocation12 + $0x78] sm:$0xff]
    %v6975 = vld [vmem:[#allocation12 + $0x80] sm:$0xff]
    %v6976 = vld [vmem:[#allocation12 + $0x88] sm:$0xff]
    %v6977 = vld [vmem:[#allocation12 + $0x90] sm:$0xff]
    %v6978 = vld [vmem:[#allocation12 + $0x98] sm:$0xff]
    %v6979 = vld [vmem:[#allocation12 + $0xa0] sm:$0xff]
    %v6980 = vld [vmem:[#allocation12 + $0xa8] sm:$0xff]
    %v6981 = vld [vmem:[#allocation12 + $0xb0] sm:$0xff]
    %v6982 = vld [vmem:[#allocation12 + $0xb8] sm:$0xff]
    %v6983 = vld [vmem:[#allocation12 + $0xc0] sm:$0xff]
    %v6984 = vld [vmem:[#allocation12 + $0xc8] sm:$0xff]
    %v6985 = vld [vmem:[#allocation12 + $0xd0] sm:$0xff]
    %v6986 = vld [vmem:[#allocation12 + $0xd8] sm:$0xff]
    %v6987 = vld [vmem:[#allocation12 + $0xe0] sm:$0xff]
    %v6988 = vld [vmem:[#allocation12 + $0xe8] sm:$0xff]
    %v6989 = vld [vmem:[#allocation12 + $0xf0] sm:$0xff]
    %v6990 = vld [vmem:[#allocation12 + $0xf8] sm:$0xff]
    %v6991 = vld [vmem:[#allocation12 + $0x100] sm:$0xff]
    %v6992 = vld [vmem:[#allocation12 + $0x108] sm:$0xff]
    %v6993 = vld [vmem:[#allocation12 + $0x110] sm:$0xff]
    %v6994 = vld [vmem:[#allocation12 + $0x118] sm:$0xff]
    %v6995 = vld [vmem:[#allocation12 + $0x120] sm:$0xff]
    %v6996 = vld [vmem:[#allocation12 + $0x128] sm:$0xff]
    %v6997 = vld [vmem:[#allocation12 + $0x130] sm:$0xff]
    %v6998 = vld [vmem:[#allocation12 + $0x138] sm:$0xff]
    %v6999 = vld [vmem:[#allocation12 + $0x140] sm:$0xff]
    %v7000 = vld [vmem:[#allocation12 + $0x148] sm:$0xff]
    %v7001 = vld [vmem:[#allocation12 + $0x150] sm:$0xff]
    %v7002 = vld [vmem:[#allocation12 + $0x158] sm:$0xff]
    %v7003 = vld [vmem:[#allocation12 + $0x160] sm:$0xff]
    %v7004 = vld [vmem:[#allocation12 + $0x168] sm:$0xff]
    %v7005 = vld [vmem:[#allocation12 + $0x170] sm:$0xff]
    %v7006 = vld [vmem:[#allocation12 + $0x178] sm:$0xff]
    %v7007 = vld [vmem:[#allocation12 + $0x180] sm:$0xff]
    %v7008 = vld [vmem:[#allocation12 + $0x188] sm:$0xff]
    %v7009 = vld [vmem:[#allocation12 + $0x190] sm:$0xff]
    %v7010 = vld [vmem:[#allocation12 + $0x198] sm:$0xff]
    %v7011 = vld [vmem:[#allocation12 + $0x1a0] sm:$0xff]
    %v7012 = vld [vmem:[#allocation12 + $0x1a8] sm:$0xff]
    %v7013 = vld [vmem:[#allocation12 + $0x1b0] sm:$0xff]
    %v7014 = vld [vmem:[#allocation12 + $0x1b8] sm:$0xff]
    %v7015 = vld [vmem:[#allocation12 + $0x1c0] sm:$0xff]
    %v7016 = vld [vmem:[#allocation12 + $0x1c8] sm:$0xff]
    %v7017 = vld [vmem:[#allocation12 + $0x1d0] sm:$0xff]
    %v7018 = vld [vmem:[#allocation12 + $0x1d8] sm:$0xff]
    %v7019 = vld [vmem:[#allocation12 + $0x1e0] sm:$0xff]
    %v7020 = vld [vmem:[#allocation12 + $0x1e8] sm:$0xff]
    %v7021 = vld [vmem:[#allocation12 + $0x1f0] sm:$0xff]
    %v7022 = vld [vmem:[#allocation12 + $0x1f8] sm:$0xff]
    %v7023 = vld [vmem:[#allocation12 + $0x200] sm:$0xff]
    %v7024 = vld [vmem:[#allocation12 + $0x208] sm:$0xff]
    %v7025 = vld [vmem:[#allocation12 + $0x210] sm:$0xff]
    %v7026 = vld [vmem:[#allocation12 + $0x218] sm:$0xff]
    %v7027 = vld [vmem:[#allocation12 + $0x220] sm:$0xff]
    %v7028 = vld [vmem:[#allocation12 + $0x228] sm:$0xff]
    %v7029 = vld [vmem:[#allocation12 + $0x230] sm:$0xff]
    %v7030 = vld [vmem:[#allocation12 + $0x238] sm:$0xff]
    %v7031 = vld [vmem:[#allocation12 + $0x240] sm:$0xff]
    %v7032 = vld [vmem:[#allocation12 + $0x248] sm:$0xff]
    %v7033 = vld [vmem:[#allocation12 + $0x250] sm:$0xff]
    %v7034 = vld [vmem:[#allocation12 + $0x258] sm:$0xff]
    %v7035 = vld [vmem:[#allocation12 + $0x260] sm:$0xff]
    %v7036 = vld [vmem:[#allocation12 + $0x268] sm:$0xff]
    %v7037 = vld [vmem:[#allocation12 + $0x270] sm:$0xff]
    %v7038 = vld [vmem:[#allocation12 + $0x278] sm:$0xff]
    %v7039 = vld [vmem:[#allocation12 + $0x280] sm:$0xff]
    %v7040 = vld [vmem:[#allocation12 + $0x288] sm:$0xff]
    %v7041 = vld [vmem:[#allocation12 + $0x290] sm:$0xff]
    %v7042 = vld [vmem:[#allocation12 + $0x298] sm:$0xff]
    %v7043 = vld [vmem:[#allocation12 + $0x2a0] sm:$0xff]
    %v7044 = vld [vmem:[#allocation12 + $0x2a8] sm:$0xff]
    %v7045 = vld [vmem:[#allocation12 + $0x2b0] sm:$0xff]
    %v7046 = vld [vmem:[#allocation12 + $0x2b8] sm:$0xff]
    %v7047 = vld [vmem:[#allocation12 + $0x2c0] sm:$0xff]
    %v7048 = vld [vmem:[#allocation12 + $0x2c8] sm:$0xff]
    %v7049 = vld [vmem:[#allocation12 + $0x2d0] sm:$0xff]
    %v7050 = vld [vmem:[#allocation12 + $0x2d8] sm:$0xff]
    %v7051 = vld [vmem:[#allocation12 + $0x2e0] sm:$0xff]
    %v7052 = vld [vmem:[#allocation12 + $0x2e8] sm:$0xff]
    %v7053 = vld [vmem:[#allocation12 + $0x2f0] sm:$0xff]
    %v7054 = vld [vmem:[#allocation12 + $0x2f8] sm:$0xff]
    %v7055 = vld [vmem:[#allocation12 + $0x300] sm:$0xff]
    %v7056 = vld [vmem:[#allocation12 + $0x308] sm:$0xff]
    %v7057 = vld [vmem:[#allocation12 + $0x310] sm:$0xff]
    %v7058 = vld [vmem:[#allocation12 + $0x318] sm:$0xff]
    %v7059 = vld [vmem:[#allocation12 + $0x320] sm:$0xff]
    %v7060 = vld [vmem:[#allocation12 + $0x328] sm:$0xff]
    %v7061 = vld [vmem:[#allocation12 + $0x330] sm:$0xff]
    %v7062 = vld [vmem:[#allocation12 + $0x338] sm:$0xff]
    %v7063 = vld [vmem:[#allocation12 + $0x340] sm:$0xff]
    %v7064 = vld [vmem:[#allocation12 + $0x348] sm:$0xff]
    %v7065 = vld [vmem:[#allocation12 + $0x350] sm:$0xff]
    %v7066 = vld [vmem:[#allocation12 + $0x358] sm:$0xff]
    %v7067 = vld [vmem:[#allocation12 + $0x360] sm:$0xff]
    %v7068 = vld [vmem:[#allocation12 + $0x368] sm:$0xff]
    %v7069 = vld [vmem:[#allocation12 + $0x370] sm:$0xff]
    %v7070 = vld [vmem:[#allocation12 + $0x378] sm:$0xff]
    %v7071 = vld [vmem:[#allocation12 + $0x380] sm:$0xff]
    %v7072 = vld [vmem:[#allocation12 + $0x388] sm:$0xff]
    %v7073 = vld [vmem:[#allocation12 + $0x390] sm:$0xff]
    %v7074 = vld [vmem:[#allocation12 + $0x398] sm:$0xff]
    %v7075 = vld [vmem:[#allocation12 + $0x3a0] sm:$0xff]
    %v7076 = vld [vmem:[#allocation12 + $0x3a8] sm:$0xff]
    %v7077 = vld [vmem:[#allocation12 + $0x3b0] sm:$0xff]
    %v7078 = vld [vmem:[#allocation12 + $0x3b8] sm:$0xff]
    %v7079 = vld [vmem:[#allocation12 + $0x3c0] sm:$0xff]
    %v7080 = vld [vmem:[#allocation12 + $0x3c8] sm:$0xff]
    %v7081 = vld [vmem:[#allocation12 + $0x3d0] sm:$0xff]
    %v7082 = vld [vmem:[#allocation12 + $0x3d8] sm:$0xff]
    %v7083 = vld [vmem:[#allocation12 + $0x3e0] sm:$0xff]
    %v7084 = vld [vmem:[#allocation12 + $0x3e8] sm:$0xff]
    %v7085 = vld [vmem:[#allocation12 + $0x3f0] sm:$0xff]
    %v7086 = vld [vmem:[#allocation12 + $0x3f8] sm:$0xff]
    %v7087 = vld [vmem:[#allocation12 + $0x400] sm:$0xff]
    %v7088 = vld [vmem:[#allocation12 + $0x408] sm:$0xff]
    %v7089 = vld [vmem:[#allocation12 + $0x410] sm:$0xff]
    %v7090 = vld [vmem:[#allocation12 + $0x418] sm:$0xff]
    %v7091 = vld [vmem:[#allocation12 + $0x420] sm:$0xff]
    %v7092 = vld [vmem:[#allocation12 + $0x428] sm:$0xff]
    %v7093 = vld [vmem:[#allocation12 + $0x430] sm:$0xff]
    %v7094 = vld [vmem:[#allocation12 + $0x438] sm:$0xff]
    %v7095 = vld [vmem:[#allocation12 + $0x440] sm:$0xff]
    %v7096 = vld [vmem:[#allocation12 + $0x448] sm:$0xff]
    %v7097 = vld [vmem:[#allocation12 + $0x450] sm:$0xff]
    %v7098 = vld [vmem:[#allocation12 + $0x458] sm:$0xff]
    %v7099 = vld [vmem:[#allocation12 + $0x460] sm:$0xff]
    %v7100 = vld [vmem:[#allocation12 + $0x468] sm:$0xff]
    %v7101 = vld [vmem:[#allocation12 + $0x470] sm:$0xff]
    %v7102 = vld [vmem:[#allocation12 + $0x478] sm:$0xff]
    %v7103 = vunpack.c.l.s8.bf16 %v6959
    %v7104 = vunpack.c.l.s8.bf16 %v6960
    %v7105 = vunpack.c.l.s8.bf16 %v6961
    %v7106 = vunpack.c.l.s8.bf16 %v6962
    %v7107 = vunpack.c.l.s8.bf16 %v6963
    %v7108 = vunpack.c.l.s8.bf16 %v6964
    %v7109 = vunpack.c.h.s8.bf16 %v6959
    %v7110 = vunpack.c.h.s8.bf16 %v6960
    %v7111 = vunpack.c.h.s8.bf16 %v6961
    %v7112 = vunpack.c.h.s8.bf16 %v6962
    %v7113 = vunpack.c.h.s8.bf16 %v6963
    %v7114 = vunpack.c.h.s8.bf16 %v6964
    %v7115 = vunpack.c.l.s8.bf16 %v6965
    %v7116 = vunpack.c.l.s8.bf16 %v6966
    %v7117 = vunpack.c.l.s8.bf16 %v6967
    %v7118 = vunpack.c.l.s8.bf16 %v6968
    %v7119 = vunpack.c.l.s8.bf16 %v6969
    %v7120 = vunpack.c.l.s8.bf16 %v6970
    %v7121 = vunpack.c.h.s8.bf16 %v6965
    %v7122 = vunpack.c.h.s8.bf16 %v6966
    %v7123 = vunpack.c.h.s8.bf16 %v6967
    %v7124 = vunpack.c.h.s8.bf16 %v6968
    %v7125 = vunpack.c.h.s8.bf16 %v6969
    %v7126 = vunpack.c.h.s8.bf16 %v6970
    %v7127 = vunpack.c.l.s8.bf16 %v6971
    %v7128 = vunpack.c.l.s8.bf16 %v6972
    %v7129 = vunpack.c.l.s8.bf16 %v6973
    %v7130 = vunpack.c.l.s8.bf16 %v6974
    %v7131 = vunpack.c.l.s8.bf16 %v6975
    %v7132 = vunpack.c.l.s8.bf16 %v6976
    %v7133 = vunpack.c.h.s8.bf16 %v6971
    %v7134 = vunpack.c.h.s8.bf16 %v6972
    %v7135 = vunpack.c.h.s8.bf16 %v6973
    %v7136 = vunpack.c.h.s8.bf16 %v6974
    %v7137 = vunpack.c.h.s8.bf16 %v6975
    %v7138 = vunpack.c.h.s8.bf16 %v6976
    %v7139 = vunpack.c.l.s8.bf16 %v6977
    %v7140 = vunpack.c.l.s8.bf16 %v6978
    %v7141 = vunpack.c.l.s8.bf16 %v6979
    %v7142 = vunpack.c.l.s8.bf16 %v6980
    %v7143 = vunpack.c.l.s8.bf16 %v6981
    %v7144 = vunpack.c.l.s8.bf16 %v6982
    %v7145 = vunpack.c.h.s8.bf16 %v6977
    %v7146 = vunpack.c.h.s8.bf16 %v6978
    %v7147 = vunpack.c.h.s8.bf16 %v6979
    %v7148 = vunpack.c.h.s8.bf16 %v6980
    %v7149 = vunpack.c.h.s8.bf16 %v6981
    %v7150 = vunpack.c.h.s8.bf16 %v6982
    %v7151 = vunpack.c.l.s8.bf16 %v6983
    %v7152 = vunpack.c.l.s8.bf16 %v6984
    %v7153 = vunpack.c.l.s8.bf16 %v6985
    %v7154 = vunpack.c.l.s8.bf16 %v6986
    %v7155 = vunpack.c.l.s8.bf16 %v6987
    %v7156 = vunpack.c.l.s8.bf16 %v6988
    %v7157 = vunpack.c.h.s8.bf16 %v6983
    %v7158 = vunpack.c.h.s8.bf16 %v6984
    %v7159 = vunpack.c.h.s8.bf16 %v6985
    %v7160 = vunpack.c.h.s8.bf16 %v6986
    %v7161 = vunpack.c.h.s8.bf16 %v6987
    %v7162 = vunpack.c.h.s8.bf16 %v6988
    %v7163 = vunpack.c.l.s8.bf16 %v6989
    %v7164 = vunpack.c.l.s8.bf16 %v6990
    %v7165 = vunpack.c.l.s8.bf16 %v6991
    %v7166 = vunpack.c.l.s8.bf16 %v6992
    %v7167 = vunpack.c.l.s8.bf16 %v6993
    %v7168 = vunpack.c.l.s8.bf16 %v6994
    %v7169 = vunpack.c.h.s8.bf16 %v6989
    %v7170 = vunpack.c.h.s8.bf16 %v6990
    %v7171 = vunpack.c.h.s8.bf16 %v6991
    %v7172 = vunpack.c.h.s8.bf16 %v6992
    %v7173 = vunpack.c.h.s8.bf16 %v6993
    %v7174 = vunpack.c.h.s8.bf16 %v6994
    %v7175 = vunpack.c.l.s8.bf16 %v6995
    %v7176 = vunpack.c.l.s8.bf16 %v6996
    %v7177 = vunpack.c.l.s8.bf16 %v6997
    %v7178 = vunpack.c.l.s8.bf16 %v6998
    %v7179 = vunpack.c.l.s8.bf16 %v6999
    %v7180 = vunpack.c.l.s8.bf16 %v7000
    %v7181 = vunpack.c.h.s8.bf16 %v6995
    %v7182 = vunpack.c.h.s8.bf16 %v6996
    %v7183 = vunpack.c.h.s8.bf16 %v6997
    %v7184 = vunpack.c.h.s8.bf16 %v6998
    %v7185 = vunpack.c.h.s8.bf16 %v6999
    %v7186 = vunpack.c.h.s8.bf16 %v7000
    %v7187 = vunpack.c.l.s8.bf16 %v7001
    %v7188 = vunpack.c.l.s8.bf16 %v7002
    %v7189 = vunpack.c.l.s8.bf16 %v7003
    %v7190 = vunpack.c.l.s8.bf16 %v7004
    %v7191 = vunpack.c.l.s8.bf16 %v7005
    %v7192 = vunpack.c.l.s8.bf16 %v7006
    %v7193 = vunpack.c.h.s8.bf16 %v7001
    %v7194 = vunpack.c.h.s8.bf16 %v7002
    %v7195 = vunpack.c.h.s8.bf16 %v7003
    %v7196 = vunpack.c.h.s8.bf16 %v7004
    %v7197 = vunpack.c.h.s8.bf16 %v7005
    %v7198 = vunpack.c.h.s8.bf16 %v7006
    %v7199 = vunpack.c.l.s8.bf16 %v7007
    %v7200 = vunpack.c.l.s8.bf16 %v7008
    %v7201 = vunpack.c.l.s8.bf16 %v7009
    %v7202 = vunpack.c.l.s8.bf16 %v7010
    %v7203 = vunpack.c.l.s8.bf16 %v7011
    %v7204 = vunpack.c.l.s8.bf16 %v7012
    %v7205 = vunpack.c.h.s8.bf16 %v7007
    %v7206 = vunpack.c.h.s8.bf16 %v7008
    %v7207 = vunpack.c.h.s8.bf16 %v7009
    %v7208 = vunpack.c.h.s8.bf16 %v7010
    %v7209 = vunpack.c.h.s8.bf16 %v7011
    %v7210 = vunpack.c.h.s8.bf16 %v7012
    %v7211 = vunpack.c.l.s8.bf16 %v7013
    %v7212 = vunpack.c.l.s8.bf16 %v7014
    %v7213 = vunpack.c.l.s8.bf16 %v7015
    %v7214 = vunpack.c.l.s8.bf16 %v7016
    %v7215 = vunpack.c.l.s8.bf16 %v7017
    %v7216 = vunpack.c.l.s8.bf16 %v7018
    %v7217 = vunpack.c.h.s8.bf16 %v7013
    %v7218 = vunpack.c.h.s8.bf16 %v7014
    %v7219 = vunpack.c.h.s8.bf16 %v7015
    %v7220 = vunpack.c.h.s8.bf16 %v7016
    %v7221 = vunpack.c.h.s8.bf16 %v7017
    %v7222 = vunpack.c.h.s8.bf16 %v7018
    %v7223 = vunpack.c.l.s8.bf16 %v7019
    %v7224 = vunpack.c.l.s8.bf16 %v7020
    %v7225 = vunpack.c.l.s8.bf16 %v7021
    %v7226 = vunpack.c.l.s8.bf16 %v7022
    %v7227 = vunpack.c.l.s8.bf16 %v7023
    %v7228 = vunpack.c.l.s8.bf16 %v7024
    %v7229 = vunpack.c.h.s8.bf16 %v7019
    %v7230 = vunpack.c.h.s8.bf16 %v7020
    %v7231 = vunpack.c.h.s8.bf16 %v7021
    %v7232 = vunpack.c.h.s8.bf16 %v7022
    %v7233 = vunpack.c.h.s8.bf16 %v7023
    %v7234 = vunpack.c.h.s8.bf16 %v7024
    %v7235 = vunpack.c.l.s8.bf16 %v7025
    %v7236 = vunpack.c.l.s8.bf16 %v7026
    %v7237 = vunpack.c.l.s8.bf16 %v7027
    %v7238 = vunpack.c.l.s8.bf16 %v7028
    %v7239 = vunpack.c.l.s8.bf16 %v7029
    %v7240 = vunpack.c.l.s8.bf16 %v7030
    %v7241 = vunpack.c.h.s8.bf16 %v7025
    %v7242 = vunpack.c.h.s8.bf16 %v7026
    %v7243 = vunpack.c.h.s8.bf16 %v7027
    %v7244 = vunpack.c.h.s8.bf16 %v7028
    %v7245 = vunpack.c.h.s8.bf16 %v7029
    %v7246 = vunpack.c.h.s8.bf16 %v7030
    %v7247 = vunpack.c.l.s8.bf16 %v7031
    %v7248 = vunpack.c.l.s8.bf16 %v7032
    %v7249 = vunpack.c.l.s8.bf16 %v7033
    %v7250 = vunpack.c.l.s8.bf16 %v7034
    %v7251 = vunpack.c.l.s8.bf16 %v7035
    %v7252 = vunpack.c.l.s8.bf16 %v7036
    %v7253 = vunpack.c.h.s8.bf16 %v7031
    %v7254 = vunpack.c.h.s8.bf16 %v7032
    %v7255 = vunpack.c.h.s8.bf16 %v7033
    %v7256 = vunpack.c.h.s8.bf16 %v7034
    %v7257 = vunpack.c.h.s8.bf16 %v7035
    %v7258 = vunpack.c.h.s8.bf16 %v7036
    %v7259 = vunpack.c.l.s8.bf16 %v7037
    %v7260 = vunpack.c.l.s8.bf16 %v7038
    %v7261 = vunpack.c.l.s8.bf16 %v7039
    %v7262 = vunpack.c.l.s8.bf16 %v7040
    %v7263 = vunpack.c.l.s8.bf16 %v7041
    %v7264 = vunpack.c.l.s8.bf16 %v7042
    %v7265 = vunpack.c.h.s8.bf16 %v7037
    %v7266 = vunpack.c.h.s8.bf16 %v7038
    %v7267 = vunpack.c.h.s8.bf16 %v7039
    %v7268 = vunpack.c.h.s8.bf16 %v7040
    %v7269 = vunpack.c.h.s8.bf16 %v7041
    %v7270 = vunpack.c.h.s8.bf16 %v7042
    %v7271 = vunpack.c.l.s8.bf16 %v7043
    %v7272 = vunpack.c.l.s8.bf16 %v7044
    %v7273 = vunpack.c.l.s8.bf16 %v7045
    %v7274 = vunpack.c.l.s8.bf16 %v7046
    %v7275 = vunpack.c.l.s8.bf16 %v7047
    %v7276 = vunpack.c.l.s8.bf16 %v7048
    %v7277 = vunpack.c.h.s8.bf16 %v7043
    %v7278 = vunpack.c.h.s8.bf16 %v7044
    %v7279 = vunpack.c.h.s8.bf16 %v7045
    %v7280 = vunpack.c.h.s8.bf16 %v7046
    %v7281 = vunpack.c.h.s8.bf16 %v7047
    %v7282 = vunpack.c.h.s8.bf16 %v7048
    %v7283 = vunpack.c.l.s8.bf16 %v7049
    %v7284 = vunpack.c.l.s8.bf16 %v7050
    %v7285 = vunpack.c.l.s8.bf16 %v7051
    %v7286 = vunpack.c.l.s8.bf16 %v7052
    %v7287 = vunpack.c.l.s8.bf16 %v7053
    %v7288 = vunpack.c.l.s8.bf16 %v7054
    %v7289 = vunpack.c.h.s8.bf16 %v7049
    %v7290 = vunpack.c.h.s8.bf16 %v7050
    %v7291 = vunpack.c.h.s8.bf16 %v7051
    %v7292 = vunpack.c.h.s8.bf16 %v7052
    %v7293 = vunpack.c.h.s8.bf16 %v7053
    %v7294 = vunpack.c.h.s8.bf16 %v7054
    %v7295 = vunpack.c.l.s8.bf16 %v7055
    %v7296 = vunpack.c.l.s8.bf16 %v7056
    %v7297 = vunpack.c.l.s8.bf16 %v7057
    %v7298 = vunpack.c.l.s8.bf16 %v7058
    %v7299 = vunpack.c.l.s8.bf16 %v7059
    %v7300 = vunpack.c.l.s8.bf16 %v7060
    %v7301 = vunpack.c.h.s8.bf16 %v7055
    %v7302 = vunpack.c.h.s8.bf16 %v7056
    %v7303 = vunpack.c.h.s8.bf16 %v7057
    %v7304 = vunpack.c.h.s8.bf16 %v7058
    %v7305 = vunpack.c.h.s8.bf16 %v7059
    %v7306 = vunpack.c.h.s8.bf16 %v7060
    %v7307 = vunpack.c.l.s8.bf16 %v7061
    %v7308 = vunpack.c.l.s8.bf16 %v7062
    %v7309 = vunpack.c.l.s8.bf16 %v7063
    %v7310 = vunpack.c.l.s8.bf16 %v7064
    %v7311 = vunpack.c.l.s8.bf16 %v7065
    %v7312 = vunpack.c.l.s8.bf16 %v7066
    %v7313 = vunpack.c.h.s8.bf16 %v7061
    %v7314 = vunpack.c.h.s8.bf16 %v7062
    %v7315 = vunpack.c.h.s8.bf16 %v7063
    %v7316 = vunpack.c.h.s8.bf16 %v7064
    %v7317 = vunpack.c.h.s8.bf16 %v7065
    %v7318 = vunpack.c.h.s8.bf16 %v7066
    %v7319 = vunpack.c.l.s8.bf16 %v7067
    %v7320 = vunpack.c.l.s8.bf16 %v7068
    %v7321 = vunpack.c.l.s8.bf16 %v7069
    %v7322 = vunpack.c.l.s8.bf16 %v7070
    %v7323 = vunpack.c.l.s8.bf16 %v7071
    %v7324 = vunpack.c.l.s8.bf16 %v7072
    %v7325 = vunpack.c.h.s8.bf16 %v7067
    %v7326 = vunpack.c.h.s8.bf16 %v7068
    %v7327 = vunpack.c.h.s8.bf16 %v7069
    %v7328 = vunpack.c.h.s8.bf16 %v7070
    %v7329 = vunpack.c.h.s8.bf16 %v7071
    %v7330 = vunpack.c.h.s8.bf16 %v7072
    %v7331 = vunpack.c.l.s8.bf16 %v7073
    %v7332 = vunpack.c.l.s8.bf16 %v7074
    %v7333 = vunpack.c.l.s8.bf16 %v7075
    %v7334 = vunpack.c.l.s8.bf16 %v7076
    %v7335 = vunpack.c.l.s8.bf16 %v7077
    %v7336 = vunpack.c.l.s8.bf16 %v7078
    %v7337 = vunpack.c.h.s8.bf16 %v7073
    %v7338 = vunpack.c.h.s8.bf16 %v7074
    %v7339 = vunpack.c.h.s8.bf16 %v7075
    %v7340 = vunpack.c.h.s8.bf16 %v7076
    %v7341 = vunpack.c.h.s8.bf16 %v7077
    %v7342 = vunpack.c.h.s8.bf16 %v7078
    %v7343 = vunpack.c.l.s8.bf16 %v7079
    %v7344 = vunpack.c.l.s8.bf16 %v7080
    %v7345 = vunpack.c.l.s8.bf16 %v7081
    %v7346 = vunpack.c.l.s8.bf16 %v7082
    %v7347 = vunpack.c.l.s8.bf16 %v7083
    %v7348 = vunpack.c.l.s8.bf16 %v7084
    %v7349 = vunpack.c.h.s8.bf16 %v7079
    %v7350 = vunpack.c.h.s8.bf16 %v7080
    %v7351 = vunpack.c.h.s8.bf16 %v7081
    %v7352 = vunpack.c.h.s8.bf16 %v7082
    %v7353 = vunpack.c.h.s8.bf16 %v7083
    %v7354 = vunpack.c.h.s8.bf16 %v7084
    %v7355 = vunpack.c.l.s8.bf16 %v7085
    %v7356 = vunpack.c.l.s8.bf16 %v7086
    %v7357 = vunpack.c.l.s8.bf16 %v7087
    %v7358 = vunpack.c.l.s8.bf16 %v7088
    %v7359 = vunpack.c.l.s8.bf16 %v7089
    %v7360 = vunpack.c.l.s8.bf16 %v7090
    %v7361 = vunpack.c.h.s8.bf16 %v7085
    %v7362 = vunpack.c.h.s8.bf16 %v7086
    %v7363 = vunpack.c.h.s8.bf16 %v7087
    %v7364 = vunpack.c.h.s8.bf16 %v7088
    %v7365 = vunpack.c.h.s8.bf16 %v7089
    %v7366 = vunpack.c.h.s8.bf16 %v7090
    %v7367 = vunpack.c.l.s8.bf16 %v7091
    %v7368 = vunpack.c.l.s8.bf16 %v7092
    %v7369 = vunpack.c.l.s8.bf16 %v7093
    %v7370 = vunpack.c.l.s8.bf16 %v7094
    %v7371 = vunpack.c.l.s8.bf16 %v7095
    %v7372 = vunpack.c.l.s8.bf16 %v7096
    %v7373 = vunpack.c.h.s8.bf16 %v7091
    %v7374 = vunpack.c.h.s8.bf16 %v7092
    %v7375 = vunpack.c.h.s8.bf16 %v7093
    %v7376 = vunpack.c.h.s8.bf16 %v7094
    %v7377 = vunpack.c.h.s8.bf16 %v7095
    %v7378 = vunpack.c.h.s8.bf16 %v7096
    %v7379 = vunpack.c.l.s8.bf16 %v7097
    %v7380 = vunpack.c.l.s8.bf16 %v7098
    %v7381 = vunpack.c.l.s8.bf16 %v7099
    %v7382 = vunpack.c.l.s8.bf16 %v7100
    %v7383 = vunpack.c.l.s8.bf16 %v7101
    %v7384 = vunpack.c.l.s8.bf16 %v7102
    %v7385 = vunpack.c.h.s8.bf16 %v7097
    %v7386 = vunpack.c.h.s8.bf16 %v7098
    %v7387 = vunpack.c.h.s8.bf16 %v7099
    %v7388 = vunpack.c.h.s8.bf16 %v7100
    %v7389 = vunpack.c.h.s8.bf16 %v7101
    %v7390 = vunpack.c.h.s8.bf16 %v7102
    %v7391 = vpack.c.bf16 %v4565, %v4565
    %v7392 = vpack.c.bf16 %v4566, %v4566
    %v7393 = vpack.c.bf16 %v4567, %v4567
    %v7394 = vpack.c.bf16 %v4568, %v4568
    %v7395 = vpack.c.bf16 %v4569, %v4569
    %v7396 = vpack.c.bf16 %v4570, %v4570
    %7397 = vmatprep.subr.bf16.mxu0 %v7104
    %7398 = vmatpush1.bf16.msra.mxu0 %v7103
    %7399 = vmatprep.subr.bf16.mxu0 %v7110
    %7400 = vmatpush1.bf16.msra.mxu0 %v7109
    %7401 = vmatprep.subr.bf16.mxu0 %v7116
    %7402 = vmatpush1.bf16.msra.mxu0 %v7115
    %7403 = vmatprep.subr.bf16.mxu0 %v7122
    %7404 = vmatpush1.bf16.msra.mxu0 %v7121
    %7405 = vmatprep.subr.bf16.mxu0 %v7128
    %7406 = vmatpush1.bf16.msra.mxu0 %v7127
    %7407 = vmatprep.subr.bf16.mxu0 %v7134
    %7408 = vmatpush1.bf16.msra.mxu0 %v7133
    %7409 = vmatprep.subr.bf16.mxu0 %v7140
    %7410 = vmatpush1.bf16.msra.mxu0 %v7139
    %7411 = vmatprep.subr.bf16.mxu0 %v7146
    %7412 = vmatpush1.bf16.msra.mxu0 %v7145
    %7413 = vmatprep.subr.bf16.mxu0 %v7152
    %7414 = vmatpush1.bf16.msra.mxu0 %v7151
    %7415 = vmatprep.subr.bf16.mxu0 %v7158
    %7416 = vmatpush1.bf16.msra.mxu0 %v7157
    %7417 = vmatprep.subr.bf16.mxu0 %v7164
    %7418 = vmatpush1.bf16.msra.mxu0 %v7163
    %7419 = vmatprep.subr.bf16.mxu0 %v7170
    %7420 = vmatpush1.bf16.msra.mxu0 %v7169
    %7421 = vmatprep.subr.bf16.mxu0 %v7176
    %7422 = vmatpush1.bf16.msra.mxu0 %v7175
    %7423 = vmatprep.subr.bf16.mxu0 %v7182
    %7424 = vmatpush1.bf16.msra.mxu0 %v7181
    %7425 = vmatprep.subr.bf16.mxu0 %v7188
    %7426 = vmatpush1.bf16.msra.mxu0 %v7187
    %7427 = vmatprep.subr.bf16.mxu0 %v7194
    %7428 = vmatpush1.bf16.msra.mxu0 %v7193
    %7429 = vmatprep.mubr.bf16.mxu0 %v7392
    %7430 = vmatmul.mubr.bf16.gmra.mrb[0].mxu0 %v7391
    %v7431 = vpop.f32.mrb[0].mxu0
    %v7432 = vadd.f32 0.0, %v7431
    %v7433 = vpop.f32.mrb[0].mxu0
    %v7434 = vadd.f32 0.0, %v7433
    %v7435 = vpop.f32.mrb[0].mxu0
    %v7436 = vpop.f32.mrb[0].mxu0
    %7437 = vdwg.mxu0
    %7438 = vmatprep.subr.bf16.mxu0 %v7200
    %7439 = vmatpush1.bf16.msra.mxu0 %v7199
    %7440 = vmatprep.subr.bf16.mxu0 %v7206
    %7441 = vmatpush1.bf16.msra.mxu0 %v7205
    %7442 = vmatprep.subr.bf16.mxu0 %v7212
    %7443 = vmatpush1.bf16.msra.mxu0 %v7211
    %7444 = vmatprep.subr.bf16.mxu0 %v7218
    %7445 = vmatpush1.bf16.msra.mxu0 %v7217
    %7446 = vmatprep.subr.bf16.mxu0 %v7224
    %7447 = vmatpush1.bf16.msra.mxu0 %v7223
    %7448 = vmatprep.subr.bf16.mxu0 %v7230
    %7449 = vmatpush1.bf16.msra.mxu0 %v7229
    %7450 = vmatprep.subr.bf16.mxu0 %v7236
    %7451 = vmatpush1.bf16.msra.mxu0 %v7235
    %7452 = vmatprep.subr.bf16.mxu0 %v7242
    %7453 = vmatpush1.bf16.msra.mxu0 %v7241
    %7454 = vmatprep.subr.bf16.mxu0 %v7248
    %7455 = vmatpush1.bf16.msra.mxu0 %v7247
    %7456 = vmatprep.subr.bf16.mxu0 %v7254
    %7457 = vmatpush1.bf16.msra.mxu0 %v7253
    %7458 = vmatprep.subr.bf16.mxu0 %v7260
    %7459 = vmatpush1.bf16.msra.mxu0 %v7259
    %7460 = vmatprep.subr.bf16.mxu0 %v7266
    %7461 = vmatpush1.bf16.msra.mxu0 %v7265
    %7462 = vmatprep.subr.bf16.mxu0 %v7272
    %7463 = vmatpush1.bf16.msra.mxu0 %v7271
    %7464 = vmatprep.subr.bf16.mxu0 %v7278
    %7465 = vmatpush1.bf16.msra.mxu0 %v7277
    %7466 = vmatprep.subr.bf16.mxu0 %v7284
    %7467 = vmatpush1.bf16.msra.mxu0 %v7283
    %7468 = vmatprep.subr.bf16.mxu0 %v7290
    %7469 = vmatpush1.bf16.msra.mxu0 %v7289
    %7470 = vmatprep.mubr.bf16.mxu0 %v7394
    %7471 = vmatmul.mubr.bf16.gmra.mrb[0].mxu0 %v7393
    %v7472 = vpop.f32.mrb[0].mxu0
    %v7473 = vadd.f32 %v7432, %v7472
    %v7474 = vpop.f32.mrb[0].mxu0
    %v7475 = vadd.f32 %v7434, %v7474
    %v7476 = vpop.f32.mrb[0].mxu0
    %v7477 = vpop.f32.mrb[0].mxu0
    %7478 = vdwg.mxu0
    %7479 = vmatprep.subr.bf16.mxu0 %v7296
    %7480 = vmatpush1.bf16.msra.mxu0 %v7295
    %7481 = vmatprep.subr.bf16.mxu0 %v7302
    %7482 = vmatpush1.bf16.msra.mxu0 %v7301
    %7483 = vmatprep.subr.bf16.mxu0 %v7308
    %7484 = vmatpush1.bf16.msra.mxu0 %v7307
    %7485 = vmatprep.subr.bf16.mxu0 %v7314
    %7486 = vmatpush1.bf16.msra.mxu0 %v7313
    %7487 = vmatprep.subr.bf16.mxu0 %v7320
    %7488 = vmatpush1.bf16.msra.mxu0 %v7319
    %7489 = vmatprep.subr.bf16.mxu0 %v7326
    %7490 = vmatpush1.bf16.msra.mxu0 %v7325
    %7491 = vmatprep.subr.bf16.mxu0 %v7332
    %7492 = vmatpush1.bf16.msra.mxu0 %v7331
    %7493 = vmatprep.subr.bf16.mxu0 %v7338
    %7494 = vmatpush1.bf16.msra.mxu0 %v7337
    %7495 = vmatprep.subr.bf16.mxu0 %v7344
    %7496 = vmatpush1.bf16.msra.mxu0 %v7343
    %7497 = vmatprep.subr.bf16.mxu0 %v7350
    %7498 = vmatpush1.bf16.msra.mxu0 %v7349
    %7499 = vmatprep.subr.bf16.mxu0 %v7356
    %7500 = vmatpush1.bf16.msra.mxu0 %v7355
    %7501 = vmatprep.subr.bf16.mxu0 %v7362
    %7502 = vmatpush1.bf16.msra.mxu0 %v7361
    %7503 = vmatprep.subr.bf16.mxu0 %v7368
    %7504 = vmatpush1.bf16.msra.mxu0 %v7367
    %7505 = vmatprep.subr.bf16.mxu0 %v7374
    %7506 = vmatpush1.bf16.msra.mxu0 %v7373
    %7507 = vmatprep.subr.bf16.mxu0 %v7380
    %7508 = vmatpush1.bf16.msra.mxu0 %v7379
    %7509 = vmatprep.subr.bf16.mxu0 %v7386
    %7510 = vmatpush1.bf16.msra.mxu0 %v7385
    %7511 = vmatprep.mubr.bf16.mxu0 %v7396
    %7512 = vmatmul.mubr.bf16.gmra.mrb[0].mxu0 %v7395
    %v7513 = vpop.f32.mrb[0].mxu0
    %v7514 = vadd.f32 %v7473, %v7513
    %v7515 = vpop.f32.mrb[0].mxu0
    %v7516 = vadd.f32 %v7475, %v7515
    %v7517 = vpop.f32.mrb[0].mxu0
    %v7518 = vpop.f32.mrb[0].mxu0
    %7519 = vdwg.mxu0
    %7520 = vmatprep.subr.bf16.mxu0 %v7106
    %7521 = vmatpush1.bf16.msra.mxu0 %v7105
    %7522 = vmatprep.subr.bf16.mxu0 %v7112
    %7523 = vmatpush1.bf16.msra.mxu0 %v7111
    %7524 = vmatprep.subr.bf16.mxu0 %v7118
    %7525 = vmatpush1.bf16.msra.mxu0 %v7117
    %7526 = vmatprep.subr.bf16.mxu0 %v7124
    %7527 = vmatpush1.bf16.msra.mxu0 %v7123
    %7528 = vmatprep.subr.bf16.mxu0 %v7130
    %7529 = vmatpush1.bf16.msra.mxu0 %v7129
    %7530 = vmatprep.subr.bf16.mxu0 %v7136
    %7531 = vmatpush1.bf16.msra.mxu0 %v7135
    %7532 = vmatprep.subr.bf16.mxu0 %v7142
    %7533 = vmatpush1.bf16.msra.mxu0 %v7141
    %7534 = vmatprep.subr.bf16.mxu0 %v7148
    %7535 = vmatpush1.bf16.msra.mxu0 %v7147
    %7536 = vmatprep.subr.bf16.mxu0 %v7154
    %7537 = vmatpush1.bf16.msra.mxu0 %v7153
    %7538 = vmatprep.subr.bf16.mxu0 %v7160
    %7539 = vmatpush1.bf16.msra.mxu0 %v7159
    %7540 = vmatprep.subr.bf16.mxu0 %v7166
    %7541 = vmatpush1.bf16.msra.mxu0 %v7165
    %7542 = vmatprep.subr.bf16.mxu0 %v7172
    %7543 = vmatpush1.bf16.msra.mxu0 %v7171
    %7544 = vmatprep.subr.bf16.mxu0 %v7178
    %7545 = vmatpush1.bf16.msra.mxu0 %v7177
    %7546 = vmatprep.subr.bf16.mxu0 %v7184
    %7547 = vmatpush1.bf16.msra.mxu0 %v7183
    %7548 = vmatprep.subr.bf16.mxu0 %v7190
    %7549 = vmatpush1.bf16.msra.mxu0 %v7189
    %7550 = vmatprep.subr.bf16.mxu0 %v7196
    %7551 = vmatpush1.bf16.msra.mxu0 %v7195
    %7552 = vmatprep.mubr.bf16.mxu0 %v7392
    %7553 = vmatmul.mubr.bf16.gmra.mrb[0].mxu0 %v7391
    %v7554 = vpop.f32.mrb[0].mxu0
    %v7555 = vadd.f32 0.0, %v7554
    %v7556 = vpop.f32.mrb[0].mxu0
    %v7557 = vadd.f32 0.0, %v7556
    %v7558 = vpop.f32.mrb[0].mxu0
    %v7559 = vpop.f32.mrb[0].mxu0
    %7560 = vdwg.mxu0
    %7561 = vmatprep.subr.bf16.mxu0 %v7202
    %7562 = vmatpush1.bf16.msra.mxu0 %v7201
    %7563 = vmatprep.subr.bf16.mxu0 %v7208
    %7564 = vmatpush1.bf16.msra.mxu0 %v7207
    %7565 = vmatprep.subr.bf16.mxu0 %v7214
    %7566 = vmatpush1.bf16.msra.mxu0 %v7213
    %7567 = vmatprep.subr.bf16.mxu0 %v7220
    %7568 = vmatpush1.bf16.msra.mxu0 %v7219
    %7569 = vmatprep.subr.bf16.mxu0 %v7226
    %7570 = vmatpush1.bf16.msra.mxu0 %v7225
    %7571 = vmatprep.subr.bf16.mxu0 %v7232
    %7572 = vmatpush1.bf16.msra.mxu0 %v7231
    %7573 = vmatprep.subr.bf16.mxu0 %v7238
    %7574 = vmatpush1.bf16.msra.mxu0 %v7237
    %7575 = vmatprep.subr.bf16.mxu0 %v7244
    %7576 = vmatpush1.bf16.msra.mxu0 %v7243
    %7577 = vmatprep.subr.bf16.mxu0 %v7250
    %7578 = vmatpush1.bf16.msra.mxu0 %v7249
    %7579 = vmatprep.subr.bf16.mxu0 %v7256
    %7580 = vmatpush1.bf16.msra.mxu0 %v7255
    %7581 = vmatprep.subr.bf16.mxu0 %v7262
    %7582 = vmatpush1.bf16.msra.mxu0 %v7261
    %7583 = vmatprep.subr.bf16.mxu0 %v7268
    %7584 = vmatpush1.bf16.msra.mxu0 %v7267
    %7585 = vmatprep.subr.bf16.mxu0 %v7274
    %7586 = vmatpush1.bf16.msra.mxu0 %v7273
    %7587 = vmatprep.subr.bf16.mxu0 %v7280
    %7588 = vmatpush1.bf16.msra.mxu0 %v7279
    %7589 = vmatprep.subr.bf16.mxu0 %v7286
    %7590 = vmatpush1.bf16.msra.mxu0 %v7285
    %7591 = vmatprep.subr.bf16.mxu0 %v7292
    %7592 = vmatpush1.bf16.msra.mxu0 %v7291
    %7593 = vmatprep.mubr.bf16.mxu0 %v7394
    %7594 = vmatmul.mubr.bf16.gmra.mrb[0].mxu0 %v7393
    %v7595 = vpop.f32.mrb[0].mxu0
    %v7596 = vadd.f32 %v7555, %v7595
    %v7597 = vpop.f32.mrb[0].mxu0
    %v7598 = vadd.f32 %v7557, %v7597
    %v7599 = vpop.f32.mrb[0].mxu0
    %v7600 = vpop.f32.mrb[0].mxu0
    %7601 = vdwg.mxu0
    %7602 = vmatprep.subr.bf16.mxu0 %v7298
    %7603 = vmatpush1.bf16.msra.mxu0 %v7297
    %7604 = vmatprep.subr.bf16.mxu0 %v7304
    %7605 = vmatpush1.bf16.msra.mxu0 %v7303
    %7606 = vmatprep.subr.bf16.mxu0 %v7310
    %7607 = vmatpush1.bf16.msra.mxu0 %v7309
    %7608 = vmatprep.subr.bf16.mxu0 %v7316
    %7609 = vmatpush1.bf16.msra.mxu0 %v7315
    %7610 = vmatprep.subr.bf16.mxu0 %v7322
    %7611 = vmatpush1.bf16.msra.mxu0 %v7321
    %7612 = vmatprep.subr.bf16.mxu0 %v7328
    %7613 = vmatpush1.bf16.msra.mxu0 %v7327
    %7614 = vmatprep.subr.bf16.mxu0 %v7334
    %7615 = vmatpush1.bf16.msra.mxu0 %v7333
    %7616 = vmatprep.subr.bf16.mxu0 %v7340
    %7617 = vmatpush1.bf16.msra.mxu0 %v7339
    %7618 = vmatprep.subr.bf16.mxu0 %v7346
    %7619 = vmatpush1.bf16.msra.mxu0 %v7345
    %7620 = vmatprep.subr.bf16.mxu0 %v7352
    %7621 = vmatpush1.bf16.msra.mxu0 %v7351
    %7622 = vmatprep.subr.bf16.mxu0 %v7358
    %7623 = vmatpush1.bf16.msra.mxu0 %v7357
    %7624 = vmatprep.subr.bf16.mxu0 %v7364
    %7625 = vmatpush1.bf16.msra.mxu0 %v7363
    %7626 = vmatprep.subr.bf16.mxu0 %v7370
    %7627 = vmatpush1.bf16.msra.mxu0 %v7369
    %7628 = vmatprep.subr.bf16.mxu0 %v7376
    %7629 = vmatpush1.bf16.msra.mxu0 %v7375
    %7630 = vmatprep.subr.bf16.mxu0 %v7382
    %7631 = vmatpush1.bf16.msra.mxu0 %v7381
    %7632 = vmatprep.subr.bf16.mxu0 %v7388
    %7633 = vmatpush1.bf16.msra.mxu0 %v7387
    %7634 = vmatprep.mubr.bf16.mxu0 %v7396
    %7635 = vmatmul.mubr.bf16.gmra.mrb[0].mxu0 %v7395
    %v7636 = vpop.f32.mrb[0].mxu0
    %v7637 = vadd.f32 %v7596, %v7636
    %v7638 = vpop.f32.mrb[0].mxu0
    %v7639 = vadd.f32 %v7598, %v7638
    %v7640 = vpop.f32.mrb[0].mxu0
    %v7641 = vpop.f32.mrb[0].mxu0
    %7642 = vdwg.mxu0
    %7643 = vmatprep.subr.bf16.mxu0 %v7108
    %7644 = vmatpush1.bf16.msra.mxu0 %v7107
    %7645 = vmatprep.subr.bf16.mxu0 %v7114
    %7646 = vmatpush1.bf16.msra.mxu0 %v7113
    %7647 = vmatprep.subr.bf16.mxu0 %v7120
    %7648 = vmatpush1.bf16.msra.mxu0 %v7119
    %7649 = vmatprep.subr.bf16.mxu0 %v7126
    %7650 = vmatpush1.bf16.msra.mxu0 %v7125
    %7651 = vmatprep.subr.bf16.mxu0 %v7132
    %7652 = vmatpush1.bf16.msra.mxu0 %v7131
    %7653 = vmatprep.subr.bf16.mxu0 %v7138
    %7654 = vmatpush1.bf16.msra.mxu0 %v7137
    %7655 = vmatprep.subr.bf16.mxu0 %v7144
    %7656 = vmatpush1.bf16.msra.mxu0 %v7143
    %7657 = vmatprep.subr.bf16.mxu0 %v7150
    %7658 = vmatpush1.bf16.msra.mxu0 %v7149
    %7659 = vmatprep.subr.bf16.mxu0 %v7156
    %7660 = vmatpush1.bf16.msra.mxu0 %v7155
    %7661 = vmatprep.subr.bf16.mxu0 %v7162
    %7662 = vmatpush1.bf16.msra.mxu0 %v7161
    %7663 = vmatprep.subr.bf16.mxu0 %v7168
    %7664 = vmatpush1.bf16.msra.mxu0 %v7167
    %7665 = vmatprep.subr.bf16.mxu0 %v7174
    %7666 = vmatpush1.bf16.msra.mxu0 %v7173
    %7667 = vmatprep.subr.bf16.mxu0 %v7180
    %7668 = vmatpush1.bf16.msra.mxu0 %v7179
    %7669 = vmatprep.subr.bf16.mxu0 %v7186
    %7670 = vmatpush1.bf16.msra.mxu0 %v7185
    %7671 = vmatprep.subr.bf16.mxu0 %v7192
    %7672 = vmatpush1.bf16.msra.mxu0 %v7191
    %7673 = vmatprep.subr.bf16.mxu0 %v7198
    %7674 = vmatpush1.bf16.msra.mxu0 %v7197
    %7675 = vmatprep.mubr.bf16.mxu0 %v7392
    %7676 = vmatmul.mubr.bf16.gmra.mrb[0].mxu0 %v7391
    %v7677 = vpop.f32.mrb[0].mxu0
    %v7678 = vadd.f32 0.0, %v7677
    %v7679 = vpop.f32.mrb[0].mxu0
    %v7680 = vadd.f32 0.0, %v7679
    %v7681 = vpop.f32.mrb[0].mxu0
    %v7682 = vpop.f32.mrb[0].mxu0
    %7683 = vdwg.mxu0
    %7684 = vmatprep.subr.bf16.mxu0 %v7204
    %7685 = vmatpush1.bf16.msra.mxu0 %v7203
    %7686 = vmatprep.subr.bf16.mxu0 %v7210
    %7687 = vmatpush1.bf16.msra.mxu0 %v7209
    %7688 = vmatprep.subr.bf16.mxu0 %v7216
    %7689 = vmatpush1.bf16.msra.mxu0 %v7215
    %7690 = vmatprep.subr.bf16.mxu0 %v7222
    %7691 = vmatpush1.bf16.msra.mxu0 %v7221
    %7692 = vmatprep.subr.bf16.mxu0 %v7228
    %7693 = vmatpush1.bf16.msra.mxu0 %v7227
    %7694 = vmatprep.subr.bf16.mxu0 %v7234
    %7695 = vmatpush1.bf16.msra.mxu0 %v7233
    %7696 = vmatprep.subr.bf16.mxu0 %v7240
    %7697 = vmatpush1.bf16.msra.mxu0 %v7239
    %7698 = vmatprep.subr.bf16.mxu0 %v7246
    %7699 = vmatpush1.bf16.msra.mxu0 %v7245
    %7700 = vmatprep.subr.bf16.mxu0 %v7252
    %7701 = vmatpush1.bf16.msra.mxu0 %v7251
    %7702 = vmatprep.subr.bf16.mxu0 %v7258
    %7703 = vmatpush1.bf16.msra.mxu0 %v7257
    %7704 = vmatprep.subr.bf16.mxu0 %v7264
    %7705 = vmatpush1.bf16.msra.mxu0 %v7263
    %7706 = vmatprep.subr.bf16.mxu0 %v7270
    %7707 = vmatpush1.bf16.msra.mxu0 %v7269
    %7708 = vmatprep.subr.bf16.mxu0 %v7276
    %7709 = vmatpush1.bf16.msra.mxu0 %v7275
    %7710 = vmatprep.subr.bf16.mxu0 %v7282
    %7711 = vmatpush1.bf16.msra.mxu0 %v7281
    %7712 = vmatprep.subr.bf16.mxu0 %v7288
    %7713 = vmatpush1.bf16.msra.mxu0 %v7287
    %7714 = vmatprep.subr.bf16.mxu0 %v7294
    %7715 = vmatpush1.bf16.msra.mxu0 %v7293
    %7716 = vmatprep.mubr.bf16.mxu0 %v7394
    %7717 = vmatmul.mubr.bf16.gmra.mrb[0].mxu0 %v7393
    %v7718 = vpop.f32.mrb[0].mxu0
    %v7719 = vadd.f32 %v7678, %v7718
    %v7720 = vpop.f32.mrb[0].mxu0
    %v7721 = vadd.f32 %v7680, %v7720
    %v7722 = vpop.f32.mrb[0].mxu0
    %v7723 = vpop.f32.mrb[0].mxu0
    %7724 = vdwg.mxu0
    %7725 = vmatprep.subr.bf16.mxu0 %v7300
    %7726 = vmatpush1.bf16.msra.mxu0 %v7299
    %7727 = vmatprep.subr.bf16.mxu0 %v7306
    %7728 = vmatpush1.bf16.msra.mxu0 %v7305
    %7729 = vmatprep.subr.bf16.mxu0 %v7312
    %7730 = vmatpush1.bf16.msra.mxu0 %v7311
    %7731 = vmatprep.subr.bf16.mxu0 %v7318
    %7732 = vmatpush1.bf16.msra.mxu0 %v7317
    %7733 = vmatprep.subr.bf16.mxu0 %v7324
    %7734 = vmatpush1.bf16.msra.mxu0 %v7323
    %7735 = vmatprep.subr.bf16.mxu0 %v7330
    %7736 = vmatpush1.bf16.msra.mxu0 %v7329
    %7737 = vmatprep.subr.bf16.mxu0 %v7336
    %7738 = vmatpush1.bf16.msra.mxu0 %v7335
    %7739 = vmatprep.subr.bf16.mxu0 %v7342
    %7740 = vmatpush1.bf16.msra.mxu0 %v7341
    %7741 = vmatprep.subr.bf16.mxu0 %v7348
    %7742 = vmatpush1.bf16.msra.mxu0 %v7347
    %7743 = vmatprep.subr.bf16.mxu0 %v7354
    %7744 = vmatpush1.bf16.msra.mxu0 %v7353
    %7745 = vmatprep.subr.bf16.mxu0 %v7360
    %7746 = vmatpush1.bf16.msra.mxu0 %v7359
    %7747 = vmatprep.subr.bf16.mxu0 %v7366
    %7748 = vmatpush1.bf16.msra.mxu0 %v7365
    %7749 = vmatprep.subr.bf16.mxu0 %v7372
    %7750 = vmatpush1.bf16.msra.mxu0 %v7371
    %7751 = vmatprep.subr.bf16.mxu0 %v7378
    %7752 = vmatpush1.bf16.msra.mxu0 %v7377
    %7753 = vmatprep.subr.bf16.mxu0 %v7384
    %7754 = vmatpush1.bf16.msra.mxu0 %v7383
    %7755 = vmatprep.subr.bf16.mxu0 %v7390
    %7756 = vmatpush1.bf16.msra.mxu0 %v7389
    %7757 = vmatprep.mubr.bf16.mxu0 %v7396
    %7758 = vmatmul.mubr.bf16.gmra.mrb[0].mxu0 %v7395
    %v7759 = vpop.f32.mrb[0].mxu0
    %v7760 = vadd.f32 %v7719, %v7759
    %v7761 = vpop.f32.mrb[0].mxu0
    %v7762 = vadd.f32 %v7721, %v7761
    %v7763 = vpop.f32.mrb[0].mxu0
    %v7764 = vpop.f32.mrb[0].mxu0
    %7765 = vdwg.mxu0
    %v7766 = vld [vmem:[#allocation15 + $0x2a] sm:$0x3f]
    %v7768 = vlaneseq
    %v7769 = vshrl.u32 %v7768, 7
    %v7770 = vsub.s32 0, %v7769
    %v7771 = vrot.slane %v7766, %v7770
    %v7772 = vlaneseq
    %v7773 = vshrl.u32 %v7772, 7
    %v7774 = vsub.s32 1, %v7773
    %v7775 = vrot.slane %v7766, %v7774
    %v7776 = vlaneseq
    %v7777 = vshrl.u32 %v7776, 7
    %v7778 = vsub.s32 2, %v7777
    %v7779 = vrot.slane %v7766, %v7778
    %v7780 = vlaneseq
    %v7781 = vshrl.u32 %v7780, 7
    %v7782 = vsub.s32 3, %v7781
    %v7783 = vrot.slane %v7766, %v7782
    %v7784 = vlaneseq
    %v7785 = vshrl.u32 %v7784, 7
    %v7786 = vsub.s32 4, %v7785
    %v7787 = vrot.slane %v7766, %v7786
    %v7788 = vlaneseq
    %v7789 = vshrl.u32 %v7788, 7
    %v7790 = vsub.s32 5, %v7789
    %v7791 = vrot.slane %v7766, %v7790
    %v7798 = vmul.f32 %v7514, %v7771
    %v7799 = vmul.f32 %v7516, %v7775
    %v7800 = vmul.f32 %v7637, %v7779
    %v7801 = vmul.f32 %v7639, %v7783
    %v7802 = vmul.f32 %v7760, %v7787
    %v7803 = vmul.f32 %v7762, %v7791
    %v7804 = vadd.f32 %v6953, %v7798
    %v7805 = vadd.f32 %v6954, %v7799
    %v7806 = vadd.f32 %v6955, %v7800
    %v7807 = vadd.f32 %v6956, %v7801
    %v7808 = vadd.f32 %v6957, %v7802
    %v7809 = vadd.f32 %v6958, %v7803
    %v7810 = vld [vmem:[#allocation15 + $0x59] sm:$0x3f]
    %v7812 = vlaneseq
    %v7813 = vshrl.u32 %v7812, 7
    %v7814 = vsub.s32 0, %v7813
    %v7815 = vrot.slane %v7810, %v7814
    %v7816 = vlaneseq
    %v7817 = vshrl.u32 %v7816, 7
    %v7818 = vsub.s32 1, %v7817
    %v7819 = vrot.slane %v7810, %v7818
    %v7820 = vlaneseq
    %v7821 = vshrl.u32 %v7820, 7
    %v7822 = vsub.s32 2, %v7821
    %v7823 = vrot.slane %v7810, %v7822
    %v7824 = vlaneseq
    %v7825 = vshrl.u32 %v7824, 7
    %v7826 = vsub.s32 3, %v7825
    %v7827 = vrot.slane %v7810, %v7826
    %v7828 = vlaneseq
    %v7829 = vshrl.u32 %v7828, 7
    %v7830 = vsub.s32 4, %v7829
    %v7831 = vrot.slane %v7810, %v7830
    %v7832 = vlaneseq
    %v7833 = vshrl.u32 %v7832, 7
    %v7834 = vsub.s32 5, %v7833
    %v7835 = vrot.slane %v7810, %v7834
    %v7842 = vadd.f32 %v7804, %v7815
    %v7843 = vadd.f32 %v7805, %v7819
    %v7844 = vadd.f32 %v7806, %v7823
    %v7845 = vadd.f32 %v7807, %v7827
    %v7846 = vadd.f32 %v7808, %v7831
    %v7847 = vadd.f32 %v7809, %v7835
    %v7848 = vmax.f32 %v7842, 0.0
    %v7849 = vmax.f32 %v7843, 0.0
    %v7850 = vmax.f32 %v7844, 0.0
    %v7851 = vmax.f32 %v7845, 0.0
    %v7852 = vmax.f32 %v7846, 0.0
    %v7853 = vmax.f32 %v7847, 0.0
    %v7854 = vld [vmem:[#allocation13] sm:$0xff]
    %v7855 = vld [vmem:[#allocation13 + $0x8] sm:$0xff]
    %v7856 = vld [vmem:[#allocation13 + $0x10] sm:$0xff]
    %v7857 = vld [vmem:[#allocation13 + $0x18] sm:$0xff]
    %v7858 = vld [vmem:[#allocation13 + $0x20] sm:$0xff]
    %v7859 = vld [vmem:[#allocation13 + $0x28] sm:$0xff]
    %v7860 = vld [vmem:[#allocation13 + $0x30] sm:$0xff]
    %v7861 = vld [vmem:[#allocation13 + $0x38] sm:$0xff]
    %v7862 = vld [vmem:[#allocation13 + $0x40] sm:$0xff]
    %v7863 = vld [vmem:[#allocation13 + $0x48] sm:$0xff]
    %v7864 = vld [vmem:[#allocation13 + $0x50] sm:$0xff]
    %v7865 = vld [vmem:[#allocation13 + $0x58] sm:$0xff]
    %v7866 = vld [vmem:[#allocation13 + $0x60] sm:$0xff]
    %v7867 = vld [vmem:[#allocation13 + $0x68] sm:$0xff]
    %v7868 = vld [vmem:[#allocation13 + $0x70] sm:$0xff]
    %v7869 = vld [vmem:[#allocation13 + $0x78] sm:$0xff]
    %v7870 = vld [vmem:[#allocation13 + $0x80] sm:$0xff]
    %v7871 = vld [vmem:[#allocation13 + $0x88] sm:$0xff]
    %v7872 = vld [vmem:[#allocation13 + $0x90] sm:$0xff]
    %v7873 = vld [vmem:[#allocation13 + $0x98] sm:$0xff]
    %v7874 = vld [vmem:[#allocation13 + $0xa0] sm:$0xff]
    %v7875 = vld [vmem:[#allocation13 + $0xa8] sm:$0xff]
    %v7876 = vld [vmem:[#allocation13 + $0xb0] sm:$0xff]
    %v7877 = vld [vmem:[#allocation13 + $0xb8] sm:$0xff]
    %v7878 = vld [vmem:[#allocation13 + $0xc0] sm:$0xff]
    %v7879 = vld [vmem:[#allocation13 + $0xc8] sm:$0xff]
    %v7880 = vld [vmem:[#allocation13 + $0xd0] sm:$0xff]
    %v7881 = vld [vmem:[#allocation13 + $0xd8] sm:$0xff]
    %v7882 = vld [vmem:[#allocation13 + $0xe0] sm:$0xff]
    %v7883 = vld [vmem:[#allocation13 + $0xe8] sm:$0xff]
    %v7884 = vld [vmem:[#allocation13 + $0xf0] sm:$0xff]
    %v7885 = vld [vmem:[#allocation13 + $0xf8] sm:$0xff]
    %v7886 = vld [vmem:[#allocation13 + $0x100] sm:$0xff]
    %v7887 = vld [vmem:[#allocation13 + $0x108] sm:$0xff]
    %v7888 = vld [vmem:[#allocation13 + $0x110] sm:$0xff]
    %v7889 = vld [vmem:[#allocation13 + $0x118] sm:$0xff]
    %v7890 = vld [vmem:[#allocation13 + $0x120] sm:$0xff]
    %v7891 = vld [vmem:[#allocation13 + $0x128] sm:$0xff]
    %v7892 = vld [vmem:[#allocation13 + $0x130] sm:$0xff]
    %v7893 = vld [vmem:[#allocation13 + $0x138] sm:$0xff]
    %v7894 = vld [vmem:[#allocation13 + $0x140] sm:$0xff]
    %v7895 = vld [vmem:[#allocation13 + $0x148] sm:$0xff]
    %v7896 = vld [vmem:[#allocation13 + $0x150] sm:$0xff]
    %v7897 = vld [vmem:[#allocation13 + $0x158] sm:$0xff]
    %v7898 = vld [vmem:[#allocation13 + $0x160] sm:$0xff]
    %v7899 = vld [vmem:[#allocation13 + $0x168] sm:$0xff]
    %v7900 = vld [vmem:[#allocation13 + $0x170] sm:$0xff]
    %v7901 = vld [vmem:[#allocation13 + $0x178] sm:$0xff]
    %v7902 = vunpack.c.l.s8.bf16 %v7854
    %v7903 = vunpack.c.l.s8.bf16 %v7855
    %v7904 = vunpack.c.h.s8.bf16 %v7854
    %v7905 = vunpack.c.h.s8.bf16 %v7855
    %v7906 = vunpack.c.l.s8.bf16 %v7856
    %v7907 = vunpack.c.l.s8.bf16 %v7857
    %v7908 = vunpack.c.h.s8.bf16 %v7856
    %v7909 = vunpack.c.h.s8.bf16 %v7857
    %v7910 = vunpack.c.l.s8.bf16 %v7858
    %v7911 = vunpack.c.l.s8.bf16 %v7859
    %v7912 = vunpack.c.h.s8.bf16 %v7858
    %v7913 = vunpack.c.h.s8.bf16 %v7859
    %v7914 = vunpack.c.l.s8.bf16 %v7860
    %v7915 = vunpack.c.l.s8.bf16 %v7861
    %v7916 = vunpack.c.h.s8.bf16 %v7860
    %v7917 = vunpack.c.h.s8.bf16 %v7861
    %v7918 = vunpack.c.l.s8.bf16 %v7862
    %v7919 = vunpack.c.l.s8.bf16 %v7863
    %v7920 = vunpack.c.h.s8.bf16 %v7862
    %v7921 = vunpack.c.h.s8.bf16 %v7863
    %v7922 = vunpack.c.l.s8.bf16 %v7864
    %v7923 = vunpack.c.l.s8.bf16 %v7865
    %v7924 = vunpack.c.h.s8.bf16 %v7864
    %v7925 = vunpack.c.h.s8.bf16 %v7865
    %v7926 = vunpack.c.l.s8.bf16 %v7866
    %v7927 = vunpack.c.l.s8.bf16 %v7867
    %v7928 = vunpack.c.h.s8.bf16 %v7866
    %v7929 = vunpack.c.h.s8.bf16 %v7867
    %v7930 = vunpack.c.l.s8.bf16 %v7868
    %v7931 = vunpack.c.l.s8.bf16 %v7869
    %v7932 = vunpack.c.h.s8.bf16 %v7868
    %v7933 = vunpack.c.h.s8.bf16 %v7869
    %v7934 = vunpack.c.l.s8.bf16 %v7870
    %v7935 = vunpack.c.l.s8.bf16 %v7871
    %v7936 = vunpack.c.h.s8.bf16 %v7870
    %v7937 = vunpack.c.h.s8.bf16 %v7871
    %v7938 = vunpack.c.l.s8.bf16 %v7872
    %v7939 = vunpack.c.l.s8.bf16 %v7873
    %v7940 = vunpack.c.h.s8.bf16 %v7872
    %v7941 = vunpack.c.h.s8.bf16 %v7873
    %v7942 = vunpack.c.l.s8.bf16 %v7874
    %v7943 = vunpack.c.l.s8.bf16 %v7875
    %v7944 = vunpack.c.h.s8.bf16 %v7874
    %v7945 = vunpack.c.h.s8.bf16 %v7875
    %v7946 = vunpack.c.l.s8.bf16 %v7876
    %v7947 = vunpack.c.l.s8.bf16 %v7877
    %v7948 = vunpack.c.h.s8.bf16 %v7876
    %v7949 = vunpack.c.h.s8.bf16 %v7877
    %v7950 = vunpack.c.l.s8.bf16 %v7878
    %v7951 = vunpack.c.l.s8.bf16 %v7879
    %v7952 = vunpack.c.h.s8.bf16 %v7878
    %v7953 = vunpack.c.h.s8.bf16 %v7879
    %v7954 = vunpack.c.l.s8.bf16 %v7880
    %v7955 = vunpack.c.l.s8.bf16 %v7881
    %v7956 = vunpack.c.h.s8.bf16 %v7880
    %v7957 = vunpack.c.h.s8.bf16 %v7881
    %v7958 = vunpack.c.l.s8.bf16 %v7882
    %v7959 = vunpack.c.l.s8.bf16 %v7883
    %v7960 = vunpack.c.h.s8.bf16 %v7882
    %v7961 = vunpack.c.h.s8.bf16 %v7883
    %v7962 = vunpack.c.l.s8.bf16 %v7884
    %v7963 = vunpack.c.l.s8.bf16 %v7885
    %v7964 = vunpack.c.h.s8.bf16 %v7884
    %v7965 = vunpack.c.h.s8.bf16 %v7885
    %v7966 = vunpack.c.l.s8.bf16 %v7886
    %v7967 = vunpack.c.l.s8.bf16 %v7887
    %v7968 = vunpack.c.h.s8.bf16 %v7886
    %v7969 = vunpack.c.h.s8.bf16 %v7887
    %v7970 = vunpack.c.l.s8.bf16 %v7888
    %v7971 = vunpack.c.l.s8.bf16 %v7889
    %v7972 = vunpack.c.h.s8.bf16 %v7888
    %v7973 = vunpack.c.h.s8.bf16 %v7889
    %v7974 = vunpack.c.l.s8.bf16 %v7890
    %v7975 = vunpack.c.l.s8.bf16 %v7891
    %v7976 = vunpack.c.h.s8.bf16 %v7890
    %v7977 = vunpack.c.h.s8.bf16 %v7891
    %v7978 = vunpack.c.l.s8.bf16 %v7892
    %v7979 = vunpack.c.l.s8.bf16 %v7893
    %v7980 = vunpack.c.h.s8.bf16 %v7892
    %v7981 = vunpack.c.h.s8.bf16 %v7893
    %v7982 = vunpack.c.l.s8.bf16 %v7894
    %v7983 = vunpack.c.l.s8.bf16 %v7895
    %v7984 = vunpack.c.h.s8.bf16 %v7894
    %v7985 = vunpack.c.h.s8.bf16 %v7895
    %v7986 = vunpack.c.l.s8.bf16 %v7896
    %v7987 = vunpack.c.l.s8.bf16 %v7897
    %v7988 = vunpack.c.h.s8.bf16 %v7896
    %v7989 = vunpack.c.h.s8.bf16 %v7897
    %v7990 = vunpack.c.l.s8.bf16 %v7898
    %v7991 = vunpack.c.l.s8.bf16 %v7899
    %v7992 = vunpack.c.h.s8.bf16 %v7898
    %v7993 = vunpack.c.h.s8.bf16 %v7899
    %v7994 = vunpack.c.l.s8.bf16 %v7900
    %v7995 = vunpack.c.l.s8.bf16 %v7901
    %v7996 = vunpack.c.h.s8.bf16 %v7900
    %v7997 = vunpack.c.h.s8.bf16 %v7901
    %v7998 = vpack.c.bf16 %v7848, %v7848
    %v7999 = vpack.c.bf16 %v7849, %v7849
    %v8000 = vpack.c.bf16 %v7850, %v7850
    %v8001 = vpack.c.bf16 %v7851, %v7851
    %v8002 = vpack.c.bf16 %v7852, %v7852
    %v8003 = vpack.c.bf16 %v7853, %v7853
    %8004 = vmatprep.subr.bf16.mxu0 %v7903
    %8005 = vmatpush1.bf16.msra.mxu0 %v7902
    %8006 = vmatprep.subr.bf16.mxu0 %v7905
    %8007 = vmatpush1.bf16.msra.mxu0 %v7904
    %8008 = vmatprep.subr.bf16.mxu0 %v7907
    %8009 = vmatpush1.bf16.msra.mxu0 %v7906
    %8010 = vmatprep.subr.bf16.mxu0 %v7909
    %8011 = vmatpush1.bf16.msra.mxu0 %v7908
    %8012 = vmatprep.subr.bf16.mxu0 %v7911
    %8013 = vmatpush1.bf16.msra.mxu0 %v7910
    %8014 = vmatprep.subr.bf16.mxu0 %v7913
    %8015 = vmatpush1.bf16.msra.mxu0 %v7912
    %8016 = vmatprep.subr.bf16.mxu0 %v7915
    %8017 = vmatpush1.bf16.msra.mxu0 %v7914
    %8018 = vmatprep.subr.bf16.mxu0 %v7917
    %8019 = vmatpush1.bf16.msra.mxu0 %v7916
    %8020 = vmatprep.subr.bf16.mxu0 %v7919
    %8021 = vmatpush1.bf16.msra.mxu0 %v7918
    %8022 = vmatprep.subr.bf16.mxu0 %v7921
    %8023 = vmatpush1.bf16.msra.mxu0 %v7920
    %8024 = vmatprep.subr.bf16.mxu0 %v7923
    %8025 = vmatpush1.bf16.msra.mxu0 %v7922
    %8026 = vmatprep.subr.bf16.mxu0 %v7925
    %8027 = vmatpush1.bf16.msra.mxu0 %v7924
    %8028 = vmatprep.subr.bf16.mxu0 %v7927
    %8029 = vmatpush1.bf16.msra.mxu0 %v7926
    %8030 = vmatprep.subr.bf16.mxu0 %v7929
    %8031 = vmatpush1.bf16.msra.mxu0 %v7928
    %8032 = vmatprep.subr.bf16.mxu0 %v7931
    %8033 = vmatpush1.bf16.msra.mxu0 %v7930
    %8034 = vmatprep.subr.bf16.mxu0 %v7933
    %8035 = vmatpush1.bf16.msra.mxu0 %v7932
    %8036 = vmatprep.mubr.bf16.mxu0 %v7999
    %8037 = vmatmul.mubr.bf16.gmra.mrb[0].mxu0 %v7998
    %v8038 = vpop.f32.mrb[0].mxu0
    %v8039 = vadd.f32 0.0, %v8038
    %v8040 = vpop.f32.mrb[0].mxu0
    %v8041 = vadd.f32 0.0, %v8040
    %v8042 = vpop.f32.mrb[0].mxu0
    %v8043 = vpop.f32.mrb[0].mxu0
    %8044 = vdwg.mxu0
    %8045 = vmatprep.subr.bf16.mxu0 %v7935
    %8046 = vmatpush1.bf16.msra.mxu0 %v7934
    %8047 = vmatprep.subr.bf16.mxu0 %v7937
    %8048 = vmatpush1.bf16.msra.mxu0 %v7936
    %8049 = vmatprep.subr.bf16.mxu0 %v7939
    %8050 = vmatpush1.bf16.msra.mxu0 %v7938
    %8051 = vmatprep.subr.bf16.mxu0 %v7941
    %8052 = vmatpush1.bf16.msra.mxu0 %v7940
    %8053 = vmatprep.subr.bf16.mxu0 %v7943
    %8054 = vmatpush1.bf16.msra.mxu0 %v7942
    %8055 = vmatprep.subr.bf16.mxu0 %v7945
    %8056 = vmatpush1.bf16.msra.mxu0 %v7944
    %8057 = vmatprep.subr.bf16.mxu0 %v7947
    %8058 = vmatpush1.bf16.msra.mxu0 %v7946
    %8059 = vmatprep.subr.bf16.mxu0 %v7949
    %8060 = vmatpush1.bf16.msra.mxu0 %v7948
    %8061 = vmatprep.subr.bf16.mxu0 %v7951
    %8062 = vmatpush1.bf16.msra.mxu0 %v7950
    %8063 = vmatprep.subr.bf16.mxu0 %v7953
    %8064 = vmatpush1.bf16.msra.mxu0 %v7952
    %8065 = vmatprep.subr.bf16.mxu0 %v7955
    %8066 = vmatpush1.bf16.msra.mxu0 %v7954
    %8067 = vmatprep.subr.bf16.mxu0 %v7957
    %8068 = vmatpush1.bf16.msra.mxu0 %v7956
    %8069 = vmatprep.subr.bf16.mxu0 %v7959
    %8070 = vmatpush1.bf16.msra.mxu0 %v7958
    %8071 = vmatprep.subr.bf16.mxu0 %v7961
    %8072 = vmatpush1.bf16.msra.mxu0 %v7960
    %8073 = vmatprep.subr.bf16.mxu0 %v7963
    %8074 = vmatpush1.bf16.msra.mxu0 %v7962
    %8075 = vmatprep.subr.bf16.mxu0 %v7965
    %8076 = vmatpush1.bf16.msra.mxu0 %v7964
    %8077 = vmatprep.mubr.bf16.mxu0 %v8001
    %8078 = vmatmul.mubr.bf16.gmra.mrb[0].mxu0 %v8000
    %v8079 = vpop.f32.mrb[0].mxu0
    %v8080 = vadd.f32 %v8039, %v8079
    %v8081 = vpop.f32.mrb[0].mxu0
    %v8082 = vadd.f32 %v8041, %v8081
    %v8083 = vpop.f32.mrb[0].mxu0
    %v8084 = vpop.f32.mrb[0].mxu0
    %8085 = vdwg.mxu0
    %8086 = vmatprep.subr.bf16.mxu0 %v7967
    %8087 = vmatpush1.bf16.msra.mxu0 %v7966
    %8088 = vmatprep.subr.bf16.mxu0 %v7969
    %8089 = vmatpush1.bf16.msra.mxu0 %v7968
    %8090 = vmatprep.subr.bf16.mxu0 %v7971
    %8091 = vmatpush1.bf16.msra.mxu0 %v7970
    %8092 = vmatprep.subr.bf16.mxu0 %v7973
    %8093 = vmatpush1.bf16.msra.mxu0 %v7972
    %8094 = vmatprep.subr.bf16.mxu0 %v7975
    %8095 = vmatpush1.bf16.msra.mxu0 %v7974
    %8096 = vmatprep.subr.bf16.mxu0 %v7977
    %8097 = vmatpush1.bf16.msra.mxu0 %v7976
    %8098 = vmatprep.subr.bf16.mxu0 %v7979
    %8099 = vmatpush1.bf16.msra.mxu0 %v7978
    %8100 = vmatprep.subr.bf16.mxu0 %v7981
    %8101 = vmatpush1.bf16.msra.mxu0 %v7980
    %8102 = vmatprep.subr.bf16.mxu0 %v7983
    %8103 = vmatpush1.bf16.msra.mxu0 %v7982
    %8104 = vmatprep.subr.bf16.mxu0 %v7985
    %8105 = vmatpush1.bf16.msra.mxu0 %v7984
    %8106 = vmatprep.subr.bf16.mxu0 %v7987
    %8107 = vmatpush1.bf16.msra.mxu0 %v7986
    %8108 = vmatprep.subr.bf16.mxu0 %v7989
    %8109 = vmatpush1.bf16.msra.mxu0 %v7988
    %8110 = vmatprep.subr.bf16.mxu0 %v7991
    %8111 = vmatpush1.bf16.msra.mxu0 %v7990
    %8112 = vmatprep.subr.bf16.mxu0 %v7993
    %8113 = vmatpush1.bf16.msra.mxu0 %v7992
    %8114 = vmatprep.subr.bf16.mxu0 %v7995
    %8115 = vmatpush1.bf16.msra.mxu0 %v7994
    %8116 = vmatprep.subr.bf16.mxu0 %v7997
    %8117 = vmatpush1.bf16.msra.mxu0 %v7996
    %8118 = vmatprep.mubr.bf16.mxu0 %v8003
    %8119 = vmatmul.mubr.bf16.gmra.mrb[0].mxu0 %v8002
    %v8120 = vpop.f32.mrb[0].mxu0
    %v8121 = vadd.f32 %v8080, %v8120
    %v8122 = vpop.f32.mrb[0].mxu0
    %v8123 = vadd.f32 %v8082, %v8122
    %v8124 = vpop.f32.mrb[0].mxu0
    %v8125 = vpop.f32.mrb[0].mxu0
    %8126 = vdwg.mxu0
    %v8127 = vld [vmem:[#allocation15 + $0x30] sm:$0x3]
    %v8129 = vlaneseq
    %v8130 = vshrl.u32 %v8129, 7
    %v8131 = vsub.s32 0, %v8130
    %v8132 = vrot.slane %v8127, %v8131
    %v8133 = vlaneseq
    %v8134 = vshrl.u32 %v8133, 7
    %v8135 = vsub.s32 1, %v8134
    %v8136 = vrot.slane %v8127, %v8135
    %v8139 = vmul.f32 %v8121, %v8132
    %v8140 = vmul.f32 %v8123, %v8136
    %v8141 = vld [vmem:[#allocation15 + $0x5f] sm:$0x3]
    %v8143 = vlaneseq
    %v8144 = vshrl.u32 %v8143, 7
    %v8145 = vsub.s32 0, %v8144
    %v8146 = vrot.slane %v8141, %v8145
    %v8147 = vlaneseq
    %v8148 = vshrl.u32 %v8147, 7
    %v8149 = vsub.s32 1, %v8148
    %v8150 = vrot.slane %v8141, %v8149
    %v8153 = vadd.f32 %v8139, %v8146
    %v8154 = vadd.f32 %v8140, %v8150
    %v8155 = vld [vmem:[#allocation15 + $0x61] sm:$0x3]
    %v8156 = vld [vmem:[#allocation15 + $0x63] sm:$0x3]
    %v8157 = vadd.f32 %v8153, %v8154
    %8158 = vadd.xlane.f32.xlu0 %v8157
    %v8159 = vpop.xlane.xlu0 %8158
    %v8160 = vrcp.pop 256.0
    %v8161 = vmul.f32 %v8159, %v8160
    %v8162 = vsub.f32 %v8153, %v8161
    %v8163 = vsub.f32 %v8154, %v8161
    %v8164 = vmul.f32 %v8162, %v8162
    %v8165 = vmul.f32 %v8163, %v8163
    %v8166 = vadd.f32 %v8164, %v8165
    %8167 = vadd.xlane.f32.xlu0 %v8166
    %v8168 = vpop.xlane.xlu0 %8167
    %v8169 = vmul.f32 %v8168, %v8160
    %v8170 = vadd.f32 %v8169, 1e-05
    %v8171 = vrsqrt.pop %v8170
    %v8172 = vmul.f32 %v8162, %v8171
    %v8173 = vmul.f32 %v8163, %v8171
    %v8175 = vlaneseq
    %v8176 = vshrl.u32 %v8175, 7
    %v8177 = vsub.s32 0, %v8176
    %v8178 = vrot.slane %v8155, %v8177
    %v8179 = vlaneseq
    %v8180 = vshrl.u32 %v8179, 7
    %v8181 = vsub.s32 1, %v8180
    %v8182 = vrot.slane %v8155, %v8181
    %v8185 = vmul.f32 %v8172, %v8178
    %v8186 = vmul.f32 %v8173, %v8182
    %v8188 = vlaneseq
    %v8189 = vshrl.u32 %v8188, 7
    %v8190 = vsub.s32 0, %v8189
    %v8191 = vrot.slane %v8156, %v8190
    %v8192 = vlaneseq
    %v8193 = vshrl.u32 %v8192, 7
    %v8194 = vsub.s32 1, %v8193
    %v8195 = vrot.slane %v8156, %v8194
    %v8198 = vadd.f32 %v8185, %v8191
    %v8199 = vadd.f32 %v8186, %v8195
    %v8200 = vmax.f32 %v8198, 0.0
    %v8201 = vmax.f32 %v8199, 0.0
    %v8202 = vpack.c.bf16 %v8200, %v8200
    %v8203 = vpack.c.bf16 %v8201, %v8201
    %v8204 = vld [vmem:[%s8] sm:$0xf]
    %v8205 = vld [vmem:[%s8 + $0x4] sm:$0xf]
    %v8206 = vld [vmem:[%s8 + $0x8] sm:$0xf]
    %v8207 = vld [vmem:[%s8 + $0xc] sm:$0xf]
    %v8208 = vld [vmem:[%s8 + $0x10] sm:$0xf]
    %v8209 = vld [vmem:[%s8 + $0x14] sm:$0xf]
    %v8210 = vld [vmem:[%s8 + $0x18] sm:$0xf]
    %v8211 = vld [vmem:[%s8 + $0x1c] sm:$0xf]
    %v8212 = vld [vmem:[%s8 + $0x20] sm:$0xf]
    %v8213 = vld [vmem:[%s8 + $0x24] sm:$0xf]
    %v8214 = vld [vmem:[%s8 + $0x28] sm:$0xf]
    %v8215 = vld [vmem:[%s8 + $0x2c] sm:$0xf]
    %v8216 = vld [vmem:[%s8 + $0x30] sm:$0xf]
    %v8217 = vld [vmem:[%s8 + $0x34] sm:$0xf]
    %v8218 = vld [vmem:[%s8 + $0x38] sm:$0xf]
    %v8219 = vld [vmem:[%s8 + $0x3c] sm:$0xf]
    %v8220 = vld [vmem:[%s8 + $0x40] sm:$0xf]
    %v8221 = vld [vmem:[%s8 + $0x44] sm:$0xf]
    %v8222 = vld [vmem:[%s8 + $0x48] sm:$0xf]
    %v8223 = vld [vmem:[%s8 + $0x4c] sm:$0xf]
    %v8224 = vld [vmem:[%s8 + $0x50] sm:$0xf]
    %v8225 = vld [vmem:[%s8 + $0x54] sm:$0xf]
    %v8226 = vld [vmem:[%s8 + $0x58] sm:$0xf]
    %v8227 = vld [vmem:[%s8 + $0x5c] sm:$0xf]
    %v8228 = vld [vmem:[%s8 + $0x60] sm:$0xf]
    %v8229 = vld [vmem:[%s8 + $0x64] sm:$0xf]
    %v8230 = vld [vmem:[%s8 + $0x68] sm:$0xf]
    %v8231 = vld [vmem:[%s8 + $0x6c] sm:$0xf]
    %v8232 = vld [vmem:[%s8 + $0x70] sm:$0xf]
    %v8233 = vld [vmem:[%s8 + $0x74] sm:$0xf]
    %v8234 = vld [vmem:[%s8 + $0x78] sm:$0xf]
    %v8235 = vld [vmem:[%s8 + $0x7c] sm:$0xf]
    %v8236 = vld [vmem:[#allocation15 + $0x65] sm:$0x1]
    %v8238 = vlaneseq
    %v8239 = vshrl.u32 %v8238, 7
    %v8240 = vsub.s32 0, %v8239
    %v8241 = vrot.slane %v8236, %v8240
    %v8275 = vunpack.c.l.b16 %v8204
    %v8276 = vunpack.c.l.b16 %v8205
    %v8277 = vunpack.c.l.b16 %v8206
    %v8278 = vunpack.c.l.b16 %v8207
    %v8279 = vunpack.c.l.b16 %v8208
    %v8280 = vunpack.c.l.b16 %v8209
    %v8281 = vunpack.c.l.b16 %v8210
    %v8282 = vunpack.c.l.b16 %v8211
    %v8283 = vunpack.c.l.b16 %v8212
    %v8284 = vunpack.c.l.b16 %v8213
    %v8285 = vunpack.c.l.b16 %v8214
    %v8286 = vunpack.c.l.b16 %v8215
    %v8287 = vunpack.c.l.b16 %v8216
    %v8288 = vunpack.c.l.b16 %v8217
    %v8289 = vunpack.c.l.b16 %v8218
    %v8290 = vunpack.c.l.b16 %v8219
    %v8291 = vunpack.c.l.b16 %v8220
    %v8292 = vunpack.c.l.b16 %v8221
    %v8293 = vunpack.c.l.b16 %v8222
    %v8294 = vunpack.c.l.b16 %v8223
    %v8295 = vunpack.c.l.b16 %v8224
    %v8296 = vunpack.c.l.b16 %v8225
    %v8297 = vunpack.c.l.b16 %v8226
    %v8298 = vunpack.c.l.b16 %v8227
    %v8299 = vunpack.c.l.b16 %v8228
    %v8300 = vunpack.c.l.b16 %v8229
    %v8301 = vunpack.c.l.b16 %v8230
    %v8302 = vunpack.c.l.b16 %v8231
    %v8303 = vunpack.c.l.b16 %v8232
    %v8304 = vunpack.c.l.b16 %v8233
    %v8305 = vunpack.c.l.b16 %v8234
    %v8306 = vunpack.c.l.b16 %v8235
    %v8307 = vpack.c.b16 %v8276, %v8275
    %v8308 = vpack.c.b16 %v8278, %v8277
    %v8309 = vpack.c.b16 %v8280, %v8279
    %v8310 = vpack.c.b16 %v8282, %v8281
    %v8311 = vpack.c.b16 %v8284, %v8283
    %v8312 = vpack.c.b16 %v8286, %v8285
    %v8313 = vpack.c.b16 %v8288, %v8287
    %v8314 = vpack.c.b16 %v8290, %v8289
    %v8315 = vpack.c.b16 %v8292, %v8291
    %v8316 = vpack.c.b16 %v8294, %v8293
    %v8317 = vpack.c.b16 %v8296, %v8295
    %v8318 = vpack.c.b16 %v8298, %v8297
    %v8319 = vpack.c.b16 %v8300, %v8299
    %v8320 = vpack.c.b16 %v8302, %v8301
    %v8321 = vpack.c.b16 %v8304, %v8303
    %v8322 = vpack.c.b16 %v8306, %v8305
    %8339 = vmatprep.subr.bf16.mxu0 0
    %8340 = vmatpush1.bf16.msra.mxu0 %v8307
    %8341 = vmatprep.subr.bf16.mxu0 0
    %8342 = vmatpush1.bf16.msra.mxu0 %v8308
    %8343 = vmatprep.subr.bf16.mxu0 0
    %8344 = vmatpush1.bf16.msra.mxu0 %v8309
    %8345 = vmatprep.subr.bf16.mxu0 0
    %8346 = vmatpush1.bf16.msra.mxu0 %v8310
    %8347 = vmatprep.subr.bf16.mxu0 0
    %8348 = vmatpush1.bf16.msra.mxu0 %v8311
    %8349 = vmatprep.subr.bf16.mxu0 0
    %8350 = vmatpush1.bf16.msra.mxu0 %v8312
    %8351 = vmatprep.subr.bf16.mxu0 0
    %8352 = vmatpush1.bf16.msra.mxu0 %v8313
    %8353 = vmatprep.subr.bf16.mxu0 0
    %8354 = vmatpush1.bf16.msra.mxu0 %v8314
    %8355 = vmatprep.subr.bf16.mxu0 0
    %8356 = vmatpush1.bf16.msra.mxu0 %v8315
    %8357 = vmatprep.subr.bf16.mxu0 0
    %8358 = vmatpush1.bf16.msra.mxu0 %v8316
    %8359 = vmatprep.subr.bf16.mxu0 0
    %8360 = vmatpush1.bf16.msra.mxu0 %v8317
    %8361 = vmatprep.subr.bf16.mxu0 0
    %8362 = vmatpush1.bf16.msra.mxu0 %v8318
    %8363 = vmatprep.subr.bf16.mxu0 0
    %8364 = vmatpush1.bf16.msra.mxu0 %v8319
    %8365 = vmatprep.subr.bf16.mxu0 0
    %8366 = vmatpush1.bf16.msra.mxu0 %v8320
    %8367 = vmatprep.subr.bf16.mxu0 0
    %8368 = vmatpush1.bf16.msra.mxu0 %v8321
    %8369 = vmatprep.subr.bf16.mxu0 0
    %8370 = vmatpush1.bf16.msra.mxu0 %v8322
    %8371 = vmatprep.mubr.bf16.mxu0 %v8203
    %8372 = vmatmul.mubr.bf16.gmra.mrb[0].mxu0 %v8202
    %v8373 = vpop.f32.mrb[0].mxu0
    %v8374 = vadd.f32 %v8241, %v8373
    %v8375 = vpop.f32.mrb[0].mxu0
    %v8376 = vpop.f32.mrb[0].mxu0
    %v8377 = vpop.f32.mrb[0].mxu0
    %8378 = vdwg.mxu0
    %v8379 = vmax.f32 %v8374, 0.0
    %v8380 = vpack.c.bf16 %v8379, %v8379
    %v8381 = vld [vmem:[%s9] sm:$0xf]
    %v8382 = vld [vmem:[%s9 + $0x4] sm:$0xf]
    %v8383 = vld [vmem:[%s9 + $0x8] sm:$0xf]
    %v8384 = vld [vmem:[%s9 + $0xc] sm:$0xf]
    %v8385 = vld [vmem:[%s9 + $0x10] sm:$0xf]
    %v8386 = vld [vmem:[%s9 + $0x14] sm:$0xf]
    %v8387 = vld [vmem:[%s9 + $0x18] sm:$0xf]
    %v8388 = vld [vmem:[%s9 + $0x1c] sm:$0xf]
    %v8389 = vld [vmem:[#allocation15 + $0x66] sm:$0x1]
    %v8391 = vlaneseq
    %v8392 = vshrl.u32 %v8391, 7
    %v8393 = vsub.s32 0, %v8392
    %v8394 = vrot.slane %v8389, %v8393
    %v8404 = vunpack.c.l.b16 %v8381
    %v8405 = vunpack.c.l.b16 %v8382
    %v8406 = vunpack.c.l.b16 %v8383
    %v8407 = vunpack.c.l.b16 %v8384
    %v8408 = vunpack.c.l.b16 %v8385
    %v8409 = vunpack.c.l.b16 %v8386
    %v8410 = vunpack.c.l.b16 %v8387
    %v8411 = vunpack.c.l.b16 %v8388
    %v8412 = vpack.c.b16 %v8405, %v8404
    %v8413 = vpack.c.b16 %v8407, %v8406
    %v8414 = vpack.c.b16 %v8409, %v8408
    %v8415 = vpack.c.b16 %v8411, %v8410
    %vm8420 = vcmask 523264
    %v8422 = vsel %vm8420, %v8380, 0
    %8424 = vmatprep.subr.bf16.mxu0 0
    %8425 = vmatpush1.bf16.msra.mxu0 %v8412
    %8426 = vmatprep.subr.bf16.mxu0 0
    %8427 = vmatpush1.bf16.msra.mxu0 %v8413
    %8428 = vmatprep.subr.bf16.mxu0 0
    %8429 = vmatpush1.bf16.msra.mxu0 %v8414
    %8430 = vmatprep.subr.bf16.mxu0 0
    %8431 = vmatpush1.bf16.msra.mxu0 %v8415
    %8432 = vmatprep.subr.bf16.mxu0 0
    %8433 = vmatpush1.bf16.msra.mxu0 0
    %8434 = vmatprep.subr.bf16.mxu0 0
    %8435 = vmatpush1.bf16.msra.mxu0 0
    %8436 = vmatprep.subr.bf16.mxu0 0
    %8437 = vmatpush1.bf16.msra.mxu0 0
    %8438 = vmatprep.subr.bf16.mxu0 0
    %8439 = vmatpush1.bf16.msra.mxu0 0
    %8440 = vmatprep.subr.bf16.mxu0 0
    %8441 = vmatpush1.bf16.msra.mxu0 0
    %8442 = vmatprep.subr.bf16.mxu0 0
    %8443 = vmatpush1.bf16.msra.mxu0 0
    %8444 = vmatprep.subr.bf16.mxu0 0
    %8445 = vmatpush1.bf16.msra.mxu0 0
    %8446 = vmatprep.subr.bf16.mxu0 0
    %8447 = vmatpush1.bf16.msra.mxu0 0
    %8448 = vmatprep.subr.bf16.mxu0 0
    %8449 = vmatpush1.bf16.msra.mxu0 0
    %8450 = vmatprep.subr.bf16.mxu0 0
    %8451 = vmatpush1.bf16.msra.mxu0 0
    %8452 = vmatprep.subr.bf16.mxu0 0
    %8453 = vmatpush1.bf16.msra.mxu0 0
    %8454 = vmatprep.subr.bf16.mxu0 0
    %8455 = vmatpush1.bf16.msra.mxu0 0
    %8456 = vmatprep.mubr.bf16.mxu0 0
    %8457 = vmatmul.mubr.bf16.gmra.mrb[0].mxu0 %v8422
    %v8458 = vpop.f32.mrb[0].mxu0
    %v8459 = vadd.f32 %v8394, %v8458
    %v8460 = vpop.f32.mrb[0].mxu0
    %v8461 = vpop.f32.mrb[0].mxu0
    %v8462 = vpop.f32.mrb[0].mxu0
    %8463 = vdwg.mxu0
    %vm8464 = vcmask 261120
    %v8465 = vsel %vm8464, %v8459, 0.0
    %8466 = vadd.xlane.f32.xlu0 %v8465
    %v8467 = vpop.xlane.xlu0 %8466
    %v8468 = vrcp.pop 32.0
    %v8469 = vmul.f32 %v8467, %v8468
    %v8470 = vsub.f32 %v8459, %v8469
    %v8471 = vmul.f32 %v8470, %v8470
    %v8472 = vsel %vm8464, %v8471, 0.0
    %8473 = vadd.xlane.f32.xlu0 %v8472
    %v8474 = vpop.xlane.xlu0 %8473
    %v8475 = vmul.f32 %v8474, %v8468
    %v8476 = vadd.f32 %v8475, 1e-05
    %v8477 = vrsqrt.pop %v8476
    %v8478 = vmul.f32 %v8470, %v8477
    %v8479 = vadd.f32 %v8478, 0.0
    %v8480 = vld [vmem:[#allocation15 + $0x67] sm:$0x1]
    %v8482 = vlaneseq
    %v8483 = vshrl.u32 %v8482, 7
    %v8484 = vsub.s32 0, %v8483
    %v8485 = vrot.slane %v8480, %v8484
    %v8487 = vmul.f32 %v8479, %v8485
    %v8488 = vsel %vm8464, %v8487, 0.0
    %8489 = vadd.xlane.f32.xlu0 %v8488
    %v8490 = vpop.xlane.xlu0 %8489
    %v8491 = vld [vmem:[#allocation15 + $0x68] sm:$0x1]
    %v8493 = vlaneseq
    %v8494 = vshrl.u32 %v8493, 7
    %v8495 = vsub.s32 0, %v8494
    %v8496 = vrot.slane %v8491, %v8495
    %v8498 = vadd.f32 %v8490, %v8496
    %v8499 = vxor.u32 %v8498, 2147483648
    %v8500 = vmul.f32 %v8499, 1.442695
    %v8501 = vpow.pop %v8500
    %v8502 = vadd.f32 %v8501, 1.0
    %v8503 = vrcp.pop %v8502
    %v8504 = vmul.f32 1.0, %v8503
    %vm8505 = vcmask 7168
    %8506 = vst.msk [vmem:[%s11] sm:$0xff] %vm8505, %v8504
    // Predicated region
    $region82: #{tpu_custom_call.1} parent=1 // pred_check
      _
    $region83: #{tpu_custom_call.1} parent=1 // pred_check_branch
      %8508 = sbr.rel (0) target = $region85
    $region84: #{tpu_custom_call.1} parent=1 // pred_region
      _
    $region85: #{tpu_custom_call.1} parent=1 // pred_fallthru
      _
    // Predicated region
    $region86: #{tpu_custom_call.1} parent=1 // pred_check
      _
    $region87: #{tpu_custom_call.1} parent=1 // pred_check_branch
      %8510 = sbr.rel (0) target = $region89
    $region88: #{tpu_custom_call.1} parent=1 // pred_region
      _
    $region89: #{tpu_custom_call.1} parent=1 // pred_fallthru
      _
    %8511 = vsyncpa [#allocation3], 1
    %8512 = vsyncpa [#allocation5], 1
    %8513 = vsyncpa [#allocation8], 1
    %8514 = vsyncpa [#allocation11], 1
    %8515 = vsyncpa [#allocation14], 1

</llo_original>
